<compile_context>
chip_gen: v7x
topology: tpu7x:2x2x1
jax: 0.10.0
libtpu: 0.0.40
codegen_flags: <defaults>
</compile_context>

<pallas_src>
import functools
import math

import jax
import jax.numpy as jnp
from jax.experimental import pallas as pl
from jax.experimental.pallas import tpu as pltpu

LEAKY_SLOPE = 0.2
BN_EPS = 1e-5
VMEM_LIMIT = 32 * 1024 * 1024      # safe scoped-VMEM request on v5e/v6e/v7x
MAX_TILE_M = 2048                  # cap on conv-output rows per tile


# --------------------------- Pallas kernel: conv ----------------------------

def _conv_s2d_kernel(z_ref, w_ref, *out_refs, tile_oh, wo, nb, num_t,
                     emit_stats):
    """Stride-2 4x4 conv as ONE K-concatenated matmul on a space-to-depth input.

    z_ref : (nb, Ho+1, Wo+1, 4*Cin) bf16  s2d input, whole image(s), resident
    w_ref : (16*Cin, Cout)          bf16  fused tap weights, (bi,bj,pr,pc,cin)
    y_ref : (nb, tile_m, Cout)      f32   raw conv output, NHWC-flatten order
    st_ref: (1, 1, 2, Cout)         f32   per-tile partial (sum, sum_sq); only
                                          present for BatchNorm layers
    """
    y_ref = out_refs[0]
    t = pl.program_id(1)
    k4 = z_ref.shape[3]
    tile_m = tile_oh * wo
    cout = y_ref.shape[2]

    imgs = []
    for b in range(nb):
        taps = []
        for bi in range(2):
            if num_t == 1:                       # static row slab
                rows = z_ref[b, bi:bi + tile_oh, :, :]
            else:                                # row-tiled
                rows = z_ref[b, pl.ds(t * tile_oh + bi, tile_oh), :, :]
            for bj in range(2):
                taps.append(rows[:, bj:bj + wo, :].reshape(tile_m, k4))
        # K-concat the 4 taps -> one (tile_m, 16*Cin) operand, one MXU dot
        imgs.append(jnp.concatenate(taps, axis=-1))
    a16 = imgs[0] if nb == 1 else jnp.concatenate(imgs, axis=0)

    y = jnp.dot(a16, w_ref[...], preferred_element_type=jnp.float32)

    if emit_stats:
        st_ref = out_refs[1]
        s1 = jnp.sum(y, axis=0, keepdims=True)
        s2 = jnp.sum(y * y, axis=0, keepdims=True)
        st_ref[0, 0] = jnp.concatenate([s1, s2], axis=0)     # (2, Cout)

    y_ref[...] = y.reshape(nb, tile_m, cout)


def _conv_tiling(n, ho, wo):
    """Pick (batch-block nb, row-tile tile_oh, num row tiles)."""
    m_img = ho * wo
    if m_img >= 128:
        nb = 1
    else:
        # block over the batch so the matmul M dim is >= 128 (deep layers)
        want = -(-128 // m_img)
        nb = 1
        for d in range(1, n + 1):
            if n % d == 0 and d <= want:
                nb = d

    tile_oh = ho

    def _can_halve(t):
        return t % 2 == 0 and ((t // 2) * wo) % 8 == 0

    if nb == 1:
        while tile_oh * wo > MAX_TILE_M and _can_halve(tile_oh):
            tile_oh //= 2
        # guarantee >=2 independent grid units for v7x's 2 TCs when batch == 1
        if n == 1 and ho // tile_oh == 1 and tile_oh * wo >= 256 \
                and _can_halve(tile_oh):
            tile_oh //= 2
    num_t = ho // tile_oh
    return nb, tile_oh, num_t


def conv_s2d(z, w16, emit_stats):
    """z: (N, Ho+1, Wo+1, 4*Cin) bf16, w16: (16*Cin, Cout) bf16.
    Returns y: (N, Ho*Wo, Cout) f32 (NHWC-flatten) and, for BatchNorm layers,
    stats: (n_blocks, num_t, 2, Cout) f32 partial (sum, sum_sq)."""
    n, hp1, wp1, k4 = z.shape
    ho, wo = hp1 - 1, wp1 - 1
    k16, cout = w16.shape
    assert k16 == 4 * k4

    nb, tile_oh, num_t = _conv_tiling(n, ho, wo)
    n_blocks = n // nb
    tile_m = tile_oh * wo

    kernel = functools.partial(_conv_s2d_kernel, tile_oh=tile_oh, wo=wo,
                               nb=nb, num_t=num_t, emit_stats=emit_stats)

    y_shape = jax.ShapeDtypeStruct((n, ho * wo, cout), jnp.float32)
    y_spec = pl.BlockSpec((nb, tile_m, cout), lambda i, t: (i, t, 0))
    if emit_stats:
        out_shape = (y_shape,
                     jax.ShapeDtypeStruct((n_blocks, num_t, 2, cout),
                                          jnp.float32))
        out_specs = (y_spec,
                     pl.BlockSpec((1, 1, 2, cout), lambda i, t: (i, t, 0, 0)))
    else:
        out_shape = y_shape
        out_specs = y_spec

    flops = 2 * n * ho * wo * k16 * cout
    bytes_accessed = (2 * z.size + 2 * w16.size + 4 * n * ho * wo * cout
                      + (4 * n_blocks * num_t * 2 * cout if emit_stats else 0))

    out = pl.pallas_call(
        kernel,
        out_shape=out_shape,
        grid_spec=pltpu.PrefetchScalarGridSpec(
            num_scalar_prefetch=0,
            grid=(n_blocks, num_t),
            in_specs=[
                pl.BlockSpec((nb, hp1, wp1, k4), lambda i, t: (i, 0, 0, 0)),
                pl.BlockSpec((k16, cout), lambda i, t: (0, 0)),
            ],
            out_specs=out_specs,
        ),
        compiler_params=pltpu.CompilerParams(
            dimension_semantics=("parallel", "parallel"),
            vmem_limit_bytes=VMEM_LIMIT),
        cost_estimate=pl.CostEstimate(flops=flops, transcendentals=0,
                                      bytes_accessed=bytes_accessed),
    )(z, w16)
    if emit_stats:
        return out[0], out[1]
    return out, None


# ------------------------- Pallas kernel: FC heads --------------------------

def _fc_heads_kernel(x_ref, scale_ref, shift_ref, w_ref, b_ref, o_ref):
    # deferred BatchNorm affine + LeakyReLU of the last conv layer (f32),
    # then a bf16 MXU matmul with f32 accumulation
    x = x_ref[...] * scale_ref[...] + shift_ref[...]
    x = jnp.where(x >= 0, x, LEAKY_SLOPE * x).astype(jnp.bfloat16)
    o_ref[...] = (jnp.dot(x, w_ref[...], preferred_element_type=jnp.float32)
                  + b_ref[...])


def fc_heads(flat, scale_feat, shift_feat, w_fc, b_fc):
    b, f = flat.shape
    n2 = w_fc.shape[1]
    tb = b if b <= 128 else 128
    grid = (pl.cdiv(b, tb),)
    return pl.pallas_call(
        _fc_heads_kernel,
        out_shape=jax.ShapeDtypeStruct((b, n2), jnp.float32),
        grid_spec=pltpu.PrefetchScalarGridSpec(
            num_scalar_prefetch=0,
            grid=grid,
            in_specs=[
                pl.BlockSpec((tb, f), lambda i: (i, 0)),
                pl.BlockSpec((1, f), lambda i: (0, 0)),
                pl.BlockSpec((1, f), lambda i: (0, 0)),
                pl.BlockSpec((f, n2), lambda i: (0, 0)),
                pl.BlockSpec((1, n2), lambda i: (0, 0)),
            ],
            out_specs=pl.BlockSpec((tb, n2), lambda i: (i, 0)),
        ),
        compiler_params=pltpu.CompilerParams(
            dimension_semantics=("parallel",),
            vmem_limit_bytes=VMEM_LIMIT),
        cost_estimate=pl.CostEstimate(
            flops=2 * b * f * n2, transcendentals=0,
            bytes_accessed=4 * (b * f + 2 * f + n2 + b * n2) + 2 * f * n2),
    )(flat, scale_feat, shift_feat, w_fc, b_fc)


# ------------------------------- JAX-side glue ------------------------------

def _leaky(x):
    return jnp.where(x >= 0, x, LEAKY_SLOPE * x)


def pad_space_to_depth(y_nhwc):
    """Zero-pad (p=1) + stride-2 space-to-depth on NHWC:
    (N,H,W,C) -> (N,H/2+1,W/2+1,4C), last-dim packing (row_phase,col_phase,C)."""
    y = jnp.pad(y_nhwc, ((0, 0), (1, 1), (1, 1), (0, 0)))
    n, hp, wp, c = y.shape
    z = y.reshape(n, hp // 2, 2, wp // 2, 2, c)
    z = jnp.transpose(z, (0, 1, 3, 2, 4, 5))          # (n, i, j, pr, pc, c)
    return z.reshape(n, hp // 2, wp // 2, 4 * c)


def conv_weight_fused(w_oihw):
    """Torch (Cout, Cin, 4, 4) -> single (16*Cin, Cout) matrix whose K axis is
    packed (bi, bj, pr, pc, cin), matching the kernel's 4-tap K-concat order
    with (kh, kw) = (2*bi + pr, 2*bj + pc)."""
    cout, cin = w_oihw.shape[0], w_oihw.shape[1]
    w = jnp.transpose(w_oihw, (2, 3, 1, 0))           # (kh, kw, cin, cout)
    w = w.reshape(2, 2, 2, 2, cin, cout)              # (bi, pr, bj, pc, cin, cout)
    w = jnp.transpose(w, (0, 2, 1, 3, 4, 5))          # (bi, bj, pr, pc, cin, cout)
    return w.reshape(16 * cin, cout)


def bn_scale_shift(stats, gamma, beta, count):
    """stats: (n_blocks, T, 2, C) partial (sum, sum_sq) -> per-channel scale/shift."""
    s = jnp.sum(stats, axis=(0, 1))                   # (2, C)
    mean = s[0] / count
    var = s[1] / count - mean * mean                  # biased var, one pass
    scale = gamma * jax.lax.rsqrt(var + BN_EPS)
    shift = beta - mean * scale
    return scale, shift


def init_params(key, image_size, latent_dim, feature_map_multiplier):
    assert image_size % 16 == 0, "Image size must be a multiple of 16"
    num_downsamples = int(math.log2(image_size)) - 3
    conv_layers = []
    in_c, out_c = 3, feature_map_multiplier

    kw, key = jax.random.split(key)
    w = 0.05 * jax.random.normal(kw, (out_c, in_c, 4, 4), jnp.float32)
    conv_layers.append({"w": w,
                        "w16": conv_weight_fused(w).astype(jnp.bfloat16),
                        "gamma": None, "beta": None})
    in_c = out_c
    for _ in range(1, num_downsamples):
        out_c *= 2
        kw, kg, kb, key = jax.random.split(key, 4)
        w = 0.05 * jax.random.normal(kw, (out_c, in_c, 4, 4), jnp.float32)
        conv_layers.append({
            "w": w, "w16": conv_weight_fused(w).astype(jnp.bfloat16),
            "gamma": 1.0 + 0.1 * jax.random.normal(kg, (out_c,), jnp.float32),
            "beta": 0.1 * jax.random.normal(kb, (out_c,), jnp.float32)})
        in_c = out_c

    final_spatial = image_size // (2 ** num_downsamples)     # always 8
    hw = final_spatial * final_spatial
    fc_in = in_c * hw
    kmu, kbm, klv, kbl = jax.random.split(key, 4)
    wmu = 0.02 * jax.random.normal(kmu, (fc_in, latent_dim), jnp.float32)
    bmu = 0.02 * jax.random.normal(kbm, (latent_dim,), jnp.float32)
    wlv = 0.02 * jax.random.normal(klv, (fc_in, latent_dim), jnp.float32)
    blv = 0.02 * jax.random.normal(kbl, (latent_dim,), jnp.float32)

    # Fused FC head weights (mu || logvar).  Rows are permuted once at init
    # from the torch NCHW-flatten order (c*HW + s) to the NHWC-flatten order
    # (s*C + c) that the Pallas conv stack produces, and cast to bf16.
    w_fc = jnp.concatenate([wmu, wlv], axis=1)
    w_fc = (w_fc.reshape(in_c, hw, 2 * latent_dim)
                .transpose(1, 0, 2).reshape(fc_in, 2 * latent_dim))
    return {
        "conv": conv_layers,
        "wmu": wmu, "bmu": bmu, "wlv": wlv, "blv": blv,
        "w_fc": w_fc.astype(jnp.bfloat16),
        "b_fc": jnp.concatenate([bmu, blv], axis=0)[None, :],
    }


def encoder_forward(params, x_nchw):
    x = x_nchw.astype(jnp.float32)
    n = x.shape[0]
    conv_layers = params["conv"]
    n_layers = len(conv_layers)

    # layer-0 input: NCHW image -> NHWC -> pad + space-to-depth, bf16 operand
    z = pad_space_to_depth(jnp.transpose(x, (0, 2, 3, 1))).astype(jnp.bfloat16)
    sh, sw = x.shape[2] // 2, x.shape[3] // 2
    flat = scale_feat = shift_feat = None

    for l, layer in enumerate(conv_layers):
        cout = layer["w16"].shape[1]
        emit_stats = layer["gamma"] is not None
        y, stats = conv_s2d(z, layer["w16"], emit_stats)   # (N, sh*sw, cout) f32

        if emit_stats:
            scale, shift = bn_scale_shift(stats, layer["gamma"], layer["beta"],
                                          n * sh * sw)
        else:                                              # first layer: no BN
            scale = jnp.ones((cout,), jnp.float32)
            shift = jnp.zeros((cout,), jnp.float32)

        if l < n_layers - 1:
            # BN affine + LeakyReLU fused (by XLA) with the next layer's
            # pad + space-to-depth relayout straight from NHWC: one f32 read of
            # y and one bf16 write of z per layer boundary, no transposes.
            y_img = y.reshape(n, sh, sw, cout)
            y_act = _leaky(y_img * scale + shift) if emit_stats else _leaky(y_img)
            z = pad_space_to_depth(y_act).astype(jnp.bfloat16)
            sh //= 2
            sw //= 2
        else:
            # last conv layer: NHWC-flatten feeds the (pre-permuted) FC heads;
            # its BN affine + LeakyReLU are deferred into the FC kernel.
            flat = y.reshape(n, sh * sw * cout)
            scale_feat = jnp.broadcast_to(scale[None, :],
                                          (sh * sw, cout)).reshape(1, -1)
            shift_feat = jnp.broadcast_to(shift[None, :],
                                          (sh * sw, cout)).reshape(1, -1)

    out = fc_heads(flat, scale_feat, shift_feat, params["w_fc"], params["b_fc"])
    latent = params["w_fc"].shape[1] // 2
    return out[:, :latent], out[:, latent:]


# ----------------------------- pure-JAX reference ---------------------------

def reference_forward(params, x_nchw):
    x = x_nchw.astype(jnp.float32)
    for i, layer in enumerate(params["conv"]):
        x = jax.lax.conv_general_dilated(
            x, layer["w"], window_strides=(2, 2), padding=((1, 1), (1, 1)),
            dimension_numbers=("NCHW", "OIHW", "NCHW"),
            precision=jax.lax.Precision.HIGHEST)
        if i > 0:
            mean = jnp.mean(x, axis=(0, 2, 3), keepdims=True)
            var = jnp.mean((x - mean) ** 2, axis=(0, 2, 3), keepdims=True)
            g = layer["gamma"].reshape(1, -1, 1, 1)
            b = layer["beta"].reshape(1, -1, 1, 1)
            x = (x - mean) * jax.lax.rsqrt(var + BN_EPS) * g + b
        x = jnp.where(x >= 0, x, LEAKY_SLOPE * x)
    flat = x.reshape(x.shape[0], -1)
    hi = jax.lax.Precision.HIGHEST
    mu = jnp.dot(flat, params["wmu"], precision=hi) + params["bmu"]
    lv = jnp.dot(flat, params["wlv"], precision=hi) + params["blv"]
    return mu, lv


# ----------------------------------- main -----------------------------------

if __name__ == "__main__":
    fwd = jax.jit(encoder_forward)
    # (image_size, feature_map_multiplier, latent_dim, batch)
    for image_size, fmm, latent_dim, batch in [(64, 8, 16, 2), (32, 8, 16, 2)]:
        key = jax.random.PRNGKey(0)
        kx, kp = jax.random.split(key)
        x = jax.random.normal(kx, (batch, 3, image_size, image_size),
                              jnp.float32)
        params = init_params(kp, image_size, latent_dim, fmm)

        mu, logvar = fwd(params, x)
        mu, logvar = jax.block_until_ready((mu, logvar))

        mu_ref, lv_ref = reference_forward(params, x)
        assert mu.shape == (batch, latent_dim)
        assert logvar.shape == (batch, latent_dim)
        # bf16 matmul operands (f32 accumulation) -> slightly looser tolerance
        # than the pure-f32 reference.
        assert jnp.allclose(mu, mu_ref, atol=3e-2, rtol=3e-2), (
            "mu max abs err", float(jnp.max(jnp.abs(mu - mu_ref))))
        assert jnp.allclose(logvar, lv_ref, atol=3e-2, rtol=3e-2), (
            "logvar max abs err", float(jnp.max(jnp.abs(logvar - lv_ref))))

    print("KERNEL_OK")
</pallas_src>

<mosaic_0001>
module attributes {stable_mosaic.version = 11 : i64} {
  func.func @_conv_s2d_kernel(%arg0: i32, %arg1: i32, %arg2: memref<1x33x33x12xbf16, #tpu.memory_space<vmem>>, %arg3: memref<48x8xbf16, #tpu.memory_space<vmem>>, %arg4: memref<1x1024x8xf32, #tpu.memory_space<vmem>>) attributes {dimension_semantics = [#tpu.dimension_semantics<parallel>, #tpu.dimension_semantics<parallel>], iteration_bounds = array<i64: 2, 1>, scalar_prefetch = 0 : i64, scratch_operands = 0 : i64, tpu.core_type = #tpu.core_type<tc>, window_params = [{transform_indices = @transform_0, window_bounds = array<i64: 1, 33, 33, 12>}, {pipeline_mode = #tpu.pipeline_mode<synchronous>, transform_indices = @transform_1, window_bounds = array<i64: 48, 8>}, {transform_indices = @transform_2, window_bounds = array<i64: 1, 1024, 8>}]} {
    %c0 = arith.constant 0 : index
    %c0_0 = arith.constant 0 : index
    %c0_1 = arith.constant 0 : index
    %c0_2 = arith.constant 0 : index
    %0 = vector.load %arg2[%c0, %c0_0, %c0_1, %c0_2] : memref<1x33x33x12xbf16, #tpu.memory_space<vmem>>, vector<1x32x33x12xbf16>
    %1 = vector.shape_cast %0 : vector<1x32x33x12xbf16> to vector<32x33x12xbf16>
    %2 = vector.extract_strided_slice %1 {offsets = [0, 0, 0], sizes = [32, 32, 12], strides = [1, 1, 1]} : vector<32x33x12xbf16> to vector<32x32x12xbf16>
    %3 = vector.shape_cast %2 : vector<32x32x12xbf16> to vector<1024x12xbf16>
    %4 = vector.extract_strided_slice %1 {offsets = [0, 1, 0], sizes = [32, 32, 12], strides = [1, 1, 1]} : vector<32x33x12xbf16> to vector<32x32x12xbf16>
    %5 = vector.shape_cast %4 : vector<32x32x12xbf16> to vector<1024x12xbf16>
    %c0_3 = arith.constant 0 : index
    %c1 = arith.constant 1 : index
    %c0_4 = arith.constant 0 : index
    %c0_5 = arith.constant 0 : index
    %6 = vector.load %arg2[%c0_3, %c1, %c0_4, %c0_5] : memref<1x33x33x12xbf16, #tpu.memory_space<vmem>>, vector<1x32x33x12xbf16>
    %7 = vector.shape_cast %6 : vector<1x32x33x12xbf16> to vector<32x33x12xbf16>
    %8 = vector.extract_strided_slice %7 {offsets = [0, 0, 0], sizes = [32, 32, 12], strides = [1, 1, 1]} : vector<32x33x12xbf16> to vector<32x32x12xbf16>
    %9 = vector.shape_cast %8 : vector<32x32x12xbf16> to vector<1024x12xbf16>
    %10 = vector.extract_strided_slice %7 {offsets = [0, 1, 0], sizes = [32, 32, 12], strides = [1, 1, 1]} : vector<32x33x12xbf16> to vector<32x32x12xbf16>
    %11 = vector.shape_cast %10 : vector<32x32x12xbf16> to vector<1024x12xbf16>
    %12 = tpu.concatenate %3, %5, %9, %11 in 1 : vector<1024x12xbf16>, vector<1024x12xbf16>, vector<1024x12xbf16>, vector<1024x12xbf16> -> vector<1024x48xbf16>
    %c0_6 = arith.constant 0 : index
    %c0_7 = arith.constant 0 : index
    %13 = vector.load %arg3[%c0_6, %c0_7] : memref<48x8xbf16, #tpu.memory_space<vmem>>, vector<48x8xbf16>
    %cst = arith.constant dense<0.000000e+00> : vector<1024x8xf32>
    %14 = tpu.matmul %12, %13, %cst {dimension_numbers = #tpu.dot_dimension_numbers<[1], [0], [0], [1], [0, 0, 1, 1], [], []>} : vector<1024x48xbf16>, vector<48x8xbf16>, vector<1024x8xf32> -> vector<1024x8xf32>
    %15 = vector.shape_cast %14 : vector<1024x8xf32> to vector<1x1024x8xf32>
    %c0_8 = arith.constant 0 : index
    %c0_9 = arith.constant 0 : index
    %c0_10 = arith.constant 0 : index
    %16 = vector.load %arg4[%c0_8, %c0_9, %c0_10] : memref<1x1024x8xf32, #tpu.memory_space<vmem>>, vector<1x1024x8xf32>
    tpu.vector_store %arg4[%c0_8, %c0_9, %c0_10], %15 {strides = array<i32>} : memref<1x1024x8xf32, #tpu.memory_space<vmem>>, vector<1x1024x8xf32>,
    return
  }
  func.func @transform_0(%arg0: i32, %arg1: i32) -> (i32, i32, i32, i32) {
    %c0_i32 = arith.constant 0 : i32
    %c0_i32_0 = arith.constant 0 : i32
    %c0_i32_1 = arith.constant 0 : i32
    %c0_i32_2 = arith.constant 0 : i32
    return %arg0, %c0_i32, %c0_i32_0, %c0_i32_1 : i32, i32, i32, i32
  }
  func.func @transform_1(%arg0: i32, %arg1: i32) -> (i32, i32) {
    %c0_i32 = arith.constant 0 : i32
    %c0_i32_0 = arith.constant 0 : i32
    %c0_i32_1 = arith.constant 0 : i32
    return %c0_i32, %c0_i32_0 : i32, i32
  }
  func.func @transform_2(%arg0: i32, %arg1: i32) -> (i32, i32, i32) {
    %c0_i32 = arith.constant 0 : i32
    %c0_i32_0 = arith.constant 0 : i32
    return %arg0, %arg1, %c0_i32 : i32, i32, i32
  }
}

module attributes {stable_mosaic.version = 11 : i64} {
  func.func @_conv_s2d_kernel(%arg0: i32, %arg1: i32, %arg2: memref<1x17x17x32xbf16, #tpu.memory_space<vmem>>, %arg3: memref<128x16xbf16, #tpu.memory_space<vmem>>, %arg4: memref<1x256x16xf32, #tpu.memory_space<vmem>>, %arg5: memref<1x1x2x16xf32, #tpu.memory_space<vmem>>) attributes {dimension_semantics = [#tpu.dimension_semantics<parallel>, #tpu.dimension_semantics<parallel>], iteration_bounds = array<i64: 2, 1>, scalar_prefetch = 0 : i64, scratch_operands = 0 : i64, tpu.core_type = #tpu.core_type<tc>, window_params = [{transform_indices = @transform_0, window_bounds = array<i64: 1, 17, 17, 32>}, {pipeline_mode = #tpu.pipeline_mode<synchronous>, transform_indices = @transform_1, window_bounds = array<i64: 128, 16>}, {transform_indices = @transform_2, window_bounds = array<i64: 1, 256, 16>}, {transform_indices = @transform_3, window_bounds = array<i64: 1, 1, 2, 16>}]} {
    %c0 = arith.constant 0 : index
    %c0_0 = arith.constant 0 : index
    %c0_1 = arith.constant 0 : index
    %c0_2 = arith.constant 0 : index
    %0 = vector.load %arg2[%c0, %c0_0, %c0_1, %c0_2] : memref<1x17x17x32xbf16, #tpu.memory_space<vmem>>, vector<1x16x17x32xbf16>
    %1 = vector.shape_cast %0 : vector<1x16x17x32xbf16> to vector<16x17x32xbf16>
    %2 = vector.extract_strided_slice %1 {offsets = [0, 0, 0], sizes = [16, 16, 32], strides = [1, 1, 1]} : vector<16x17x32xbf16> to vector<16x16x32xbf16>
    %3 = vector.shape_cast %2 : vector<16x16x32xbf16> to vector<256x32xbf16>
    %4 = vector.extract_strided_slice %1 {offsets = [0, 1, 0], sizes = [16, 16, 32], strides = [1, 1, 1]} : vector<16x17x32xbf16> to vector<16x16x32xbf16>
    %5 = vector.shape_cast %4 : vector<16x16x32xbf16> to vector<256x32xbf16>
    %c0_3 = arith.constant 0 : index
    %c1 = arith.constant 1 : index
    %c0_4 = arith.constant 0 : index
    %c0_5 = arith.constant 0 : index
    %6 = vector.load %arg2[%c0_3, %c1, %c0_4, %c0_5] : memref<1x17x17x32xbf16, #tpu.memory_space<vmem>>, vector<1x16x17x32xbf16>
    %7 = vector.shape_cast %6 : vector<1x16x17x32xbf16> to vector<16x17x32xbf16>
    %8 = vector.extract_strided_slice %7 {offsets = [0, 0, 0], sizes = [16, 16, 32], strides = [1, 1, 1]} : vector<16x17x32xbf16> to vector<16x16x32xbf16>
    %9 = vector.shape_cast %8 : vector<16x16x32xbf16> to vector<256x32xbf16>
    %10 = vector.extract_strided_slice %7 {offsets = [0, 1, 0], sizes = [16, 16, 32], strides = [1, 1, 1]} : vector<16x17x32xbf16> to vector<16x16x32xbf16>
    %11 = vector.shape_cast %10 : vector<16x16x32xbf16> to vector<256x32xbf16>
    %12 = tpu.concatenate %3, %5, %9, %11 in 1 : vector<256x32xbf16>, vector<256x32xbf16>, vector<256x32xbf16>, vector<256x32xbf16> -> vector<256x128xbf16>
    %c0_6 = arith.constant 0 : index
    %c0_7 = arith.constant 0 : index
    %13 = vector.load %arg3[%c0_6, %c0_7] : memref<128x16xbf16, #tpu.memory_space<vmem>>, vector<128x16xbf16>
    %cst = arith.constant dense<0.000000e+00> : vector<256x16xf32>
    %14 = tpu.matmul %12, %13, %cst {dimension_numbers = #tpu.dot_dimension_numbers<[1], [0], [0], [1], [0, 0, 1, 1], [], []>} : vector<256x128xbf16>, vector<128x16xbf16>, vector<256x16xf32> -> vector<256x16xf32>
    %cst_8 = arith.constant dense<0.000000e+00> : vector<16xf32>
    %15 = vector.multi_reduction <add>, %14, %cst_8 [0] : vector<256x16xf32> to vector<16xf32>
    %16 = vector.shape_cast %15 : vector<16xf32> to vector<1x16xf32>
    %17 = arith.mulf %14, %14 : vector<256x16xf32>
    %cst_9 = arith.constant dense<0.000000e+00> : vector<16xf32>
    %18 = vector.multi_reduction <add>, %17, %cst_9 [0] : vector<256x16xf32> to vector<16xf32>
    %19 = vector.shape_cast %18 : vector<16xf32> to vector<1x16xf32>
    %20 = tpu.concatenate %16, %19 in 0 : vector<1x16xf32>, vector<1x16xf32> -> vector<2x16xf32>
    %c0_10 = arith.constant 0 : index
    %c0_11 = arith.constant 0 : index
    %c0_12 = arith.constant 0 : index
    %c0_13 = arith.constant 0 : index
    %21 = vector.load %arg5[%c0_10, %c0_11, %c0_12, %c0_13] : memref<1x1x2x16xf32, #tpu.memory_space<vmem>>, vector<1x1x2x16xf32>
    %22 = vector.shape_cast %21 : vector<1x1x2x16xf32> to vector<2x16xf32>
    %23 = vector.shape_cast %20 : vector<2x16xf32> to vector<1x1x2x16xf32>
    tpu.vector_store %arg5[%c0_10, %c0_11, %c0_12, %c0_13], %23 {strides = array<i32>} : memref<1x1x2x16xf32, #tpu.memory_space<vmem>>, vector<1x1x2x16xf32>,
    %24 = vector.shape_cast %14 : vector<256x16xf32> to vector<1x256x16xf32>
    %c0_14 = arith.constant 0 : index
    %c0_15 = arith.constant 0 : index
    %c0_16 = arith.constant 0 : index
    %25 = vector.load %arg4[%c0_14, %c0_15, %c0_16] : memref<1x256x16xf32, #tpu.memory_space<vmem>>, vector<1x256x16xf32>
    tpu.vector_store %arg4[%c0_14, %c0_15, %c0_16], %24 {strides = array<i32>} : memref<1x256x16xf32, #tpu.memory_space<vmem>>, vector<1x256x16xf32>,
    return
  }
  func.func @transform_0(%arg0: i32, %arg1: i32) -> (i32, i32, i32, i32) {
    %c0_i32 = arith.constant 0 : i32
    %c0_i32_0 = arith.constant 0 : i32
    %c0_i32_1 = arith.constant 0 : i32
    %c0_i32_2 = arith.constant 0 : i32
    return %arg0, %c0_i32, %c0_i32_0, %c0_i32_1 : i32, i32, i32, i32
  }
  func.func @transform_1(%arg0: i32, %arg1: i32) -> (i32, i32) {
    %c0_i32 = arith.constant 0 : i32
    %c0_i32_0 = arith.constant 0 : i32
    %c0_i32_1 = arith.constant 0 : i32
    return %c0_i32, %c0_i32_0 : i32, i32
  }
  func.func @transform_2(%arg0: i32, %arg1: i32) -> (i32, i32, i32) {
    %c0_i32 = arith.constant 0 : i32
    %c0_i32_0 = arith.constant 0 : i32
    return %arg0, %arg1, %c0_i32 : i32, i32, i32
  }
  func.func @transform_3(%arg0: i32, %arg1: i32) -> (i32, i32, i32, i32) {
    %c0_i32 = arith.constant 0 : i32
    %c0_i32_0 = arith.constant 0 : i32
    %c0_i32_1 = arith.constant 0 : i32
    return %arg0, %arg1, %c0_i32, %c0_i32_0 : i32, i32, i32, i32
  }
}

module attributes {stable_mosaic.version = 11 : i64} {
  func.func @_conv_s2d_kernel(%arg0: i32, %arg1: i32, %arg2: memref<2x9x9x64xbf16, #tpu.memory_space<vmem>>, %arg3: memref<256x32xbf16, #tpu.memory_space<vmem>>, %arg4: memref<2x64x32xf32, #tpu.memory_space<vmem>>, %arg5: memref<1x1x2x32xf32, #tpu.memory_space<vmem>>) attributes {dimension_semantics = [#tpu.dimension_semantics<parallel>, #tpu.dimension_semantics<parallel>], iteration_bounds = array<i64: 1, 1>, scalar_prefetch = 0 : i64, scratch_operands = 0 : i64, tpu.core_type = #tpu.core_type<tc>, window_params = [{transform_indices = @transform_0, window_bounds = array<i64: 2, 9, 9, 64>}, {pipeline_mode = #tpu.pipeline_mode<synchronous>, transform_indices = @transform_1, window_bounds = array<i64: 256, 32>}, {transform_indices = @transform_2, window_bounds = array<i64: 2, 64, 32>}, {transform_indices = @transform_3, window_bounds = array<i64: 1, 1, 2, 32>}]} {
    %c0 = arith.constant 0 : index
    %c0_0 = arith.constant 0 : index
    %c0_1 = arith.constant 0 : index
    %c0_2 = arith.constant 0 : index
    %0 = vector.load %arg2[%c0, %c0_0, %c0_1, %c0_2] : memref<2x9x9x64xbf16, #tpu.memory_space<vmem>>, vector<1x8x9x64xbf16>
    %1 = vector.shape_cast %0 : vector<1x8x9x64xbf16> to vector<8x9x64xbf16>
    %2 = vector.extract_strided_slice %1 {offsets = [0, 0, 0], sizes = [8, 8, 64], strides = [1, 1, 1]} : vector<8x9x64xbf16> to vector<8x8x64xbf16>
    %3 = vector.shape_cast %2 : vector<8x8x64xbf16> to vector<64x64xbf16>
    %4 = vector.extract_strided_slice %1 {offsets = [0, 1, 0], sizes = [8, 8, 64], strides = [1, 1, 1]} : vector<8x9x64xbf16> to vector<8x8x64xbf16>
    %5 = vector.shape_cast %4 : vector<8x8x64xbf16> to vector<64x64xbf16>
    %c0_3 = arith.constant 0 : index
    %c1 = arith.constant 1 : index
    %c0_4 = arith.constant 0 : index
    %c0_5 = arith.constant 0 : index
    %6 = vector.load %arg2[%c0_3, %c1, %c0_4, %c0_5] : memref<2x9x9x64xbf16, #tpu.memory_space<vmem>>, vector<1x8x9x64xbf16>
    %7 = vector.shape_cast %6 : vector<1x8x9x64xbf16> to vector<8x9x64xbf16>
    %8 = vector.extract_strided_slice %7 {offsets = [0, 0, 0], sizes = [8, 8, 64], strides = [1, 1, 1]} : vector<8x9x64xbf16> to vector<8x8x64xbf16>
    %9 = vector.shape_cast %8 : vector<8x8x64xbf16> to vector<64x64xbf16>
    %10 = vector.extract_strided_slice %7 {offsets = [0, 1, 0], sizes = [8, 8, 64], strides = [1, 1, 1]} : vector<8x9x64xbf16> to vector<8x8x64xbf16>
    %11 = vector.shape_cast %10 : vector<8x8x64xbf16> to vector<64x64xbf16>
    %12 = tpu.concatenate %3, %5, %9, %11 in 1 : vector<64x64xbf16>, vector<64x64xbf16>, vector<64x64xbf16>, vector<64x64xbf16> -> vector<64x256xbf16>
    %c1_6 = arith.constant 1 : index
    %c0_7 = arith.constant 0 : index
    %c0_8 = arith.constant 0 : index
    %c0_9 = arith.constant 0 : index
    %13 = vector.load %arg2[%c1_6, %c0_7, %c0_8, %c0_9] : memref<2x9x9x64xbf16, #tpu.memory_space<vmem>>, vector<1x8x9x64xbf16>
    %14 = vector.shape_cast %13 : vector<1x8x9x64xbf16> to vector<8x9x64xbf16>
    %15 = vector.extract_strided_slice %14 {offsets = [0, 0, 0], sizes = [8, 8, 64], strides = [1, 1, 1]} : vector<8x9x64xbf16> to vector<8x8x64xbf16>
    %16 = vector.shape_cast %15 : vector<8x8x64xbf16> to vector<64x64xbf16>
    %17 = vector.extract_strided_slice %14 {offsets = [0, 1, 0], sizes = [8, 8, 64], strides = [1, 1, 1]} : vector<8x9x64xbf16> to vector<8x8x64xbf16>
    %18 = vector.shape_cast %17 : vector<8x8x64xbf16> to vector<64x64xbf16>
    %c1_10 = arith.constant 1 : index
    %c1_11 = arith.constant 1 : index
    %c0_12 = arith.constant 0 : index
    %c0_13 = arith.constant 0 : index
    %19 = vector.load %arg2[%c1_10, %c1_11, %c0_12, %c0_13] : memref<2x9x9x64xbf16, #tpu.memory_space<vmem>>, vector<1x8x9x64xbf16>
    %20 = vector.shape_cast %19 : vector<1x8x9x64xbf16> to vector<8x9x64xbf16>
    %21 = vector.extract_strided_slice %20 {offsets = [0, 0, 0], sizes = [8, 8, 64], strides = [1, 1, 1]} : vector<8x9x64xbf16> to vector<8x8x64xbf16>
    %22 = vector.shape_cast %21 : vector<8x8x64xbf16> to vector<64x64xbf16>
    %23 = vector.extract_strided_slice %20 {offsets = [0, 1, 0], sizes = [8, 8, 64], strides = [1, 1, 1]} : vector<8x9x64xbf16> to vector<8x8x64xbf16>
    %24 = vector.shape_cast %23 : vector<8x8x64xbf16> to vector<64x64xbf16>
    %25 = tpu.concatenate %16, %18, %22, %24 in 1 : vector<64x64xbf16>, vector<64x64xbf16>, vector<64x64xbf16>, vector<64x64xbf16> -> vector<64x256xbf16>
    %26 = tpu.concatenate %12, %25 in 0 : vector<64x256xbf16>, vector<64x256xbf16> -> vector<128x256xbf16>
    %c0_14 = arith.constant 0 : index
    %c0_15 = arith.constant 0 : index
    %27 = vector.load %arg3[%c0_14, %c0_15] : memref<256x32xbf16, #tpu.memory_space<vmem>>, vector<256x32xbf16>
    %cst = arith.constant dense<0.000000e+00> : vector<128x32xf32>
    %28 = tpu.matmul %26, %27, %cst {dimension_numbers = #tpu.dot_dimension_numbers<[1], [0], [0], [1], [0, 0, 1, 1], [], []>} : vector<128x256xbf16>, vector<256x32xbf16>, vector<128x32xf32> -> vector<128x32xf32>
    %cst_16 = arith.constant dense<0.000000e+00> : vector<32xf32>
    %29 = vector.multi_reduction <add>, %28, %cst_16 [0] : vector<128x32xf32> to vector<32xf32>
    %30 = vector.shape_cast %29 : vector<32xf32> to vector<1x32xf32>
    %31 = arith.mulf %28, %28 : vector<128x32xf32>
    %cst_17 = arith.constant dense<0.000000e+00> : vector<32xf32>
    %32 = vector.multi_reduction <add>, %31, %cst_17 [0] : vector<128x32xf32> to vector<32xf32>
    %33 = vector.shape_cast %32 : vector<32xf32> to vector<1x32xf32>
    %34 = tpu.concatenate %30, %33 in 0 : vector<1x32xf32>, vector<1x32xf32> -> vector<2x32xf32>
    %c0_18 = arith.constant 0 : index
    %c0_19 = arith.constant 0 : index
    %c0_20 = arith.constant 0 : index
    %c0_21 = arith.constant 0 : index
    %35 = vector.load %arg5[%c0_18, %c0_19, %c0_20, %c0_21] : memref<1x1x2x32xf32, #tpu.memory_space<vmem>>, vector<1x1x2x32xf32>
    %36 = vector.shape_cast %35 : vector<1x1x2x32xf32> to vector<2x32xf32>
    %37 = vector.shape_cast %34 : vector<2x32xf32> to vector<1x1x2x32xf32>
    tpu.vector_store %arg5[%c0_18, %c0_19, %c0_20, %c0_21], %37 {strides = array<i32>} : memref<1x1x2x32xf32, #tpu.memory_space<vmem>>, vector<1x1x2x32xf32>,
    %38 = vector.shape_cast %28 : vector<128x32xf32> to vector<2x64x32xf32>
    %c0_22 = arith.constant 0 : index
    %c0_23 = arith.constant 0 : index
    %c0_24 = arith.constant 0 : index
    %39 = vector.load %arg4[%c0_22, %c0_23, %c0_24] : memref<2x64x32xf32, #tpu.memory_space<vmem>>, vector<2x64x32xf32>
    tpu.vector_store %arg4[%c0_22, %c0_23, %c0_24], %38 {strides = array<i32>} : memref<2x64x32xf32, #tpu.memory_space<vmem>>, vector<2x64x32xf32>,
    return
  }
  func.func @transform_0(%arg0: i32, %arg1: i32) -> (i32, i32, i32, i32) {
    %c0_i32 = arith.constant 0 : i32
    %c0_i32_0 = arith.constant 0 : i32
    %c0_i32_1 = arith.constant 0 : i32
    %c0_i32_2 = arith.constant 0 : i32
    return %arg0, %c0_i32, %c0_i32_0, %c0_i32_1 : i32, i32, i32, i32
  }
  func.func @transform_1(%arg0: i32, %arg1: i32) -> (i32, i32) {
    %c0_i32 = arith.constant 0 : i32
    %c0_i32_0 = arith.constant 0 : i32
    %c0_i32_1 = arith.constant 0 : i32
    return %c0_i32, %c0_i32_0 : i32, i32
  }
  func.func @transform_2(%arg0: i32, %arg1: i32) -> (i32, i32, i32) {
    %c0_i32 = arith.constant 0 : i32
    %c0_i32_0 = arith.constant 0 : i32
    return %arg0, %arg1, %c0_i32 : i32, i32, i32
  }
  func.func @transform_3(%arg0: i32, %arg1: i32) -> (i32, i32, i32, i32) {
    %c0_i32 = arith.constant 0 : i32
    %c0_i32_0 = arith.constant 0 : i32
    %c0_i32_1 = arith.constant 0 : i32
    return %arg0, %arg1, %c0_i32, %c0_i32_0 : i32, i32, i32, i32
  }
}

module attributes {stable_mosaic.version = 11 : i64} {
  func.func @_fc_heads_kernel(%arg0: i32, %arg1: memref<2x2048xf32, #tpu.memory_space<vmem>>, %arg2: memref<1x2048xf32, #tpu.memory_space<vmem>>, %arg3: memref<1x2048xf32, #tpu.memory_space<vmem>>, %arg4: memref<2048x32xbf16, #tpu.memory_space<vmem>>, %arg5: memref<1x32xf32, #tpu.memory_space<vmem>>, %arg6: memref<2x32xf32, #tpu.memory_space<vmem>>) attributes {dimension_semantics = [#tpu.dimension_semantics<parallel>], iteration_bounds = array<i64: 1>, scalar_prefetch = 0 : i64, scratch_operands = 0 : i64, tpu.core_type = #tpu.core_type<tc>, window_params = [{transform_indices = @transform_0, window_bounds = array<i64: 2, 2048>}, {pipeline_mode = #tpu.pipeline_mode<synchronous>, transform_indices = @transform_1, window_bounds = array<i64: 1, 2048>}, {pipeline_mode = #tpu.pipeline_mode<synchronous>, transform_indices = @transform_2, window_bounds = array<i64: 1, 2048>}, {pipeline_mode = #tpu.pipeline_mode<synchronous>, transform_indices = @transform_3, window_bounds = array<i64: 2048, 32>}, {pipeline_mode = #tpu.pipeline_mode<synchronous>, transform_indices = @transform_4, window_bounds = array<i64: 1, 32>}, {transform_indices = @transform_5, window_bounds = array<i64: 2, 32>}]} {
    %c0 = arith.constant 0 : index
    %c0_0 = arith.constant 0 : index
    %0 = vector.load %arg1[%c0, %c0_0] : memref<2x2048xf32, #tpu.memory_space<vmem>>, vector<2x2048xf32>
    %c0_1 = arith.constant 0 : index
    %c0_2 = arith.constant 0 : index
    %1 = vector.load %arg2[%c0_1, %c0_2] : memref<1x2048xf32, #tpu.memory_space<vmem>>, vector<1x2048xf32>
    %2 = vector.broadcast %1 : vector<1x2048xf32> to vector<2x2048xf32>
    %3 = arith.mulf %0, %2 : vector<2x2048xf32>
    %c0_3 = arith.constant 0 : index
    %c0_4 = arith.constant 0 : index
    %4 = vector.load %arg3[%c0_3, %c0_4] : memref<1x2048xf32, #tpu.memory_space<vmem>>, vector<1x2048xf32>
    %5 = vector.broadcast %4 : vector<1x2048xf32> to vector<2x2048xf32>
    %6 = arith.addf %3, %5 : vector<2x2048xf32>
    %cst = arith.constant 0.000000e+00 : f32
    %7 = vector.broadcast %cst : f32 to vector<2x2048xf32>
    %8 = arith.cmpf oge, %6, %7 : vector<2x2048xf32>
    %cst_5 = arith.constant 2.000000e-01 : f32
    %9 = vector.broadcast %cst_5 : f32 to vector<2x2048xf32>
    %10 = arith.mulf %9, %6 : vector<2x2048xf32>
    %11 = arith.select %8, %6, %10 : vector<2x2048xi1>, vector<2x2048xf32>
    %12 = arith.truncf %11 : vector<2x2048xf32> to vector<2x2048xbf16>
    %c0_6 = arith.constant 0 : index
    %c0_7 = arith.constant 0 : index
    %13 = vector.load %arg4[%c0_6, %c0_7] : memref<2048x32xbf16, #tpu.memory_space<vmem>>, vector<2048x32xbf16>
    %cst_8 = arith.constant dense<0.000000e+00> : vector<2x32xf32>
    %14 = tpu.matmul %12, %13, %cst_8 {dimension_numbers = #tpu.dot_dimension_numbers<[1], [0], [0], [1], [0, 0, 1, 1], [], []>} : vector<2x2048xbf16>, vector<2048x32xbf16>, vector<2x32xf32> -> vector<2x32xf32>
    %c0_9 = arith.constant 0 : index
    %c0_10 = arith.constant 0 : index
    %15 = vector.load %arg5[%c0_9, %c0_10] : memref<1x32xf32, #tpu.memory_space<vmem>>, vector<1x32xf32>
    %16 = vector.broadcast %15 : vector<1x32xf32> to vector<2x32xf32>
    %17 = arith.addf %14, %16 : vector<2x32xf32>
    %c0_11 = arith.constant 0 : index
    %c0_12 = arith.constant 0 : index
    %18 = vector.load %arg6[%c0_11, %c0_12] : memref<2x32xf32, #tpu.memory_space<vmem>>, vector<2x32xf32>
    tpu.vector_store %arg6[%c0_11, %c0_12], %17 {strides = array<i32>} : memref<2x32xf32, #tpu.memory_space<vmem>>, vector<2x32xf32>,
    return
  }
  func.func @transform_0(%arg0: i32) -> (i32, i32) {
    %c0_i32 = arith.constant 0 : i32
    %c0_i32_0 = arith.constant 0 : i32
    return %arg0, %c0_i32 : i32, i32
  }
  func.func @transform_1(%arg0: i32) -> (i32, i32) {
    %c0_i32 = arith.constant 0 : i32
    %c0_i32_0 = arith.constant 0 : i32
    %c0_i32_1 = arith.constant 0 : i32
    return %c0_i32, %c0_i32_0 : i32, i32
  }
  func.func @transform_2(%arg0: i32) -> (i32, i32) {
    %c0_i32 = arith.constant 0 : i32
    %c0_i32_0 = arith.constant 0 : i32
    %c0_i32_1 = arith.constant 0 : i32
    return %c0_i32, %c0_i32_0 : i32, i32
  }
  func.func @transform_3(%arg0: i32) -> (i32, i32) {
    %c0_i32 = arith.constant 0 : i32
    %c0_i32_0 = arith.constant 0 : i32
    %c0_i32_1 = arith.constant 0 : i32
    return %c0_i32, %c0_i32_0 : i32, i32
  }
  func.func @transform_4(%arg0: i32) -> (i32, i32) {
    %c0_i32 = arith.constant 0 : i32
    %c0_i32_0 = arith.constant 0 : i32
    %c0_i32_1 = arith.constant 0 : i32
    return %c0_i32, %c0_i32_0 : i32, i32
  }
  func.func @transform_5(%arg0: i32) -> (i32, i32) {
    %c0_i32 = arith.constant 0 : i32
    %c0_i32_0 = arith.constant 0 : i32
    return %arg0, %c0_i32 : i32, i32
  }
}

</mosaic_0001>

<llo_original>
// kernel: encoder_forward.4
$region0: #{encoder_forward.4}
  #allocation0 [shape = 'u32[]', space=smem, size = 0x4, offset = 0x4, fixed_abs, tag = 'smem constant byte address 0x4 - core index']
  #allocation1 [shape = 'u32[144,128]{1,0:T(1,128)}', space=vmem, size = 0x12000, scoped, tag = 'internal scratch']
  %s0 = inlined_call_operand.vmem [shape: bf16[2,33,33,12], index: 0, kind: input, shape index: {}]
  %s1 = inlined_call_operand.vmem [shape: bf16[48,8], index: 1, kind: input, shape index: {}]
  %s2 = inlined_call_operand.vmem [shape: f32[2,1024,8], index: 2, kind: output, shape index: {}]
  %s3 = sld [smem:[#allocation0]]
  $region41: #{encoder_forward.4} parent=0
    _
  %s5 = ssub.s32 1, %s3
  %s6 = scalar_select 0, %s5, %s3
  loop: start=0, step=1, limit=4
  $region2: #{encoder_forward.4} parent=0 // loop_pre_header
    _
  $region3: #{encoder_forward.4} parent=0 // loop_header
    %s8 = sphi 0, %s12
    %p9 = scmp.ge.s32.totalorder %s8, 4
    %s15 = sphi 0, %s27
    %s16 = sphi 0, %s23
    %s17 = sphi 0, %s15
    %s18 = sphi 0, %s16
    %s19 = sphi 0, %s17
    %s20 = sphi 0, %s18
    %s30 = sphi 0, %s32
    %s33 = sphi 0, %s30
    %s34 = sphi 0, %s33
    %s50 = sphi 0, %s34
    %s54 = sphi 0, %s54
    %s56 = sphi 0, %s54
    %s57 = sphi 0, %s56
    %s71 = sphi 0, %s57
    %s79 = sphi 0, %s81
    %s82 = sphi 0, %s79
    %s83 = sphi 0, %s82
    %s99 = sphi 0, %s83
  $region4: #{encoder_forward.4} parent=0 // loop_header_branch
    %11 = sbr.rel (%p9) target = $region8
  $region5: #{encoder_forward.4} parent=0 // loop_body
    %s13 = ssub.s32 %s8, 1
    %s14 = ssub.s32 %s8, 2
    %s21 = sadd.s32 1, %s16
    %p22 = scmp.ge.s32.totalorder %s21, 1
    %s23 = scalar_select %p22, 0, %s21
    %s24 = sadd.s32 1, %s15
    %s25 = scalar_select %p22, %s24, %s15
    %p26 = scmp.ge.s32.totalorder %s25, 2
    %s27 = scalar_select %p26, 0, %s25
    %s28 = ssub.s32 %s15, %s27
    %p29 = scmp.eq.s32.totalorder %s28, 0
    %s31 = sadd.s32 %s30, 1
    %s32 = scalar_select %p29, %s30, %s31
    %p35 = pneg %p29
    %p36 = scmp.eq.s32.totalorder %s8, 1
    %p37 = por %p35, %p36
    %p38 = scmp.ne.s32.totalorder %s30, %s33
    %p39 = scmp.eq.s32.totalorder %s8, 0
    %p40 = por %p38, %p39
    %p41 = scmp.ne.s32.totalorder %s30, %s33
    %p42 = scmp.eq.s32.totalorder %s13, 1
    %p43 = por %p41, %p42
    %p44 = scmp.ne.s32.totalorder %s33, %s34
    %p45 = scmp.eq.s32.totalorder %s13, 0
    %p46 = por %p44, %p45
    %p47 = scmp.ne.s32.totalorder %s33, %s34
    %p48 = scmp.eq.s32.totalorder %s14, 1
    %p49 = por %p47, %p48
    %p51 = scmp.ne.s32.totalorder %s34, %s50
    %p52 = scmp.eq.s32.totalorder %s14, 0
    %p53 = por %p51, %p52
    %s55 = sadd.s32 %s54, 1
    %p58 = scmp.eq.s32.totalorder %s8, 1
    %p59 = scmp.ne.s32.totalorder %s54, %s56
    %p60 = scmp.eq.s32.totalorder %s8, 0
    %p61 = por %p59, %p60
    %p62 = scmp.ne.s32.totalorder %s54, %s56
    %p63 = scmp.eq.s32.totalorder %s13, 1
    %p64 = por %p62, %p63
    %p65 = scmp.ne.s32.totalorder %s56, %s57
    %p66 = scmp.eq.s32.totalorder %s13, 0
    %p67 = por %p65, %p66
    %p68 = scmp.ne.s32.totalorder %s56, %s57
    %p69 = scmp.eq.s32.totalorder %s14, 1
    %p70 = por %p68, %p69
    %p72 = scmp.ne.s32.totalorder %s57, %s71
    %p73 = scmp.eq.s32.totalorder %s14, 0
    %p74 = por %p72, %p73
    %s75 = ssub.s32 %s15, %s27
    %s76 = ssub.s32 %s16, %s23
    %s77 = sor.u32 %s75, %s76
    %p78 = scmp.eq.s32.totalorder %s77, 0
    %s80 = sadd.s32 %s79, 1
    %s81 = scalar_select %p78, %s79, %s80
    %p84 = pneg %p78
    %p85 = scmp.eq.s32.totalorder %s8, 1
    %p86 = por %p84, %p85
    %p87 = scmp.ne.s32.totalorder %s79, %s82
    %p88 = scmp.eq.s32.totalorder %s8, 0
    %p89 = por %p87, %p88
    %p90 = scmp.ne.s32.totalorder %s79, %s82
    %p91 = scmp.eq.s32.totalorder %s13, 1
    %p92 = por %p90, %p91
    %p93 = scmp.ne.s32.totalorder %s82, %s83
    %p94 = scmp.eq.s32.totalorder %s13, 0
    %p95 = por %p93, %p94
    %p96 = scmp.ne.s32.totalorder %s82, %s83
    %p97 = scmp.eq.s32.totalorder %s14, 1
    %p98 = por %p96, %p97
    %p100 = scmp.ne.s32.totalorder %s83, %s99
    %p101 = scmp.eq.s32.totalorder %s14, 0
    %p102 = por %p100, %p101
    %p103 = scmp.le.s32.totalorder 1, %s8
    %p104 = scmp.lt.s32.totalorder %s8, 3
    %p105 = pnand %p103, %p104
    %p106 = pneg %p105
    // Predicated region
    $region9: #{encoder_forward.4} parent=5 // pred_check
      _
    $region10: #{encoder_forward.4} parent=5 // pred_check_branch
      %108 = sbr.rel (%p105) target = $region12
    $region11: #{encoder_forward.4} parent=5 // pred_region
      %s109 = ssub.s32 %s8, 1
      // Predicated region
      $region13: #{encoder_forward.4} parent=11 // pred_check
        %p110 = pneg %p67
      $region14: #{encoder_forward.4} parent=11 // pred_check_branch
        %112 = sbr.rel (%p110) target = $region16
      $region15: #{encoder_forward.4} parent=11 // pred_region
        _
      $region16: #{encoder_forward.4} parent=11 // pred_fallthru
        _
    $region12: #{encoder_forward.4} parent=5 // pred_fallthru
      _
    %p113 = scmp.lt.s32.totalorder %s8, 2
    // Predicated region
    $region17: #{encoder_forward.4} parent=5 // pred_check
      %p114 = pneg %p113
    $region18: #{encoder_forward.4} parent=5 // pred_check_branch
      %116 = sbr.rel (%p114) target = $region20
    $region19: #{encoder_forward.4} parent=5 // pred_region
      // Predicated region
      $region21: #{encoder_forward.4} parent=19 // pred_check
        %p117 = pneg %p40
      $region22: #{encoder_forward.4} parent=19 // pred_check_branch
        %119 = sbr.rel (%p117) target = $region24
      $region23: #{encoder_forward.4} parent=19 // pred_region
        %p120 = scmp.lt.s32.totalorder %s15, 1
        %s121 = scalar_select %p120, %s15, 1
        %s122 = smul.addr %s121, 165
        %s123 = smul.addr %s122, 4
        %s124 = scalar_lea.vmem %s0, %s123
      $region24: #{encoder_forward.4} parent=19 // pred_fallthru
        _
    $region20: #{encoder_forward.4} parent=5 // pred_fallthru
      _
    %p125 = scmp.le.s32.totalorder 1, %s8
    %p126 = scmp.lt.s32.totalorder %s8, 3
    %p127 = pnand %p125, %p126
    %p128 = pneg %p127
    // Predicated region
    $region25: #{encoder_forward.4} parent=5 // pred_check
      _
    $region26: #{encoder_forward.4} parent=5 // pred_check_branch
      %130 = sbr.rel (%p127) target = $region28
    $region27: #{encoder_forward.4} parent=5 // pred_region
      %s131 = ssub.s32 %s8, 1
      %p132 = scmp.lt.s32.totalorder %s17, 1
      %s133 = scalar_select %p132, %s17, 1
      %s134 = smul.addr %s133, 165
      %s135 = smul.addr %s134, 4
      %s136 = scalar_lea.vmem %s0, %s135
      %p137 = pneg %p46
      %p138 = pneg %p43
      %p139 = pneg %p67
      %p140 = pneg %p64
      %p141 = pneg %p95
      %p142 = pneg %p92
      %s143 = smul.u32 128, %s18
      %p144 = scmp.lt.s32.totalorder %s17, 1
      %s145 = scalar_select %p144, %s17, 1
      %p146 = scmp.lt.s32.totalorder %s143, 127
      %s147 = scalar_select %p146, %s143, 127
      %s148 = smul.addr %s145, 128
      %s149 = sadd.s32 %s147, %s148
      %s150 = smul.addr %s149, 8
      %s151 = scalar_lea.vmem %s2, %s150
      %p152 = scmp.lt.s32.totalorder %s17, 1
      %s153 = scalar_select %p152, %s17, 1
      %s154 = smul.addr %s153, 165
      %s155 = smul.addr %s154, 4
      %s156 = scalar_lea.vmem %s0, %s155
      %s157 = smul.u32 128, %s18
      %p158 = scmp.lt.s32.totalorder %s17, 1
      %s159 = scalar_select %p158, %s17, 1
      %p160 = scmp.lt.s32.totalorder %s157, 127
      %s161 = scalar_select %p160, %s157, 127
      %s162 = smul.addr %s159, 128
      %s163 = sadd.s32 %s161, %s162
      %s164 = smul.addr %s163, 8
      %s165 = scalar_lea.vmem %s2, %s164
      %s166 = smul.u32 128, %s18
      %v168 = vld [vmem:[%s156] sm:$0xf]
      %v169 = vld [vmem:[%s156 + $0x4] sm:$0xf]
      %v170 = vld [vmem:[%s156 + $0x8] sm:$0xf]
      %v171 = vld [vmem:[%s156 + $0xc] sm:$0xf]
      %v172 = vld [vmem:[%s156 + $0x10] sm:$0x1]
      %v173 = vld [vmem:[%s156 + $0x14] sm:$0xf]
      %v174 = vld [vmem:[%s156 + $0x18] sm:$0xf]
      %v175 = vld [vmem:[%s156 + $0x1c] sm:$0xf]
      %v176 = vld [vmem:[%s156 + $0x20] sm:$0xf]
      %v177 = vld [vmem:[%s156 + $0x24] sm:$0x1]
      %v178 = vld [vmem:[%s156 + $0x28] sm:$0xf]
      %v179 = vld [vmem:[%s156 + $0x2c] sm:$0xf]
      %v180 = vld [vmem:[%s156 + $0x30] sm:$0xf]
      %v181 = vld [vmem:[%s156 + $0x34] sm:$0xf]
      %v182 = vld [vmem:[%s156 + $0x38] sm:$0x1]
      %v183 = vld [vmem:[%s156 + $0x3c] sm:$0xf]
      %v184 = vld [vmem:[%s156 + $0x40] sm:$0xf]
      %v185 = vld [vmem:[%s156 + $0x44] sm:$0xf]
      %v186 = vld [vmem:[%s156 + $0x48] sm:$0xf]
      %v187 = vld [vmem:[%s156 + $0x4c] sm:$0x1]
      %v188 = vld [vmem:[%s156 + $0x50] sm:$0xf]
      %v189 = vld [vmem:[%s156 + $0x54] sm:$0xf]
      %v190 = vld [vmem:[%s156 + $0x58] sm:$0xf]
      %v191 = vld [vmem:[%s156 + $0x5c] sm:$0xf]
      %v192 = vld [vmem:[%s156 + $0x60] sm:$0x1]
      %v193 = vld [vmem:[%s156 + $0x64] sm:$0xf]
      %v194 = vld [vmem:[%s156 + $0x68] sm:$0xf]
      %v195 = vld [vmem:[%s156 + $0x6c] sm:$0xf]
      %v196 = vld [vmem:[%s156 + $0x70] sm:$0xf]
      %v197 = vld [vmem:[%s156 + $0x74] sm:$0x1]
      %v198 = vld [vmem:[%s156 + $0x78] sm:$0xf]
      %v199 = vld [vmem:[%s156 + $0x7c] sm:$0xf]
      %v200 = vld [vmem:[%s156 + $0x80] sm:$0xf]
      %v201 = vld [vmem:[%s156 + $0x84] sm:$0xf]
      %v202 = vld [vmem:[%s156 + $0x88] sm:$0x1]
      %v203 = vld [vmem:[%s156 + $0x8c] sm:$0xf]
      %v204 = vld [vmem:[%s156 + $0x90] sm:$0xf]
      %v205 = vld [vmem:[%s156 + $0x94] sm:$0xf]
      %v206 = vld [vmem:[%s156 + $0x98] sm:$0xf]
      %v207 = vld [vmem:[%s156 + $0x9c] sm:$0x1]
      %v208 = vld [vmem:[%s156 + $0xa0] sm:$0xf]
      %v209 = vld [vmem:[%s156 + $0xa4] sm:$0xf]
      %v210 = vld [vmem:[%s156 + $0xa8] sm:$0xf]
      %v211 = vld [vmem:[%s156 + $0xac] sm:$0xf]
      %v212 = vld [vmem:[%s156 + $0xb0] sm:$0x1]
      %v213 = vld [vmem:[%s156 + $0xb4] sm:$0xf]
      %v214 = vld [vmem:[%s156 + $0xb8] sm:$0xf]
      %v215 = vld [vmem:[%s156 + $0xbc] sm:$0xf]
      %v216 = vld [vmem:[%s156 + $0xc0] sm:$0xf]
      %v217 = vld [vmem:[%s156 + $0xc4] sm:$0x1]
      %v218 = vld [vmem:[%s156 + $0xc8] sm:$0xf]
      %v219 = vld [vmem:[%s156 + $0xcc] sm:$0xf]
      %v220 = vld [vmem:[%s156 + $0xd0] sm:$0xf]
      %v221 = vld [vmem:[%s156 + $0xd4] sm:$0xf]
      %v222 = vld [vmem:[%s156 + $0xd8] sm:$0x1]
      %v223 = vld [vmem:[%s156 + $0xdc] sm:$0xf]
      %v224 = vld [vmem:[%s156 + $0xe0] sm:$0xf]
      %v225 = vld [vmem:[%s156 + $0xe4] sm:$0xf]
      %v226 = vld [vmem:[%s156 + $0xe8] sm:$0xf]
      %v227 = vld [vmem:[%s156 + $0xec] sm:$0x1]
      %v228 = vld [vmem:[%s156 + $0xf0] sm:$0xf]
      %v229 = vld [vmem:[%s156 + $0xf4] sm:$0xf]
      %v230 = vld [vmem:[%s156 + $0xf8] sm:$0xf]
      %v231 = vld [vmem:[%s156 + $0xfc] sm:$0xf]
      %v232 = vld [vmem:[%s156 + $0x100] sm:$0x1]
      %v233 = vld [vmem:[%s156 + $0x104] sm:$0xf]
      %v234 = vld [vmem:[%s156 + $0x108] sm:$0xf]
      %v235 = vld [vmem:[%s156 + $0x10c] sm:$0xf]
      %v236 = vld [vmem:[%s156 + $0x110] sm:$0xf]
      %v237 = vld [vmem:[%s156 + $0x114] sm:$0x1]
      %v238 = vld [vmem:[%s156 + $0x118] sm:$0xf]
      %v239 = vld [vmem:[%s156 + $0x11c] sm:$0xf]
      %v240 = vld [vmem:[%s156 + $0x120] sm:$0xf]
      %v241 = vld [vmem:[%s156 + $0x124] sm:$0xf]
      %v242 = vld [vmem:[%s156 + $0x128] sm:$0x1]
      %v243 = vld [vmem:[%s156 + $0x12c] sm:$0xf]
      %v244 = vld [vmem:[%s156 + $0x130] sm:$0xf]
      %v245 = vld [vmem:[%s156 + $0x134] sm:$0xf]
      %v246 = vld [vmem:[%s156 + $0x138] sm:$0xf]
      %v247 = vld [vmem:[%s156 + $0x13c] sm:$0x1]
      %v248 = vld [vmem:[%s156 + $0x140] sm:$0xf]
      %v249 = vld [vmem:[%s156 + $0x144] sm:$0xf]
      %v250 = vld [vmem:[%s156 + $0x148] sm:$0xf]
      %v251 = vld [vmem:[%s156 + $0x14c] sm:$0xf]
      %v252 = vld [vmem:[%s156 + $0x150] sm:$0x1]
      %v253 = vld [vmem:[%s156 + $0x154] sm:$0xf]
      %v254 = vld [vmem:[%s156 + $0x158] sm:$0xf]
      %v255 = vld [vmem:[%s156 + $0x15c] sm:$0xf]
      %v256 = vld [vmem:[%s156 + $0x160] sm:$0xf]
      %v257 = vld [vmem:[%s156 + $0x164] sm:$0x1]
      %v258 = vld [vmem:[%s156 + $0x168] sm:$0xf]
      %v259 = vld [vmem:[%s156 + $0x16c] sm:$0xf]
      %v260 = vld [vmem:[%s156 + $0x170] sm:$0xf]
      %v261 = vld [vmem:[%s156 + $0x174] sm:$0xf]
      %v262 = vld [vmem:[%s156 + $0x178] sm:$0x1]
      %v263 = vld [vmem:[%s156 + $0x17c] sm:$0xf]
      %v264 = vld [vmem:[%s156 + $0x180] sm:$0xf]
      %v265 = vld [vmem:[%s156 + $0x184] sm:$0xf]
      %v266 = vld [vmem:[%s156 + $0x188] sm:$0xf]
      %v267 = vld [vmem:[%s156 + $0x18c] sm:$0x1]
      %v268 = vld [vmem:[%s156 + $0x190] sm:$0xf]
      %v269 = vld [vmem:[%s156 + $0x194] sm:$0xf]
      %v270 = vld [vmem:[%s156 + $0x198] sm:$0xf]
      %v271 = vld [vmem:[%s156 + $0x19c] sm:$0xf]
      %v272 = vld [vmem:[%s156 + $0x1a0] sm:$0x1]
      %v273 = vld [vmem:[%s156 + $0x1a4] sm:$0xf]
      %v274 = vld [vmem:[%s156 + $0x1a8] sm:$0xf]
      %v275 = vld [vmem:[%s156 + $0x1ac] sm:$0xf]
      %v276 = vld [vmem:[%s156 + $0x1b0] sm:$0xf]
      %v277 = vld [vmem:[%s156 + $0x1b4] sm:$0x1]
      %v278 = vld [vmem:[%s156 + $0x1b8] sm:$0xf]
      %v279 = vld [vmem:[%s156 + $0x1bc] sm:$0xf]
      %v280 = vld [vmem:[%s156 + $0x1c0] sm:$0xf]
      %v281 = vld [vmem:[%s156 + $0x1c4] sm:$0xf]
      %v282 = vld [vmem:[%s156 + $0x1c8] sm:$0x1]
      %v283 = vld [vmem:[%s156 + $0x1cc] sm:$0xf]
      %v284 = vld [vmem:[%s156 + $0x1d0] sm:$0xf]
      %v285 = vld [vmem:[%s156 + $0x1d4] sm:$0xf]
      %v286 = vld [vmem:[%s156 + $0x1d8] sm:$0xf]
      %v287 = vld [vmem:[%s156 + $0x1dc] sm:$0x1]
      %v288 = vld [vmem:[%s156 + $0x1e0] sm:$0xf]
      %v289 = vld [vmem:[%s156 + $0x1e4] sm:$0xf]
      %v290 = vld [vmem:[%s156 + $0x1e8] sm:$0xf]
      %v291 = vld [vmem:[%s156 + $0x1ec] sm:$0xf]
      %v292 = vld [vmem:[%s156 + $0x1f0] sm:$0x1]
      %v293 = vld [vmem:[%s156 + $0x1f4] sm:$0xf]
      %v294 = vld [vmem:[%s156 + $0x1f8] sm:$0xf]
      %v295 = vld [vmem:[%s156 + $0x1fc] sm:$0xf]
      %v296 = vld [vmem:[%s156 + $0x200] sm:$0xf]
      %v297 = vld [vmem:[%s156 + $0x204] sm:$0x1]
      %v298 = vld [vmem:[%s156 + $0x208] sm:$0xf]
      %v299 = vld [vmem:[%s156 + $0x20c] sm:$0xf]
      %v300 = vld [vmem:[%s156 + $0x210] sm:$0xf]
      %v301 = vld [vmem:[%s156 + $0x214] sm:$0xf]
      %v302 = vld [vmem:[%s156 + $0x218] sm:$0x1]
      %v303 = vld [vmem:[%s156 + $0x21c] sm:$0xf]
      %v304 = vld [vmem:[%s156 + $0x220] sm:$0xf]
      %v305 = vld [vmem:[%s156 + $0x224] sm:$0xf]
      %v306 = vld [vmem:[%s156 + $0x228] sm:$0xf]
      %v307 = vld [vmem:[%s156 + $0x22c] sm:$0x1]
      %v308 = vld [vmem:[%s156 + $0x230] sm:$0xf]
      %v309 = vld [vmem:[%s156 + $0x234] sm:$0xf]
      %v310 = vld [vmem:[%s156 + $0x238] sm:$0xf]
      %v311 = vld [vmem:[%s156 + $0x23c] sm:$0xf]
      %v312 = vld [vmem:[%s156 + $0x240] sm:$0x1]
      %v313 = vld [vmem:[%s156 + $0x244] sm:$0xf]
      %v314 = vld [vmem:[%s156 + $0x248] sm:$0xf]
      %v315 = vld [vmem:[%s156 + $0x24c] sm:$0xf]
      %v316 = vld [vmem:[%s156 + $0x250] sm:$0xf]
      %v317 = vld [vmem:[%s156 + $0x254] sm:$0x1]
      %v318 = vld [vmem:[%s156 + $0x258] sm:$0xf]
      %v319 = vld [vmem:[%s156 + $0x25c] sm:$0xf]
      %v320 = vld [vmem:[%s156 + $0x260] sm:$0xf]
      %v321 = vld [vmem:[%s156 + $0x264] sm:$0xf]
      %v322 = vld [vmem:[%s156 + $0x268] sm:$0x1]
      %v323 = vld [vmem:[%s156 + $0x26c] sm:$0xf]
      %v324 = vld [vmem:[%s156 + $0x270] sm:$0xf]
      %v325 = vld [vmem:[%s156 + $0x274] sm:$0xf]
      %v326 = vld [vmem:[%s156 + $0x278] sm:$0xf]
      %v327 = vld [vmem:[%s156 + $0x27c] sm:$0x1]
      %vm328 = vsmask.f32 3328
      %vm329 = vsmask.f32 7440
      %vm330 = vmor %vm328, %vm329
      %v332 = vshrl.u32 %v168, 16
      %v334 = vrot.slane %v332, 4
      %v335 = vshll.u32 %v168, 16
      %v337 = vrot.slane %v335, 5
      %v338 = vor.u32 %v334, %v337
      %v339 = vrot.slane %v338, 4
      %v341 = vshll.u32 %v169, 16
      %v343 = vrot.slane %v341, 5
      %v344 = vsel %vm330, %v339, %v343
      %v345 = vshrl.u32 %v169, 16
      %v347 = vrot.slane %v345, 4
      %v348 = vor.u32 %v347, %v343
      %v349 = vrot.slane %v348, 4
      %v351 = vshll.u32 %v170, 16
      %v353 = vrot.slane %v351, 5
      %v354 = vsel %vm330, %v349, %v353
      %v355 = vshrl.u32 %v170, 16
      %v357 = vrot.slane %v355, 4
      %v358 = vor.u32 %v357, %v353
      %v359 = vrot.slane %v358, 4
      %v361 = vshll.u32 %v171, 16
      %v363 = vrot.slane %v361, 5
      %v364 = vsel %vm330, %v359, %v363
      %v365 = vshrl.u32 %v171, 16
      %v367 = vrot.slane %v365, 4
      %v368 = vor.u32 %v367, %v363
      %v369 = vrot.slane %v368, 4
      %v371 = vshll.u32 %v172, 16
      %v373 = vrot.slane %v371, 5
      %v374 = vsel %vm330, %v369, %v373
      %v376 = vshrl.u32 %v173, 16
      %v378 = vrot.slane %v376, 4
      %v379 = vshll.u32 %v173, 16
      %v381 = vrot.slane %v379, 5
      %v382 = vor.u32 %v378, %v381
      %v383 = vrot.slane %v382, 4
      %v385 = vshll.u32 %v174, 16
      %v387 = vrot.slane %v385, 5
      %v388 = vsel %vm330, %v383, %v387
      %v389 = vshrl.u32 %v174, 16
      %v391 = vrot.slane %v389, 4
      %v392 = vor.u32 %v391, %v387
      %v393 = vrot.slane %v392, 4
      %v395 = vshll.u32 %v175, 16
      %v397 = vrot.slane %v395, 5
      %v398 = vsel %vm330, %v393, %v397
      %v399 = vshrl.u32 %v175, 16
      %v401 = vrot.slane %v399, 4
      %v402 = vor.u32 %v401, %v397
      %v403 = vrot.slane %v402, 4
      %v405 = vshll.u32 %v176, 16
      %v407 = vrot.slane %v405, 5
      %v408 = vsel %vm330, %v403, %v407
      %v409 = vshrl.u32 %v176, 16
      %v411 = vrot.slane %v409, 4
      %v412 = vor.u32 %v411, %v407
      %v413 = vrot.slane %v412, 4
      %v415 = vshll.u32 %v177, 16
      %v417 = vrot.slane %v415, 5
      %v418 = vsel %vm330, %v413, %v417
      %v420 = vshrl.u32 %v178, 16
      %v422 = vrot.slane %v420, 4
      %v423 = vshll.u32 %v178, 16
      %v425 = vrot.slane %v423, 5
      %v426 = vor.u32 %v422, %v425
      %v427 = vrot.slane %v426, 4
      %v429 = vshll.u32 %v179, 16
      %v431 = vrot.slane %v429, 5
      %v432 = vsel %vm330, %v427, %v431
      %v433 = vshrl.u32 %v179, 16
      %v435 = vrot.slane %v433, 4
      %v436 = vor.u32 %v435, %v431
      %v437 = vrot.slane %v436, 4
      %v439 = vshll.u32 %v180, 16
      %v441 = vrot.slane %v439, 5
      %v442 = vsel %vm330, %v437, %v441
      %v443 = vshrl.u32 %v180, 16
      %v445 = vrot.slane %v443, 4
      %v446 = vor.u32 %v445, %v441
      %v447 = vrot.slane %v446, 4
      %v449 = vshll.u32 %v181, 16
      %v451 = vrot.slane %v449, 5
      %v452 = vsel %vm330, %v447, %v451
      %v453 = vshrl.u32 %v181, 16
      %v455 = vrot.slane %v453, 4
      %v456 = vor.u32 %v455, %v451
      %v457 = vrot.slane %v456, 4
      %v459 = vshll.u32 %v182, 16
      %v461 = vrot.slane %v459, 5
      %v462 = vsel %vm330, %v457, %v461
      %v464 = vshrl.u32 %v183, 16
      %v466 = vrot.slane %v464, 4
      %v467 = vshll.u32 %v183, 16
      %v469 = vrot.slane %v467, 5
      %v470 = vor.u32 %v466, %v469
      %v471 = vrot.slane %v470, 4
      %v473 = vshll.u32 %v184, 16
      %v475 = vrot.slane %v473, 5
      %v476 = vsel %vm330, %v471, %v475
      %v477 = vshrl.u32 %v184, 16
      %v479 = vrot.slane %v477, 4
      %v480 = vor.u32 %v479, %v475
      %v481 = vrot.slane %v480, 4
      %v483 = vshll.u32 %v185, 16
      %v485 = vrot.slane %v483, 5
      %v486 = vsel %vm330, %v481, %v485
      %v487 = vshrl.u32 %v185, 16
      %v489 = vrot.slane %v487, 4
      %v490 = vor.u32 %v489, %v485
      %v491 = vrot.slane %v490, 4
      %v493 = vshll.u32 %v186, 16
      %v495 = vrot.slane %v493, 5
      %v496 = vsel %vm330, %v491, %v495
      %v497 = vshrl.u32 %v186, 16
      %v499 = vrot.slane %v497, 4
      %v500 = vor.u32 %v499, %v495
      %v501 = vrot.slane %v500, 4
      %v503 = vshll.u32 %v187, 16
      %v505 = vrot.slane %v503, 5
      %v506 = vsel %vm330, %v501, %v505
      %v508 = vshrl.u32 %v188, 16
      %v510 = vrot.slane %v508, 4
      %v511 = vshll.u32 %v188, 16
      %v513 = vrot.slane %v511, 5
      %v514 = vor.u32 %v510, %v513
      %v515 = vrot.slane %v514, 4
      %v517 = vshll.u32 %v189, 16
      %v519 = vrot.slane %v517, 5
      %v520 = vsel %vm330, %v515, %v519
      %v521 = vshrl.u32 %v189, 16
      %v523 = vrot.slane %v521, 4
      %v524 = vor.u32 %v523, %v519
      %v525 = vrot.slane %v524, 4
      %v527 = vshll.u32 %v190, 16
      %v529 = vrot.slane %v527, 5
      %v530 = vsel %vm330, %v525, %v529
      %v531 = vshrl.u32 %v190, 16
      %v533 = vrot.slane %v531, 4
      %v534 = vor.u32 %v533, %v529
      %v535 = vrot.slane %v534, 4
      %v537 = vshll.u32 %v191, 16
      %v539 = vrot.slane %v537, 5
      %v540 = vsel %vm330, %v535, %v539
      %v541 = vshrl.u32 %v191, 16
      %v543 = vrot.slane %v541, 4
      %v544 = vor.u32 %v543, %v539
      %v545 = vrot.slane %v544, 4
      %v547 = vshll.u32 %v192, 16
      %v549 = vrot.slane %v547, 5
      %v550 = vsel %vm330, %v545, %v549
      %v552 = vshrl.u32 %v193, 16
      %v554 = vrot.slane %v552, 4
      %v555 = vshll.u32 %v193, 16
      %v557 = vrot.slane %v555, 5
      %v558 = vor.u32 %v554, %v557
      %v559 = vrot.slane %v558, 4
      %v561 = vshll.u32 %v194, 16
      %v563 = vrot.slane %v561, 5
      %v564 = vsel %vm330, %v559, %v563
      %v565 = vshrl.u32 %v194, 16
      %v567 = vrot.slane %v565, 4
      %v568 = vor.u32 %v567, %v563
      %v569 = vrot.slane %v568, 4
      %v571 = vshll.u32 %v195, 16
      %v573 = vrot.slane %v571, 5
      %v574 = vsel %vm330, %v569, %v573
      %v575 = vshrl.u32 %v195, 16
      %v577 = vrot.slane %v575, 4
      %v578 = vor.u32 %v577, %v573
      %v579 = vrot.slane %v578, 4
      %v581 = vshll.u32 %v196, 16
      %v583 = vrot.slane %v581, 5
      %v584 = vsel %vm330, %v579, %v583
      %v585 = vshrl.u32 %v196, 16
      %v587 = vrot.slane %v585, 4
      %v588 = vor.u32 %v587, %v583
      %v589 = vrot.slane %v588, 4
      %v591 = vshll.u32 %v197, 16
      %v593 = vrot.slane %v591, 5
      %v594 = vsel %vm330, %v589, %v593
      %v596 = vshrl.u32 %v198, 16
      %v598 = vrot.slane %v596, 4
      %v599 = vshll.u32 %v198, 16
      %v601 = vrot.slane %v599, 5
      %v602 = vor.u32 %v598, %v601
      %v603 = vrot.slane %v602, 4
      %v605 = vshll.u32 %v199, 16
      %v607 = vrot.slane %v605, 5
      %v608 = vsel %vm330, %v603, %v607
      %v609 = vshrl.u32 %v199, 16
      %v611 = vrot.slane %v609, 4
      %v612 = vor.u32 %v611, %v607
      %v613 = vrot.slane %v612, 4
      %v615 = vshll.u32 %v200, 16
      %v617 = vrot.slane %v615, 5
      %v618 = vsel %vm330, %v613, %v617
      %v619 = vshrl.u32 %v200, 16
      %v621 = vrot.slane %v619, 4
      %v622 = vor.u32 %v621, %v617
      %v623 = vrot.slane %v622, 4
      %v625 = vshll.u32 %v201, 16
      %v627 = vrot.slane %v625, 5
      %v628 = vsel %vm330, %v623, %v627
      %v629 = vshrl.u32 %v201, 16
      %v631 = vrot.slane %v629, 4
      %v632 = vor.u32 %v631, %v627
      %v633 = vrot.slane %v632, 4
      %v635 = vshll.u32 %v202, 16
      %v637 = vrot.slane %v635, 5
      %v638 = vsel %vm330, %v633, %v637
      %v640 = vshrl.u32 %v203, 16
      %v642 = vrot.slane %v640, 4
      %v643 = vshll.u32 %v203, 16
      %v645 = vrot.slane %v643, 5
      %v646 = vor.u32 %v642, %v645
      %v647 = vrot.slane %v646, 4
      %v649 = vshll.u32 %v204, 16
      %v651 = vrot.slane %v649, 5
      %v652 = vsel %vm330, %v647, %v651
      %v653 = vshrl.u32 %v204, 16
      %v655 = vrot.slane %v653, 4
      %v656 = vor.u32 %v655, %v651
      %v657 = vrot.slane %v656, 4
      %v659 = vshll.u32 %v205, 16
      %v661 = vrot.slane %v659, 5
      %v662 = vsel %vm330, %v657, %v661
      %v663 = vshrl.u32 %v205, 16
      %v665 = vrot.slane %v663, 4
      %v666 = vor.u32 %v665, %v661
      %v667 = vrot.slane %v666, 4
      %v669 = vshll.u32 %v206, 16
      %v671 = vrot.slane %v669, 5
      %v672 = vsel %vm330, %v667, %v671
      %v673 = vshrl.u32 %v206, 16
      %v675 = vrot.slane %v673, 4
      %v676 = vor.u32 %v675, %v671
      %v677 = vrot.slane %v676, 4
      %v679 = vshll.u32 %v207, 16
      %v681 = vrot.slane %v679, 5
      %v682 = vsel %vm330, %v677, %v681
      %v684 = vshrl.u32 %v208, 16
      %v686 = vrot.slane %v684, 4
      %v687 = vshll.u32 %v208, 16
      %v689 = vrot.slane %v687, 5
      %v690 = vor.u32 %v686, %v689
      %v691 = vrot.slane %v690, 4
      %v693 = vshll.u32 %v209, 16
      %v695 = vrot.slane %v693, 5
      %v696 = vsel %vm330, %v691, %v695
      %v697 = vshrl.u32 %v209, 16
      %v699 = vrot.slane %v697, 4
      %v700 = vor.u32 %v699, %v695
      %v701 = vrot.slane %v700, 4
      %v703 = vshll.u32 %v210, 16
      %v705 = vrot.slane %v703, 5
      %v706 = vsel %vm330, %v701, %v705
      %v707 = vshrl.u32 %v210, 16
      %v709 = vrot.slane %v707, 4
      %v710 = vor.u32 %v709, %v705
      %v711 = vrot.slane %v710, 4
      %v713 = vshll.u32 %v211, 16
      %v715 = vrot.slane %v713, 5
      %v716 = vsel %vm330, %v711, %v715
      %v717 = vshrl.u32 %v211, 16
      %v719 = vrot.slane %v717, 4
      %v720 = vor.u32 %v719, %v715
      %v721 = vrot.slane %v720, 4
      %v723 = vshll.u32 %v212, 16
      %v725 = vrot.slane %v723, 5
      %v726 = vsel %vm330, %v721, %v725
      %v728 = vshrl.u32 %v213, 16
      %v730 = vrot.slane %v728, 4
      %v731 = vshll.u32 %v213, 16
      %v733 = vrot.slane %v731, 5
      %v734 = vor.u32 %v730, %v733
      %v735 = vrot.slane %v734, 4
      %v737 = vshll.u32 %v214, 16
      %v739 = vrot.slane %v737, 5
      %v740 = vsel %vm330, %v735, %v739
      %v741 = vshrl.u32 %v214, 16
      %v743 = vrot.slane %v741, 4
      %v744 = vor.u32 %v743, %v739
      %v745 = vrot.slane %v744, 4
      %v747 = vshll.u32 %v215, 16
      %v749 = vrot.slane %v747, 5
      %v750 = vsel %vm330, %v745, %v749
      %v751 = vshrl.u32 %v215, 16
      %v753 = vrot.slane %v751, 4
      %v754 = vor.u32 %v753, %v749
      %v755 = vrot.slane %v754, 4
      %v757 = vshll.u32 %v216, 16
      %v759 = vrot.slane %v757, 5
      %v760 = vsel %vm330, %v755, %v759
      %v761 = vshrl.u32 %v216, 16
      %v763 = vrot.slane %v761, 4
      %v764 = vor.u32 %v763, %v759
      %v765 = vrot.slane %v764, 4
      %v767 = vshll.u32 %v217, 16
      %v769 = vrot.slane %v767, 5
      %v770 = vsel %vm330, %v765, %v769
      %v772 = vshrl.u32 %v218, 16
      %v774 = vrot.slane %v772, 4
      %v775 = vshll.u32 %v218, 16
      %v777 = vrot.slane %v775, 5
      %v778 = vor.u32 %v774, %v777
      %v779 = vrot.slane %v778, 4
      %v781 = vshll.u32 %v219, 16
      %v783 = vrot.slane %v781, 5
      %v784 = vsel %vm330, %v779, %v783
      %v785 = vshrl.u32 %v219, 16
      %v787 = vrot.slane %v785, 4
      %v788 = vor.u32 %v787, %v783
      %v789 = vrot.slane %v788, 4
      %v791 = vshll.u32 %v220, 16
      %v793 = vrot.slane %v791, 5
      %v794 = vsel %vm330, %v789, %v793
      %v795 = vshrl.u32 %v220, 16
      %v797 = vrot.slane %v795, 4
      %v798 = vor.u32 %v797, %v793
      %v799 = vrot.slane %v798, 4
      %v801 = vshll.u32 %v221, 16
      %v803 = vrot.slane %v801, 5
      %v804 = vsel %vm330, %v799, %v803
      %v805 = vshrl.u32 %v221, 16
      %v807 = vrot.slane %v805, 4
      %v808 = vor.u32 %v807, %v803
      %v809 = vrot.slane %v808, 4
      %v811 = vshll.u32 %v222, 16
      %v813 = vrot.slane %v811, 5
      %v814 = vsel %vm330, %v809, %v813
      %v816 = vshrl.u32 %v223, 16
      %v818 = vrot.slane %v816, 4
      %v819 = vshll.u32 %v223, 16
      %v821 = vrot.slane %v819, 5
      %v822 = vor.u32 %v818, %v821
      %v823 = vrot.slane %v822, 4
      %v825 = vshll.u32 %v224, 16
      %v827 = vrot.slane %v825, 5
      %v828 = vsel %vm330, %v823, %v827
      %v829 = vshrl.u32 %v224, 16
      %v831 = vrot.slane %v829, 4
      %v832 = vor.u32 %v831, %v827
      %v833 = vrot.slane %v832, 4
      %v835 = vshll.u32 %v225, 16
      %v837 = vrot.slane %v835, 5
      %v838 = vsel %vm330, %v833, %v837
      %v839 = vshrl.u32 %v225, 16
      %v841 = vrot.slane %v839, 4
      %v842 = vor.u32 %v841, %v837
      %v843 = vrot.slane %v842, 4
      %v845 = vshll.u32 %v226, 16
      %v847 = vrot.slane %v845, 5
      %v848 = vsel %vm330, %v843, %v847
      %v849 = vshrl.u32 %v226, 16
      %v851 = vrot.slane %v849, 4
      %v852 = vor.u32 %v851, %v847
      %v853 = vrot.slane %v852, 4
      %v855 = vshll.u32 %v227, 16
      %v857 = vrot.slane %v855, 5
      %v858 = vsel %vm330, %v853, %v857
      %v860 = vshrl.u32 %v228, 16
      %v862 = vrot.slane %v860, 4
      %v863 = vshll.u32 %v228, 16
      %v865 = vrot.slane %v863, 5
      %v866 = vor.u32 %v862, %v865
      %v867 = vrot.slane %v866, 4
      %v869 = vshll.u32 %v229, 16
      %v871 = vrot.slane %v869, 5
      %v872 = vsel %vm330, %v867, %v871
      %v873 = vshrl.u32 %v229, 16
      %v875 = vrot.slane %v873, 4
      %v876 = vor.u32 %v875, %v871
      %v877 = vrot.slane %v876, 4
      %v879 = vshll.u32 %v230, 16
      %v881 = vrot.slane %v879, 5
      %v882 = vsel %vm330, %v877, %v881
      %v883 = vshrl.u32 %v230, 16
      %v885 = vrot.slane %v883, 4
      %v886 = vor.u32 %v885, %v881
      %v887 = vrot.slane %v886, 4
      %v889 = vshll.u32 %v231, 16
      %v891 = vrot.slane %v889, 5
      %v892 = vsel %vm330, %v887, %v891
      %v893 = vshrl.u32 %v231, 16
      %v895 = vrot.slane %v893, 4
      %v896 = vor.u32 %v895, %v891
      %v897 = vrot.slane %v896, 4
      %v899 = vshll.u32 %v232, 16
      %v901 = vrot.slane %v899, 5
      %v902 = vsel %vm330, %v897, %v901
      %v904 = vshrl.u32 %v233, 16
      %v906 = vrot.slane %v904, 4
      %v907 = vshll.u32 %v233, 16
      %v909 = vrot.slane %v907, 5
      %v910 = vor.u32 %v906, %v909
      %v911 = vrot.slane %v910, 4
      %v913 = vshll.u32 %v234, 16
      %v915 = vrot.slane %v913, 5
      %v916 = vsel %vm330, %v911, %v915
      %v917 = vshrl.u32 %v234, 16
      %v919 = vrot.slane %v917, 4
      %v920 = vor.u32 %v919, %v915
      %v921 = vrot.slane %v920, 4
      %v923 = vshll.u32 %v235, 16
      %v925 = vrot.slane %v923, 5
      %v926 = vsel %vm330, %v921, %v925
      %v927 = vshrl.u32 %v235, 16
      %v929 = vrot.slane %v927, 4
      %v930 = vor.u32 %v929, %v925
      %v931 = vrot.slane %v930, 4
      %v933 = vshll.u32 %v236, 16
      %v935 = vrot.slane %v933, 5
      %v936 = vsel %vm330, %v931, %v935
      %v937 = vshrl.u32 %v236, 16
      %v939 = vrot.slane %v937, 4
      %v940 = vor.u32 %v939, %v935
      %v941 = vrot.slane %v940, 4
      %v943 = vshll.u32 %v237, 16
      %v945 = vrot.slane %v943, 5
      %v946 = vsel %vm330, %v941, %v945
      %v948 = vshrl.u32 %v238, 16
      %v950 = vrot.slane %v948, 4
      %v951 = vshll.u32 %v238, 16
      %v953 = vrot.slane %v951, 5
      %v954 = vor.u32 %v950, %v953
      %v955 = vrot.slane %v954, 4
      %v957 = vshll.u32 %v239, 16
      %v959 = vrot.slane %v957, 5
      %v960 = vsel %vm330, %v955, %v959
      %v961 = vshrl.u32 %v239, 16
      %v963 = vrot.slane %v961, 4
      %v964 = vor.u32 %v963, %v959
      %v965 = vrot.slane %v964, 4
      %v967 = vshll.u32 %v240, 16
      %v969 = vrot.slane %v967, 5
      %v970 = vsel %vm330, %v965, %v969
      %v971 = vshrl.u32 %v240, 16
      %v973 = vrot.slane %v971, 4
      %v974 = vor.u32 %v973, %v969
      %v975 = vrot.slane %v974, 4
      %v977 = vshll.u32 %v241, 16
      %v979 = vrot.slane %v977, 5
      %v980 = vsel %vm330, %v975, %v979
      %v981 = vshrl.u32 %v241, 16
      %v983 = vrot.slane %v981, 4
      %v984 = vor.u32 %v983, %v979
      %v985 = vrot.slane %v984, 4
      %v987 = vshll.u32 %v242, 16
      %v989 = vrot.slane %v987, 5
      %v990 = vsel %vm330, %v985, %v989
      %v992 = vshrl.u32 %v243, 16
      %v994 = vrot.slane %v992, 4
      %v995 = vshll.u32 %v243, 16
      %v997 = vrot.slane %v995, 5
      %v998 = vor.u32 %v994, %v997
      %v999 = vrot.slane %v998, 4
      %v1001 = vshll.u32 %v244, 16
      %v1003 = vrot.slane %v1001, 5
      %v1004 = vsel %vm330, %v999, %v1003
      %v1005 = vshrl.u32 %v244, 16
      %v1007 = vrot.slane %v1005, 4
      %v1008 = vor.u32 %v1007, %v1003
      %v1009 = vrot.slane %v1008, 4
      %v1011 = vshll.u32 %v245, 16
      %v1013 = vrot.slane %v1011, 5
      %v1014 = vsel %vm330, %v1009, %v1013
      %v1015 = vshrl.u32 %v245, 16
      %v1017 = vrot.slane %v1015, 4
      %v1018 = vor.u32 %v1017, %v1013
      %v1019 = vrot.slane %v1018, 4
      %v1021 = vshll.u32 %v246, 16
      %v1023 = vrot.slane %v1021, 5
      %v1024 = vsel %vm330, %v1019, %v1023
      %v1025 = vshrl.u32 %v246, 16
      %v1027 = vrot.slane %v1025, 4
      %v1028 = vor.u32 %v1027, %v1023
      %v1029 = vrot.slane %v1028, 4
      %v1031 = vshll.u32 %v247, 16
      %v1033 = vrot.slane %v1031, 5
      %v1034 = vsel %vm330, %v1029, %v1033
      %v1036 = vshrl.u32 %v248, 16
      %v1038 = vrot.slane %v1036, 4
      %v1039 = vshll.u32 %v248, 16
      %v1041 = vrot.slane %v1039, 5
      %v1042 = vor.u32 %v1038, %v1041
      %v1043 = vrot.slane %v1042, 4
      %v1045 = vshll.u32 %v249, 16
      %v1047 = vrot.slane %v1045, 5
      %v1048 = vsel %vm330, %v1043, %v1047
      %v1049 = vshrl.u32 %v249, 16
      %v1051 = vrot.slane %v1049, 4
      %v1052 = vor.u32 %v1051, %v1047
      %v1053 = vrot.slane %v1052, 4
      %v1055 = vshll.u32 %v250, 16
      %v1057 = vrot.slane %v1055, 5
      %v1058 = vsel %vm330, %v1053, %v1057
      %v1059 = vshrl.u32 %v250, 16
      %v1061 = vrot.slane %v1059, 4
      %v1062 = vor.u32 %v1061, %v1057
      %v1063 = vrot.slane %v1062, 4
      %v1065 = vshll.u32 %v251, 16
      %v1067 = vrot.slane %v1065, 5
      %v1068 = vsel %vm330, %v1063, %v1067
      %v1069 = vshrl.u32 %v251, 16
      %v1071 = vrot.slane %v1069, 4
      %v1072 = vor.u32 %v1071, %v1067
      %v1073 = vrot.slane %v1072, 4
      %v1075 = vshll.u32 %v252, 16
      %v1077 = vrot.slane %v1075, 5
      %v1078 = vsel %vm330, %v1073, %v1077
      %v1080 = vshrl.u32 %v253, 16
      %v1082 = vrot.slane %v1080, 4
      %v1083 = vshll.u32 %v253, 16
      %v1085 = vrot.slane %v1083, 5
      %v1086 = vor.u32 %v1082, %v1085
      %v1087 = vrot.slane %v1086, 4
      %v1089 = vshll.u32 %v254, 16
      %v1091 = vrot.slane %v1089, 5
      %v1092 = vsel %vm330, %v1087, %v1091
      %v1093 = vshrl.u32 %v254, 16
      %v1095 = vrot.slane %v1093, 4
      %v1096 = vor.u32 %v1095, %v1091
      %v1097 = vrot.slane %v1096, 4
      %v1099 = vshll.u32 %v255, 16
      %v1101 = vrot.slane %v1099, 5
      %v1102 = vsel %vm330, %v1097, %v1101
      %v1103 = vshrl.u32 %v255, 16
      %v1105 = vrot.slane %v1103, 4
      %v1106 = vor.u32 %v1105, %v1101
      %v1107 = vrot.slane %v1106, 4
      %v1109 = vshll.u32 %v256, 16
      %v1111 = vrot.slane %v1109, 5
      %v1112 = vsel %vm330, %v1107, %v1111
      %v1113 = vshrl.u32 %v256, 16
      %v1115 = vrot.slane %v1113, 4
      %v1116 = vor.u32 %v1115, %v1111
      %v1117 = vrot.slane %v1116, 4
      %v1119 = vshll.u32 %v257, 16
      %v1121 = vrot.slane %v1119, 5
      %v1122 = vsel %vm330, %v1117, %v1121
      %v1124 = vshrl.u32 %v258, 16
      %v1126 = vrot.slane %v1124, 4
      %v1127 = vshll.u32 %v258, 16
      %v1129 = vrot.slane %v1127, 5
      %v1130 = vor.u32 %v1126, %v1129
      %v1131 = vrot.slane %v1130, 4
      %v1133 = vshll.u32 %v259, 16
      %v1135 = vrot.slane %v1133, 5
      %v1136 = vsel %vm330, %v1131, %v1135
      %v1137 = vshrl.u32 %v259, 16
      %v1139 = vrot.slane %v1137, 4
      %v1140 = vor.u32 %v1139, %v1135
      %v1141 = vrot.slane %v1140, 4
      %v1143 = vshll.u32 %v260, 16
      %v1145 = vrot.slane %v1143, 5
      %v1146 = vsel %vm330, %v1141, %v1145
      %v1147 = vshrl.u32 %v260, 16
      %v1149 = vrot.slane %v1147, 4
      %v1150 = vor.u32 %v1149, %v1145
      %v1151 = vrot.slane %v1150, 4
      %v1153 = vshll.u32 %v261, 16
      %v1155 = vrot.slane %v1153, 5
      %v1156 = vsel %vm330, %v1151, %v1155
      %v1157 = vshrl.u32 %v261, 16
      %v1159 = vrot.slane %v1157, 4
      %v1160 = vor.u32 %v1159, %v1155
      %v1161 = vrot.slane %v1160, 4
      %v1163 = vshll.u32 %v262, 16
      %v1165 = vrot.slane %v1163, 5
      %v1166 = vsel %vm330, %v1161, %v1165
      %v1168 = vshrl.u32 %v263, 16
      %v1170 = vrot.slane %v1168, 4
      %v1171 = vshll.u32 %v263, 16
      %v1173 = vrot.slane %v1171, 5
      %v1174 = vor.u32 %v1170, %v1173
      %v1175 = vrot.slane %v1174, 4
      %v1177 = vshll.u32 %v264, 16
      %v1179 = vrot.slane %v1177, 5
      %v1180 = vsel %vm330, %v1175, %v1179
      %v1181 = vshrl.u32 %v264, 16
      %v1183 = vrot.slane %v1181, 4
      %v1184 = vor.u32 %v1183, %v1179
      %v1185 = vrot.slane %v1184, 4
      %v1187 = vshll.u32 %v265, 16
      %v1189 = vrot.slane %v1187, 5
      %v1190 = vsel %vm330, %v1185, %v1189
      %v1191 = vshrl.u32 %v265, 16
      %v1193 = vrot.slane %v1191, 4
      %v1194 = vor.u32 %v1193, %v1189
      %v1195 = vrot.slane %v1194, 4
      %v1197 = vshll.u32 %v266, 16
      %v1199 = vrot.slane %v1197, 5
      %v1200 = vsel %vm330, %v1195, %v1199
      %v1201 = vshrl.u32 %v266, 16
      %v1203 = vrot.slane %v1201, 4
      %v1204 = vor.u32 %v1203, %v1199
      %v1205 = vrot.slane %v1204, 4
      %v1207 = vshll.u32 %v267, 16
      %v1209 = vrot.slane %v1207, 5
      %v1210 = vsel %vm330, %v1205, %v1209
      %v1212 = vshrl.u32 %v268, 16
      %v1214 = vrot.slane %v1212, 4
      %v1215 = vshll.u32 %v268, 16
      %v1217 = vrot.slane %v1215, 5
      %v1218 = vor.u32 %v1214, %v1217
      %v1219 = vrot.slane %v1218, 4
      %v1221 = vshll.u32 %v269, 16
      %v1223 = vrot.slane %v1221, 5
      %v1224 = vsel %vm330, %v1219, %v1223
      %v1225 = vshrl.u32 %v269, 16
      %v1227 = vrot.slane %v1225, 4
      %v1228 = vor.u32 %v1227, %v1223
      %v1229 = vrot.slane %v1228, 4
      %v1231 = vshll.u32 %v270, 16
      %v1233 = vrot.slane %v1231, 5
      %v1234 = vsel %vm330, %v1229, %v1233
      %v1235 = vshrl.u32 %v270, 16
      %v1237 = vrot.slane %v1235, 4
      %v1238 = vor.u32 %v1237, %v1233
      %v1239 = vrot.slane %v1238, 4
      %v1241 = vshll.u32 %v271, 16
      %v1243 = vrot.slane %v1241, 5
      %v1244 = vsel %vm330, %v1239, %v1243
      %v1245 = vshrl.u32 %v271, 16
      %v1247 = vrot.slane %v1245, 4
      %v1248 = vor.u32 %v1247, %v1243
      %v1249 = vrot.slane %v1248, 4
      %v1251 = vshll.u32 %v272, 16
      %v1253 = vrot.slane %v1251, 5
      %v1254 = vsel %vm330, %v1249, %v1253
      %v1256 = vshrl.u32 %v273, 16
      %v1258 = vrot.slane %v1256, 4
      %v1259 = vshll.u32 %v273, 16
      %v1261 = vrot.slane %v1259, 5
      %v1262 = vor.u32 %v1258, %v1261
      %v1263 = vrot.slane %v1262, 4
      %v1265 = vshll.u32 %v274, 16
      %v1267 = vrot.slane %v1265, 5
      %v1268 = vsel %vm330, %v1263, %v1267
      %v1269 = vshrl.u32 %v274, 16
      %v1271 = vrot.slane %v1269, 4
      %v1272 = vor.u32 %v1271, %v1267
      %v1273 = vrot.slane %v1272, 4
      %v1275 = vshll.u32 %v275, 16
      %v1277 = vrot.slane %v1275, 5
      %v1278 = vsel %vm330, %v1273, %v1277
      %v1279 = vshrl.u32 %v275, 16
      %v1281 = vrot.slane %v1279, 4
      %v1282 = vor.u32 %v1281, %v1277
      %v1283 = vrot.slane %v1282, 4
      %v1285 = vshll.u32 %v276, 16
      %v1287 = vrot.slane %v1285, 5
      %v1288 = vsel %vm330, %v1283, %v1287
      %v1289 = vshrl.u32 %v276, 16
      %v1291 = vrot.slane %v1289, 4
      %v1292 = vor.u32 %v1291, %v1287
      %v1293 = vrot.slane %v1292, 4
      %v1295 = vshll.u32 %v277, 16
      %v1297 = vrot.slane %v1295, 5
      %v1298 = vsel %vm330, %v1293, %v1297
      %v1300 = vshrl.u32 %v278, 16
      %v1302 = vrot.slane %v1300, 4
      %v1303 = vshll.u32 %v278, 16
      %v1305 = vrot.slane %v1303, 5
      %v1306 = vor.u32 %v1302, %v1305
      %v1307 = vrot.slane %v1306, 4
      %v1309 = vshll.u32 %v279, 16
      %v1311 = vrot.slane %v1309, 5
      %v1312 = vsel %vm330, %v1307, %v1311
      %v1313 = vshrl.u32 %v279, 16
      %v1315 = vrot.slane %v1313, 4
      %v1316 = vor.u32 %v1315, %v1311
      %v1317 = vrot.slane %v1316, 4
      %v1319 = vshll.u32 %v280, 16
      %v1321 = vrot.slane %v1319, 5
      %v1322 = vsel %vm330, %v1317, %v1321
      %v1323 = vshrl.u32 %v280, 16
      %v1325 = vrot.slane %v1323, 4
      %v1326 = vor.u32 %v1325, %v1321
      %v1327 = vrot.slane %v1326, 4
      %v1329 = vshll.u32 %v281, 16
      %v1331 = vrot.slane %v1329, 5
      %v1332 = vsel %vm330, %v1327, %v1331
      %v1333 = vshrl.u32 %v281, 16
      %v1335 = vrot.slane %v1333, 4
      %v1336 = vor.u32 %v1335, %v1331
      %v1337 = vrot.slane %v1336, 4
      %v1339 = vshll.u32 %v282, 16
      %v1341 = vrot.slane %v1339, 5
      %v1342 = vsel %vm330, %v1337, %v1341
      %v1344 = vshrl.u32 %v283, 16
      %v1346 = vrot.slane %v1344, 4
      %v1347 = vshll.u32 %v283, 16
      %v1349 = vrot.slane %v1347, 5
      %v1350 = vor.u32 %v1346, %v1349
      %v1351 = vrot.slane %v1350, 4
      %v1353 = vshll.u32 %v284, 16
      %v1355 = vrot.slane %v1353, 5
      %v1356 = vsel %vm330, %v1351, %v1355
      %v1357 = vshrl.u32 %v284, 16
      %v1359 = vrot.slane %v1357, 4
      %v1360 = vor.u32 %v1359, %v1355
      %v1361 = vrot.slane %v1360, 4
      %v1363 = vshll.u32 %v285, 16
      %v1365 = vrot.slane %v1363, 5
      %v1366 = vsel %vm330, %v1361, %v1365
      %v1367 = vshrl.u32 %v285, 16
      %v1369 = vrot.slane %v1367, 4
      %v1370 = vor.u32 %v1369, %v1365
      %v1371 = vrot.slane %v1370, 4
      %v1373 = vshll.u32 %v286, 16
      %v1375 = vrot.slane %v1373, 5
      %v1376 = vsel %vm330, %v1371, %v1375
      %v1377 = vshrl.u32 %v286, 16
      %v1379 = vrot.slane %v1377, 4
      %v1380 = vor.u32 %v1379, %v1375
      %v1381 = vrot.slane %v1380, 4
      %v1383 = vshll.u32 %v287, 16
      %v1385 = vrot.slane %v1383, 5
      %v1386 = vsel %vm330, %v1381, %v1385
      %v1388 = vshrl.u32 %v288, 16
      %v1390 = vrot.slane %v1388, 4
      %v1391 = vshll.u32 %v288, 16
      %v1393 = vrot.slane %v1391, 5
      %v1394 = vor.u32 %v1390, %v1393
      %v1395 = vrot.slane %v1394, 4
      %v1397 = vshll.u32 %v289, 16
      %v1399 = vrot.slane %v1397, 5
      %v1400 = vsel %vm330, %v1395, %v1399
      %v1401 = vshrl.u32 %v289, 16
      %v1403 = vrot.slane %v1401, 4
      %v1404 = vor.u32 %v1403, %v1399
      %v1405 = vrot.slane %v1404, 4
      %v1407 = vshll.u32 %v290, 16
      %v1409 = vrot.slane %v1407, 5
      %v1410 = vsel %vm330, %v1405, %v1409
      %v1411 = vshrl.u32 %v290, 16
      %v1413 = vrot.slane %v1411, 4
      %v1414 = vor.u32 %v1413, %v1409
      %v1415 = vrot.slane %v1414, 4
      %v1417 = vshll.u32 %v291, 16
      %v1419 = vrot.slane %v1417, 5
      %v1420 = vsel %vm330, %v1415, %v1419
      %v1421 = vshrl.u32 %v291, 16
      %v1423 = vrot.slane %v1421, 4
      %v1424 = vor.u32 %v1423, %v1419
      %v1425 = vrot.slane %v1424, 4
      %v1427 = vshll.u32 %v292, 16
      %v1429 = vrot.slane %v1427, 5
      %v1430 = vsel %vm330, %v1425, %v1429
      %v1432 = vshrl.u32 %v293, 16
      %v1434 = vrot.slane %v1432, 4
      %v1435 = vshll.u32 %v293, 16
      %v1437 = vrot.slane %v1435, 5
      %v1438 = vor.u32 %v1434, %v1437
      %v1439 = vrot.slane %v1438, 4
      %v1441 = vshll.u32 %v294, 16
      %v1443 = vrot.slane %v1441, 5
      %v1444 = vsel %vm330, %v1439, %v1443
      %v1445 = vshrl.u32 %v294, 16
      %v1447 = vrot.slane %v1445, 4
      %v1448 = vor.u32 %v1447, %v1443
      %v1449 = vrot.slane %v1448, 4
      %v1451 = vshll.u32 %v295, 16
      %v1453 = vrot.slane %v1451, 5
      %v1454 = vsel %vm330, %v1449, %v1453
      %v1455 = vshrl.u32 %v295, 16
      %v1457 = vrot.slane %v1455, 4
      %v1458 = vor.u32 %v1457, %v1453
      %v1459 = vrot.slane %v1458, 4
      %v1461 = vshll.u32 %v296, 16
      %v1463 = vrot.slane %v1461, 5
      %v1464 = vsel %vm330, %v1459, %v1463
      %v1465 = vshrl.u32 %v296, 16
      %v1467 = vrot.slane %v1465, 4
      %v1468 = vor.u32 %v1467, %v1463
      %v1469 = vrot.slane %v1468, 4
      %v1471 = vshll.u32 %v297, 16
      %v1473 = vrot.slane %v1471, 5
      %v1474 = vsel %vm330, %v1469, %v1473
      %v1476 = vshrl.u32 %v298, 16
      %v1478 = vrot.slane %v1476, 4
      %v1479 = vshll.u32 %v298, 16
      %v1481 = vrot.slane %v1479, 5
      %v1482 = vor.u32 %v1478, %v1481
      %v1483 = vrot.slane %v1482, 4
      %v1485 = vshll.u32 %v299, 16
      %v1487 = vrot.slane %v1485, 5
      %v1488 = vsel %vm330, %v1483, %v1487
      %v1489 = vshrl.u32 %v299, 16
      %v1491 = vrot.slane %v1489, 4
      %v1492 = vor.u32 %v1491, %v1487
      %v1493 = vrot.slane %v1492, 4
      %v1495 = vshll.u32 %v300, 16
      %v1497 = vrot.slane %v1495, 5
      %v1498 = vsel %vm330, %v1493, %v1497
      %v1499 = vshrl.u32 %v300, 16
      %v1501 = vrot.slane %v1499, 4
      %v1502 = vor.u32 %v1501, %v1497
      %v1503 = vrot.slane %v1502, 4
      %v1505 = vshll.u32 %v301, 16
      %v1507 = vrot.slane %v1505, 5
      %v1508 = vsel %vm330, %v1503, %v1507
      %v1509 = vshrl.u32 %v301, 16
      %v1511 = vrot.slane %v1509, 4
      %v1512 = vor.u32 %v1511, %v1507
      %v1513 = vrot.slane %v1512, 4
      %v1515 = vshll.u32 %v302, 16
      %v1517 = vrot.slane %v1515, 5
      %v1518 = vsel %vm330, %v1513, %v1517
      %v1520 = vshrl.u32 %v303, 16
      %v1522 = vrot.slane %v1520, 4
      %v1523 = vshll.u32 %v303, 16
      %v1525 = vrot.slane %v1523, 5
      %v1526 = vor.u32 %v1522, %v1525
      %v1527 = vrot.slane %v1526, 4
      %v1529 = vshll.u32 %v304, 16
      %v1531 = vrot.slane %v1529, 5
      %v1532 = vsel %vm330, %v1527, %v1531
      %v1533 = vshrl.u32 %v304, 16
      %v1535 = vrot.slane %v1533, 4
      %v1536 = vor.u32 %v1535, %v1531
      %v1537 = vrot.slane %v1536, 4
      %v1539 = vshll.u32 %v305, 16
      %v1541 = vrot.slane %v1539, 5
      %v1542 = vsel %vm330, %v1537, %v1541
      %v1543 = vshrl.u32 %v305, 16
      %v1545 = vrot.slane %v1543, 4
      %v1546 = vor.u32 %v1545, %v1541
      %v1547 = vrot.slane %v1546, 4
      %v1549 = vshll.u32 %v306, 16
      %v1551 = vrot.slane %v1549, 5
      %v1552 = vsel %vm330, %v1547, %v1551
      %v1553 = vshrl.u32 %v306, 16
      %v1555 = vrot.slane %v1553, 4
      %v1556 = vor.u32 %v1555, %v1551
      %v1557 = vrot.slane %v1556, 4
      %v1559 = vshll.u32 %v307, 16
      %v1561 = vrot.slane %v1559, 5
      %v1562 = vsel %vm330, %v1557, %v1561
      %v1564 = vshrl.u32 %v308, 16
      %v1566 = vrot.slane %v1564, 4
      %v1567 = vshll.u32 %v308, 16
      %v1569 = vrot.slane %v1567, 5
      %v1570 = vor.u32 %v1566, %v1569
      %v1571 = vrot.slane %v1570, 4
      %v1573 = vshll.u32 %v309, 16
      %v1575 = vrot.slane %v1573, 5
      %v1576 = vsel %vm330, %v1571, %v1575
      %v1577 = vshrl.u32 %v309, 16
      %v1579 = vrot.slane %v1577, 4
      %v1580 = vor.u32 %v1579, %v1575
      %v1581 = vrot.slane %v1580, 4
      %v1583 = vshll.u32 %v310, 16
      %v1585 = vrot.slane %v1583, 5
      %v1586 = vsel %vm330, %v1581, %v1585
      %v1587 = vshrl.u32 %v310, 16
      %v1589 = vrot.slane %v1587, 4
      %v1590 = vor.u32 %v1589, %v1585
      %v1591 = vrot.slane %v1590, 4
      %v1593 = vshll.u32 %v311, 16
      %v1595 = vrot.slane %v1593, 5
      %v1596 = vsel %vm330, %v1591, %v1595
      %v1597 = vshrl.u32 %v311, 16
      %v1599 = vrot.slane %v1597, 4
      %v1600 = vor.u32 %v1599, %v1595
      %v1601 = vrot.slane %v1600, 4
      %v1603 = vshll.u32 %v312, 16
      %v1605 = vrot.slane %v1603, 5
      %v1606 = vsel %vm330, %v1601, %v1605
      %v1608 = vshrl.u32 %v313, 16
      %v1610 = vrot.slane %v1608, 4
      %v1611 = vshll.u32 %v313, 16
      %v1613 = vrot.slane %v1611, 5
      %v1614 = vor.u32 %v1610, %v1613
      %v1615 = vrot.slane %v1614, 4
      %v1617 = vshll.u32 %v314, 16
      %v1619 = vrot.slane %v1617, 5
      %v1620 = vsel %vm330, %v1615, %v1619
      %v1621 = vshrl.u32 %v314, 16
      %v1623 = vrot.slane %v1621, 4
      %v1624 = vor.u32 %v1623, %v1619
      %v1625 = vrot.slane %v1624, 4
      %v1627 = vshll.u32 %v315, 16
      %v1629 = vrot.slane %v1627, 5
      %v1630 = vsel %vm330, %v1625, %v1629
      %v1631 = vshrl.u32 %v315, 16
      %v1633 = vrot.slane %v1631, 4
      %v1634 = vor.u32 %v1633, %v1629
      %v1635 = vrot.slane %v1634, 4
      %v1637 = vshll.u32 %v316, 16
      %v1639 = vrot.slane %v1637, 5
      %v1640 = vsel %vm330, %v1635, %v1639
      %v1641 = vshrl.u32 %v316, 16
      %v1643 = vrot.slane %v1641, 4
      %v1644 = vor.u32 %v1643, %v1639
      %v1645 = vrot.slane %v1644, 4
      %v1647 = vshll.u32 %v317, 16
      %v1649 = vrot.slane %v1647, 5
      %v1650 = vsel %vm330, %v1645, %v1649
      %v1652 = vshrl.u32 %v318, 16
      %v1654 = vrot.slane %v1652, 4
      %v1655 = vshll.u32 %v318, 16
      %v1657 = vrot.slane %v1655, 5
      %v1658 = vor.u32 %v1654, %v1657
      %v1659 = vrot.slane %v1658, 4
      %v1661 = vshll.u32 %v319, 16
      %v1663 = vrot.slane %v1661, 5
      %v1664 = vsel %vm330, %v1659, %v1663
      %v1665 = vshrl.u32 %v319, 16
      %v1667 = vrot.slane %v1665, 4
      %v1668 = vor.u32 %v1667, %v1663
      %v1669 = vrot.slane %v1668, 4
      %v1671 = vshll.u32 %v320, 16
      %v1673 = vrot.slane %v1671, 5
      %v1674 = vsel %vm330, %v1669, %v1673
      %v1675 = vshrl.u32 %v320, 16
      %v1677 = vrot.slane %v1675, 4
      %v1678 = vor.u32 %v1677, %v1673
      %v1679 = vrot.slane %v1678, 4
      %v1681 = vshll.u32 %v321, 16
      %v1683 = vrot.slane %v1681, 5
      %v1684 = vsel %vm330, %v1679, %v1683
      %v1685 = vshrl.u32 %v321, 16
      %v1687 = vrot.slane %v1685, 4
      %v1688 = vor.u32 %v1687, %v1683
      %v1689 = vrot.slane %v1688, 4
      %v1691 = vshll.u32 %v322, 16
      %v1693 = vrot.slane %v1691, 5
      %v1694 = vsel %vm330, %v1689, %v1693
      %v1696 = vshrl.u32 %v323, 16
      %v1698 = vrot.slane %v1696, 4
      %v1699 = vshll.u32 %v323, 16
      %v1701 = vrot.slane %v1699, 5
      %v1702 = vor.u32 %v1698, %v1701
      %v1703 = vrot.slane %v1702, 4
      %v1705 = vshll.u32 %v324, 16
      %v1707 = vrot.slane %v1705, 5
      %v1708 = vsel %vm330, %v1703, %v1707
      %v1709 = vshrl.u32 %v324, 16
      %v1711 = vrot.slane %v1709, 4
      %v1712 = vor.u32 %v1711, %v1707
      %v1713 = vrot.slane %v1712, 4
      %v1715 = vshll.u32 %v325, 16
      %v1717 = vrot.slane %v1715, 5
      %v1718 = vsel %vm330, %v1713, %v1717
      %v1719 = vshrl.u32 %v325, 16
      %v1721 = vrot.slane %v1719, 4
      %v1722 = vor.u32 %v1721, %v1717
      %v1723 = vrot.slane %v1722, 4
      %v1725 = vshll.u32 %v326, 16
      %v1727 = vrot.slane %v1725, 5
      %v1728 = vsel %vm330, %v1723, %v1727
      %v1729 = vshrl.u32 %v326, 16
      %v1731 = vrot.slane %v1729, 4
      %v1732 = vor.u32 %v1731, %v1727
      %v1733 = vrot.slane %v1732, 4
      %v1735 = vshll.u32 %v327, 16
      %v1737 = vrot.slane %v1735, 5
      %v1738 = vsel %vm330, %v1733, %v1737
      %s1739 = scalar_lea.vmem %s156, 20
      %v1740 = vld [vmem:[%s1739] sm:$0xf]
      %v1741 = vld [vmem:[%s1739 + $0x4] sm:$0xf]
      %v1742 = vld [vmem:[%s1739 + $0x8] sm:$0xf]
      %v1743 = vld [vmem:[%s1739 + $0xc] sm:$0xf]
      %v1744 = vld [vmem:[%s1739 + $0x10] sm:$0x1]
      %v1745 = vld [vmem:[%s1739 + $0x14] sm:$0xf]
      %v1746 = vld [vmem:[%s1739 + $0x18] sm:$0xf]
      %v1747 = vld [vmem:[%s1739 + $0x1c] sm:$0xf]
      %v1748 = vld [vmem:[%s1739 + $0x20] sm:$0xf]
      %v1749 = vld [vmem:[%s1739 + $0x24] sm:$0x1]
      %v1750 = vld [vmem:[%s1739 + $0x28] sm:$0xf]
      %v1751 = vld [vmem:[%s1739 + $0x2c] sm:$0xf]
      %v1752 = vld [vmem:[%s1739 + $0x30] sm:$0xf]
      %v1753 = vld [vmem:[%s1739 + $0x34] sm:$0xf]
      %v1754 = vld [vmem:[%s1739 + $0x38] sm:$0x1]
      %v1755 = vld [vmem:[%s1739 + $0x3c] sm:$0xf]
      %v1756 = vld [vmem:[%s1739 + $0x40] sm:$0xf]
      %v1757 = vld [vmem:[%s1739 + $0x44] sm:$0xf]
      %v1758 = vld [vmem:[%s1739 + $0x48] sm:$0xf]
      %v1759 = vld [vmem:[%s1739 + $0x4c] sm:$0x1]
      %v1760 = vld [vmem:[%s1739 + $0x50] sm:$0xf]
      %v1761 = vld [vmem:[%s1739 + $0x54] sm:$0xf]
      %v1762 = vld [vmem:[%s1739 + $0x58] sm:$0xf]
      %v1763 = vld [vmem:[%s1739 + $0x5c] sm:$0xf]
      %v1764 = vld [vmem:[%s1739 + $0x60] sm:$0x1]
      %v1765 = vld [vmem:[%s1739 + $0x64] sm:$0xf]
      %v1766 = vld [vmem:[%s1739 + $0x68] sm:$0xf]
      %v1767 = vld [vmem:[%s1739 + $0x6c] sm:$0xf]
      %v1768 = vld [vmem:[%s1739 + $0x70] sm:$0xf]
      %v1769 = vld [vmem:[%s1739 + $0x74] sm:$0x1]
      %v1770 = vld [vmem:[%s1739 + $0x78] sm:$0xf]
      %v1771 = vld [vmem:[%s1739 + $0x7c] sm:$0xf]
      %v1772 = vld [vmem:[%s1739 + $0x80] sm:$0xf]
      %v1773 = vld [vmem:[%s1739 + $0x84] sm:$0xf]
      %v1774 = vld [vmem:[%s1739 + $0x88] sm:$0x1]
      %v1775 = vld [vmem:[%s1739 + $0x8c] sm:$0xf]
      %v1776 = vld [vmem:[%s1739 + $0x90] sm:$0xf]
      %v1777 = vld [vmem:[%s1739 + $0x94] sm:$0xf]
      %v1778 = vld [vmem:[%s1739 + $0x98] sm:$0xf]
      %v1779 = vld [vmem:[%s1739 + $0x9c] sm:$0x1]
      %v1780 = vld [vmem:[%s1739 + $0xa0] sm:$0xf]
      %v1781 = vld [vmem:[%s1739 + $0xa4] sm:$0xf]
      %v1782 = vld [vmem:[%s1739 + $0xa8] sm:$0xf]
      %v1783 = vld [vmem:[%s1739 + $0xac] sm:$0xf]
      %v1784 = vld [vmem:[%s1739 + $0xb0] sm:$0x1]
      %v1785 = vld [vmem:[%s1739 + $0xb4] sm:$0xf]
      %v1786 = vld [vmem:[%s1739 + $0xb8] sm:$0xf]
      %v1787 = vld [vmem:[%s1739 + $0xbc] sm:$0xf]
      %v1788 = vld [vmem:[%s1739 + $0xc0] sm:$0xf]
      %v1789 = vld [vmem:[%s1739 + $0xc4] sm:$0x1]
      %v1790 = vld [vmem:[%s1739 + $0xc8] sm:$0xf]
      %v1791 = vld [vmem:[%s1739 + $0xcc] sm:$0xf]
      %v1792 = vld [vmem:[%s1739 + $0xd0] sm:$0xf]
      %v1793 = vld [vmem:[%s1739 + $0xd4] sm:$0xf]
      %v1794 = vld [vmem:[%s1739 + $0xd8] sm:$0x1]
      %v1795 = vld [vmem:[%s1739 + $0xdc] sm:$0xf]
      %v1796 = vld [vmem:[%s1739 + $0xe0] sm:$0xf]
      %v1797 = vld [vmem:[%s1739 + $0xe4] sm:$0xf]
      %v1798 = vld [vmem:[%s1739 + $0xe8] sm:$0xf]
      %v1799 = vld [vmem:[%s1739 + $0xec] sm:$0x1]
      %v1800 = vld [vmem:[%s1739 + $0xf0] sm:$0xf]
      %v1801 = vld [vmem:[%s1739 + $0xf4] sm:$0xf]
      %v1802 = vld [vmem:[%s1739 + $0xf8] sm:$0xf]
      %v1803 = vld [vmem:[%s1739 + $0xfc] sm:$0xf]
      %v1804 = vld [vmem:[%s1739 + $0x100] sm:$0x1]
      %v1805 = vld [vmem:[%s1739 + $0x104] sm:$0xf]
      %v1806 = vld [vmem:[%s1739 + $0x108] sm:$0xf]
      %v1807 = vld [vmem:[%s1739 + $0x10c] sm:$0xf]
      %v1808 = vld [vmem:[%s1739 + $0x110] sm:$0xf]
      %v1809 = vld [vmem:[%s1739 + $0x114] sm:$0x1]
      %v1810 = vld [vmem:[%s1739 + $0x118] sm:$0xf]
      %v1811 = vld [vmem:[%s1739 + $0x11c] sm:$0xf]
      %v1812 = vld [vmem:[%s1739 + $0x120] sm:$0xf]
      %v1813 = vld [vmem:[%s1739 + $0x124] sm:$0xf]
      %v1814 = vld [vmem:[%s1739 + $0x128] sm:$0x1]
      %v1815 = vld [vmem:[%s1739 + $0x12c] sm:$0xf]
      %v1816 = vld [vmem:[%s1739 + $0x130] sm:$0xf]
      %v1817 = vld [vmem:[%s1739 + $0x134] sm:$0xf]
      %v1818 = vld [vmem:[%s1739 + $0x138] sm:$0xf]
      %v1819 = vld [vmem:[%s1739 + $0x13c] sm:$0x1]
      %v1820 = vld [vmem:[%s1739 + $0x140] sm:$0xf]
      %v1821 = vld [vmem:[%s1739 + $0x144] sm:$0xf]
      %v1822 = vld [vmem:[%s1739 + $0x148] sm:$0xf]
      %v1823 = vld [vmem:[%s1739 + $0x14c] sm:$0xf]
      %v1824 = vld [vmem:[%s1739 + $0x150] sm:$0x1]
      %v1825 = vld [vmem:[%s1739 + $0x154] sm:$0xf]
      %v1826 = vld [vmem:[%s1739 + $0x158] sm:$0xf]
      %v1827 = vld [vmem:[%s1739 + $0x15c] sm:$0xf]
      %v1828 = vld [vmem:[%s1739 + $0x160] sm:$0xf]
      %v1829 = vld [vmem:[%s1739 + $0x164] sm:$0x1]
      %v1830 = vld [vmem:[%s1739 + $0x168] sm:$0xf]
      %v1831 = vld [vmem:[%s1739 + $0x16c] sm:$0xf]
      %v1832 = vld [vmem:[%s1739 + $0x170] sm:$0xf]
      %v1833 = vld [vmem:[%s1739 + $0x174] sm:$0xf]
      %v1834 = vld [vmem:[%s1739 + $0x178] sm:$0x1]
      %v1835 = vld [vmem:[%s1739 + $0x17c] sm:$0xf]
      %v1836 = vld [vmem:[%s1739 + $0x180] sm:$0xf]
      %v1837 = vld [vmem:[%s1739 + $0x184] sm:$0xf]
      %v1838 = vld [vmem:[%s1739 + $0x188] sm:$0xf]
      %v1839 = vld [vmem:[%s1739 + $0x18c] sm:$0x1]
      %v1840 = vld [vmem:[%s1739 + $0x190] sm:$0xf]
      %v1841 = vld [vmem:[%s1739 + $0x194] sm:$0xf]
      %v1842 = vld [vmem:[%s1739 + $0x198] sm:$0xf]
      %v1843 = vld [vmem:[%s1739 + $0x19c] sm:$0xf]
      %v1844 = vld [vmem:[%s1739 + $0x1a0] sm:$0x1]
      %v1845 = vld [vmem:[%s1739 + $0x1a4] sm:$0xf]
      %v1846 = vld [vmem:[%s1739 + $0x1a8] sm:$0xf]
      %v1847 = vld [vmem:[%s1739 + $0x1ac] sm:$0xf]
      %v1848 = vld [vmem:[%s1739 + $0x1b0] sm:$0xf]
      %v1849 = vld [vmem:[%s1739 + $0x1b4] sm:$0x1]
      %v1850 = vld [vmem:[%s1739 + $0x1b8] sm:$0xf]
      %v1851 = vld [vmem:[%s1739 + $0x1bc] sm:$0xf]
      %v1852 = vld [vmem:[%s1739 + $0x1c0] sm:$0xf]
      %v1853 = vld [vmem:[%s1739 + $0x1c4] sm:$0xf]
      %v1854 = vld [vmem:[%s1739 + $0x1c8] sm:$0x1]
      %v1855 = vld [vmem:[%s1739 + $0x1cc] sm:$0xf]
      %v1856 = vld [vmem:[%s1739 + $0x1d0] sm:$0xf]
      %v1857 = vld [vmem:[%s1739 + $0x1d4] sm:$0xf]
      %v1858 = vld [vmem:[%s1739 + $0x1d8] sm:$0xf]
      %v1859 = vld [vmem:[%s1739 + $0x1dc] sm:$0x1]
      %v1860 = vld [vmem:[%s1739 + $0x1e0] sm:$0xf]
      %v1861 = vld [vmem:[%s1739 + $0x1e4] sm:$0xf]
      %v1862 = vld [vmem:[%s1739 + $0x1e8] sm:$0xf]
      %v1863 = vld [vmem:[%s1739 + $0x1ec] sm:$0xf]
      %v1864 = vld [vmem:[%s1739 + $0x1f0] sm:$0x1]
      %v1865 = vld [vmem:[%s1739 + $0x1f4] sm:$0xf]
      %v1866 = vld [vmem:[%s1739 + $0x1f8] sm:$0xf]
      %v1867 = vld [vmem:[%s1739 + $0x1fc] sm:$0xf]
      %v1868 = vld [vmem:[%s1739 + $0x200] sm:$0xf]
      %v1869 = vld [vmem:[%s1739 + $0x204] sm:$0x1]
      %v1870 = vld [vmem:[%s1739 + $0x208] sm:$0xf]
      %v1871 = vld [vmem:[%s1739 + $0x20c] sm:$0xf]
      %v1872 = vld [vmem:[%s1739 + $0x210] sm:$0xf]
      %v1873 = vld [vmem:[%s1739 + $0x214] sm:$0xf]
      %v1874 = vld [vmem:[%s1739 + $0x218] sm:$0x1]
      %v1875 = vld [vmem:[%s1739 + $0x21c] sm:$0xf]
      %v1876 = vld [vmem:[%s1739 + $0x220] sm:$0xf]
      %v1877 = vld [vmem:[%s1739 + $0x224] sm:$0xf]
      %v1878 = vld [vmem:[%s1739 + $0x228] sm:$0xf]
      %v1879 = vld [vmem:[%s1739 + $0x22c] sm:$0x1]
      %v1880 = vld [vmem:[%s1739 + $0x230] sm:$0xf]
      %v1881 = vld [vmem:[%s1739 + $0x234] sm:$0xf]
      %v1882 = vld [vmem:[%s1739 + $0x238] sm:$0xf]
      %v1883 = vld [vmem:[%s1739 + $0x23c] sm:$0xf]
      %v1884 = vld [vmem:[%s1739 + $0x240] sm:$0x1]
      %v1885 = vld [vmem:[%s1739 + $0x244] sm:$0xf]
      %v1886 = vld [vmem:[%s1739 + $0x248] sm:$0xf]
      %v1887 = vld [vmem:[%s1739 + $0x24c] sm:$0xf]
      %v1888 = vld [vmem:[%s1739 + $0x250] sm:$0xf]
      %v1889 = vld [vmem:[%s1739 + $0x254] sm:$0x1]
      %v1890 = vld [vmem:[%s1739 + $0x258] sm:$0xf]
      %v1891 = vld [vmem:[%s1739 + $0x25c] sm:$0xf]
      %v1892 = vld [vmem:[%s1739 + $0x260] sm:$0xf]
      %v1893 = vld [vmem:[%s1739 + $0x264] sm:$0xf]
      %v1894 = vld [vmem:[%s1739 + $0x268] sm:$0x1]
      %v1895 = vld [vmem:[%s1739 + $0x26c] sm:$0xf]
      %v1896 = vld [vmem:[%s1739 + $0x270] sm:$0xf]
      %v1897 = vld [vmem:[%s1739 + $0x274] sm:$0xf]
      %v1898 = vld [vmem:[%s1739 + $0x278] sm:$0xf]
      %v1899 = vld [vmem:[%s1739 + $0x27c] sm:$0x1]
      %v1901 = vshrl.u32 %v1740, 16
      %v1903 = vrot.slane %v1901, 4
      %v1904 = vshll.u32 %v1740, 16
      %v1906 = vrot.slane %v1904, 5
      %v1907 = vor.u32 %v1903, %v1906
      %v1908 = vrot.slane %v1907, 4
      %v1910 = vshll.u32 %v1741, 16
      %v1912 = vrot.slane %v1910, 5
      %v1913 = vsel %vm330, %v1908, %v1912
      %v1914 = vshrl.u32 %v1741, 16
      %v1916 = vrot.slane %v1914, 4
      %v1917 = vor.u32 %v1916, %v1912
      %v1918 = vrot.slane %v1917, 4
      %v1920 = vshll.u32 %v1742, 16
      %v1922 = vrot.slane %v1920, 5
      %v1923 = vsel %vm330, %v1918, %v1922
      %v1924 = vshrl.u32 %v1742, 16
      %v1926 = vrot.slane %v1924, 4
      %v1927 = vor.u32 %v1926, %v1922
      %v1928 = vrot.slane %v1927, 4
      %v1930 = vshll.u32 %v1743, 16
      %v1932 = vrot.slane %v1930, 5
      %v1933 = vsel %vm330, %v1928, %v1932
      %v1934 = vshrl.u32 %v1743, 16
      %v1936 = vrot.slane %v1934, 4
      %v1937 = vor.u32 %v1936, %v1932
      %v1938 = vrot.slane %v1937, 4
      %v1940 = vshll.u32 %v1744, 16
      %v1942 = vrot.slane %v1940, 5
      %v1943 = vsel %vm330, %v1938, %v1942
      %v1945 = vshrl.u32 %v1745, 16
      %v1947 = vrot.slane %v1945, 4
      %v1948 = vshll.u32 %v1745, 16
      %v1950 = vrot.slane %v1948, 5
      %v1951 = vor.u32 %v1947, %v1950
      %v1952 = vrot.slane %v1951, 4
      %v1954 = vshll.u32 %v1746, 16
      %v1956 = vrot.slane %v1954, 5
      %v1957 = vsel %vm330, %v1952, %v1956
      %v1958 = vshrl.u32 %v1746, 16
      %v1960 = vrot.slane %v1958, 4
      %v1961 = vor.u32 %v1960, %v1956
      %v1962 = vrot.slane %v1961, 4
      %v1964 = vshll.u32 %v1747, 16
      %v1966 = vrot.slane %v1964, 5
      %v1967 = vsel %vm330, %v1962, %v1966
      %v1968 = vshrl.u32 %v1747, 16
      %v1970 = vrot.slane %v1968, 4
      %v1971 = vor.u32 %v1970, %v1966
      %v1972 = vrot.slane %v1971, 4
      %v1974 = vshll.u32 %v1748, 16
      %v1976 = vrot.slane %v1974, 5
      %v1977 = vsel %vm330, %v1972, %v1976
      %v1978 = vshrl.u32 %v1748, 16
      %v1980 = vrot.slane %v1978, 4
      %v1981 = vor.u32 %v1980, %v1976
      %v1982 = vrot.slane %v1981, 4
      %v1984 = vshll.u32 %v1749, 16
      %v1986 = vrot.slane %v1984, 5
      %v1987 = vsel %vm330, %v1982, %v1986
      %v1989 = vshrl.u32 %v1750, 16
      %v1991 = vrot.slane %v1989, 4
      %v1992 = vshll.u32 %v1750, 16
      %v1994 = vrot.slane %v1992, 5
      %v1995 = vor.u32 %v1991, %v1994
      %v1996 = vrot.slane %v1995, 4
      %v1998 = vshll.u32 %v1751, 16
      %v2000 = vrot.slane %v1998, 5
      %v2001 = vsel %vm330, %v1996, %v2000
      %v2002 = vshrl.u32 %v1751, 16
      %v2004 = vrot.slane %v2002, 4
      %v2005 = vor.u32 %v2004, %v2000
      %v2006 = vrot.slane %v2005, 4
      %v2008 = vshll.u32 %v1752, 16
      %v2010 = vrot.slane %v2008, 5
      %v2011 = vsel %vm330, %v2006, %v2010
      %v2012 = vshrl.u32 %v1752, 16
      %v2014 = vrot.slane %v2012, 4
      %v2015 = vor.u32 %v2014, %v2010
      %v2016 = vrot.slane %v2015, 4
      %v2018 = vshll.u32 %v1753, 16
      %v2020 = vrot.slane %v2018, 5
      %v2021 = vsel %vm330, %v2016, %v2020
      %v2022 = vshrl.u32 %v1753, 16
      %v2024 = vrot.slane %v2022, 4
      %v2025 = vor.u32 %v2024, %v2020
      %v2026 = vrot.slane %v2025, 4
      %v2028 = vshll.u32 %v1754, 16
      %v2030 = vrot.slane %v2028, 5
      %v2031 = vsel %vm330, %v2026, %v2030
      %v2033 = vshrl.u32 %v1755, 16
      %v2035 = vrot.slane %v2033, 4
      %v2036 = vshll.u32 %v1755, 16
      %v2038 = vrot.slane %v2036, 5
      %v2039 = vor.u32 %v2035, %v2038
      %v2040 = vrot.slane %v2039, 4
      %v2042 = vshll.u32 %v1756, 16
      %v2044 = vrot.slane %v2042, 5
      %v2045 = vsel %vm330, %v2040, %v2044
      %v2046 = vshrl.u32 %v1756, 16
      %v2048 = vrot.slane %v2046, 4
      %v2049 = vor.u32 %v2048, %v2044
      %v2050 = vrot.slane %v2049, 4
      %v2052 = vshll.u32 %v1757, 16
      %v2054 = vrot.slane %v2052, 5
      %v2055 = vsel %vm330, %v2050, %v2054
      %v2056 = vshrl.u32 %v1757, 16
      %v2058 = vrot.slane %v2056, 4
      %v2059 = vor.u32 %v2058, %v2054
      %v2060 = vrot.slane %v2059, 4
      %v2062 = vshll.u32 %v1758, 16
      %v2064 = vrot.slane %v2062, 5
      %v2065 = vsel %vm330, %v2060, %v2064
      %v2066 = vshrl.u32 %v1758, 16
      %v2068 = vrot.slane %v2066, 4
      %v2069 = vor.u32 %v2068, %v2064
      %v2070 = vrot.slane %v2069, 4
      %v2072 = vshll.u32 %v1759, 16
      %v2074 = vrot.slane %v2072, 5
      %v2075 = vsel %vm330, %v2070, %v2074
      %v2077 = vshrl.u32 %v1760, 16
      %v2079 = vrot.slane %v2077, 4
      %v2080 = vshll.u32 %v1760, 16
      %v2082 = vrot.slane %v2080, 5
      %v2083 = vor.u32 %v2079, %v2082
      %v2084 = vrot.slane %v2083, 4
      %v2086 = vshll.u32 %v1761, 16
      %v2088 = vrot.slane %v2086, 5
      %v2089 = vsel %vm330, %v2084, %v2088
      %v2090 = vshrl.u32 %v1761, 16
      %v2092 = vrot.slane %v2090, 4
      %v2093 = vor.u32 %v2092, %v2088
      %v2094 = vrot.slane %v2093, 4
      %v2096 = vshll.u32 %v1762, 16
      %v2098 = vrot.slane %v2096, 5
      %v2099 = vsel %vm330, %v2094, %v2098
      %v2100 = vshrl.u32 %v1762, 16
      %v2102 = vrot.slane %v2100, 4
      %v2103 = vor.u32 %v2102, %v2098
      %v2104 = vrot.slane %v2103, 4
      %v2106 = vshll.u32 %v1763, 16
      %v2108 = vrot.slane %v2106, 5
      %v2109 = vsel %vm330, %v2104, %v2108
      %v2110 = vshrl.u32 %v1763, 16
      %v2112 = vrot.slane %v2110, 4
      %v2113 = vor.u32 %v2112, %v2108
      %v2114 = vrot.slane %v2113, 4
      %v2116 = vshll.u32 %v1764, 16
      %v2118 = vrot.slane %v2116, 5
      %v2119 = vsel %vm330, %v2114, %v2118
      %v2121 = vshrl.u32 %v1765, 16
      %v2123 = vrot.slane %v2121, 4
      %v2124 = vshll.u32 %v1765, 16
      %v2126 = vrot.slane %v2124, 5
      %v2127 = vor.u32 %v2123, %v2126
      %v2128 = vrot.slane %v2127, 4
      %v2130 = vshll.u32 %v1766, 16
      %v2132 = vrot.slane %v2130, 5
      %v2133 = vsel %vm330, %v2128, %v2132
      %v2134 = vshrl.u32 %v1766, 16
      %v2136 = vrot.slane %v2134, 4
      %v2137 = vor.u32 %v2136, %v2132
      %v2138 = vrot.slane %v2137, 4
      %v2140 = vshll.u32 %v1767, 16
      %v2142 = vrot.slane %v2140, 5
      %v2143 = vsel %vm330, %v2138, %v2142
      %v2144 = vshrl.u32 %v1767, 16
      %v2146 = vrot.slane %v2144, 4
      %v2147 = vor.u32 %v2146, %v2142
      %v2148 = vrot.slane %v2147, 4
      %v2150 = vshll.u32 %v1768, 16
      %v2152 = vrot.slane %v2150, 5
      %v2153 = vsel %vm330, %v2148, %v2152
      %v2154 = vshrl.u32 %v1768, 16
      %v2156 = vrot.slane %v2154, 4
      %v2157 = vor.u32 %v2156, %v2152
      %v2158 = vrot.slane %v2157, 4
      %v2160 = vshll.u32 %v1769, 16
      %v2162 = vrot.slane %v2160, 5
      %v2163 = vsel %vm330, %v2158, %v2162
      %v2165 = vshrl.u32 %v1770, 16
      %v2167 = vrot.slane %v2165, 4
      %v2168 = vshll.u32 %v1770, 16
      %v2170 = vrot.slane %v2168, 5
      %v2171 = vor.u32 %v2167, %v2170
      %v2172 = vrot.slane %v2171, 4
      %v2174 = vshll.u32 %v1771, 16
      %v2176 = vrot.slane %v2174, 5
      %v2177 = vsel %vm330, %v2172, %v2176
      %v2178 = vshrl.u32 %v1771, 16
      %v2180 = vrot.slane %v2178, 4
      %v2181 = vor.u32 %v2180, %v2176
      %v2182 = vrot.slane %v2181, 4
      %v2184 = vshll.u32 %v1772, 16
      %v2186 = vrot.slane %v2184, 5
      %v2187 = vsel %vm330, %v2182, %v2186
      %v2188 = vshrl.u32 %v1772, 16
      %v2190 = vrot.slane %v2188, 4
      %v2191 = vor.u32 %v2190, %v2186
      %v2192 = vrot.slane %v2191, 4
      %v2194 = vshll.u32 %v1773, 16
      %v2196 = vrot.slane %v2194, 5
      %v2197 = vsel %vm330, %v2192, %v2196
      %v2198 = vshrl.u32 %v1773, 16
      %v2200 = vrot.slane %v2198, 4
      %v2201 = vor.u32 %v2200, %v2196
      %v2202 = vrot.slane %v2201, 4
      %v2204 = vshll.u32 %v1774, 16
      %v2206 = vrot.slane %v2204, 5
      %v2207 = vsel %vm330, %v2202, %v2206
      %v2209 = vshrl.u32 %v1775, 16
      %v2211 = vrot.slane %v2209, 4
      %v2212 = vshll.u32 %v1775, 16
      %v2214 = vrot.slane %v2212, 5
      %v2215 = vor.u32 %v2211, %v2214
      %v2216 = vrot.slane %v2215, 4
      %v2218 = vshll.u32 %v1776, 16
      %v2220 = vrot.slane %v2218, 5
      %v2221 = vsel %vm330, %v2216, %v2220
      %v2222 = vshrl.u32 %v1776, 16
      %v2224 = vrot.slane %v2222, 4
      %v2225 = vor.u32 %v2224, %v2220
      %v2226 = vrot.slane %v2225, 4
      %v2228 = vshll.u32 %v1777, 16
      %v2230 = vrot.slane %v2228, 5
      %v2231 = vsel %vm330, %v2226, %v2230
      %v2232 = vshrl.u32 %v1777, 16
      %v2234 = vrot.slane %v2232, 4
      %v2235 = vor.u32 %v2234, %v2230
      %v2236 = vrot.slane %v2235, 4
      %v2238 = vshll.u32 %v1778, 16
      %v2240 = vrot.slane %v2238, 5
      %v2241 = vsel %vm330, %v2236, %v2240
      %v2242 = vshrl.u32 %v1778, 16
      %v2244 = vrot.slane %v2242, 4
      %v2245 = vor.u32 %v2244, %v2240
      %v2246 = vrot.slane %v2245, 4
      %v2248 = vshll.u32 %v1779, 16
      %v2250 = vrot.slane %v2248, 5
      %v2251 = vsel %vm330, %v2246, %v2250
      %v2253 = vshrl.u32 %v1780, 16
      %v2255 = vrot.slane %v2253, 4
      %v2256 = vshll.u32 %v1780, 16
      %v2258 = vrot.slane %v2256, 5
      %v2259 = vor.u32 %v2255, %v2258
      %v2260 = vrot.slane %v2259, 4
      %v2262 = vshll.u32 %v1781, 16
      %v2264 = vrot.slane %v2262, 5
      %v2265 = vsel %vm330, %v2260, %v2264
      %v2266 = vshrl.u32 %v1781, 16
      %v2268 = vrot.slane %v2266, 4
      %v2269 = vor.u32 %v2268, %v2264
      %v2270 = vrot.slane %v2269, 4
      %v2272 = vshll.u32 %v1782, 16
      %v2274 = vrot.slane %v2272, 5
      %v2275 = vsel %vm330, %v2270, %v2274
      %v2276 = vshrl.u32 %v1782, 16
      %v2278 = vrot.slane %v2276, 4
      %v2279 = vor.u32 %v2278, %v2274
      %v2280 = vrot.slane %v2279, 4
      %v2282 = vshll.u32 %v1783, 16
      %v2284 = vrot.slane %v2282, 5
      %v2285 = vsel %vm330, %v2280, %v2284
      %v2286 = vshrl.u32 %v1783, 16
      %v2288 = vrot.slane %v2286, 4
      %v2289 = vor.u32 %v2288, %v2284
      %v2290 = vrot.slane %v2289, 4
      %v2292 = vshll.u32 %v1784, 16
      %v2294 = vrot.slane %v2292, 5
      %v2295 = vsel %vm330, %v2290, %v2294
      %v2297 = vshrl.u32 %v1785, 16
      %v2299 = vrot.slane %v2297, 4
      %v2300 = vshll.u32 %v1785, 16
      %v2302 = vrot.slane %v2300, 5
      %v2303 = vor.u32 %v2299, %v2302
      %v2304 = vrot.slane %v2303, 4
      %v2306 = vshll.u32 %v1786, 16
      %v2308 = vrot.slane %v2306, 5
      %v2309 = vsel %vm330, %v2304, %v2308
      %v2310 = vshrl.u32 %v1786, 16
      %v2312 = vrot.slane %v2310, 4
      %v2313 = vor.u32 %v2312, %v2308
      %v2314 = vrot.slane %v2313, 4
      %v2316 = vshll.u32 %v1787, 16
      %v2318 = vrot.slane %v2316, 5
      %v2319 = vsel %vm330, %v2314, %v2318
      %v2320 = vshrl.u32 %v1787, 16
      %v2322 = vrot.slane %v2320, 4
      %v2323 = vor.u32 %v2322, %v2318
      %v2324 = vrot.slane %v2323, 4
      %v2326 = vshll.u32 %v1788, 16
      %v2328 = vrot.slane %v2326, 5
      %v2329 = vsel %vm330, %v2324, %v2328
      %v2330 = vshrl.u32 %v1788, 16
      %v2332 = vrot.slane %v2330, 4
      %v2333 = vor.u32 %v2332, %v2328
      %v2334 = vrot.slane %v2333, 4
      %v2336 = vshll.u32 %v1789, 16
      %v2338 = vrot.slane %v2336, 5
      %v2339 = vsel %vm330, %v2334, %v2338
      %v2341 = vshrl.u32 %v1790, 16
      %v2343 = vrot.slane %v2341, 4
      %v2344 = vshll.u32 %v1790, 16
      %v2346 = vrot.slane %v2344, 5
      %v2347 = vor.u32 %v2343, %v2346
      %v2348 = vrot.slane %v2347, 4
      %v2350 = vshll.u32 %v1791, 16
      %v2352 = vrot.slane %v2350, 5
      %v2353 = vsel %vm330, %v2348, %v2352
      %v2354 = vshrl.u32 %v1791, 16
      %v2356 = vrot.slane %v2354, 4
      %v2357 = vor.u32 %v2356, %v2352
      %v2358 = vrot.slane %v2357, 4
      %v2360 = vshll.u32 %v1792, 16
      %v2362 = vrot.slane %v2360, 5
      %v2363 = vsel %vm330, %v2358, %v2362
      %v2364 = vshrl.u32 %v1792, 16
      %v2366 = vrot.slane %v2364, 4
      %v2367 = vor.u32 %v2366, %v2362
      %v2368 = vrot.slane %v2367, 4
      %v2370 = vshll.u32 %v1793, 16
      %v2372 = vrot.slane %v2370, 5
      %v2373 = vsel %vm330, %v2368, %v2372
      %v2374 = vshrl.u32 %v1793, 16
      %v2376 = vrot.slane %v2374, 4
      %v2377 = vor.u32 %v2376, %v2372
      %v2378 = vrot.slane %v2377, 4
      %v2380 = vshll.u32 %v1794, 16
      %v2382 = vrot.slane %v2380, 5
      %v2383 = vsel %vm330, %v2378, %v2382
      %v2385 = vshrl.u32 %v1795, 16
      %v2387 = vrot.slane %v2385, 4
      %v2388 = vshll.u32 %v1795, 16
      %v2390 = vrot.slane %v2388, 5
      %v2391 = vor.u32 %v2387, %v2390
      %v2392 = vrot.slane %v2391, 4
      %v2394 = vshll.u32 %v1796, 16
      %v2396 = vrot.slane %v2394, 5
      %v2397 = vsel %vm330, %v2392, %v2396
      %v2398 = vshrl.u32 %v1796, 16
      %v2400 = vrot.slane %v2398, 4
      %v2401 = vor.u32 %v2400, %v2396
      %v2402 = vrot.slane %v2401, 4
      %v2404 = vshll.u32 %v1797, 16
      %v2406 = vrot.slane %v2404, 5
      %v2407 = vsel %vm330, %v2402, %v2406
      %v2408 = vshrl.u32 %v1797, 16
      %v2410 = vrot.slane %v2408, 4
      %v2411 = vor.u32 %v2410, %v2406
      %v2412 = vrot.slane %v2411, 4
      %v2414 = vshll.u32 %v1798, 16
      %v2416 = vrot.slane %v2414, 5
      %v2417 = vsel %vm330, %v2412, %v2416
      %v2418 = vshrl.u32 %v1798, 16
      %v2420 = vrot.slane %v2418, 4
      %v2421 = vor.u32 %v2420, %v2416
      %v2422 = vrot.slane %v2421, 4
      %v2424 = vshll.u32 %v1799, 16
      %v2426 = vrot.slane %v2424, 5
      %v2427 = vsel %vm330, %v2422, %v2426
      %v2429 = vshrl.u32 %v1800, 16
      %v2431 = vrot.slane %v2429, 4
      %v2432 = vshll.u32 %v1800, 16
      %v2434 = vrot.slane %v2432, 5
      %v2435 = vor.u32 %v2431, %v2434
      %v2436 = vrot.slane %v2435, 4
      %v2438 = vshll.u32 %v1801, 16
      %v2440 = vrot.slane %v2438, 5
      %v2441 = vsel %vm330, %v2436, %v2440
      %v2442 = vshrl.u32 %v1801, 16
      %v2444 = vrot.slane %v2442, 4
      %v2445 = vor.u32 %v2444, %v2440
      %v2446 = vrot.slane %v2445, 4
      %v2448 = vshll.u32 %v1802, 16
      %v2450 = vrot.slane %v2448, 5
      %v2451 = vsel %vm330, %v2446, %v2450
      %v2452 = vshrl.u32 %v1802, 16
      %v2454 = vrot.slane %v2452, 4
      %v2455 = vor.u32 %v2454, %v2450
      %v2456 = vrot.slane %v2455, 4
      %v2458 = vshll.u32 %v1803, 16
      %v2460 = vrot.slane %v2458, 5
      %v2461 = vsel %vm330, %v2456, %v2460
      %v2462 = vshrl.u32 %v1803, 16
      %v2464 = vrot.slane %v2462, 4
      %v2465 = vor.u32 %v2464, %v2460
      %v2466 = vrot.slane %v2465, 4
      %v2468 = vshll.u32 %v1804, 16
      %v2470 = vrot.slane %v2468, 5
      %v2471 = vsel %vm330, %v2466, %v2470
      %v2473 = vshrl.u32 %v1805, 16
      %v2475 = vrot.slane %v2473, 4
      %v2476 = vshll.u32 %v1805, 16
      %v2478 = vrot.slane %v2476, 5
      %v2479 = vor.u32 %v2475, %v2478
      %v2480 = vrot.slane %v2479, 4
      %v2482 = vshll.u32 %v1806, 16
      %v2484 = vrot.slane %v2482, 5
      %v2485 = vsel %vm330, %v2480, %v2484
      %v2486 = vshrl.u32 %v1806, 16
      %v2488 = vrot.slane %v2486, 4
      %v2489 = vor.u32 %v2488, %v2484
      %v2490 = vrot.slane %v2489, 4
      %v2492 = vshll.u32 %v1807, 16
      %v2494 = vrot.slane %v2492, 5
      %v2495 = vsel %vm330, %v2490, %v2494
      %v2496 = vshrl.u32 %v1807, 16
      %v2498 = vrot.slane %v2496, 4
      %v2499 = vor.u32 %v2498, %v2494
      %v2500 = vrot.slane %v2499, 4
      %v2502 = vshll.u32 %v1808, 16
      %v2504 = vrot.slane %v2502, 5
      %v2505 = vsel %vm330, %v2500, %v2504
      %v2506 = vshrl.u32 %v1808, 16
      %v2508 = vrot.slane %v2506, 4
      %v2509 = vor.u32 %v2508, %v2504
      %v2510 = vrot.slane %v2509, 4
      %v2512 = vshll.u32 %v1809, 16
      %v2514 = vrot.slane %v2512, 5
      %v2515 = vsel %vm330, %v2510, %v2514
      %v2517 = vshrl.u32 %v1810, 16
      %v2519 = vrot.slane %v2517, 4
      %v2520 = vshll.u32 %v1810, 16
      %v2522 = vrot.slane %v2520, 5
      %v2523 = vor.u32 %v2519, %v2522
      %v2524 = vrot.slane %v2523, 4
      %v2526 = vshll.u32 %v1811, 16
      %v2528 = vrot.slane %v2526, 5
      %v2529 = vsel %vm330, %v2524, %v2528
      %v2530 = vshrl.u32 %v1811, 16
      %v2532 = vrot.slane %v2530, 4
      %v2533 = vor.u32 %v2532, %v2528
      %v2534 = vrot.slane %v2533, 4
      %v2536 = vshll.u32 %v1812, 16
      %v2538 = vrot.slane %v2536, 5
      %v2539 = vsel %vm330, %v2534, %v2538
      %v2540 = vshrl.u32 %v1812, 16
      %v2542 = vrot.slane %v2540, 4
      %v2543 = vor.u32 %v2542, %v2538
      %v2544 = vrot.slane %v2543, 4
      %v2546 = vshll.u32 %v1813, 16
      %v2548 = vrot.slane %v2546, 5
      %v2549 = vsel %vm330, %v2544, %v2548
      %v2550 = vshrl.u32 %v1813, 16
      %v2552 = vrot.slane %v2550, 4
      %v2553 = vor.u32 %v2552, %v2548
      %v2554 = vrot.slane %v2553, 4
      %v2556 = vshll.u32 %v1814, 16
      %v2558 = vrot.slane %v2556, 5
      %v2559 = vsel %vm330, %v2554, %v2558
      %v2561 = vshrl.u32 %v1815, 16
      %v2563 = vrot.slane %v2561, 4
      %v2564 = vshll.u32 %v1815, 16
      %v2566 = vrot.slane %v2564, 5
      %v2567 = vor.u32 %v2563, %v2566
      %v2568 = vrot.slane %v2567, 4
      %v2570 = vshll.u32 %v1816, 16
      %v2572 = vrot.slane %v2570, 5
      %v2573 = vsel %vm330, %v2568, %v2572
      %v2574 = vshrl.u32 %v1816, 16
      %v2576 = vrot.slane %v2574, 4
      %v2577 = vor.u32 %v2576, %v2572
      %v2578 = vrot.slane %v2577, 4
      %v2580 = vshll.u32 %v1817, 16
      %v2582 = vrot.slane %v2580, 5
      %v2583 = vsel %vm330, %v2578, %v2582
      %v2584 = vshrl.u32 %v1817, 16
      %v2586 = vrot.slane %v2584, 4
      %v2587 = vor.u32 %v2586, %v2582
      %v2588 = vrot.slane %v2587, 4
      %v2590 = vshll.u32 %v1818, 16
      %v2592 = vrot.slane %v2590, 5
      %v2593 = vsel %vm330, %v2588, %v2592
      %v2594 = vshrl.u32 %v1818, 16
      %v2596 = vrot.slane %v2594, 4
      %v2597 = vor.u32 %v2596, %v2592
      %v2598 = vrot.slane %v2597, 4
      %v2600 = vshll.u32 %v1819, 16
      %v2602 = vrot.slane %v2600, 5
      %v2603 = vsel %vm330, %v2598, %v2602
      %v2605 = vshrl.u32 %v1820, 16
      %v2607 = vrot.slane %v2605, 4
      %v2608 = vshll.u32 %v1820, 16
      %v2610 = vrot.slane %v2608, 5
      %v2611 = vor.u32 %v2607, %v2610
      %v2612 = vrot.slane %v2611, 4
      %v2614 = vshll.u32 %v1821, 16
      %v2616 = vrot.slane %v2614, 5
      %v2617 = vsel %vm330, %v2612, %v2616
      %v2618 = vshrl.u32 %v1821, 16
      %v2620 = vrot.slane %v2618, 4
      %v2621 = vor.u32 %v2620, %v2616
      %v2622 = vrot.slane %v2621, 4
      %v2624 = vshll.u32 %v1822, 16
      %v2626 = vrot.slane %v2624, 5
      %v2627 = vsel %vm330, %v2622, %v2626
      %v2628 = vshrl.u32 %v1822, 16
      %v2630 = vrot.slane %v2628, 4
      %v2631 = vor.u32 %v2630, %v2626
      %v2632 = vrot.slane %v2631, 4
      %v2634 = vshll.u32 %v1823, 16
      %v2636 = vrot.slane %v2634, 5
      %v2637 = vsel %vm330, %v2632, %v2636
      %v2638 = vshrl.u32 %v1823, 16
      %v2640 = vrot.slane %v2638, 4
      %v2641 = vor.u32 %v2640, %v2636
      %v2642 = vrot.slane %v2641, 4
      %v2644 = vshll.u32 %v1824, 16
      %v2646 = vrot.slane %v2644, 5
      %v2647 = vsel %vm330, %v2642, %v2646
      %v2649 = vshrl.u32 %v1825, 16
      %v2651 = vrot.slane %v2649, 4
      %v2652 = vshll.u32 %v1825, 16
      %v2654 = vrot.slane %v2652, 5
      %v2655 = vor.u32 %v2651, %v2654
      %v2656 = vrot.slane %v2655, 4
      %v2658 = vshll.u32 %v1826, 16
      %v2660 = vrot.slane %v2658, 5
      %v2661 = vsel %vm330, %v2656, %v2660
      %v2662 = vshrl.u32 %v1826, 16
      %v2664 = vrot.slane %v2662, 4
      %v2665 = vor.u32 %v2664, %v2660
      %v2666 = vrot.slane %v2665, 4
      %v2668 = vshll.u32 %v1827, 16
      %v2670 = vrot.slane %v2668, 5
      %v2671 = vsel %vm330, %v2666, %v2670
      %v2672 = vshrl.u32 %v1827, 16
      %v2674 = vrot.slane %v2672, 4
      %v2675 = vor.u32 %v2674, %v2670
      %v2676 = vrot.slane %v2675, 4
      %v2678 = vshll.u32 %v1828, 16
      %v2680 = vrot.slane %v2678, 5
      %v2681 = vsel %vm330, %v2676, %v2680
      %v2682 = vshrl.u32 %v1828, 16
      %v2684 = vrot.slane %v2682, 4
      %v2685 = vor.u32 %v2684, %v2680
      %v2686 = vrot.slane %v2685, 4
      %v2688 = vshll.u32 %v1829, 16
      %v2690 = vrot.slane %v2688, 5
      %v2691 = vsel %vm330, %v2686, %v2690
      %v2693 = vshrl.u32 %v1830, 16
      %v2695 = vrot.slane %v2693, 4
      %v2696 = vshll.u32 %v1830, 16
      %v2698 = vrot.slane %v2696, 5
      %v2699 = vor.u32 %v2695, %v2698
      %v2700 = vrot.slane %v2699, 4
      %v2702 = vshll.u32 %v1831, 16
      %v2704 = vrot.slane %v2702, 5
      %v2705 = vsel %vm330, %v2700, %v2704
      %v2706 = vshrl.u32 %v1831, 16
      %v2708 = vrot.slane %v2706, 4
      %v2709 = vor.u32 %v2708, %v2704
      %v2710 = vrot.slane %v2709, 4
      %v2712 = vshll.u32 %v1832, 16
      %v2714 = vrot.slane %v2712, 5
      %v2715 = vsel %vm330, %v2710, %v2714
      %v2716 = vshrl.u32 %v1832, 16
      %v2718 = vrot.slane %v2716, 4
      %v2719 = vor.u32 %v2718, %v2714
      %v2720 = vrot.slane %v2719, 4
      %v2722 = vshll.u32 %v1833, 16
      %v2724 = vrot.slane %v2722, 5
      %v2725 = vsel %vm330, %v2720, %v2724
      %v2726 = vshrl.u32 %v1833, 16
      %v2728 = vrot.slane %v2726, 4
      %v2729 = vor.u32 %v2728, %v2724
      %v2730 = vrot.slane %v2729, 4
      %v2732 = vshll.u32 %v1834, 16
      %v2734 = vrot.slane %v2732, 5
      %v2735 = vsel %vm330, %v2730, %v2734
      %v2737 = vshrl.u32 %v1835, 16
      %v2739 = vrot.slane %v2737, 4
      %v2740 = vshll.u32 %v1835, 16
      %v2742 = vrot.slane %v2740, 5
      %v2743 = vor.u32 %v2739, %v2742
      %v2744 = vrot.slane %v2743, 4
      %v2746 = vshll.u32 %v1836, 16
      %v2748 = vrot.slane %v2746, 5
      %v2749 = vsel %vm330, %v2744, %v2748
      %v2750 = vshrl.u32 %v1836, 16
      %v2752 = vrot.slane %v2750, 4
      %v2753 = vor.u32 %v2752, %v2748
      %v2754 = vrot.slane %v2753, 4
      %v2756 = vshll.u32 %v1837, 16
      %v2758 = vrot.slane %v2756, 5
      %v2759 = vsel %vm330, %v2754, %v2758
      %v2760 = vshrl.u32 %v1837, 16
      %v2762 = vrot.slane %v2760, 4
      %v2763 = vor.u32 %v2762, %v2758
      %v2764 = vrot.slane %v2763, 4
      %v2766 = vshll.u32 %v1838, 16
      %v2768 = vrot.slane %v2766, 5
      %v2769 = vsel %vm330, %v2764, %v2768
      %v2770 = vshrl.u32 %v1838, 16
      %v2772 = vrot.slane %v2770, 4
      %v2773 = vor.u32 %v2772, %v2768
      %v2774 = vrot.slane %v2773, 4
      %v2776 = vshll.u32 %v1839, 16
      %v2778 = vrot.slane %v2776, 5
      %v2779 = vsel %vm330, %v2774, %v2778
      %v2781 = vshrl.u32 %v1840, 16
      %v2783 = vrot.slane %v2781, 4
      %v2784 = vshll.u32 %v1840, 16
      %v2786 = vrot.slane %v2784, 5
      %v2787 = vor.u32 %v2783, %v2786
      %v2788 = vrot.slane %v2787, 4
      %v2790 = vshll.u32 %v1841, 16
      %v2792 = vrot.slane %v2790, 5
      %v2793 = vsel %vm330, %v2788, %v2792
      %v2794 = vshrl.u32 %v1841, 16
      %v2796 = vrot.slane %v2794, 4
      %v2797 = vor.u32 %v2796, %v2792
      %v2798 = vrot.slane %v2797, 4
      %v2800 = vshll.u32 %v1842, 16
      %v2802 = vrot.slane %v2800, 5
      %v2803 = vsel %vm330, %v2798, %v2802
      %v2804 = vshrl.u32 %v1842, 16
      %v2806 = vrot.slane %v2804, 4
      %v2807 = vor.u32 %v2806, %v2802
      %v2808 = vrot.slane %v2807, 4
      %v2810 = vshll.u32 %v1843, 16
      %v2812 = vrot.slane %v2810, 5
      %v2813 = vsel %vm330, %v2808, %v2812
      %v2814 = vshrl.u32 %v1843, 16
      %v2816 = vrot.slane %v2814, 4
      %v2817 = vor.u32 %v2816, %v2812
      %v2818 = vrot.slane %v2817, 4
      %v2820 = vshll.u32 %v1844, 16
      %v2822 = vrot.slane %v2820, 5
      %v2823 = vsel %vm330, %v2818, %v2822
      %v2825 = vshrl.u32 %v1845, 16
      %v2827 = vrot.slane %v2825, 4
      %v2828 = vshll.u32 %v1845, 16
      %v2830 = vrot.slane %v2828, 5
      %v2831 = vor.u32 %v2827, %v2830
      %v2832 = vrot.slane %v2831, 4
      %v2834 = vshll.u32 %v1846, 16
      %v2836 = vrot.slane %v2834, 5
      %v2837 = vsel %vm330, %v2832, %v2836
      %v2838 = vshrl.u32 %v1846, 16
      %v2840 = vrot.slane %v2838, 4
      %v2841 = vor.u32 %v2840, %v2836
      %v2842 = vrot.slane %v2841, 4
      %v2844 = vshll.u32 %v1847, 16
      %v2846 = vrot.slane %v2844, 5
      %v2847 = vsel %vm330, %v2842, %v2846
      %v2848 = vshrl.u32 %v1847, 16
      %v2850 = vrot.slane %v2848, 4
      %v2851 = vor.u32 %v2850, %v2846
      %v2852 = vrot.slane %v2851, 4
      %v2854 = vshll.u32 %v1848, 16
      %v2856 = vrot.slane %v2854, 5
      %v2857 = vsel %vm330, %v2852, %v2856
      %v2858 = vshrl.u32 %v1848, 16
      %v2860 = vrot.slane %v2858, 4
      %v2861 = vor.u32 %v2860, %v2856
      %v2862 = vrot.slane %v2861, 4
      %v2864 = vshll.u32 %v1849, 16
      %v2866 = vrot.slane %v2864, 5
      %v2867 = vsel %vm330, %v2862, %v2866
      %v2869 = vshrl.u32 %v1850, 16
      %v2871 = vrot.slane %v2869, 4
      %v2872 = vshll.u32 %v1850, 16
      %v2874 = vrot.slane %v2872, 5
      %v2875 = vor.u32 %v2871, %v2874
      %v2876 = vrot.slane %v2875, 4
      %v2878 = vshll.u32 %v1851, 16
      %v2880 = vrot.slane %v2878, 5
      %v2881 = vsel %vm330, %v2876, %v2880
      %v2882 = vshrl.u32 %v1851, 16
      %v2884 = vrot.slane %v2882, 4
      %v2885 = vor.u32 %v2884, %v2880
      %v2886 = vrot.slane %v2885, 4
      %v2888 = vshll.u32 %v1852, 16
      %v2890 = vrot.slane %v2888, 5
      %v2891 = vsel %vm330, %v2886, %v2890
      %v2892 = vshrl.u32 %v1852, 16
      %v2894 = vrot.slane %v2892, 4
      %v2895 = vor.u32 %v2894, %v2890
      %v2896 = vrot.slane %v2895, 4
      %v2898 = vshll.u32 %v1853, 16
      %v2900 = vrot.slane %v2898, 5
      %v2901 = vsel %vm330, %v2896, %v2900
      %v2902 = vshrl.u32 %v1853, 16
      %v2904 = vrot.slane %v2902, 4
      %v2905 = vor.u32 %v2904, %v2900
      %v2906 = vrot.slane %v2905, 4
      %v2908 = vshll.u32 %v1854, 16
      %v2910 = vrot.slane %v2908, 5
      %v2911 = vsel %vm330, %v2906, %v2910
      %v2913 = vshrl.u32 %v1855, 16
      %v2915 = vrot.slane %v2913, 4
      %v2916 = vshll.u32 %v1855, 16
      %v2918 = vrot.slane %v2916, 5
      %v2919 = vor.u32 %v2915, %v2918
      %v2920 = vrot.slane %v2919, 4
      %v2922 = vshll.u32 %v1856, 16
      %v2924 = vrot.slane %v2922, 5
      %v2925 = vsel %vm330, %v2920, %v2924
      %v2926 = vshrl.u32 %v1856, 16
      %v2928 = vrot.slane %v2926, 4
      %v2929 = vor.u32 %v2928, %v2924
      %v2930 = vrot.slane %v2929, 4
      %v2932 = vshll.u32 %v1857, 16
      %v2934 = vrot.slane %v2932, 5
      %v2935 = vsel %vm330, %v2930, %v2934
      %v2936 = vshrl.u32 %v1857, 16
      %v2938 = vrot.slane %v2936, 4
      %v2939 = vor.u32 %v2938, %v2934
      %v2940 = vrot.slane %v2939, 4
      %v2942 = vshll.u32 %v1858, 16
      %v2944 = vrot.slane %v2942, 5
      %v2945 = vsel %vm330, %v2940, %v2944
      %v2946 = vshrl.u32 %v1858, 16
      %v2948 = vrot.slane %v2946, 4
      %v2949 = vor.u32 %v2948, %v2944
      %v2950 = vrot.slane %v2949, 4
      %v2952 = vshll.u32 %v1859, 16
      %v2954 = vrot.slane %v2952, 5
      %v2955 = vsel %vm330, %v2950, %v2954
      %v2957 = vshrl.u32 %v1860, 16
      %v2959 = vrot.slane %v2957, 4
      %v2960 = vshll.u32 %v1860, 16
      %v2962 = vrot.slane %v2960, 5
      %v2963 = vor.u32 %v2959, %v2962
      %v2964 = vrot.slane %v2963, 4
      %v2966 = vshll.u32 %v1861, 16
      %v2968 = vrot.slane %v2966, 5
      %v2969 = vsel %vm330, %v2964, %v2968
      %v2970 = vshrl.u32 %v1861, 16
      %v2972 = vrot.slane %v2970, 4
      %v2973 = vor.u32 %v2972, %v2968
      %v2974 = vrot.slane %v2973, 4
      %v2976 = vshll.u32 %v1862, 16
      %v2978 = vrot.slane %v2976, 5
      %v2979 = vsel %vm330, %v2974, %v2978
      %v2980 = vshrl.u32 %v1862, 16
      %v2982 = vrot.slane %v2980, 4
      %v2983 = vor.u32 %v2982, %v2978
      %v2984 = vrot.slane %v2983, 4
      %v2986 = vshll.u32 %v1863, 16
      %v2988 = vrot.slane %v2986, 5
      %v2989 = vsel %vm330, %v2984, %v2988
      %v2990 = vshrl.u32 %v1863, 16
      %v2992 = vrot.slane %v2990, 4
      %v2993 = vor.u32 %v2992, %v2988
      %v2994 = vrot.slane %v2993, 4
      %v2996 = vshll.u32 %v1864, 16
      %v2998 = vrot.slane %v2996, 5
      %v2999 = vsel %vm330, %v2994, %v2998
      %v3001 = vshrl.u32 %v1865, 16
      %v3003 = vrot.slane %v3001, 4
      %v3004 = vshll.u32 %v1865, 16
      %v3006 = vrot.slane %v3004, 5
      %v3007 = vor.u32 %v3003, %v3006
      %v3008 = vrot.slane %v3007, 4
      %v3010 = vshll.u32 %v1866, 16
      %v3012 = vrot.slane %v3010, 5
      %v3013 = vsel %vm330, %v3008, %v3012
      %v3014 = vshrl.u32 %v1866, 16
      %v3016 = vrot.slane %v3014, 4
      %v3017 = vor.u32 %v3016, %v3012
      %v3018 = vrot.slane %v3017, 4
      %v3020 = vshll.u32 %v1867, 16
      %v3022 = vrot.slane %v3020, 5
      %v3023 = vsel %vm330, %v3018, %v3022
      %v3024 = vshrl.u32 %v1867, 16
      %v3026 = vrot.slane %v3024, 4
      %v3027 = vor.u32 %v3026, %v3022
      %v3028 = vrot.slane %v3027, 4
      %v3030 = vshll.u32 %v1868, 16
      %v3032 = vrot.slane %v3030, 5
      %v3033 = vsel %vm330, %v3028, %v3032
      %v3034 = vshrl.u32 %v1868, 16
      %v3036 = vrot.slane %v3034, 4
      %v3037 = vor.u32 %v3036, %v3032
      %v3038 = vrot.slane %v3037, 4
      %v3040 = vshll.u32 %v1869, 16
      %v3042 = vrot.slane %v3040, 5
      %v3043 = vsel %vm330, %v3038, %v3042
      %v3045 = vshrl.u32 %v1870, 16
      %v3047 = vrot.slane %v3045, 4
      %v3048 = vshll.u32 %v1870, 16
      %v3050 = vrot.slane %v3048, 5
      %v3051 = vor.u32 %v3047, %v3050
      %v3052 = vrot.slane %v3051, 4
      %v3054 = vshll.u32 %v1871, 16
      %v3056 = vrot.slane %v3054, 5
      %v3057 = vsel %vm330, %v3052, %v3056
      %v3058 = vshrl.u32 %v1871, 16
      %v3060 = vrot.slane %v3058, 4
      %v3061 = vor.u32 %v3060, %v3056
      %v3062 = vrot.slane %v3061, 4
      %v3064 = vshll.u32 %v1872, 16
      %v3066 = vrot.slane %v3064, 5
      %v3067 = vsel %vm330, %v3062, %v3066
      %v3068 = vshrl.u32 %v1872, 16
      %v3070 = vrot.slane %v3068, 4
      %v3071 = vor.u32 %v3070, %v3066
      %v3072 = vrot.slane %v3071, 4
      %v3074 = vshll.u32 %v1873, 16
      %v3076 = vrot.slane %v3074, 5
      %v3077 = vsel %vm330, %v3072, %v3076
      %v3078 = vshrl.u32 %v1873, 16
      %v3080 = vrot.slane %v3078, 4
      %v3081 = vor.u32 %v3080, %v3076
      %v3082 = vrot.slane %v3081, 4
      %v3084 = vshll.u32 %v1874, 16
      %v3086 = vrot.slane %v3084, 5
      %v3087 = vsel %vm330, %v3082, %v3086
      %v3089 = vshrl.u32 %v1875, 16
      %v3091 = vrot.slane %v3089, 4
      %v3092 = vshll.u32 %v1875, 16
      %v3094 = vrot.slane %v3092, 5
      %v3095 = vor.u32 %v3091, %v3094
      %v3096 = vrot.slane %v3095, 4
      %v3098 = vshll.u32 %v1876, 16
      %v3100 = vrot.slane %v3098, 5
      %v3101 = vsel %vm330, %v3096, %v3100
      %v3102 = vshrl.u32 %v1876, 16
      %v3104 = vrot.slane %v3102, 4
      %v3105 = vor.u32 %v3104, %v3100
      %v3106 = vrot.slane %v3105, 4
      %v3108 = vshll.u32 %v1877, 16
      %v3110 = vrot.slane %v3108, 5
      %v3111 = vsel %vm330, %v3106, %v3110
      %v3112 = vshrl.u32 %v1877, 16
      %v3114 = vrot.slane %v3112, 4
      %v3115 = vor.u32 %v3114, %v3110
      %v3116 = vrot.slane %v3115, 4
      %v3118 = vshll.u32 %v1878, 16
      %v3120 = vrot.slane %v3118, 5
      %v3121 = vsel %vm330, %v3116, %v3120
      %v3122 = vshrl.u32 %v1878, 16
      %v3124 = vrot.slane %v3122, 4
      %v3125 = vor.u32 %v3124, %v3120
      %v3126 = vrot.slane %v3125, 4
      %v3128 = vshll.u32 %v1879, 16
      %v3130 = vrot.slane %v3128, 5
      %v3131 = vsel %vm330, %v3126, %v3130
      %v3133 = vshrl.u32 %v1880, 16
      %v3135 = vrot.slane %v3133, 4
      %v3136 = vshll.u32 %v1880, 16
      %v3138 = vrot.slane %v3136, 5
      %v3139 = vor.u32 %v3135, %v3138
      %v3140 = vrot.slane %v3139, 4
      %v3142 = vshll.u32 %v1881, 16
      %v3144 = vrot.slane %v3142, 5
      %v3145 = vsel %vm330, %v3140, %v3144
      %v3146 = vshrl.u32 %v1881, 16
      %v3148 = vrot.slane %v3146, 4
      %v3149 = vor.u32 %v3148, %v3144
      %v3150 = vrot.slane %v3149, 4
      %v3152 = vshll.u32 %v1882, 16
      %v3154 = vrot.slane %v3152, 5
      %v3155 = vsel %vm330, %v3150, %v3154
      %v3156 = vshrl.u32 %v1882, 16
      %v3158 = vrot.slane %v3156, 4
      %v3159 = vor.u32 %v3158, %v3154
      %v3160 = vrot.slane %v3159, 4
      %v3162 = vshll.u32 %v1883, 16
      %v3164 = vrot.slane %v3162, 5
      %v3165 = vsel %vm330, %v3160, %v3164
      %v3166 = vshrl.u32 %v1883, 16
      %v3168 = vrot.slane %v3166, 4
      %v3169 = vor.u32 %v3168, %v3164
      %v3170 = vrot.slane %v3169, 4
      %v3172 = vshll.u32 %v1884, 16
      %v3174 = vrot.slane %v3172, 5
      %v3175 = vsel %vm330, %v3170, %v3174
      %v3177 = vshrl.u32 %v1885, 16
      %v3179 = vrot.slane %v3177, 4
      %v3180 = vshll.u32 %v1885, 16
      %v3182 = vrot.slane %v3180, 5
      %v3183 = vor.u32 %v3179, %v3182
      %v3184 = vrot.slane %v3183, 4
      %v3186 = vshll.u32 %v1886, 16
      %v3188 = vrot.slane %v3186, 5
      %v3189 = vsel %vm330, %v3184, %v3188
      %v3190 = vshrl.u32 %v1886, 16
      %v3192 = vrot.slane %v3190, 4
      %v3193 = vor.u32 %v3192, %v3188
      %v3194 = vrot.slane %v3193, 4
      %v3196 = vshll.u32 %v1887, 16
      %v3198 = vrot.slane %v3196, 5
      %v3199 = vsel %vm330, %v3194, %v3198
      %v3200 = vshrl.u32 %v1887, 16
      %v3202 = vrot.slane %v3200, 4
      %v3203 = vor.u32 %v3202, %v3198
      %v3204 = vrot.slane %v3203, 4
      %v3206 = vshll.u32 %v1888, 16
      %v3208 = vrot.slane %v3206, 5
      %v3209 = vsel %vm330, %v3204, %v3208
      %v3210 = vshrl.u32 %v1888, 16
      %v3212 = vrot.slane %v3210, 4
      %v3213 = vor.u32 %v3212, %v3208
      %v3214 = vrot.slane %v3213, 4
      %v3216 = vshll.u32 %v1889, 16
      %v3218 = vrot.slane %v3216, 5
      %v3219 = vsel %vm330, %v3214, %v3218
      %v3221 = vshrl.u32 %v1890, 16
      %v3223 = vrot.slane %v3221, 4
      %v3224 = vshll.u32 %v1890, 16
      %v3226 = vrot.slane %v3224, 5
      %v3227 = vor.u32 %v3223, %v3226
      %v3228 = vrot.slane %v3227, 4
      %v3230 = vshll.u32 %v1891, 16
      %v3232 = vrot.slane %v3230, 5
      %v3233 = vsel %vm330, %v3228, %v3232
      %v3234 = vshrl.u32 %v1891, 16
      %v3236 = vrot.slane %v3234, 4
      %v3237 = vor.u32 %v3236, %v3232
      %v3238 = vrot.slane %v3237, 4
      %v3240 = vshll.u32 %v1892, 16
      %v3242 = vrot.slane %v3240, 5
      %v3243 = vsel %vm330, %v3238, %v3242
      %v3244 = vshrl.u32 %v1892, 16
      %v3246 = vrot.slane %v3244, 4
      %v3247 = vor.u32 %v3246, %v3242
      %v3248 = vrot.slane %v3247, 4
      %v3250 = vshll.u32 %v1893, 16
      %v3252 = vrot.slane %v3250, 5
      %v3253 = vsel %vm330, %v3248, %v3252
      %v3254 = vshrl.u32 %v1893, 16
      %v3256 = vrot.slane %v3254, 4
      %v3257 = vor.u32 %v3256, %v3252
      %v3258 = vrot.slane %v3257, 4
      %v3260 = vshll.u32 %v1894, 16
      %v3262 = vrot.slane %v3260, 5
      %v3263 = vsel %vm330, %v3258, %v3262
      %v3265 = vshrl.u32 %v1895, 16
      %v3267 = vrot.slane %v3265, 4
      %v3268 = vshll.u32 %v1895, 16
      %v3270 = vrot.slane %v3268, 5
      %v3271 = vor.u32 %v3267, %v3270
      %v3272 = vrot.slane %v3271, 4
      %v3274 = vshll.u32 %v1896, 16
      %v3276 = vrot.slane %v3274, 5
      %v3277 = vsel %vm330, %v3272, %v3276
      %v3278 = vshrl.u32 %v1896, 16
      %v3280 = vrot.slane %v3278, 4
      %v3281 = vor.u32 %v3280, %v3276
      %v3282 = vrot.slane %v3281, 4
      %v3284 = vshll.u32 %v1897, 16
      %v3286 = vrot.slane %v3284, 5
      %v3287 = vsel %vm330, %v3282, %v3286
      %v3288 = vshrl.u32 %v1897, 16
      %v3290 = vrot.slane %v3288, 4
      %v3291 = vor.u32 %v3290, %v3286
      %v3292 = vrot.slane %v3291, 4
      %v3294 = vshll.u32 %v1898, 16
      %v3296 = vrot.slane %v3294, 5
      %v3297 = vsel %vm330, %v3292, %v3296
      %v3298 = vshrl.u32 %v1898, 16
      %v3300 = vrot.slane %v3298, 4
      %v3301 = vor.u32 %v3300, %v3296
      %v3302 = vrot.slane %v3301, 4
      %v3304 = vshll.u32 %v1899, 16
      %v3306 = vrot.slane %v3304, 5
      %v3307 = vsel %vm330, %v3302, %v3306
      %v3436 = vunpack.c.l.b16 %v168
      %v3437 = vunpack.c.l.b16 %v169
      %v3438 = vunpack.c.l.b16 %v170
      %v3439 = vunpack.c.l.b16 %v171
      %v3440 = vunpack.c.l.b16 %v173
      %v3441 = vunpack.c.l.b16 %v174
      %v3442 = vunpack.c.l.b16 %v175
      %v3443 = vunpack.c.l.b16 %v176
      %v3444 = vunpack.c.l.b16 %v178
      %v3445 = vunpack.c.l.b16 %v179
      %v3446 = vunpack.c.l.b16 %v180
      %v3447 = vunpack.c.l.b16 %v181
      %v3448 = vunpack.c.l.b16 %v183
      %v3449 = vunpack.c.l.b16 %v184
      %v3450 = vunpack.c.l.b16 %v185
      %v3451 = vunpack.c.l.b16 %v186
      %v3452 = vunpack.c.l.b16 %v188
      %v3453 = vunpack.c.l.b16 %v189
      %v3454 = vunpack.c.l.b16 %v190
      %v3455 = vunpack.c.l.b16 %v191
      %v3456 = vunpack.c.l.b16 %v193
      %v3457 = vunpack.c.l.b16 %v194
      %v3458 = vunpack.c.l.b16 %v195
      %v3459 = vunpack.c.l.b16 %v196
      %v3460 = vunpack.c.l.b16 %v198
      %v3461 = vunpack.c.l.b16 %v199
      %v3462 = vunpack.c.l.b16 %v200
      %v3463 = vunpack.c.l.b16 %v201
      %v3464 = vunpack.c.l.b16 %v203
      %v3465 = vunpack.c.l.b16 %v204
      %v3466 = vunpack.c.l.b16 %v205
      %v3467 = vunpack.c.l.b16 %v206
      %v3468 = vunpack.c.l.b16 %v208
      %v3469 = vunpack.c.l.b16 %v209
      %v3470 = vunpack.c.l.b16 %v210
      %v3471 = vunpack.c.l.b16 %v211
      %v3472 = vunpack.c.l.b16 %v213
      %v3473 = vunpack.c.l.b16 %v214
      %v3474 = vunpack.c.l.b16 %v215
      %v3475 = vunpack.c.l.b16 %v216
      %v3476 = vunpack.c.l.b16 %v218
      %v3477 = vunpack.c.l.b16 %v219
      %v3478 = vunpack.c.l.b16 %v220
      %v3479 = vunpack.c.l.b16 %v221
      %v3480 = vunpack.c.l.b16 %v223
      %v3481 = vunpack.c.l.b16 %v224
      %v3482 = vunpack.c.l.b16 %v225
      %v3483 = vunpack.c.l.b16 %v226
      %v3484 = vunpack.c.l.b16 %v228
      %v3485 = vunpack.c.l.b16 %v229
      %v3486 = vunpack.c.l.b16 %v230
      %v3487 = vunpack.c.l.b16 %v231
      %v3488 = vunpack.c.l.b16 %v233
      %v3489 = vunpack.c.l.b16 %v234
      %v3490 = vunpack.c.l.b16 %v235
      %v3491 = vunpack.c.l.b16 %v236
      %v3492 = vunpack.c.l.b16 %v238
      %v3493 = vunpack.c.l.b16 %v239
      %v3494 = vunpack.c.l.b16 %v240
      %v3495 = vunpack.c.l.b16 %v241
      %v3496 = vunpack.c.l.b16 %v243
      %v3497 = vunpack.c.l.b16 %v244
      %v3498 = vunpack.c.l.b16 %v245
      %v3499 = vunpack.c.l.b16 %v246
      %v3500 = vunpack.c.l.b16 %v248
      %v3501 = vunpack.c.l.b16 %v249
      %v3502 = vunpack.c.l.b16 %v250
      %v3503 = vunpack.c.l.b16 %v251
      %v3504 = vunpack.c.l.b16 %v253
      %v3505 = vunpack.c.l.b16 %v254
      %v3506 = vunpack.c.l.b16 %v255
      %v3507 = vunpack.c.l.b16 %v256
      %v3508 = vunpack.c.l.b16 %v258
      %v3509 = vunpack.c.l.b16 %v259
      %v3510 = vunpack.c.l.b16 %v260
      %v3511 = vunpack.c.l.b16 %v261
      %v3512 = vunpack.c.l.b16 %v263
      %v3513 = vunpack.c.l.b16 %v264
      %v3514 = vunpack.c.l.b16 %v265
      %v3515 = vunpack.c.l.b16 %v266
      %v3516 = vunpack.c.l.b16 %v268
      %v3517 = vunpack.c.l.b16 %v269
      %v3518 = vunpack.c.l.b16 %v270
      %v3519 = vunpack.c.l.b16 %v271
      %v3520 = vunpack.c.l.b16 %v273
      %v3521 = vunpack.c.l.b16 %v274
      %v3522 = vunpack.c.l.b16 %v275
      %v3523 = vunpack.c.l.b16 %v276
      %v3524 = vunpack.c.l.b16 %v278
      %v3525 = vunpack.c.l.b16 %v279
      %v3526 = vunpack.c.l.b16 %v280
      %v3527 = vunpack.c.l.b16 %v281
      %v3528 = vunpack.c.l.b16 %v283
      %v3529 = vunpack.c.l.b16 %v284
      %v3530 = vunpack.c.l.b16 %v285
      %v3531 = vunpack.c.l.b16 %v286
      %v3532 = vunpack.c.l.b16 %v288
      %v3533 = vunpack.c.l.b16 %v289
      %v3534 = vunpack.c.l.b16 %v290
      %v3535 = vunpack.c.l.b16 %v291
      %v3536 = vunpack.c.l.b16 %v293
      %v3537 = vunpack.c.l.b16 %v294
      %v3538 = vunpack.c.l.b16 %v295
      %v3539 = vunpack.c.l.b16 %v296
      %v3540 = vunpack.c.l.b16 %v298
      %v3541 = vunpack.c.l.b16 %v299
      %v3542 = vunpack.c.l.b16 %v300
      %v3543 = vunpack.c.l.b16 %v301
      %v3544 = vunpack.c.l.b16 %v303
      %v3545 = vunpack.c.l.b16 %v304
      %v3546 = vunpack.c.l.b16 %v305
      %v3547 = vunpack.c.l.b16 %v306
      %v3548 = vunpack.c.l.b16 %v308
      %v3549 = vunpack.c.l.b16 %v309
      %v3550 = vunpack.c.l.b16 %v310
      %v3551 = vunpack.c.l.b16 %v311
      %v3552 = vunpack.c.l.b16 %v313
      %v3553 = vunpack.c.l.b16 %v314
      %v3554 = vunpack.c.l.b16 %v315
      %v3555 = vunpack.c.l.b16 %v316
      %v3556 = vunpack.c.l.b16 %v318
      %v3557 = vunpack.c.l.b16 %v319
      %v3558 = vunpack.c.l.b16 %v320
      %v3559 = vunpack.c.l.b16 %v321
      %v3560 = vunpack.c.l.b16 %v323
      %v3561 = vunpack.c.l.b16 %v324
      %v3562 = vunpack.c.l.b16 %v325
      %v3563 = vunpack.c.l.b16 %v326
      %v3564 = vpack.c.b16 %v3437, %v3436
      %v3565 = vpack.c.b16 %v3439, %v3438
      %v3566 = vpack.c.b16 %v3441, %v3440
      %v3567 = vpack.c.b16 %v3443, %v3442
      %v3568 = vpack.c.b16 %v3445, %v3444
      %v3569 = vpack.c.b16 %v3447, %v3446
      %v3570 = vpack.c.b16 %v3449, %v3448
      %v3571 = vpack.c.b16 %v3451, %v3450
      %v3572 = vpack.c.b16 %v3453, %v3452
      %v3573 = vpack.c.b16 %v3455, %v3454
      %v3574 = vpack.c.b16 %v3457, %v3456
      %v3575 = vpack.c.b16 %v3459, %v3458
      %v3576 = vpack.c.b16 %v3461, %v3460
      %v3577 = vpack.c.b16 %v3463, %v3462
      %v3578 = vpack.c.b16 %v3465, %v3464
      %v3579 = vpack.c.b16 %v3467, %v3466
      %v3580 = vpack.c.b16 %v3469, %v3468
      %v3581 = vpack.c.b16 %v3471, %v3470
      %v3582 = vpack.c.b16 %v3473, %v3472
      %v3583 = vpack.c.b16 %v3475, %v3474
      %v3584 = vpack.c.b16 %v3477, %v3476
      %v3585 = vpack.c.b16 %v3479, %v3478
      %v3586 = vpack.c.b16 %v3481, %v3480
      %v3587 = vpack.c.b16 %v3483, %v3482
      %v3588 = vpack.c.b16 %v3485, %v3484
      %v3589 = vpack.c.b16 %v3487, %v3486
      %v3590 = vpack.c.b16 %v3489, %v3488
      %v3591 = vpack.c.b16 %v3491, %v3490
      %v3592 = vpack.c.b16 %v3493, %v3492
      %v3593 = vpack.c.b16 %v3495, %v3494
      %v3594 = vpack.c.b16 %v3497, %v3496
      %v3595 = vpack.c.b16 %v3499, %v3498
      %v3596 = vpack.c.b16 %v3501, %v3500
      %v3597 = vpack.c.b16 %v3503, %v3502
      %v3598 = vpack.c.b16 %v3505, %v3504
      %v3599 = vpack.c.b16 %v3507, %v3506
      %v3600 = vpack.c.b16 %v3509, %v3508
      %v3601 = vpack.c.b16 %v3511, %v3510
      %v3602 = vpack.c.b16 %v3513, %v3512
      %v3603 = vpack.c.b16 %v3515, %v3514
      %v3604 = vpack.c.b16 %v3517, %v3516
      %v3605 = vpack.c.b16 %v3519, %v3518
      %v3606 = vpack.c.b16 %v3521, %v3520
      %v3607 = vpack.c.b16 %v3523, %v3522
      %v3608 = vpack.c.b16 %v3525, %v3524
      %v3609 = vpack.c.b16 %v3527, %v3526
      %v3610 = vpack.c.b16 %v3529, %v3528
      %v3611 = vpack.c.b16 %v3531, %v3530
      %v3612 = vpack.c.b16 %v3533, %v3532
      %v3613 = vpack.c.b16 %v3535, %v3534
      %v3614 = vpack.c.b16 %v3537, %v3536
      %v3615 = vpack.c.b16 %v3539, %v3538
      %v3616 = vpack.c.b16 %v3541, %v3540
      %v3617 = vpack.c.b16 %v3543, %v3542
      %v3618 = vpack.c.b16 %v3545, %v3544
      %v3619 = vpack.c.b16 %v3547, %v3546
      %v3620 = vpack.c.b16 %v3549, %v3548
      %v3621 = vpack.c.b16 %v3551, %v3550
      %v3622 = vpack.c.b16 %v3553, %v3552
      %v3623 = vpack.c.b16 %v3555, %v3554
      %v3624 = vpack.c.b16 %v3557, %v3556
      %v3625 = vpack.c.b16 %v3559, %v3558
      %v3626 = vpack.c.b16 %v3561, %v3560
      %v3627 = vpack.c.b16 %v3563, %v3562
      %v3628 = vunpack.c.l.b16 %v344
      %v3629 = vunpack.c.l.b16 %v354
      %v3630 = vunpack.c.l.b16 %v364
      %v3631 = vunpack.c.l.b16 %v374
      %v3632 = vunpack.c.l.b16 %v388
      %v3633 = vunpack.c.l.b16 %v398
      %v3634 = vunpack.c.l.b16 %v408
      %v3635 = vunpack.c.l.b16 %v418
      %v3636 = vunpack.c.l.b16 %v432
      %v3637 = vunpack.c.l.b16 %v442
      %v3638 = vunpack.c.l.b16 %v452
      %v3639 = vunpack.c.l.b16 %v462
      %v3640 = vunpack.c.l.b16 %v476
      %v3641 = vunpack.c.l.b16 %v486
      %v3642 = vunpack.c.l.b16 %v496
      %v3643 = vunpack.c.l.b16 %v506
      %v3644 = vunpack.c.l.b16 %v520
      %v3645 = vunpack.c.l.b16 %v530
      %v3646 = vunpack.c.l.b16 %v540
      %v3647 = vunpack.c.l.b16 %v550
      %v3648 = vunpack.c.l.b16 %v564
      %v3649 = vunpack.c.l.b16 %v574
      %v3650 = vunpack.c.l.b16 %v584
      %v3651 = vunpack.c.l.b16 %v594
      %v3652 = vunpack.c.l.b16 %v608
      %v3653 = vunpack.c.l.b16 %v618
      %v3654 = vunpack.c.l.b16 %v628
      %v3655 = vunpack.c.l.b16 %v638
      %v3656 = vunpack.c.l.b16 %v652
      %v3657 = vunpack.c.l.b16 %v662
      %v3658 = vunpack.c.l.b16 %v672
      %v3659 = vunpack.c.l.b16 %v682
      %v3660 = vunpack.c.l.b16 %v696
      %v3661 = vunpack.c.l.b16 %v706
      %v3662 = vunpack.c.l.b16 %v716
      %v3663 = vunpack.c.l.b16 %v726
      %v3664 = vunpack.c.l.b16 %v740
      %v3665 = vunpack.c.l.b16 %v750
      %v3666 = vunpack.c.l.b16 %v760
      %v3667 = vunpack.c.l.b16 %v770
      %v3668 = vunpack.c.l.b16 %v784
      %v3669 = vunpack.c.l.b16 %v794
      %v3670 = vunpack.c.l.b16 %v804
      %v3671 = vunpack.c.l.b16 %v814
      %v3672 = vunpack.c.l.b16 %v828
      %v3673 = vunpack.c.l.b16 %v838
      %v3674 = vunpack.c.l.b16 %v848
      %v3675 = vunpack.c.l.b16 %v858
      %v3676 = vunpack.c.l.b16 %v872
      %v3677 = vunpack.c.l.b16 %v882
      %v3678 = vunpack.c.l.b16 %v892
      %v3679 = vunpack.c.l.b16 %v902
      %v3680 = vunpack.c.l.b16 %v916
      %v3681 = vunpack.c.l.b16 %v926
      %v3682 = vunpack.c.l.b16 %v936
      %v3683 = vunpack.c.l.b16 %v946
      %v3684 = vunpack.c.l.b16 %v960
      %v3685 = vunpack.c.l.b16 %v970
      %v3686 = vunpack.c.l.b16 %v980
      %v3687 = vunpack.c.l.b16 %v990
      %v3688 = vunpack.c.l.b16 %v1004
      %v3689 = vunpack.c.l.b16 %v1014
      %v3690 = vunpack.c.l.b16 %v1024
      %v3691 = vunpack.c.l.b16 %v1034
      %v3692 = vunpack.c.l.b16 %v1048
      %v3693 = vunpack.c.l.b16 %v1058
      %v3694 = vunpack.c.l.b16 %v1068
      %v3695 = vunpack.c.l.b16 %v1078
      %v3696 = vunpack.c.l.b16 %v1092
      %v3697 = vunpack.c.l.b16 %v1102
      %v3698 = vunpack.c.l.b16 %v1112
      %v3699 = vunpack.c.l.b16 %v1122
      %v3700 = vunpack.c.l.b16 %v1136
      %v3701 = vunpack.c.l.b16 %v1146
      %v3702 = vunpack.c.l.b16 %v1156
      %v3703 = vunpack.c.l.b16 %v1166
      %v3704 = vunpack.c.l.b16 %v1180
      %v3705 = vunpack.c.l.b16 %v1190
      %v3706 = vunpack.c.l.b16 %v1200
      %v3707 = vunpack.c.l.b16 %v1210
      %v3708 = vunpack.c.l.b16 %v1224
      %v3709 = vunpack.c.l.b16 %v1234
      %v3710 = vunpack.c.l.b16 %v1244
      %v3711 = vunpack.c.l.b16 %v1254
      %v3712 = vunpack.c.l.b16 %v1268
      %v3713 = vunpack.c.l.b16 %v1278
      %v3714 = vunpack.c.l.b16 %v1288
      %v3715 = vunpack.c.l.b16 %v1298
      %v3716 = vunpack.c.l.b16 %v1312
      %v3717 = vunpack.c.l.b16 %v1322
      %v3718 = vunpack.c.l.b16 %v1332
      %v3719 = vunpack.c.l.b16 %v1342
      %v3720 = vunpack.c.l.b16 %v1356
      %v3721 = vunpack.c.l.b16 %v1366
      %v3722 = vunpack.c.l.b16 %v1376
      %v3723 = vunpack.c.l.b16 %v1386
      %v3724 = vunpack.c.l.b16 %v1400
      %v3725 = vunpack.c.l.b16 %v1410
      %v3726 = vunpack.c.l.b16 %v1420
      %v3727 = vunpack.c.l.b16 %v1430
      %v3728 = vunpack.c.l.b16 %v1444
      %v3729 = vunpack.c.l.b16 %v1454
      %v3730 = vunpack.c.l.b16 %v1464
      %v3731 = vunpack.c.l.b16 %v1474
      %v3732 = vunpack.c.l.b16 %v1488
      %v3733 = vunpack.c.l.b16 %v1498
      %v3734 = vunpack.c.l.b16 %v1508
      %v3735 = vunpack.c.l.b16 %v1518
      %v3736 = vunpack.c.l.b16 %v1532
      %v3737 = vunpack.c.l.b16 %v1542
      %v3738 = vunpack.c.l.b16 %v1552
      %v3739 = vunpack.c.l.b16 %v1562
      %v3740 = vunpack.c.l.b16 %v1576
      %v3741 = vunpack.c.l.b16 %v1586
      %v3742 = vunpack.c.l.b16 %v1596
      %v3743 = vunpack.c.l.b16 %v1606
      %v3744 = vunpack.c.l.b16 %v1620
      %v3745 = vunpack.c.l.b16 %v1630
      %v3746 = vunpack.c.l.b16 %v1640
      %v3747 = vunpack.c.l.b16 %v1650
      %v3748 = vunpack.c.l.b16 %v1664
      %v3749 = vunpack.c.l.b16 %v1674
      %v3750 = vunpack.c.l.b16 %v1684
      %v3751 = vunpack.c.l.b16 %v1694
      %v3752 = vunpack.c.l.b16 %v1708
      %v3753 = vunpack.c.l.b16 %v1718
      %v3754 = vunpack.c.l.b16 %v1728
      %v3755 = vunpack.c.l.b16 %v1738
      %v3756 = vpack.c.b16 %v3629, %v3628
      %v3757 = vpack.c.b16 %v3631, %v3630
      %v3758 = vpack.c.b16 %v3633, %v3632
      %v3759 = vpack.c.b16 %v3635, %v3634
      %v3760 = vpack.c.b16 %v3637, %v3636
      %v3761 = vpack.c.b16 %v3639, %v3638
      %v3762 = vpack.c.b16 %v3641, %v3640
      %v3763 = vpack.c.b16 %v3643, %v3642
      %v3764 = vpack.c.b16 %v3645, %v3644
      %v3765 = vpack.c.b16 %v3647, %v3646
      %v3766 = vpack.c.b16 %v3649, %v3648
      %v3767 = vpack.c.b16 %v3651, %v3650
      %v3768 = vpack.c.b16 %v3653, %v3652
      %v3769 = vpack.c.b16 %v3655, %v3654
      %v3770 = vpack.c.b16 %v3657, %v3656
      %v3771 = vpack.c.b16 %v3659, %v3658
      %v3772 = vpack.c.b16 %v3661, %v3660
      %v3773 = vpack.c.b16 %v3663, %v3662
      %v3774 = vpack.c.b16 %v3665, %v3664
      %v3775 = vpack.c.b16 %v3667, %v3666
      %v3776 = vpack.c.b16 %v3669, %v3668
      %v3777 = vpack.c.b16 %v3671, %v3670
      %v3778 = vpack.c.b16 %v3673, %v3672
      %v3779 = vpack.c.b16 %v3675, %v3674
      %v3780 = vpack.c.b16 %v3677, %v3676
      %v3781 = vpack.c.b16 %v3679, %v3678
      %v3782 = vpack.c.b16 %v3681, %v3680
      %v3783 = vpack.c.b16 %v3683, %v3682
      %v3784 = vpack.c.b16 %v3685, %v3684
      %v3785 = vpack.c.b16 %v3687, %v3686
      %v3786 = vpack.c.b16 %v3689, %v3688
      %v3787 = vpack.c.b16 %v3691, %v3690
      %v3788 = vpack.c.b16 %v3693, %v3692
      %v3789 = vpack.c.b16 %v3695, %v3694
      %v3790 = vpack.c.b16 %v3697, %v3696
      %v3791 = vpack.c.b16 %v3699, %v3698
      %v3792 = vpack.c.b16 %v3701, %v3700
      %v3793 = vpack.c.b16 %v3703, %v3702
      %v3794 = vpack.c.b16 %v3705, %v3704
      %v3795 = vpack.c.b16 %v3707, %v3706
      %v3796 = vpack.c.b16 %v3709, %v3708
      %v3797 = vpack.c.b16 %v3711, %v3710
      %v3798 = vpack.c.b16 %v3713, %v3712
      %v3799 = vpack.c.b16 %v3715, %v3714
      %v3800 = vpack.c.b16 %v3717, %v3716
      %v3801 = vpack.c.b16 %v3719, %v3718
      %v3802 = vpack.c.b16 %v3721, %v3720
      %v3803 = vpack.c.b16 %v3723, %v3722
      %v3804 = vpack.c.b16 %v3725, %v3724
      %v3805 = vpack.c.b16 %v3727, %v3726
      %v3806 = vpack.c.b16 %v3729, %v3728
      %v3807 = vpack.c.b16 %v3731, %v3730
      %v3808 = vpack.c.b16 %v3733, %v3732
      %v3809 = vpack.c.b16 %v3735, %v3734
      %v3810 = vpack.c.b16 %v3737, %v3736
      %v3811 = vpack.c.b16 %v3739, %v3738
      %v3812 = vpack.c.b16 %v3741, %v3740
      %v3813 = vpack.c.b16 %v3743, %v3742
      %v3814 = vpack.c.b16 %v3745, %v3744
      %v3815 = vpack.c.b16 %v3747, %v3746
      %v3816 = vpack.c.b16 %v3749, %v3748
      %v3817 = vpack.c.b16 %v3751, %v3750
      %v3818 = vpack.c.b16 %v3753, %v3752
      %v3819 = vpack.c.b16 %v3755, %v3754
      %3820 = vrot.lane.b32.xlu0 %v3756, 12
      %v3821 = vpop.permute.xlu0 %3820
      %3822 = vrot.lane.b32.xlu0 %v3757, 12
      %v3823 = vpop.permute.xlu0 %3822
      %3824 = vrot.lane.b32.xlu0 %v3758, 12
      %v3825 = vpop.permute.xlu0 %3824
      %3826 = vrot.lane.b32.xlu0 %v3759, 12
      %v3827 = vpop.permute.xlu0 %3826
      %3828 = vrot.lane.b32.xlu0 %v3760, 12
      %v3829 = vpop.permute.xlu0 %3828
      %3830 = vrot.lane.b32.xlu0 %v3761, 12
      %v3831 = vpop.permute.xlu0 %3830
      %3832 = vrot.lane.b32.xlu0 %v3762, 12
      %v3833 = vpop.permute.xlu0 %3832
      %3834 = vrot.lane.b32.xlu0 %v3763, 12
      %v3835 = vpop.permute.xlu0 %3834
      %3836 = vrot.lane.b32.xlu0 %v3764, 12
      %v3837 = vpop.permute.xlu0 %3836
      %3838 = vrot.lane.b32.xlu0 %v3765, 12
      %v3839 = vpop.permute.xlu0 %3838
      %3840 = vrot.lane.b32.xlu0 %v3766, 12
      %v3841 = vpop.permute.xlu0 %3840
      %3842 = vrot.lane.b32.xlu0 %v3767, 12
      %v3843 = vpop.permute.xlu0 %3842
      %3844 = vrot.lane.b32.xlu0 %v3768, 12
      %v3845 = vpop.permute.xlu0 %3844
      %3846 = vrot.lane.b32.xlu0 %v3769, 12
      %v3847 = vpop.permute.xlu0 %3846
      %3848 = vrot.lane.b32.xlu0 %v3770, 12
      %v3849 = vpop.permute.xlu0 %3848
      %3850 = vrot.lane.b32.xlu0 %v3771, 12
      %v3851 = vpop.permute.xlu0 %3850
      %3852 = vrot.lane.b32.xlu0 %v3772, 12
      %v3853 = vpop.permute.xlu0 %3852
      %3854 = vrot.lane.b32.xlu0 %v3773, 12
      %v3855 = vpop.permute.xlu0 %3854
      %3856 = vrot.lane.b32.xlu0 %v3774, 12
      %v3857 = vpop.permute.xlu0 %3856
      %3858 = vrot.lane.b32.xlu0 %v3775, 12
      %v3859 = vpop.permute.xlu0 %3858
      %3860 = vrot.lane.b32.xlu0 %v3776, 12
      %v3861 = vpop.permute.xlu0 %3860
      %3862 = vrot.lane.b32.xlu0 %v3777, 12
      %v3863 = vpop.permute.xlu0 %3862
      %3864 = vrot.lane.b32.xlu0 %v3778, 12
      %v3865 = vpop.permute.xlu0 %3864
      %3866 = vrot.lane.b32.xlu0 %v3779, 12
      %v3867 = vpop.permute.xlu0 %3866
      %3868 = vrot.lane.b32.xlu0 %v3780, 12
      %v3869 = vpop.permute.xlu0 %3868
      %3870 = vrot.lane.b32.xlu0 %v3781, 12
      %v3871 = vpop.permute.xlu0 %3870
      %3872 = vrot.lane.b32.xlu0 %v3782, 12
      %v3873 = vpop.permute.xlu0 %3872
      %3874 = vrot.lane.b32.xlu0 %v3783, 12
      %v3875 = vpop.permute.xlu0 %3874
      %3876 = vrot.lane.b32.xlu0 %v3784, 12
      %v3877 = vpop.permute.xlu0 %3876
      %3878 = vrot.lane.b32.xlu0 %v3785, 12
      %v3879 = vpop.permute.xlu0 %3878
      %3880 = vrot.lane.b32.xlu0 %v3786, 12
      %v3881 = vpop.permute.xlu0 %3880
      %3882 = vrot.lane.b32.xlu0 %v3787, 12
      %v3883 = vpop.permute.xlu0 %3882
      %3884 = vrot.lane.b32.xlu0 %v3788, 12
      %v3885 = vpop.permute.xlu0 %3884
      %3886 = vrot.lane.b32.xlu0 %v3789, 12
      %v3887 = vpop.permute.xlu0 %3886
      %3888 = vrot.lane.b32.xlu0 %v3790, 12
      %v3889 = vpop.permute.xlu0 %3888
      %3890 = vrot.lane.b32.xlu0 %v3791, 12
      %v3891 = vpop.permute.xlu0 %3890
      %3892 = vrot.lane.b32.xlu0 %v3792, 12
      %v3893 = vpop.permute.xlu0 %3892
      %3894 = vrot.lane.b32.xlu0 %v3793, 12
      %v3895 = vpop.permute.xlu0 %3894
      %3896 = vrot.lane.b32.xlu0 %v3794, 12
      %v3897 = vpop.permute.xlu0 %3896
      %3898 = vrot.lane.b32.xlu0 %v3795, 12
      %v3899 = vpop.permute.xlu0 %3898
      %3900 = vrot.lane.b32.xlu0 %v3796, 12
      %v3901 = vpop.permute.xlu0 %3900
      %3902 = vrot.lane.b32.xlu0 %v3797, 12
      %v3903 = vpop.permute.xlu0 %3902
      %3904 = vrot.lane.b32.xlu0 %v3798, 12
      %v3905 = vpop.permute.xlu0 %3904
      %3906 = vrot.lane.b32.xlu0 %v3799, 12
      %v3907 = vpop.permute.xlu0 %3906
      %3908 = vrot.lane.b32.xlu0 %v3800, 12
      %v3909 = vpop.permute.xlu0 %3908
      %3910 = vrot.lane.b32.xlu0 %v3801, 12
      %v3911 = vpop.permute.xlu0 %3910
      %3912 = vrot.lane.b32.xlu0 %v3802, 12
      %v3913 = vpop.permute.xlu0 %3912
      %3914 = vrot.lane.b32.xlu0 %v3803, 12
      %v3915 = vpop.permute.xlu0 %3914
      %3916 = vrot.lane.b32.xlu0 %v3804, 12
      %v3917 = vpop.permute.xlu0 %3916
      %3918 = vrot.lane.b32.xlu0 %v3805, 12
      %v3919 = vpop.permute.xlu0 %3918
      %3920 = vrot.lane.b32.xlu0 %v3806, 12
      %v3921 = vpop.permute.xlu0 %3920
      %3922 = vrot.lane.b32.xlu0 %v3807, 12
      %v3923 = vpop.permute.xlu0 %3922
      %3924 = vrot.lane.b32.xlu0 %v3808, 12
      %v3925 = vpop.permute.xlu0 %3924
      %3926 = vrot.lane.b32.xlu0 %v3809, 12
      %v3927 = vpop.permute.xlu0 %3926
      %3928 = vrot.lane.b32.xlu0 %v3810, 12
      %v3929 = vpop.permute.xlu0 %3928
      %3930 = vrot.lane.b32.xlu0 %v3811, 12
      %v3931 = vpop.permute.xlu0 %3930
      %3932 = vrot.lane.b32.xlu0 %v3812, 12
      %v3933 = vpop.permute.xlu0 %3932
      %3934 = vrot.lane.b32.xlu0 %v3813, 12
      %v3935 = vpop.permute.xlu0 %3934
      %3936 = vrot.lane.b32.xlu0 %v3814, 12
      %v3937 = vpop.permute.xlu0 %3936
      %3938 = vrot.lane.b32.xlu0 %v3815, 12
      %v3939 = vpop.permute.xlu0 %3938
      %3940 = vrot.lane.b32.xlu0 %v3816, 12
      %v3941 = vpop.permute.xlu0 %3940
      %3942 = vrot.lane.b32.xlu0 %v3817, 12
      %v3943 = vpop.permute.xlu0 %3942
      %3944 = vrot.lane.b32.xlu0 %v3818, 12
      %v3945 = vpop.permute.xlu0 %3944
      %3946 = vrot.lane.b32.xlu0 %v3819, 12
      %v3947 = vpop.permute.xlu0 %3946
      %v4076 = vunpack.c.l.b16 %v1740
      %v4077 = vunpack.c.l.b16 %v1741
      %v4078 = vunpack.c.l.b16 %v1742
      %v4079 = vunpack.c.l.b16 %v1743
      %v4080 = vunpack.c.l.b16 %v1745
      %v4081 = vunpack.c.l.b16 %v1746
      %v4082 = vunpack.c.l.b16 %v1747
      %v4083 = vunpack.c.l.b16 %v1748
      %v4084 = vunpack.c.l.b16 %v1750
      %v4085 = vunpack.c.l.b16 %v1751
      %v4086 = vunpack.c.l.b16 %v1752
      %v4087 = vunpack.c.l.b16 %v1753
      %v4088 = vunpack.c.l.b16 %v1755
      %v4089 = vunpack.c.l.b16 %v1756
      %v4090 = vunpack.c.l.b16 %v1757
      %v4091 = vunpack.c.l.b16 %v1758
      %v4092 = vunpack.c.l.b16 %v1760
      %v4093 = vunpack.c.l.b16 %v1761
      %v4094 = vunpack.c.l.b16 %v1762
      %v4095 = vunpack.c.l.b16 %v1763
      %v4096 = vunpack.c.l.b16 %v1765
      %v4097 = vunpack.c.l.b16 %v1766
      %v4098 = vunpack.c.l.b16 %v1767
      %v4099 = vunpack.c.l.b16 %v1768
      %v4100 = vunpack.c.l.b16 %v1770
      %v4101 = vunpack.c.l.b16 %v1771
      %v4102 = vunpack.c.l.b16 %v1772
      %v4103 = vunpack.c.l.b16 %v1773
      %v4104 = vunpack.c.l.b16 %v1775
      %v4105 = vunpack.c.l.b16 %v1776
      %v4106 = vunpack.c.l.b16 %v1777
      %v4107 = vunpack.c.l.b16 %v1778
      %v4108 = vunpack.c.l.b16 %v1780
      %v4109 = vunpack.c.l.b16 %v1781
      %v4110 = vunpack.c.l.b16 %v1782
      %v4111 = vunpack.c.l.b16 %v1783
      %v4112 = vunpack.c.l.b16 %v1785
      %v4113 = vunpack.c.l.b16 %v1786
      %v4114 = vunpack.c.l.b16 %v1787
      %v4115 = vunpack.c.l.b16 %v1788
      %v4116 = vunpack.c.l.b16 %v1790
      %v4117 = vunpack.c.l.b16 %v1791
      %v4118 = vunpack.c.l.b16 %v1792
      %v4119 = vunpack.c.l.b16 %v1793
      %v4120 = vunpack.c.l.b16 %v1795
      %v4121 = vunpack.c.l.b16 %v1796
      %v4122 = vunpack.c.l.b16 %v1797
      %v4123 = vunpack.c.l.b16 %v1798
      %v4124 = vunpack.c.l.b16 %v1800
      %v4125 = vunpack.c.l.b16 %v1801
      %v4126 = vunpack.c.l.b16 %v1802
      %v4127 = vunpack.c.l.b16 %v1803
      %v4128 = vunpack.c.l.b16 %v1805
      %v4129 = vunpack.c.l.b16 %v1806
      %v4130 = vunpack.c.l.b16 %v1807
      %v4131 = vunpack.c.l.b16 %v1808
      %v4132 = vunpack.c.l.b16 %v1810
      %v4133 = vunpack.c.l.b16 %v1811
      %v4134 = vunpack.c.l.b16 %v1812
      %v4135 = vunpack.c.l.b16 %v1813
      %v4136 = vunpack.c.l.b16 %v1815
      %v4137 = vunpack.c.l.b16 %v1816
      %v4138 = vunpack.c.l.b16 %v1817
      %v4139 = vunpack.c.l.b16 %v1818
      %v4140 = vunpack.c.l.b16 %v1820
      %v4141 = vunpack.c.l.b16 %v1821
      %v4142 = vunpack.c.l.b16 %v1822
      %v4143 = vunpack.c.l.b16 %v1823
      %v4144 = vunpack.c.l.b16 %v1825
      %v4145 = vunpack.c.l.b16 %v1826
      %v4146 = vunpack.c.l.b16 %v1827
      %v4147 = vunpack.c.l.b16 %v1828
      %v4148 = vunpack.c.l.b16 %v1830
      %v4149 = vunpack.c.l.b16 %v1831
      %v4150 = vunpack.c.l.b16 %v1832
      %v4151 = vunpack.c.l.b16 %v1833
      %v4152 = vunpack.c.l.b16 %v1835
      %v4153 = vunpack.c.l.b16 %v1836
      %v4154 = vunpack.c.l.b16 %v1837
      %v4155 = vunpack.c.l.b16 %v1838
      %v4156 = vunpack.c.l.b16 %v1840
      %v4157 = vunpack.c.l.b16 %v1841
      %v4158 = vunpack.c.l.b16 %v1842
      %v4159 = vunpack.c.l.b16 %v1843
      %v4160 = vunpack.c.l.b16 %v1845
      %v4161 = vunpack.c.l.b16 %v1846
      %v4162 = vunpack.c.l.b16 %v1847
      %v4163 = vunpack.c.l.b16 %v1848
      %v4164 = vunpack.c.l.b16 %v1850
      %v4165 = vunpack.c.l.b16 %v1851
      %v4166 = vunpack.c.l.b16 %v1852
      %v4167 = vunpack.c.l.b16 %v1853
      %v4168 = vunpack.c.l.b16 %v1855
      %v4169 = vunpack.c.l.b16 %v1856
      %v4170 = vunpack.c.l.b16 %v1857
      %v4171 = vunpack.c.l.b16 %v1858
      %v4172 = vunpack.c.l.b16 %v1860
      %v4173 = vunpack.c.l.b16 %v1861
      %v4174 = vunpack.c.l.b16 %v1862
      %v4175 = vunpack.c.l.b16 %v1863
      %v4176 = vunpack.c.l.b16 %v1865
      %v4177 = vunpack.c.l.b16 %v1866
      %v4178 = vunpack.c.l.b16 %v1867
      %v4179 = vunpack.c.l.b16 %v1868
      %v4180 = vunpack.c.l.b16 %v1870
      %v4181 = vunpack.c.l.b16 %v1871
      %v4182 = vunpack.c.l.b16 %v1872
      %v4183 = vunpack.c.l.b16 %v1873
      %v4184 = vunpack.c.l.b16 %v1875
      %v4185 = vunpack.c.l.b16 %v1876
      %v4186 = vunpack.c.l.b16 %v1877
      %v4187 = vunpack.c.l.b16 %v1878
      %v4188 = vunpack.c.l.b16 %v1880
      %v4189 = vunpack.c.l.b16 %v1881
      %v4190 = vunpack.c.l.b16 %v1882
      %v4191 = vunpack.c.l.b16 %v1883
      %v4192 = vunpack.c.l.b16 %v1885
      %v4193 = vunpack.c.l.b16 %v1886
      %v4194 = vunpack.c.l.b16 %v1887
      %v4195 = vunpack.c.l.b16 %v1888
      %v4196 = vunpack.c.l.b16 %v1890
      %v4197 = vunpack.c.l.b16 %v1891
      %v4198 = vunpack.c.l.b16 %v1892
      %v4199 = vunpack.c.l.b16 %v1893
      %v4200 = vunpack.c.l.b16 %v1895
      %v4201 = vunpack.c.l.b16 %v1896
      %v4202 = vunpack.c.l.b16 %v1897
      %v4203 = vunpack.c.l.b16 %v1898
      %v4204 = vpack.c.b16 %v4077, %v4076
      %v4205 = vpack.c.b16 %v4079, %v4078
      %v4206 = vpack.c.b16 %v4081, %v4080
      %v4207 = vpack.c.b16 %v4083, %v4082
      %v4208 = vpack.c.b16 %v4085, %v4084
      %v4209 = vpack.c.b16 %v4087, %v4086
      %v4210 = vpack.c.b16 %v4089, %v4088
      %v4211 = vpack.c.b16 %v4091, %v4090
      %v4212 = vpack.c.b16 %v4093, %v4092
      %v4213 = vpack.c.b16 %v4095, %v4094
      %v4214 = vpack.c.b16 %v4097, %v4096
      %v4215 = vpack.c.b16 %v4099, %v4098
      %v4216 = vpack.c.b16 %v4101, %v4100
      %v4217 = vpack.c.b16 %v4103, %v4102
      %v4218 = vpack.c.b16 %v4105, %v4104
      %v4219 = vpack.c.b16 %v4107, %v4106
      %v4220 = vpack.c.b16 %v4109, %v4108
      %v4221 = vpack.c.b16 %v4111, %v4110
      %v4222 = vpack.c.b16 %v4113, %v4112
      %v4223 = vpack.c.b16 %v4115, %v4114
      %v4224 = vpack.c.b16 %v4117, %v4116
      %v4225 = vpack.c.b16 %v4119, %v4118
      %v4226 = vpack.c.b16 %v4121, %v4120
      %v4227 = vpack.c.b16 %v4123, %v4122
      %v4228 = vpack.c.b16 %v4125, %v4124
      %v4229 = vpack.c.b16 %v4127, %v4126
      %v4230 = vpack.c.b16 %v4129, %v4128
      %v4231 = vpack.c.b16 %v4131, %v4130
      %v4232 = vpack.c.b16 %v4133, %v4132
      %v4233 = vpack.c.b16 %v4135, %v4134
      %v4234 = vpack.c.b16 %v4137, %v4136
      %v4235 = vpack.c.b16 %v4139, %v4138
      %v4236 = vpack.c.b16 %v4141, %v4140
      %v4237 = vpack.c.b16 %v4143, %v4142
      %v4238 = vpack.c.b16 %v4145, %v4144
      %v4239 = vpack.c.b16 %v4147, %v4146
      %v4240 = vpack.c.b16 %v4149, %v4148
      %v4241 = vpack.c.b16 %v4151, %v4150
      %v4242 = vpack.c.b16 %v4153, %v4152
      %v4243 = vpack.c.b16 %v4155, %v4154
      %v4244 = vpack.c.b16 %v4157, %v4156
      %v4245 = vpack.c.b16 %v4159, %v4158
      %v4246 = vpack.c.b16 %v4161, %v4160
      %v4247 = vpack.c.b16 %v4163, %v4162
      %v4248 = vpack.c.b16 %v4165, %v4164
      %v4249 = vpack.c.b16 %v4167, %v4166
      %v4250 = vpack.c.b16 %v4169, %v4168
      %v4251 = vpack.c.b16 %v4171, %v4170
      %v4252 = vpack.c.b16 %v4173, %v4172
      %v4253 = vpack.c.b16 %v4175, %v4174
      %v4254 = vpack.c.b16 %v4177, %v4176
      %v4255 = vpack.c.b16 %v4179, %v4178
      %v4256 = vpack.c.b16 %v4181, %v4180
      %v4257 = vpack.c.b16 %v4183, %v4182
      %v4258 = vpack.c.b16 %v4185, %v4184
      %v4259 = vpack.c.b16 %v4187, %v4186
      %v4260 = vpack.c.b16 %v4189, %v4188
      %v4261 = vpack.c.b16 %v4191, %v4190
      %v4262 = vpack.c.b16 %v4193, %v4192
      %v4263 = vpack.c.b16 %v4195, %v4194
      %v4264 = vpack.c.b16 %v4197, %v4196
      %v4265 = vpack.c.b16 %v4199, %v4198
      %v4266 = vpack.c.b16 %v4201, %v4200
      %v4267 = vpack.c.b16 %v4203, %v4202
      %4268 = vrot.lane.b32.xlu0 %v4204, 24
      %v4269 = vpop.permute.xlu0 %4268
      %4270 = vrot.lane.b32.xlu0 %v4205, 24
      %v4271 = vpop.permute.xlu0 %4270
      %4272 = vrot.lane.b32.xlu0 %v4206, 24
      %v4273 = vpop.permute.xlu0 %4272
      %4274 = vrot.lane.b32.xlu0 %v4207, 24
      %v4275 = vpop.permute.xlu0 %4274
      %4276 = vrot.lane.b32.xlu0 %v4208, 24
      %v4277 = vpop.permute.xlu0 %4276
      %4278 = vrot.lane.b32.xlu0 %v4209, 24
      %v4279 = vpop.permute.xlu0 %4278
      %4280 = vrot.lane.b32.xlu0 %v4210, 24
      %v4281 = vpop.permute.xlu0 %4280
      %4282 = vrot.lane.b32.xlu0 %v4211, 24
      %v4283 = vpop.permute.xlu0 %4282
      %4284 = vrot.lane.b32.xlu0 %v4212, 24
      %v4285 = vpop.permute.xlu0 %4284
      %4286 = vrot.lane.b32.xlu0 %v4213, 24
      %v4287 = vpop.permute.xlu0 %4286
      %4288 = vrot.lane.b32.xlu0 %v4214, 24
      %v4289 = vpop.permute.xlu0 %4288
      %4290 = vrot.lane.b32.xlu0 %v4215, 24
      %v4291 = vpop.permute.xlu0 %4290
      %4292 = vrot.lane.b32.xlu0 %v4216, 24
      %v4293 = vpop.permute.xlu0 %4292
      %4294 = vrot.lane.b32.xlu0 %v4217, 24
      %v4295 = vpop.permute.xlu0 %4294
      %4296 = vrot.lane.b32.xlu0 %v4218, 24
      %v4297 = vpop.permute.xlu0 %4296
      %4298 = vrot.lane.b32.xlu0 %v4219, 24
      %v4299 = vpop.permute.xlu0 %4298
      %4300 = vrot.lane.b32.xlu0 %v4220, 24
      %v4301 = vpop.permute.xlu0 %4300
      %4302 = vrot.lane.b32.xlu0 %v4221, 24
      %v4303 = vpop.permute.xlu0 %4302
      %4304 = vrot.lane.b32.xlu0 %v4222, 24
      %v4305 = vpop.permute.xlu0 %4304
      %4306 = vrot.lane.b32.xlu0 %v4223, 24
      %v4307 = vpop.permute.xlu0 %4306
      %4308 = vrot.lane.b32.xlu0 %v4224, 24
      %v4309 = vpop.permute.xlu0 %4308
      %4310 = vrot.lane.b32.xlu0 %v4225, 24
      %v4311 = vpop.permute.xlu0 %4310
      %4312 = vrot.lane.b32.xlu0 %v4226, 24
      %v4313 = vpop.permute.xlu0 %4312
      %4314 = vrot.lane.b32.xlu0 %v4227, 24
      %v4315 = vpop.permute.xlu0 %4314
      %4316 = vrot.lane.b32.xlu0 %v4228, 24
      %v4317 = vpop.permute.xlu0 %4316
      %4318 = vrot.lane.b32.xlu0 %v4229, 24
      %v4319 = vpop.permute.xlu0 %4318
      %4320 = vrot.lane.b32.xlu0 %v4230, 24
      %v4321 = vpop.permute.xlu0 %4320
      %4322 = vrot.lane.b32.xlu0 %v4231, 24
      %v4323 = vpop.permute.xlu0 %4322
      %4324 = vrot.lane.b32.xlu0 %v4232, 24
      %v4325 = vpop.permute.xlu0 %4324
      %4326 = vrot.lane.b32.xlu0 %v4233, 24
      %v4327 = vpop.permute.xlu0 %4326
      %4328 = vrot.lane.b32.xlu0 %v4234, 24
      %v4329 = vpop.permute.xlu0 %4328
      %4330 = vrot.lane.b32.xlu0 %v4235, 24
      %v4331 = vpop.permute.xlu0 %4330
      %4332 = vrot.lane.b32.xlu0 %v4236, 24
      %v4333 = vpop.permute.xlu0 %4332
      %4334 = vrot.lane.b32.xlu0 %v4237, 24
      %v4335 = vpop.permute.xlu0 %4334
      %4336 = vrot.lane.b32.xlu0 %v4238, 24
      %v4337 = vpop.permute.xlu0 %4336
      %4338 = vrot.lane.b32.xlu0 %v4239, 24
      %v4339 = vpop.permute.xlu0 %4338
      %4340 = vrot.lane.b32.xlu0 %v4240, 24
      %v4341 = vpop.permute.xlu0 %4340
      %4342 = vrot.lane.b32.xlu0 %v4241, 24
      %v4343 = vpop.permute.xlu0 %4342
      %4344 = vrot.lane.b32.xlu0 %v4242, 24
      %v4345 = vpop.permute.xlu0 %4344
      %4346 = vrot.lane.b32.xlu0 %v4243, 24
      %v4347 = vpop.permute.xlu0 %4346
      %4348 = vrot.lane.b32.xlu0 %v4244, 24
      %v4349 = vpop.permute.xlu0 %4348
      %4350 = vrot.lane.b32.xlu0 %v4245, 24
      %v4351 = vpop.permute.xlu0 %4350
      %4352 = vrot.lane.b32.xlu0 %v4246, 24
      %v4353 = vpop.permute.xlu0 %4352
      %4354 = vrot.lane.b32.xlu0 %v4247, 24
      %v4355 = vpop.permute.xlu0 %4354
      %4356 = vrot.lane.b32.xlu0 %v4248, 24
      %v4357 = vpop.permute.xlu0 %4356
      %4358 = vrot.lane.b32.xlu0 %v4249, 24
      %v4359 = vpop.permute.xlu0 %4358
      %4360 = vrot.lane.b32.xlu0 %v4250, 24
      %v4361 = vpop.permute.xlu0 %4360
      %4362 = vrot.lane.b32.xlu0 %v4251, 24
      %v4363 = vpop.permute.xlu0 %4362
      %4364 = vrot.lane.b32.xlu0 %v4252, 24
      %v4365 = vpop.permute.xlu0 %4364
      %4366 = vrot.lane.b32.xlu0 %v4253, 24
      %v4367 = vpop.permute.xlu0 %4366
      %4368 = vrot.lane.b32.xlu0 %v4254, 24
      %v4369 = vpop.permute.xlu0 %4368
      %4370 = vrot.lane.b32.xlu0 %v4255, 24
      %v4371 = vpop.permute.xlu0 %4370
      %4372 = vrot.lane.b32.xlu0 %v4256, 24
      %v4373 = vpop.permute.xlu0 %4372
      %4374 = vrot.lane.b32.xlu0 %v4257, 24
      %v4375 = vpop.permute.xlu0 %4374
      %4376 = vrot.lane.b32.xlu0 %v4258, 24
      %v4377 = vpop.permute.xlu0 %4376
      %4378 = vrot.lane.b32.xlu0 %v4259, 24
      %v4379 = vpop.permute.xlu0 %4378
      %4380 = vrot.lane.b32.xlu0 %v4260, 24
      %v4381 = vpop.permute.xlu0 %4380
      %4382 = vrot.lane.b32.xlu0 %v4261, 24
      %v4383 = vpop.permute.xlu0 %4382
      %4384 = vrot.lane.b32.xlu0 %v4262, 24
      %v4385 = vpop.permute.xlu0 %4384
      %4386 = vrot.lane.b32.xlu0 %v4263, 24
      %v4387 = vpop.permute.xlu0 %4386
      %4388 = vrot.lane.b32.xlu0 %v4264, 24
      %v4389 = vpop.permute.xlu0 %4388
      %4390 = vrot.lane.b32.xlu0 %v4265, 24
      %v4391 = vpop.permute.xlu0 %4390
      %4392 = vrot.lane.b32.xlu0 %v4266, 24
      %v4393 = vpop.permute.xlu0 %4392
      %4394 = vrot.lane.b32.xlu0 %v4267, 24
      %v4395 = vpop.permute.xlu0 %4394
      %v4396 = vunpack.c.l.b16 %v1913
      %v4397 = vunpack.c.l.b16 %v1923
      %v4398 = vunpack.c.l.b16 %v1933
      %v4399 = vunpack.c.l.b16 %v1943
      %v4400 = vunpack.c.l.b16 %v1957
      %v4401 = vunpack.c.l.b16 %v1967
      %v4402 = vunpack.c.l.b16 %v1977
      %v4403 = vunpack.c.l.b16 %v1987
      %v4404 = vunpack.c.l.b16 %v2001
      %v4405 = vunpack.c.l.b16 %v2011
      %v4406 = vunpack.c.l.b16 %v2021
      %v4407 = vunpack.c.l.b16 %v2031
      %v4408 = vunpack.c.l.b16 %v2045
      %v4409 = vunpack.c.l.b16 %v2055
      %v4410 = vunpack.c.l.b16 %v2065
      %v4411 = vunpack.c.l.b16 %v2075
      %v4412 = vunpack.c.l.b16 %v2089
      %v4413 = vunpack.c.l.b16 %v2099
      %v4414 = vunpack.c.l.b16 %v2109
      %v4415 = vunpack.c.l.b16 %v2119
      %v4416 = vunpack.c.l.b16 %v2133
      %v4417 = vunpack.c.l.b16 %v2143
      %v4418 = vunpack.c.l.b16 %v2153
      %v4419 = vunpack.c.l.b16 %v2163
      %v4420 = vunpack.c.l.b16 %v2177
      %v4421 = vunpack.c.l.b16 %v2187
      %v4422 = vunpack.c.l.b16 %v2197
      %v4423 = vunpack.c.l.b16 %v2207
      %v4424 = vunpack.c.l.b16 %v2221
      %v4425 = vunpack.c.l.b16 %v2231
      %v4426 = vunpack.c.l.b16 %v2241
      %v4427 = vunpack.c.l.b16 %v2251
      %v4428 = vunpack.c.l.b16 %v2265
      %v4429 = vunpack.c.l.b16 %v2275
      %v4430 = vunpack.c.l.b16 %v2285
      %v4431 = vunpack.c.l.b16 %v2295
      %v4432 = vunpack.c.l.b16 %v2309
      %v4433 = vunpack.c.l.b16 %v2319
      %v4434 = vunpack.c.l.b16 %v2329
      %v4435 = vunpack.c.l.b16 %v2339
      %v4436 = vunpack.c.l.b16 %v2353
      %v4437 = vunpack.c.l.b16 %v2363
      %v4438 = vunpack.c.l.b16 %v2373
      %v4439 = vunpack.c.l.b16 %v2383
      %v4440 = vunpack.c.l.b16 %v2397
      %v4441 = vunpack.c.l.b16 %v2407
      %v4442 = vunpack.c.l.b16 %v2417
      %v4443 = vunpack.c.l.b16 %v2427
      %v4444 = vunpack.c.l.b16 %v2441
      %v4445 = vunpack.c.l.b16 %v2451
      %v4446 = vunpack.c.l.b16 %v2461
      %v4447 = vunpack.c.l.b16 %v2471
      %v4448 = vunpack.c.l.b16 %v2485
      %v4449 = vunpack.c.l.b16 %v2495
      %v4450 = vunpack.c.l.b16 %v2505
      %v4451 = vunpack.c.l.b16 %v2515
      %v4452 = vunpack.c.l.b16 %v2529
      %v4453 = vunpack.c.l.b16 %v2539
      %v4454 = vunpack.c.l.b16 %v2549
      %v4455 = vunpack.c.l.b16 %v2559
      %v4456 = vunpack.c.l.b16 %v2573
      %v4457 = vunpack.c.l.b16 %v2583
      %v4458 = vunpack.c.l.b16 %v2593
      %v4459 = vunpack.c.l.b16 %v2603
      %v4460 = vunpack.c.l.b16 %v2617
      %v4461 = vunpack.c.l.b16 %v2627
      %v4462 = vunpack.c.l.b16 %v2637
      %v4463 = vunpack.c.l.b16 %v2647
      %v4464 = vunpack.c.l.b16 %v2661
      %v4465 = vunpack.c.l.b16 %v2671
      %v4466 = vunpack.c.l.b16 %v2681
      %v4467 = vunpack.c.l.b16 %v2691
      %v4468 = vunpack.c.l.b16 %v2705
      %v4469 = vunpack.c.l.b16 %v2715
      %v4470 = vunpack.c.l.b16 %v2725
      %v4471 = vunpack.c.l.b16 %v2735
      %v4472 = vunpack.c.l.b16 %v2749
      %v4473 = vunpack.c.l.b16 %v2759
      %v4474 = vunpack.c.l.b16 %v2769
      %v4475 = vunpack.c.l.b16 %v2779
      %v4476 = vunpack.c.l.b16 %v2793
      %v4477 = vunpack.c.l.b16 %v2803
      %v4478 = vunpack.c.l.b16 %v2813
      %v4479 = vunpack.c.l.b16 %v2823
      %v4480 = vunpack.c.l.b16 %v2837
      %v4481 = vunpack.c.l.b16 %v2847
      %v4482 = vunpack.c.l.b16 %v2857
      %v4483 = vunpack.c.l.b16 %v2867
      %v4484 = vunpack.c.l.b16 %v2881
      %v4485 = vunpack.c.l.b16 %v2891
      %v4486 = vunpack.c.l.b16 %v2901
      %v4487 = vunpack.c.l.b16 %v2911
      %v4488 = vunpack.c.l.b16 %v2925
      %v4489 = vunpack.c.l.b16 %v2935
      %v4490 = vunpack.c.l.b16 %v2945
      %v4491 = vunpack.c.l.b16 %v2955
      %v4492 = vunpack.c.l.b16 %v2969
      %v4493 = vunpack.c.l.b16 %v2979
      %v4494 = vunpack.c.l.b16 %v2989
      %v4495 = vunpack.c.l.b16 %v2999
      %v4496 = vunpack.c.l.b16 %v3013
      %v4497 = vunpack.c.l.b16 %v3023
      %v4498 = vunpack.c.l.b16 %v3033
      %v4499 = vunpack.c.l.b16 %v3043
      %v4500 = vunpack.c.l.b16 %v3057
      %v4501 = vunpack.c.l.b16 %v3067
      %v4502 = vunpack.c.l.b16 %v3077
      %v4503 = vunpack.c.l.b16 %v3087
      %v4504 = vunpack.c.l.b16 %v3101
      %v4505 = vunpack.c.l.b16 %v3111
      %v4506 = vunpack.c.l.b16 %v3121
      %v4507 = vunpack.c.l.b16 %v3131
      %v4508 = vunpack.c.l.b16 %v3145
      %v4509 = vunpack.c.l.b16 %v3155
      %v4510 = vunpack.c.l.b16 %v3165
      %v4511 = vunpack.c.l.b16 %v3175
      %v4512 = vunpack.c.l.b16 %v3189
      %v4513 = vunpack.c.l.b16 %v3199
      %v4514 = vunpack.c.l.b16 %v3209
      %v4515 = vunpack.c.l.b16 %v3219
      %v4516 = vunpack.c.l.b16 %v3233
      %v4517 = vunpack.c.l.b16 %v3243
      %v4518 = vunpack.c.l.b16 %v3253
      %v4519 = vunpack.c.l.b16 %v3263
      %v4520 = vunpack.c.l.b16 %v3277
      %v4521 = vunpack.c.l.b16 %v3287
      %v4522 = vunpack.c.l.b16 %v3297
      %v4523 = vunpack.c.l.b16 %v3307
      %v4524 = vpack.c.b16 %v4397, %v4396
      %v4525 = vpack.c.b16 %v4399, %v4398
      %v4526 = vpack.c.b16 %v4401, %v4400
      %v4527 = vpack.c.b16 %v4403, %v4402
      %v4528 = vpack.c.b16 %v4405, %v4404
      %v4529 = vpack.c.b16 %v4407, %v4406
      %v4530 = vpack.c.b16 %v4409, %v4408
      %v4531 = vpack.c.b16 %v4411, %v4410
      %v4532 = vpack.c.b16 %v4413, %v4412
      %v4533 = vpack.c.b16 %v4415, %v4414
      %v4534 = vpack.c.b16 %v4417, %v4416
      %v4535 = vpack.c.b16 %v4419, %v4418
      %v4536 = vpack.c.b16 %v4421, %v4420
      %v4537 = vpack.c.b16 %v4423, %v4422
      %v4538 = vpack.c.b16 %v4425, %v4424
      %v4539 = vpack.c.b16 %v4427, %v4426
      %v4540 = vpack.c.b16 %v4429, %v4428
      %v4541 = vpack.c.b16 %v4431, %v4430
      %v4542 = vpack.c.b16 %v4433, %v4432
      %v4543 = vpack.c.b16 %v4435, %v4434
      %v4544 = vpack.c.b16 %v4437, %v4436
      %v4545 = vpack.c.b16 %v4439, %v4438
      %v4546 = vpack.c.b16 %v4441, %v4440
      %v4547 = vpack.c.b16 %v4443, %v4442
      %v4548 = vpack.c.b16 %v4445, %v4444
      %v4549 = vpack.c.b16 %v4447, %v4446
      %v4550 = vpack.c.b16 %v4449, %v4448
      %v4551 = vpack.c.b16 %v4451, %v4450
      %v4552 = vpack.c.b16 %v4453, %v4452
      %v4553 = vpack.c.b16 %v4455, %v4454
      %v4554 = vpack.c.b16 %v4457, %v4456
      %v4555 = vpack.c.b16 %v4459, %v4458
      %v4556 = vpack.c.b16 %v4461, %v4460
      %v4557 = vpack.c.b16 %v4463, %v4462
      %v4558 = vpack.c.b16 %v4465, %v4464
      %v4559 = vpack.c.b16 %v4467, %v4466
      %v4560 = vpack.c.b16 %v4469, %v4468
      %v4561 = vpack.c.b16 %v4471, %v4470
      %v4562 = vpack.c.b16 %v4473, %v4472
      %v4563 = vpack.c.b16 %v4475, %v4474
      %v4564 = vpack.c.b16 %v4477, %v4476
      %v4565 = vpack.c.b16 %v4479, %v4478
      %v4566 = vpack.c.b16 %v4481, %v4480
      %v4567 = vpack.c.b16 %v4483, %v4482
      %v4568 = vpack.c.b16 %v4485, %v4484
      %v4569 = vpack.c.b16 %v4487, %v4486
      %v4570 = vpack.c.b16 %v4489, %v4488
      %v4571 = vpack.c.b16 %v4491, %v4490
      %v4572 = vpack.c.b16 %v4493, %v4492
      %v4573 = vpack.c.b16 %v4495, %v4494
      %v4574 = vpack.c.b16 %v4497, %v4496
      %v4575 = vpack.c.b16 %v4499, %v4498
      %v4576 = vpack.c.b16 %v4501, %v4500
      %v4577 = vpack.c.b16 %v4503, %v4502
      %v4578 = vpack.c.b16 %v4505, %v4504
      %v4579 = vpack.c.b16 %v4507, %v4506
      %v4580 = vpack.c.b16 %v4509, %v4508
      %v4581 = vpack.c.b16 %v4511, %v4510
      %v4582 = vpack.c.b16 %v4513, %v4512
      %v4583 = vpack.c.b16 %v4515, %v4514
      %v4584 = vpack.c.b16 %v4517, %v4516
      %v4585 = vpack.c.b16 %v4519, %v4518
      %v4586 = vpack.c.b16 %v4521, %v4520
      %v4587 = vpack.c.b16 %v4523, %v4522
      %4588 = vrot.lane.b32.xlu0 %v4524, 36
      %v4589 = vpop.permute.xlu0 %4588
      %4590 = vrot.lane.b32.xlu0 %v4525, 36
      %v4591 = vpop.permute.xlu0 %4590
      %4592 = vrot.lane.b32.xlu0 %v4526, 36
      %v4593 = vpop.permute.xlu0 %4592
      %4594 = vrot.lane.b32.xlu0 %v4527, 36
      %v4595 = vpop.permute.xlu0 %4594
      %4596 = vrot.lane.b32.xlu0 %v4528, 36
      %v4597 = vpop.permute.xlu0 %4596
      %4598 = vrot.lane.b32.xlu0 %v4529, 36
      %v4599 = vpop.permute.xlu0 %4598
      %4600 = vrot.lane.b32.xlu0 %v4530, 36
      %v4601 = vpop.permute.xlu0 %4600
      %4602 = vrot.lane.b32.xlu0 %v4531, 36
      %v4603 = vpop.permute.xlu0 %4602
      %4604 = vrot.lane.b32.xlu0 %v4532, 36
      %v4605 = vpop.permute.xlu0 %4604
      %4606 = vrot.lane.b32.xlu0 %v4533, 36
      %v4607 = vpop.permute.xlu0 %4606
      %4608 = vrot.lane.b32.xlu0 %v4534, 36
      %v4609 = vpop.permute.xlu0 %4608
      %4610 = vrot.lane.b32.xlu0 %v4535, 36
      %v4611 = vpop.permute.xlu0 %4610
      %4612 = vrot.lane.b32.xlu0 %v4536, 36
      %v4613 = vpop.permute.xlu0 %4612
      %4614 = vrot.lane.b32.xlu0 %v4537, 36
      %v4615 = vpop.permute.xlu0 %4614
      %4616 = vrot.lane.b32.xlu0 %v4538, 36
      %v4617 = vpop.permute.xlu0 %4616
      %4618 = vrot.lane.b32.xlu0 %v4539, 36
      %v4619 = vpop.permute.xlu0 %4618
      %4620 = vrot.lane.b32.xlu0 %v4540, 36
      %v4621 = vpop.permute.xlu0 %4620
      %4622 = vrot.lane.b32.xlu0 %v4541, 36
      %v4623 = vpop.permute.xlu0 %4622
      %4624 = vrot.lane.b32.xlu0 %v4542, 36
      %v4625 = vpop.permute.xlu0 %4624
      %4626 = vrot.lane.b32.xlu0 %v4543, 36
      %v4627 = vpop.permute.xlu0 %4626
      %4628 = vrot.lane.b32.xlu0 %v4544, 36
      %v4629 = vpop.permute.xlu0 %4628
      %4630 = vrot.lane.b32.xlu0 %v4545, 36
      %v4631 = vpop.permute.xlu0 %4630
      %4632 = vrot.lane.b32.xlu0 %v4546, 36
      %v4633 = vpop.permute.xlu0 %4632
      %4634 = vrot.lane.b32.xlu0 %v4547, 36
      %v4635 = vpop.permute.xlu0 %4634
      %4636 = vrot.lane.b32.xlu0 %v4548, 36
      %v4637 = vpop.permute.xlu0 %4636
      %4638 = vrot.lane.b32.xlu0 %v4549, 36
      %v4639 = vpop.permute.xlu0 %4638
      %4640 = vrot.lane.b32.xlu0 %v4550, 36
      %v4641 = vpop.permute.xlu0 %4640
      %4642 = vrot.lane.b32.xlu0 %v4551, 36
      %v4643 = vpop.permute.xlu0 %4642
      %4644 = vrot.lane.b32.xlu0 %v4552, 36
      %v4645 = vpop.permute.xlu0 %4644
      %4646 = vrot.lane.b32.xlu0 %v4553, 36
      %v4647 = vpop.permute.xlu0 %4646
      %4648 = vrot.lane.b32.xlu0 %v4554, 36
      %v4649 = vpop.permute.xlu0 %4648
      %4650 = vrot.lane.b32.xlu0 %v4555, 36
      %v4651 = vpop.permute.xlu0 %4650
      %4652 = vrot.lane.b32.xlu0 %v4556, 36
      %v4653 = vpop.permute.xlu0 %4652
      %4654 = vrot.lane.b32.xlu0 %v4557, 36
      %v4655 = vpop.permute.xlu0 %4654
      %4656 = vrot.lane.b32.xlu0 %v4558, 36
      %v4657 = vpop.permute.xlu0 %4656
      %4658 = vrot.lane.b32.xlu0 %v4559, 36
      %v4659 = vpop.permute.xlu0 %4658
      %4660 = vrot.lane.b32.xlu0 %v4560, 36
      %v4661 = vpop.permute.xlu0 %4660
      %4662 = vrot.lane.b32.xlu0 %v4561, 36
      %v4663 = vpop.permute.xlu0 %4662
      %4664 = vrot.lane.b32.xlu0 %v4562, 36
      %v4665 = vpop.permute.xlu0 %4664
      %4666 = vrot.lane.b32.xlu0 %v4563, 36
      %v4667 = vpop.permute.xlu0 %4666
      %4668 = vrot.lane.b32.xlu0 %v4564, 36
      %v4669 = vpop.permute.xlu0 %4668
      %4670 = vrot.lane.b32.xlu0 %v4565, 36
      %v4671 = vpop.permute.xlu0 %4670
      %4672 = vrot.lane.b32.xlu0 %v4566, 36
      %v4673 = vpop.permute.xlu0 %4672
      %4674 = vrot.lane.b32.xlu0 %v4567, 36
      %v4675 = vpop.permute.xlu0 %4674
      %4676 = vrot.lane.b32.xlu0 %v4568, 36
      %v4677 = vpop.permute.xlu0 %4676
      %4678 = vrot.lane.b32.xlu0 %v4569, 36
      %v4679 = vpop.permute.xlu0 %4678
      %4680 = vrot.lane.b32.xlu0 %v4570, 36
      %v4681 = vpop.permute.xlu0 %4680
      %4682 = vrot.lane.b32.xlu0 %v4571, 36
      %v4683 = vpop.permute.xlu0 %4682
      %4684 = vrot.lane.b32.xlu0 %v4572, 36
      %v4685 = vpop.permute.xlu0 %4684
      %4686 = vrot.lane.b32.xlu0 %v4573, 36
      %v4687 = vpop.permute.xlu0 %4686
      %4688 = vrot.lane.b32.xlu0 %v4574, 36
      %v4689 = vpop.permute.xlu0 %4688
      %4690 = vrot.lane.b32.xlu0 %v4575, 36
      %v4691 = vpop.permute.xlu0 %4690
      %4692 = vrot.lane.b32.xlu0 %v4576, 36
      %v4693 = vpop.permute.xlu0 %4692
      %4694 = vrot.lane.b32.xlu0 %v4577, 36
      %v4695 = vpop.permute.xlu0 %4694
      %4696 = vrot.lane.b32.xlu0 %v4578, 36
      %v4697 = vpop.permute.xlu0 %4696
      %4698 = vrot.lane.b32.xlu0 %v4579, 36
      %v4699 = vpop.permute.xlu0 %4698
      %4700 = vrot.lane.b32.xlu0 %v4580, 36
      %v4701 = vpop.permute.xlu0 %4700
      %4702 = vrot.lane.b32.xlu0 %v4581, 36
      %v4703 = vpop.permute.xlu0 %4702
      %4704 = vrot.lane.b32.xlu0 %v4582, 36
      %v4705 = vpop.permute.xlu0 %4704
      %4706 = vrot.lane.b32.xlu0 %v4583, 36
      %v4707 = vpop.permute.xlu0 %4706
      %4708 = vrot.lane.b32.xlu0 %v4584, 36
      %v4709 = vpop.permute.xlu0 %4708
      %4710 = vrot.lane.b32.xlu0 %v4585, 36
      %v4711 = vpop.permute.xlu0 %4710
      %4712 = vrot.lane.b32.xlu0 %v4586, 36
      %v4713 = vpop.permute.xlu0 %4712
      %4714 = vrot.lane.b32.xlu0 %v4587, 36
      %v4715 = vpop.permute.xlu0 %4714
      %vm4716 = vcmask 97280
      %v4719 = vsel %vm4716, %v3564, %v3821
      %v4722 = vsel %vm4716, %v3565, %v3823
      %v4725 = vsel %vm4716, %v3566, %v3825
      %v4728 = vsel %vm4716, %v3567, %v3827
      %v4731 = vsel %vm4716, %v3568, %v3829
      %v4734 = vsel %vm4716, %v3569, %v3831
      %v4737 = vsel %vm4716, %v3570, %v3833
      %v4740 = vsel %vm4716, %v3571, %v3835
      %v4743 = vsel %vm4716, %v3572, %v3837
      %v4746 = vsel %vm4716, %v3573, %v3839
      %v4749 = vsel %vm4716, %v3574, %v3841
      %v4752 = vsel %vm4716, %v3575, %v3843
      %v4755 = vsel %vm4716, %v3576, %v3845
      %v4758 = vsel %vm4716, %v3577, %v3847
      %v4761 = vsel %vm4716, %v3578, %v3849
      %v4764 = vsel %vm4716, %v3579, %v3851
      %v4767 = vsel %vm4716, %v3580, %v3853
      %v4770 = vsel %vm4716, %v3581, %v3855
      %v4773 = vsel %vm4716, %v3582, %v3857
      %v4776 = vsel %vm4716, %v3583, %v3859
      %v4779 = vsel %vm4716, %v3584, %v3861
      %v4782 = vsel %vm4716, %v3585, %v3863
      %v4785 = vsel %vm4716, %v3586, %v3865
      %v4788 = vsel %vm4716, %v3587, %v3867
      %v4791 = vsel %vm4716, %v3588, %v3869
      %v4794 = vsel %vm4716, %v3589, %v3871
      %v4797 = vsel %vm4716, %v3590, %v3873
      %v4800 = vsel %vm4716, %v3591, %v3875
      %v4803 = vsel %vm4716, %v3592, %v3877
      %v4806 = vsel %vm4716, %v3593, %v3879
      %v4809 = vsel %vm4716, %v3594, %v3881
      %v4812 = vsel %vm4716, %v3595, %v3883
      %v4815 = vsel %vm4716, %v3596, %v3885
      %v4818 = vsel %vm4716, %v3597, %v3887
      %v4821 = vsel %vm4716, %v3598, %v3889
      %v4824 = vsel %vm4716, %v3599, %v3891
      %v4827 = vsel %vm4716, %v3600, %v3893
      %v4830 = vsel %vm4716, %v3601, %v3895
      %v4833 = vsel %vm4716, %v3602, %v3897
      %v4836 = vsel %vm4716, %v3603, %v3899
      %v4839 = vsel %vm4716, %v3604, %v3901
      %v4842 = vsel %vm4716, %v3605, %v3903
      %v4845 = vsel %vm4716, %v3606, %v3905
      %v4848 = vsel %vm4716, %v3607, %v3907
      %v4851 = vsel %vm4716, %v3608, %v3909
      %v4854 = vsel %vm4716, %v3609, %v3911
      %v4857 = vsel %vm4716, %v3610, %v3913
      %v4860 = vsel %vm4716, %v3611, %v3915
      %v4863 = vsel %vm4716, %v3612, %v3917
      %v4866 = vsel %vm4716, %v3613, %v3919
      %v4869 = vsel %vm4716, %v3614, %v3921
      %v4872 = vsel %vm4716, %v3615, %v3923
      %v4875 = vsel %vm4716, %v3616, %v3925
      %v4878 = vsel %vm4716, %v3617, %v3927
      %v4881 = vsel %vm4716, %v3618, %v3929
      %v4884 = vsel %vm4716, %v3619, %v3931
      %v4887 = vsel %vm4716, %v3620, %v3933
      %v4890 = vsel %vm4716, %v3621, %v3935
      %v4893 = vsel %vm4716, %v3622, %v3937
      %v4896 = vsel %vm4716, %v3623, %v3939
      %v4899 = vsel %vm4716, %v3624, %v3941
      %v4902 = vsel %vm4716, %v3625, %v3943
      %v4905 = vsel %vm4716, %v3626, %v3945
      %v4908 = vsel %vm4716, %v3627, %v3947
      %vm4909 = vcmask 195584
      %v4911 = vsel %vm4909, %v4719, %v4269
      %v4913 = vsel %vm4909, %v4722, %v4271
      %v4915 = vsel %vm4909, %v4725, %v4273
      %v4917 = vsel %vm4909, %v4728, %v4275
      %v4919 = vsel %vm4909, %v4731, %v4277
      %v4921 = vsel %vm4909, %v4734, %v4279
      %v4923 = vsel %vm4909, %v4737, %v4281
      %v4925 = vsel %vm4909, %v4740, %v4283
      %v4927 = vsel %vm4909, %v4743, %v4285
      %v4929 = vsel %vm4909, %v4746, %v4287
      %v4931 = vsel %vm4909, %v4749, %v4289
      %v4933 = vsel %vm4909, %v4752, %v4291
      %v4935 = vsel %vm4909, %v4755, %v4293
      %v4937 = vsel %vm4909, %v4758, %v4295
      %v4939 = vsel %vm4909, %v4761, %v4297
      %v4941 = vsel %vm4909, %v4764, %v4299
      %v4943 = vsel %vm4909, %v4767, %v4301
      %v4945 = vsel %vm4909, %v4770, %v4303
      %v4947 = vsel %vm4909, %v4773, %v4305
      %v4949 = vsel %vm4909, %v4776, %v4307
      %v4951 = vsel %vm4909, %v4779, %v4309
      %v4953 = vsel %vm4909, %v4782, %v4311
      %v4955 = vsel %vm4909, %v4785, %v4313
      %v4957 = vsel %vm4909, %v4788, %v4315
      %v4959 = vsel %vm4909, %v4791, %v4317
      %v4961 = vsel %vm4909, %v4794, %v4319
      %v4963 = vsel %vm4909, %v4797, %v4321
      %v4965 = vsel %vm4909, %v4800, %v4323
      %v4967 = vsel %vm4909, %v4803, %v4325
      %v4969 = vsel %vm4909, %v4806, %v4327
      %v4971 = vsel %vm4909, %v4809, %v4329
      %v4973 = vsel %vm4909, %v4812, %v4331
      %v4975 = vsel %vm4909, %v4815, %v4333
      %v4977 = vsel %vm4909, %v4818, %v4335
      %v4979 = vsel %vm4909, %v4821, %v4337
      %v4981 = vsel %vm4909, %v4824, %v4339
      %v4983 = vsel %vm4909, %v4827, %v4341
      %v4985 = vsel %vm4909, %v4830, %v4343
      %v4987 = vsel %vm4909, %v4833, %v4345
      %v4989 = vsel %vm4909, %v4836, %v4347
      %v4991 = vsel %vm4909, %v4839, %v4349
      %v4993 = vsel %vm4909, %v4842, %v4351
      %v4995 = vsel %vm4909, %v4845, %v4353
      %v4997 = vsel %vm4909, %v4848, %v4355
      %v4999 = vsel %vm4909, %v4851, %v4357
      %v5001 = vsel %vm4909, %v4854, %v4359
      %v5003 = vsel %vm4909, %v4857, %v4361
      %v5005 = vsel %vm4909, %v4860, %v4363
      %v5007 = vsel %vm4909, %v4863, %v4365
      %v5009 = vsel %vm4909, %v4866, %v4367
      %v5011 = vsel %vm4909, %v4869, %v4369
      %v5013 = vsel %vm4909, %v4872, %v4371
      %v5015 = vsel %vm4909, %v4875, %v4373
      %v5017 = vsel %vm4909, %v4878, %v4375
      %v5019 = vsel %vm4909, %v4881, %v4377
      %v5021 = vsel %vm4909, %v4884, %v4379
      %v5023 = vsel %vm4909, %v4887, %v4381
      %v5025 = vsel %vm4909, %v4890, %v4383
      %v5027 = vsel %vm4909, %v4893, %v4385
      %v5029 = vsel %vm4909, %v4896, %v4387
      %v5031 = vsel %vm4909, %v4899, %v4389
      %v5033 = vsel %vm4909, %v4902, %v4391
      %v5035 = vsel %vm4909, %v4905, %v4393
      %v5037 = vsel %vm4909, %v4908, %v4395
      %vm5038 = vcmask 293888
      %v5040 = vsel %vm5038, %v4911, %v4589
      %v5042 = vsel %vm5038, %v4913, %v4591
      %v5044 = vsel %vm5038, %v4915, %v4593
      %v5046 = vsel %vm5038, %v4917, %v4595
      %v5048 = vsel %vm5038, %v4919, %v4597
      %v5050 = vsel %vm5038, %v4921, %v4599
      %v5052 = vsel %vm5038, %v4923, %v4601
      %v5054 = vsel %vm5038, %v4925, %v4603
      %v5056 = vsel %vm5038, %v4927, %v4605
      %v5058 = vsel %vm5038, %v4929, %v4607
      %v5060 = vsel %vm5038, %v4931, %v4609
      %v5062 = vsel %vm5038, %v4933, %v4611
      %v5064 = vsel %vm5038, %v4935, %v4613
      %v5066 = vsel %vm5038, %v4937, %v4615
      %v5068 = vsel %vm5038, %v4939, %v4617
      %v5070 = vsel %vm5038, %v4941, %v4619
      %v5072 = vsel %vm5038, %v4943, %v4621
      %v5074 = vsel %vm5038, %v4945, %v4623
      %v5076 = vsel %vm5038, %v4947, %v4625
      %v5078 = vsel %vm5038, %v4949, %v4627
      %v5080 = vsel %vm5038, %v4951, %v4629
      %v5082 = vsel %vm5038, %v4953, %v4631
      %v5084 = vsel %vm5038, %v4955, %v4633
      %v5086 = vsel %vm5038, %v4957, %v4635
      %v5088 = vsel %vm5038, %v4959, %v4637
      %v5090 = vsel %vm5038, %v4961, %v4639
      %v5092 = vsel %vm5038, %v4963, %v4641
      %v5094 = vsel %vm5038, %v4965, %v4643
      %v5096 = vsel %vm5038, %v4967, %v4645
      %v5098 = vsel %vm5038, %v4969, %v4647
      %v5100 = vsel %vm5038, %v4971, %v4649
      %v5102 = vsel %vm5038, %v4973, %v4651
      %v5104 = vsel %vm5038, %v4975, %v4653
      %v5106 = vsel %vm5038, %v4977, %v4655
      %v5108 = vsel %vm5038, %v4979, %v4657
      %v5110 = vsel %vm5038, %v4981, %v4659
      %v5112 = vsel %vm5038, %v4983, %v4661
      %v5114 = vsel %vm5038, %v4985, %v4663
      %v5116 = vsel %vm5038, %v4987, %v4665
      %v5118 = vsel %vm5038, %v4989, %v4667
      %v5120 = vsel %vm5038, %v4991, %v4669
      %v5122 = vsel %vm5038, %v4993, %v4671
      %v5124 = vsel %vm5038, %v4995, %v4673
      %v5126 = vsel %vm5038, %v4997, %v4675
      %v5128 = vsel %vm5038, %v4999, %v4677
      %v5130 = vsel %vm5038, %v5001, %v4679
      %v5132 = vsel %vm5038, %v5003, %v4681
      %v5134 = vsel %vm5038, %v5005, %v4683
      %v5136 = vsel %vm5038, %v5007, %v4685
      %v5138 = vsel %vm5038, %v5009, %v4687
      %v5140 = vsel %vm5038, %v5011, %v4689
      %v5142 = vsel %vm5038, %v5013, %v4691
      %v5144 = vsel %vm5038, %v5015, %v4693
      %v5146 = vsel %vm5038, %v5017, %v4695
      %v5148 = vsel %vm5038, %v5019, %v4697
      %v5150 = vsel %vm5038, %v5021, %v4699
      %v5152 = vsel %vm5038, %v5023, %v4701
      %v5154 = vsel %vm5038, %v5025, %v4703
      %v5156 = vsel %vm5038, %v5027, %v4705
      %v5158 = vsel %vm5038, %v5029, %v4707
      %v5160 = vsel %vm5038, %v5031, %v4709
      %v5162 = vsel %vm5038, %v5033, %v4711
      %v5164 = vsel %vm5038, %v5035, %v4713
      %v5166 = vsel %vm5038, %v5037, %v4715
      %v5167 = vld [vmem:[%s1] sm:$0xf]
      %v5168 = vld [vmem:[%s1 + $0x4] sm:$0xf]
      %v5169 = vld [vmem:[%s1 + $0x8] sm:$0xf]
      %v5170 = vld [vmem:[%s1 + $0xc] sm:$0xf]
      %v5171 = vld [vmem:[%s1 + $0x10] sm:$0xf]
      %v5172 = vld [vmem:[%s1 + $0x14] sm:$0xf]
      %v5179 = vunpack.c.l.b16 %v5167
      %v5180 = vunpack.c.l.b16 %v5168
      %v5181 = vunpack.c.l.b16 %v5169
      %v5182 = vunpack.c.l.b16 %v5170
      %v5183 = vunpack.c.l.b16 %v5171
      %v5184 = vunpack.c.l.b16 %v5172
      %v5185 = vpack.c.b16 %v5180, %v5179
      %v5186 = vpack.c.b16 %v5182, %v5181
      %v5187 = vpack.c.b16 %v5184, %v5183
      %vm5191 = vcmask 392192
      %v5192 = vsel %vm5191, %v5040, 0
      %v5194 = vsel %vm5191, %v5042, 0
      %v5196 = vsel %vm5191, %v5044, 0
      %v5198 = vsel %vm5191, %v5046, 0
      %v5200 = vsel %vm5191, %v5048, 0
      %v5202 = vsel %vm5191, %v5050, 0
      %v5204 = vsel %vm5191, %v5052, 0
      %v5206 = vsel %vm5191, %v5054, 0
      %v5208 = vsel %vm5191, %v5056, 0
      %v5210 = vsel %vm5191, %v5058, 0
      %v5212 = vsel %vm5191, %v5060, 0
      %v5214 = vsel %vm5191, %v5062, 0
      %v5216 = vsel %vm5191, %v5064, 0
      %v5218 = vsel %vm5191, %v5066, 0
      %v5220 = vsel %vm5191, %v5068, 0
      %v5222 = vsel %vm5191, %v5070, 0
      %v5224 = vsel %vm5191, %v5072, 0
      %v5226 = vsel %vm5191, %v5074, 0
      %v5228 = vsel %vm5191, %v5076, 0
      %v5230 = vsel %vm5191, %v5078, 0
      %v5232 = vsel %vm5191, %v5080, 0
      %v5234 = vsel %vm5191, %v5082, 0
      %v5236 = vsel %vm5191, %v5084, 0
      %v5238 = vsel %vm5191, %v5086, 0
      %v5240 = vsel %vm5191, %v5088, 0
      %v5242 = vsel %vm5191, %v5090, 0
      %v5244 = vsel %vm5191, %v5092, 0
      %v5246 = vsel %vm5191, %v5094, 0
      %v5248 = vsel %vm5191, %v5096, 0
      %v5250 = vsel %vm5191, %v5098, 0
      %v5252 = vsel %vm5191, %v5100, 0
      %v5254 = vsel %vm5191, %v5102, 0
      %v5256 = vsel %vm5191, %v5104, 0
      %v5258 = vsel %vm5191, %v5106, 0
      %v5260 = vsel %vm5191, %v5108, 0
      %v5262 = vsel %vm5191, %v5110, 0
      %v5264 = vsel %vm5191, %v5112, 0
      %v5266 = vsel %vm5191, %v5114, 0
      %v5268 = vsel %vm5191, %v5116, 0
      %v5270 = vsel %vm5191, %v5118, 0
      %v5272 = vsel %vm5191, %v5120, 0
      %v5274 = vsel %vm5191, %v5122, 0
      %v5276 = vsel %vm5191, %v5124, 0
      %v5278 = vsel %vm5191, %v5126, 0
      %v5280 = vsel %vm5191, %v5128, 0
      %v5282 = vsel %vm5191, %v5130, 0
      %v5284 = vsel %vm5191, %v5132, 0
      %v5286 = vsel %vm5191, %v5134, 0
      %v5288 = vsel %vm5191, %v5136, 0
      %v5290 = vsel %vm5191, %v5138, 0
      %v5292 = vsel %vm5191, %v5140, 0
      %v5294 = vsel %vm5191, %v5142, 0
      %v5296 = vsel %vm5191, %v5144, 0
      %v5298 = vsel %vm5191, %v5146, 0
      %v5300 = vsel %vm5191, %v5148, 0
      %v5302 = vsel %vm5191, %v5150, 0
      %v5304 = vsel %vm5191, %v5152, 0
      %v5306 = vsel %vm5191, %v5154, 0
      %v5308 = vsel %vm5191, %v5156, 0
      %v5310 = vsel %vm5191, %v5158, 0
      %v5312 = vsel %vm5191, %v5160, 0
      %v5314 = vsel %vm5191, %v5162, 0
      %v5316 = vsel %vm5191, %v5164, 0
      %v5318 = vsel %vm5191, %v5166, 0
      %5320 = vmatprep.subr.bf16.mxu0 0
      %5321 = vmatpush1.bf16.msra.mxu0 %v5185
      %5322 = vmatprep.subr.bf16.mxu0 0
      %5323 = vmatpush1.bf16.msra.mxu0 %v5186
      %5324 = vmatprep.subr.bf16.mxu0 0
      %5325 = vmatpush1.bf16.msra.mxu0 %v5187
      %5326 = vmatprep.subr.bf16.mxu0 0
      %5327 = vmatpush1.bf16.msra.mxu0 0
      %5328 = vmatprep.subr.bf16.mxu0 0
      %5329 = vmatpush1.bf16.msra.mxu0 0
      %5330 = vmatprep.subr.bf16.mxu0 0
      %5331 = vmatpush1.bf16.msra.mxu0 0
      %5332 = vmatprep.subr.bf16.mxu0 0
      %5333 = vmatpush1.bf16.msra.mxu0 0
      %5334 = vmatprep.subr.bf16.mxu0 0
      %5335 = vmatpush1.bf16.msra.mxu0 0
      %5336 = vmatprep.subr.bf16.mxu0 0
      %5337 = vmatpush1.bf16.msra.mxu0 0
      %5338 = vmatprep.subr.bf16.mxu0 0
      %5339 = vmatpush1.bf16.msra.mxu0 0
      %5340 = vmatprep.subr.bf16.mxu0 0
      %5341 = vmatpush1.bf16.msra.mxu0 0
      %5342 = vmatprep.subr.bf16.mxu0 0
      %5343 = vmatpush1.bf16.msra.mxu0 0
      %5344 = vmatprep.subr.bf16.mxu0 0
      %5345 = vmatpush1.bf16.msra.mxu0 0
      %5346 = vmatprep.subr.bf16.mxu0 0
      %5347 = vmatpush1.bf16.msra.mxu0 0
      %5348 = vmatprep.subr.bf16.mxu0 0
      %5349 = vmatpush1.bf16.msra.mxu0 0
      %5350 = vmatprep.subr.bf16.mxu0 0
      %5351 = vmatpush1.bf16.msra.mxu0 0
      %5352 = vmatprep.mubr.bf16.mxu0 0
      %5353 = vmatmul.mubr.bf16.gmra.mrb[0].mxu0 %v5192
      %v5354 = vpop.f32.mrb[0].mxu0
      %v5355 = vadd.f32 0.0, %v5354
      %v5356 = vpop.f32.mrb[0].mxu0
      %v5357 = vpop.f32.mrb[0].mxu0
      %v5358 = vadd.f32 0.0, %v5357
      %v5359 = vpop.f32.mrb[0].mxu0
      %5360 = vmatprep.mubr.bf16.mxu0 0
      %5361 = vmatmul.mubr.bf16.gmra.mrb[0].mxu0 %v5194
      %v5362 = vpop.f32.mrb[0].mxu0
      %v5363 = vadd.f32 0.0, %v5362
      %v5364 = vpop.f32.mrb[0].mxu0
      %v5365 = vpop.f32.mrb[0].mxu0
      %v5366 = vadd.f32 0.0, %v5365
      %v5367 = vpop.f32.mrb[0].mxu0
      %5368 = vmatprep.mubr.bf16.mxu0 0
      %5369 = vmatmul.mubr.bf16.gmra.mrb[0].mxu0 %v5196
      %v5370 = vpop.f32.mrb[0].mxu0
      %v5371 = vadd.f32 0.0, %v5370
      %v5372 = vpop.f32.mrb[0].mxu0
      %v5373 = vpop.f32.mrb[0].mxu0
      %v5374 = vadd.f32 0.0, %v5373
      %v5375 = vpop.f32.mrb[0].mxu0
      %5376 = vmatprep.mubr.bf16.mxu0 0
      %5377 = vmatmul.mubr.bf16.gmra.mrb[0].mxu0 %v5198
      %v5378 = vpop.f32.mrb[0].mxu0
      %v5379 = vadd.f32 0.0, %v5378
      %v5380 = vpop.f32.mrb[0].mxu0
      %v5381 = vpop.f32.mrb[0].mxu0
      %v5382 = vadd.f32 0.0, %v5381
      %v5383 = vpop.f32.mrb[0].mxu0
      %5384 = vmatprep.mubr.bf16.mxu0 0
      %5385 = vmatmul.mubr.bf16.gmra.mrb[0].mxu0 %v5200
      %v5386 = vpop.f32.mrb[0].mxu0
      %v5387 = vadd.f32 0.0, %v5386
      %v5388 = vpop.f32.mrb[0].mxu0
      %v5389 = vpop.f32.mrb[0].mxu0
      %v5390 = vadd.f32 0.0, %v5389
      %v5391 = vpop.f32.mrb[0].mxu0
      %5392 = vmatprep.mubr.bf16.mxu0 0
      %5393 = vmatmul.mubr.bf16.gmra.mrb[0].mxu0 %v5202
      %v5394 = vpop.f32.mrb[0].mxu0
      %v5395 = vadd.f32 0.0, %v5394
      %v5396 = vpop.f32.mrb[0].mxu0
      %v5397 = vpop.f32.mrb[0].mxu0
      %v5398 = vadd.f32 0.0, %v5397
      %v5399 = vpop.f32.mrb[0].mxu0
      %5400 = vmatprep.mubr.bf16.mxu0 0
      %5401 = vmatmul.mubr.bf16.gmra.mrb[0].mxu0 %v5204
      %v5402 = vpop.f32.mrb[0].mxu0
      %v5403 = vadd.f32 0.0, %v5402
      %v5404 = vpop.f32.mrb[0].mxu0
      %v5405 = vpop.f32.mrb[0].mxu0
      %v5406 = vadd.f32 0.0, %v5405
      %v5407 = vpop.f32.mrb[0].mxu0
      %5408 = vmatprep.mubr.bf16.mxu0 0
      %5409 = vmatmul.mubr.bf16.gmra.mrb[0].mxu0 %v5206
      %v5410 = vpop.f32.mrb[0].mxu0
      %v5411 = vadd.f32 0.0, %v5410
      %v5412 = vpop.f32.mrb[0].mxu0
      %v5413 = vpop.f32.mrb[0].mxu0
      %v5414 = vadd.f32 0.0, %v5413
      %v5415 = vpop.f32.mrb[0].mxu0
      %5416 = vmatprep.mubr.bf16.mxu0 0
      %5417 = vmatmul.mubr.bf16.gmra.mrb[0].mxu0 %v5208
      %v5418 = vpop.f32.mrb[0].mxu0
      %v5419 = vadd.f32 0.0, %v5418
      %v5420 = vpop.f32.mrb[0].mxu0
      %v5421 = vpop.f32.mrb[0].mxu0
      %v5422 = vadd.f32 0.0, %v5421
      %v5423 = vpop.f32.mrb[0].mxu0
      %5424 = vmatprep.mubr.bf16.mxu0 0
      %5425 = vmatmul.mubr.bf16.gmra.mrb[0].mxu0 %v5210
      %v5426 = vpop.f32.mrb[0].mxu0
      %v5427 = vadd.f32 0.0, %v5426
      %v5428 = vpop.f32.mrb[0].mxu0
      %v5429 = vpop.f32.mrb[0].mxu0
      %v5430 = vadd.f32 0.0, %v5429
      %v5431 = vpop.f32.mrb[0].mxu0
      %5432 = vmatprep.mubr.bf16.mxu0 0
      %5433 = vmatmul.mubr.bf16.gmra.mrb[0].mxu0 %v5212
      %v5434 = vpop.f32.mrb[0].mxu0
      %v5435 = vadd.f32 0.0, %v5434
      %v5436 = vpop.f32.mrb[0].mxu0
      %v5437 = vpop.f32.mrb[0].mxu0
      %v5438 = vadd.f32 0.0, %v5437
      %v5439 = vpop.f32.mrb[0].mxu0
      %5440 = vmatprep.mubr.bf16.mxu0 0
      %5441 = vmatmul.mubr.bf16.gmra.mrb[0].mxu0 %v5214
      %v5442 = vpop.f32.mrb[0].mxu0
      %v5443 = vadd.f32 0.0, %v5442
      %v5444 = vpop.f32.mrb[0].mxu0
      %v5445 = vpop.f32.mrb[0].mxu0
      %v5446 = vadd.f32 0.0, %v5445
      %v5447 = vpop.f32.mrb[0].mxu0
      %5448 = vmatprep.mubr.bf16.mxu0 0
      %5449 = vmatmul.mubr.bf16.gmra.mrb[0].mxu0 %v5216
      %v5450 = vpop.f32.mrb[0].mxu0
      %v5451 = vadd.f32 0.0, %v5450
      %v5452 = vpop.f32.mrb[0].mxu0
      %v5453 = vpop.f32.mrb[0].mxu0
      %v5454 = vadd.f32 0.0, %v5453
      %v5455 = vpop.f32.mrb[0].mxu0
      %5456 = vmatprep.mubr.bf16.mxu0 0
      %5457 = vmatmul.mubr.bf16.gmra.mrb[0].mxu0 %v5218
      %v5458 = vpop.f32.mrb[0].mxu0
      %v5459 = vadd.f32 0.0, %v5458
      %v5460 = vpop.f32.mrb[0].mxu0
      %v5461 = vpop.f32.mrb[0].mxu0
      %v5462 = vadd.f32 0.0, %v5461
      %v5463 = vpop.f32.mrb[0].mxu0
      %5464 = vmatprep.mubr.bf16.mxu0 0
      %5465 = vmatmul.mubr.bf16.gmra.mrb[0].mxu0 %v5220
      %v5466 = vpop.f32.mrb[0].mxu0
      %v5467 = vadd.f32 0.0, %v5466
      %v5468 = vpop.f32.mrb[0].mxu0
      %v5469 = vpop.f32.mrb[0].mxu0
      %v5470 = vadd.f32 0.0, %v5469
      %v5471 = vpop.f32.mrb[0].mxu0
      %5472 = vmatprep.mubr.bf16.mxu0 0
      %5473 = vmatmul.mubr.bf16.gmra.mrb[0].mxu0 %v5222
      %v5474 = vpop.f32.mrb[0].mxu0
      %v5475 = vadd.f32 0.0, %v5474
      %v5476 = vpop.f32.mrb[0].mxu0
      %v5477 = vpop.f32.mrb[0].mxu0
      %v5478 = vadd.f32 0.0, %v5477
      %v5479 = vpop.f32.mrb[0].mxu0
      %5480 = vmatprep.mubr.bf16.mxu0 0
      %5481 = vmatmul.mubr.bf16.gmra.mrb[0].mxu0 %v5224
      %v5482 = vpop.f32.mrb[0].mxu0
      %v5483 = vadd.f32 0.0, %v5482
      %v5484 = vpop.f32.mrb[0].mxu0
      %v5485 = vpop.f32.mrb[0].mxu0
      %v5486 = vadd.f32 0.0, %v5485
      %v5487 = vpop.f32.mrb[0].mxu0
      %5488 = vmatprep.mubr.bf16.mxu0 0
      %5489 = vmatmul.mubr.bf16.gmra.mrb[0].mxu0 %v5226
      %v5490 = vpop.f32.mrb[0].mxu0
      %v5491 = vadd.f32 0.0, %v5490
      %v5492 = vpop.f32.mrb[0].mxu0
      %v5493 = vpop.f32.mrb[0].mxu0
      %v5494 = vadd.f32 0.0, %v5493
      %v5495 = vpop.f32.mrb[0].mxu0
      %5496 = vmatprep.mubr.bf16.mxu0 0
      %5497 = vmatmul.mubr.bf16.gmra.mrb[0].mxu0 %v5228
      %v5498 = vpop.f32.mrb[0].mxu0
      %v5499 = vadd.f32 0.0, %v5498
      %v5500 = vpop.f32.mrb[0].mxu0
      %v5501 = vpop.f32.mrb[0].mxu0
      %v5502 = vadd.f32 0.0, %v5501
      %v5503 = vpop.f32.mrb[0].mxu0
      %5504 = vmatprep.mubr.bf16.mxu0 0
      %5505 = vmatmul.mubr.bf16.gmra.mrb[0].mxu0 %v5230
      %v5506 = vpop.f32.mrb[0].mxu0
      %v5507 = vadd.f32 0.0, %v5506
      %v5508 = vpop.f32.mrb[0].mxu0
      %v5509 = vpop.f32.mrb[0].mxu0
      %v5510 = vadd.f32 0.0, %v5509
      %v5511 = vpop.f32.mrb[0].mxu0
      %5512 = vmatprep.mubr.bf16.mxu0 0
      %5513 = vmatmul.mubr.bf16.gmra.mrb[0].mxu0 %v5232
      %v5514 = vpop.f32.mrb[0].mxu0
      %v5515 = vadd.f32 0.0, %v5514
      %v5516 = vpop.f32.mrb[0].mxu0
      %v5517 = vpop.f32.mrb[0].mxu0
      %v5518 = vadd.f32 0.0, %v5517
      %v5519 = vpop.f32.mrb[0].mxu0
      %5520 = vmatprep.mubr.bf16.mxu0 0
      %5521 = vmatmul.mubr.bf16.gmra.mrb[0].mxu0 %v5234
      %v5522 = vpop.f32.mrb[0].mxu0
      %v5523 = vadd.f32 0.0, %v5522
      %v5524 = vpop.f32.mrb[0].mxu0
      %v5525 = vpop.f32.mrb[0].mxu0
      %v5526 = vadd.f32 0.0, %v5525
      %v5527 = vpop.f32.mrb[0].mxu0
      %5528 = vmatprep.mubr.bf16.mxu0 0
      %5529 = vmatmul.mubr.bf16.gmra.mrb[0].mxu0 %v5236
      %v5530 = vpop.f32.mrb[0].mxu0
      %v5531 = vadd.f32 0.0, %v5530
      %v5532 = vpop.f32.mrb[0].mxu0
      %v5533 = vpop.f32.mrb[0].mxu0
      %v5534 = vadd.f32 0.0, %v5533
      %v5535 = vpop.f32.mrb[0].mxu0
      %5536 = vmatprep.mubr.bf16.mxu0 0
      %5537 = vmatmul.mubr.bf16.gmra.mrb[0].mxu0 %v5238
      %v5538 = vpop.f32.mrb[0].mxu0
      %v5539 = vadd.f32 0.0, %v5538
      %v5540 = vpop.f32.mrb[0].mxu0
      %v5541 = vpop.f32.mrb[0].mxu0
      %v5542 = vadd.f32 0.0, %v5541
      %v5543 = vpop.f32.mrb[0].mxu0
      %5544 = vmatprep.mubr.bf16.mxu0 0
      %5545 = vmatmul.mubr.bf16.gmra.mrb[0].mxu0 %v5240
      %v5546 = vpop.f32.mrb[0].mxu0
      %v5547 = vadd.f32 0.0, %v5546
      %v5548 = vpop.f32.mrb[0].mxu0
      %v5549 = vpop.f32.mrb[0].mxu0
      %v5550 = vadd.f32 0.0, %v5549
      %v5551 = vpop.f32.mrb[0].mxu0
      %5552 = vmatprep.mubr.bf16.mxu0 0
      %5553 = vmatmul.mubr.bf16.gmra.mrb[0].mxu0 %v5242
      %v5554 = vpop.f32.mrb[0].mxu0
      %v5555 = vadd.f32 0.0, %v5554
      %v5556 = vpop.f32.mrb[0].mxu0
      %v5557 = vpop.f32.mrb[0].mxu0
      %v5558 = vadd.f32 0.0, %v5557
      %v5559 = vpop.f32.mrb[0].mxu0
      %5560 = vmatprep.mubr.bf16.mxu0 0
      %5561 = vmatmul.mubr.bf16.gmra.mrb[0].mxu0 %v5244
      %v5562 = vpop.f32.mrb[0].mxu0
      %v5563 = vadd.f32 0.0, %v5562
      %v5564 = vpop.f32.mrb[0].mxu0
      %v5565 = vpop.f32.mrb[0].mxu0
      %v5566 = vadd.f32 0.0, %v5565
      %v5567 = vpop.f32.mrb[0].mxu0
      %5568 = vmatprep.mubr.bf16.mxu0 0
      %5569 = vmatmul.mubr.bf16.gmra.mrb[0].mxu0 %v5246
      %v5570 = vpop.f32.mrb[0].mxu0
      %v5571 = vadd.f32 0.0, %v5570
      %v5572 = vpop.f32.mrb[0].mxu0
      %v5573 = vpop.f32.mrb[0].mxu0
      %v5574 = vadd.f32 0.0, %v5573
      %v5575 = vpop.f32.mrb[0].mxu0
      %5576 = vmatprep.mubr.bf16.mxu0 0
      %5577 = vmatmul.mubr.bf16.gmra.mrb[0].mxu0 %v5248
      %v5578 = vpop.f32.mrb[0].mxu0
      %v5579 = vadd.f32 0.0, %v5578
      %v5580 = vpop.f32.mrb[0].mxu0
      %v5581 = vpop.f32.mrb[0].mxu0
      %v5582 = vadd.f32 0.0, %v5581
      %v5583 = vpop.f32.mrb[0].mxu0
      %5584 = vmatprep.mubr.bf16.mxu0 0
      %5585 = vmatmul.mubr.bf16.gmra.mrb[0].mxu0 %v5250
      %v5586 = vpop.f32.mrb[0].mxu0
      %v5587 = vadd.f32 0.0, %v5586
      %v5588 = vpop.f32.mrb[0].mxu0
      %v5589 = vpop.f32.mrb[0].mxu0
      %v5590 = vadd.f32 0.0, %v5589
      %v5591 = vpop.f32.mrb[0].mxu0
      %5592 = vmatprep.mubr.bf16.mxu0 0
      %5593 = vmatmul.mubr.bf16.gmra.mrb[0].mxu0 %v5252
      %v5594 = vpop.f32.mrb[0].mxu0
      %v5595 = vadd.f32 0.0, %v5594
      %v5596 = vpop.f32.mrb[0].mxu0
      %v5597 = vpop.f32.mrb[0].mxu0
      %v5598 = vadd.f32 0.0, %v5597
      %v5599 = vpop.f32.mrb[0].mxu0
      %5600 = vmatprep.mubr.bf16.mxu0 0
      %5601 = vmatmul.mubr.bf16.gmra.mrb[0].mxu0 %v5254
      %v5602 = vpop.f32.mrb[0].mxu0
      %v5603 = vadd.f32 0.0, %v5602
      %v5604 = vpop.f32.mrb[0].mxu0
      %v5605 = vpop.f32.mrb[0].mxu0
      %v5606 = vadd.f32 0.0, %v5605
      %v5607 = vpop.f32.mrb[0].mxu0
      %5608 = vmatprep.mubr.bf16.mxu0 0
      %5609 = vmatmul.mubr.bf16.gmra.mrb[0].mxu0 %v5256
      %v5610 = vpop.f32.mrb[0].mxu0
      %v5611 = vadd.f32 0.0, %v5610
      %v5612 = vpop.f32.mrb[0].mxu0
      %v5613 = vpop.f32.mrb[0].mxu0
      %v5614 = vadd.f32 0.0, %v5613
      %v5615 = vpop.f32.mrb[0].mxu0
      %5616 = vmatprep.mubr.bf16.mxu0 0
      %5617 = vmatmul.mubr.bf16.gmra.mrb[0].mxu0 %v5258
      %v5618 = vpop.f32.mrb[0].mxu0
      %v5619 = vadd.f32 0.0, %v5618
      %v5620 = vpop.f32.mrb[0].mxu0
      %v5621 = vpop.f32.mrb[0].mxu0
      %v5622 = vadd.f32 0.0, %v5621
      %v5623 = vpop.f32.mrb[0].mxu0
      %5624 = vmatprep.mubr.bf16.mxu0 0
      %5625 = vmatmul.mubr.bf16.gmra.mrb[0].mxu0 %v5260
      %v5626 = vpop.f32.mrb[0].mxu0
      %v5627 = vadd.f32 0.0, %v5626
      %v5628 = vpop.f32.mrb[0].mxu0
      %v5629 = vpop.f32.mrb[0].mxu0
      %v5630 = vadd.f32 0.0, %v5629
      %v5631 = vpop.f32.mrb[0].mxu0
      %5632 = vmatprep.mubr.bf16.mxu0 0
      %5633 = vmatmul.mubr.bf16.gmra.mrb[0].mxu0 %v5262
      %v5634 = vpop.f32.mrb[0].mxu0
      %v5635 = vadd.f32 0.0, %v5634
      %v5636 = vpop.f32.mrb[0].mxu0
      %v5637 = vpop.f32.mrb[0].mxu0
      %v5638 = vadd.f32 0.0, %v5637
      %v5639 = vpop.f32.mrb[0].mxu0
      %5640 = vmatprep.mubr.bf16.mxu0 0
      %5641 = vmatmul.mubr.bf16.gmra.mrb[0].mxu0 %v5264
      %v5642 = vpop.f32.mrb[0].mxu0
      %v5643 = vadd.f32 0.0, %v5642
      %v5644 = vpop.f32.mrb[0].mxu0
      %v5645 = vpop.f32.mrb[0].mxu0
      %v5646 = vadd.f32 0.0, %v5645
      %v5647 = vpop.f32.mrb[0].mxu0
      %5648 = vmatprep.mubr.bf16.mxu0 0
      %5649 = vmatmul.mubr.bf16.gmra.mrb[0].mxu0 %v5266
      %v5650 = vpop.f32.mrb[0].mxu0
      %v5651 = vadd.f32 0.0, %v5650
      %v5652 = vpop.f32.mrb[0].mxu0
      %v5653 = vpop.f32.mrb[0].mxu0
      %v5654 = vadd.f32 0.0, %v5653
      %v5655 = vpop.f32.mrb[0].mxu0
      %5656 = vmatprep.mubr.bf16.mxu0 0
      %5657 = vmatmul.mubr.bf16.gmra.mrb[0].mxu0 %v5268
      %v5658 = vpop.f32.mrb[0].mxu0
      %v5659 = vadd.f32 0.0, %v5658
      %v5660 = vpop.f32.mrb[0].mxu0
      %v5661 = vpop.f32.mrb[0].mxu0
      %v5662 = vadd.f32 0.0, %v5661
      %v5663 = vpop.f32.mrb[0].mxu0
      %5664 = vmatprep.mubr.bf16.mxu0 0
      %5665 = vmatmul.mubr.bf16.gmra.mrb[0].mxu0 %v5270
      %v5666 = vpop.f32.mrb[0].mxu0
      %v5667 = vadd.f32 0.0, %v5666
      %v5668 = vpop.f32.mrb[0].mxu0
      %v5669 = vpop.f32.mrb[0].mxu0
      %v5670 = vadd.f32 0.0, %v5669
      %v5671 = vpop.f32.mrb[0].mxu0
      %5672 = vmatprep.mubr.bf16.mxu0 0
      %5673 = vmatmul.mubr.bf16.gmra.mrb[0].mxu0 %v5272
      %v5674 = vpop.f32.mrb[0].mxu0
      %v5675 = vadd.f32 0.0, %v5674
      %v5676 = vpop.f32.mrb[0].mxu0
      %v5677 = vpop.f32.mrb[0].mxu0
      %v5678 = vadd.f32 0.0, %v5677
      %v5679 = vpop.f32.mrb[0].mxu0
      %5680 = vmatprep.mubr.bf16.mxu0 0
      %5681 = vmatmul.mubr.bf16.gmra.mrb[0].mxu0 %v5274
      %v5682 = vpop.f32.mrb[0].mxu0
      %v5683 = vadd.f32 0.0, %v5682
      %v5684 = vpop.f32.mrb[0].mxu0
      %v5685 = vpop.f32.mrb[0].mxu0
      %v5686 = vadd.f32 0.0, %v5685
      %v5687 = vpop.f32.mrb[0].mxu0
      %5688 = vmatprep.mubr.bf16.mxu0 0
      %5689 = vmatmul.mubr.bf16.gmra.mrb[0].mxu0 %v5276
      %v5690 = vpop.f32.mrb[0].mxu0
      %v5691 = vadd.f32 0.0, %v5690
      %v5692 = vpop.f32.mrb[0].mxu0
      %v5693 = vpop.f32.mrb[0].mxu0
      %v5694 = vadd.f32 0.0, %v5693
      %v5695 = vpop.f32.mrb[0].mxu0
      %5696 = vmatprep.mubr.bf16.mxu0 0
      %5697 = vmatmul.mubr.bf16.gmra.mrb[0].mxu0 %v5278
      %v5698 = vpop.f32.mrb[0].mxu0
      %v5699 = vadd.f32 0.0, %v5698
      %v5700 = vpop.f32.mrb[0].mxu0
      %v5701 = vpop.f32.mrb[0].mxu0
      %v5702 = vadd.f32 0.0, %v5701
      %v5703 = vpop.f32.mrb[0].mxu0
      %5704 = vmatprep.mubr.bf16.mxu0 0
      %5705 = vmatmul.mubr.bf16.gmra.mrb[0].mxu0 %v5280
      %v5706 = vpop.f32.mrb[0].mxu0
      %v5707 = vadd.f32 0.0, %v5706
      %v5708 = vpop.f32.mrb[0].mxu0
      %v5709 = vpop.f32.mrb[0].mxu0
      %v5710 = vadd.f32 0.0, %v5709
      %v5711 = vpop.f32.mrb[0].mxu0
      %5712 = vmatprep.mubr.bf16.mxu0 0
      %5713 = vmatmul.mubr.bf16.gmra.mrb[0].mxu0 %v5282
      %v5714 = vpop.f32.mrb[0].mxu0
      %v5715 = vadd.f32 0.0, %v5714
      %v5716 = vpop.f32.mrb[0].mxu0
      %v5717 = vpop.f32.mrb[0].mxu0
      %v5718 = vadd.f32 0.0, %v5717
      %v5719 = vpop.f32.mrb[0].mxu0
      %5720 = vmatprep.mubr.bf16.mxu0 0
      %5721 = vmatmul.mubr.bf16.gmra.mrb[0].mxu0 %v5284
      %v5722 = vpop.f32.mrb[0].mxu0
      %v5723 = vadd.f32 0.0, %v5722
      %v5724 = vpop.f32.mrb[0].mxu0
      %v5725 = vpop.f32.mrb[0].mxu0
      %v5726 = vadd.f32 0.0, %v5725
      %v5727 = vpop.f32.mrb[0].mxu0
      %5728 = vmatprep.mubr.bf16.mxu0 0
      %5729 = vmatmul.mubr.bf16.gmra.mrb[0].mxu0 %v5286
      %v5730 = vpop.f32.mrb[0].mxu0
      %v5731 = vadd.f32 0.0, %v5730
      %v5732 = vpop.f32.mrb[0].mxu0
      %v5733 = vpop.f32.mrb[0].mxu0
      %v5734 = vadd.f32 0.0, %v5733
      %v5735 = vpop.f32.mrb[0].mxu0
      %5736 = vmatprep.mubr.bf16.mxu0 0
      %5737 = vmatmul.mubr.bf16.gmra.mrb[0].mxu0 %v5288
      %v5738 = vpop.f32.mrb[0].mxu0
      %v5739 = vadd.f32 0.0, %v5738
      %v5740 = vpop.f32.mrb[0].mxu0
      %v5741 = vpop.f32.mrb[0].mxu0
      %v5742 = vadd.f32 0.0, %v5741
      %v5743 = vpop.f32.mrb[0].mxu0
      %5744 = vmatprep.mubr.bf16.mxu0 0
      %5745 = vmatmul.mubr.bf16.gmra.mrb[0].mxu0 %v5290
      %v5746 = vpop.f32.mrb[0].mxu0
      %v5747 = vadd.f32 0.0, %v5746
      %v5748 = vpop.f32.mrb[0].mxu0
      %v5749 = vpop.f32.mrb[0].mxu0
      %v5750 = vadd.f32 0.0, %v5749
      %v5751 = vpop.f32.mrb[0].mxu0
      %5752 = vmatprep.mubr.bf16.mxu0 0
      %5753 = vmatmul.mubr.bf16.gmra.mrb[0].mxu0 %v5292
      %v5754 = vpop.f32.mrb[0].mxu0
      %v5755 = vadd.f32 0.0, %v5754
      %v5756 = vpop.f32.mrb[0].mxu0
      %v5757 = vpop.f32.mrb[0].mxu0
      %v5758 = vadd.f32 0.0, %v5757
      %v5759 = vpop.f32.mrb[0].mxu0
      %5760 = vmatprep.mubr.bf16.mxu0 0
      %5761 = vmatmul.mubr.bf16.gmra.mrb[0].mxu0 %v5294
      %v5762 = vpop.f32.mrb[0].mxu0
      %v5763 = vadd.f32 0.0, %v5762
      %v5764 = vpop.f32.mrb[0].mxu0
      %v5765 = vpop.f32.mrb[0].mxu0
      %v5766 = vadd.f32 0.0, %v5765
      %v5767 = vpop.f32.mrb[0].mxu0
      %5768 = vmatprep.mubr.bf16.mxu0 0
      %5769 = vmatmul.mubr.bf16.gmra.mrb[0].mxu0 %v5296
      %v5770 = vpop.f32.mrb[0].mxu0
      %v5771 = vadd.f32 0.0, %v5770
      %v5772 = vpop.f32.mrb[0].mxu0
      %v5773 = vpop.f32.mrb[0].mxu0
      %v5774 = vadd.f32 0.0, %v5773
      %v5775 = vpop.f32.mrb[0].mxu0
      %5776 = vmatprep.mubr.bf16.mxu0 0
      %5777 = vmatmul.mubr.bf16.gmra.mrb[0].mxu0 %v5298
      %v5778 = vpop.f32.mrb[0].mxu0
      %v5779 = vadd.f32 0.0, %v5778
      %v5780 = vpop.f32.mrb[0].mxu0
      %v5781 = vpop.f32.mrb[0].mxu0
      %v5782 = vadd.f32 0.0, %v5781
      %v5783 = vpop.f32.mrb[0].mxu0
      %5784 = vmatprep.mubr.bf16.mxu0 0
      %5785 = vmatmul.mubr.bf16.gmra.mrb[0].mxu0 %v5300
      %v5786 = vpop.f32.mrb[0].mxu0
      %v5787 = vadd.f32 0.0, %v5786
      %v5788 = vpop.f32.mrb[0].mxu0
      %v5789 = vpop.f32.mrb[0].mxu0
      %v5790 = vadd.f32 0.0, %v5789
      %v5791 = vpop.f32.mrb[0].mxu0
      %5792 = vmatprep.mubr.bf16.mxu0 0
      %5793 = vmatmul.mubr.bf16.gmra.mrb[0].mxu0 %v5302
      %v5794 = vpop.f32.mrb[0].mxu0
      %v5795 = vadd.f32 0.0, %v5794
      %v5796 = vpop.f32.mrb[0].mxu0
      %v5797 = vpop.f32.mrb[0].mxu0
      %v5798 = vadd.f32 0.0, %v5797
      %v5799 = vpop.f32.mrb[0].mxu0
      %5800 = vmatprep.mubr.bf16.mxu0 0
      %5801 = vmatmul.mubr.bf16.gmra.mrb[0].mxu0 %v5304
      %v5802 = vpop.f32.mrb[0].mxu0
      %v5803 = vadd.f32 0.0, %v5802
      %v5804 = vpop.f32.mrb[0].mxu0
      %v5805 = vpop.f32.mrb[0].mxu0
      %v5806 = vadd.f32 0.0, %v5805
      %v5807 = vpop.f32.mrb[0].mxu0
      %5808 = vmatprep.mubr.bf16.mxu0 0
      %5809 = vmatmul.mubr.bf16.gmra.mrb[0].mxu0 %v5306
      %v5810 = vpop.f32.mrb[0].mxu0
      %v5811 = vadd.f32 0.0, %v5810
      %v5812 = vpop.f32.mrb[0].mxu0
      %v5813 = vpop.f32.mrb[0].mxu0
      %v5814 = vadd.f32 0.0, %v5813
      %v5815 = vpop.f32.mrb[0].mxu0
      %5816 = vmatprep.mubr.bf16.mxu0 0
      %5817 = vmatmul.mubr.bf16.gmra.mrb[0].mxu0 %v5308
      %v5818 = vpop.f32.mrb[0].mxu0
      %v5819 = vadd.f32 0.0, %v5818
      %v5820 = vpop.f32.mrb[0].mxu0
      %v5821 = vpop.f32.mrb[0].mxu0
      %v5822 = vadd.f32 0.0, %v5821
      %v5823 = vpop.f32.mrb[0].mxu0
      %5824 = vmatprep.mubr.bf16.mxu0 0
      %5825 = vmatmul.mubr.bf16.gmra.mrb[0].mxu0 %v5310
      %v5826 = vpop.f32.mrb[0].mxu0
      %v5827 = vadd.f32 0.0, %v5826
      %v5828 = vpop.f32.mrb[0].mxu0
      %v5829 = vpop.f32.mrb[0].mxu0
      %v5830 = vadd.f32 0.0, %v5829
      %v5831 = vpop.f32.mrb[0].mxu0
      %5832 = vmatprep.mubr.bf16.mxu0 0
      %5833 = vmatmul.mubr.bf16.gmra.mrb[0].mxu0 %v5312
      %v5834 = vpop.f32.mrb[0].mxu0
      %v5835 = vadd.f32 0.0, %v5834
      %v5836 = vpop.f32.mrb[0].mxu0
      %v5837 = vpop.f32.mrb[0].mxu0
      %v5838 = vadd.f32 0.0, %v5837
      %v5839 = vpop.f32.mrb[0].mxu0
      %5840 = vmatprep.mubr.bf16.mxu0 0
      %5841 = vmatmul.mubr.bf16.gmra.mrb[0].mxu0 %v5314
      %v5842 = vpop.f32.mrb[0].mxu0
      %v5843 = vadd.f32 0.0, %v5842
      %v5844 = vpop.f32.mrb[0].mxu0
      %v5845 = vpop.f32.mrb[0].mxu0
      %v5846 = vadd.f32 0.0, %v5845
      %v5847 = vpop.f32.mrb[0].mxu0
      %5848 = vmatprep.mubr.bf16.mxu0 0
      %5849 = vmatmul.mubr.bf16.gmra.mrb[0].mxu0 %v5316
      %v5850 = vpop.f32.mrb[0].mxu0
      %v5851 = vadd.f32 0.0, %v5850
      %v5852 = vpop.f32.mrb[0].mxu0
      %v5853 = vpop.f32.mrb[0].mxu0
      %v5854 = vadd.f32 0.0, %v5853
      %v5855 = vpop.f32.mrb[0].mxu0
      %5856 = vmatprep.mubr.bf16.mxu0 0
      %5857 = vmatmul.mubr.bf16.gmra.mrb[0].mxu0 %v5318
      %v5858 = vpop.f32.mrb[0].mxu0
      %v5859 = vadd.f32 0.0, %v5858
      %v5860 = vpop.f32.mrb[0].mxu0
      %v5861 = vpop.f32.mrb[0].mxu0
      %v5862 = vadd.f32 0.0, %v5861
      %v5863 = vpop.f32.mrb[0].mxu0
      %5864 = vdwg.mxu0
      %vm5865 = vcmask 64512
      %5866 = vst.msk [vmem:[%s165] sm:$0xff] %vm5865, %v5355
      %5867 = vst.msk [vmem:[%s165 + $0x8] sm:$0xff] %vm5865, %v5358
      %5868 = vst.msk [vmem:[%s165 + $0x10] sm:$0xff] %vm5865, %v5363
      %5869 = vst.msk [vmem:[%s165 + $0x18] sm:$0xff] %vm5865, %v5366
      %5870 = vst.msk [vmem:[%s165 + $0x20] sm:$0xff] %vm5865, %v5371
      %5871 = vst.msk [vmem:[%s165 + $0x28] sm:$0xff] %vm5865, %v5374
      %5872 = vst.msk [vmem:[%s165 + $0x30] sm:$0xff] %vm5865, %v5379
      %5873 = vst.msk [vmem:[%s165 + $0x38] sm:$0xff] %vm5865, %v5382
      %5874 = vst.msk [vmem:[%s165 + $0x40] sm:$0xff] %vm5865, %v5387
      %5875 = vst.msk [vmem:[%s165 + $0x48] sm:$0xff] %vm5865, %v5390
      %5876 = vst.msk [vmem:[%s165 + $0x50] sm:$0xff] %vm5865, %v5395
      %5877 = vst.msk [vmem:[%s165 + $0x58] sm:$0xff] %vm5865, %v5398
      %5878 = vst.msk [vmem:[%s165 + $0x60] sm:$0xff] %vm5865, %v5403
      %5879 = vst.msk [vmem:[%s165 + $0x68] sm:$0xff] %vm5865, %v5406
      %5880 = vst.msk [vmem:[%s165 + $0x70] sm:$0xff] %vm5865, %v5411
      %5881 = vst.msk [vmem:[%s165 + $0x78] sm:$0xff] %vm5865, %v5414
      %5882 = vst.msk [vmem:[%s165 + $0x80] sm:$0xff] %vm5865, %v5419
      %5883 = vst.msk [vmem:[%s165 + $0x88] sm:$0xff] %vm5865, %v5422
      %5884 = vst.msk [vmem:[%s165 + $0x90] sm:$0xff] %vm5865, %v5427
      %5885 = vst.msk [vmem:[%s165 + $0x98] sm:$0xff] %vm5865, %v5430
      %5886 = vst.msk [vmem:[%s165 + $0xa0] sm:$0xff] %vm5865, %v5435
      %5887 = vst.msk [vmem:[%s165 + $0xa8] sm:$0xff] %vm5865, %v5438
      %5888 = vst.msk [vmem:[%s165 + $0xb0] sm:$0xff] %vm5865, %v5443
      %5889 = vst.msk [vmem:[%s165 + $0xb8] sm:$0xff] %vm5865, %v5446
      %5890 = vst.msk [vmem:[%s165 + $0xc0] sm:$0xff] %vm5865, %v5451
      %5891 = vst.msk [vmem:[%s165 + $0xc8] sm:$0xff] %vm5865, %v5454
      %5892 = vst.msk [vmem:[%s165 + $0xd0] sm:$0xff] %vm5865, %v5459
      %5893 = vst.msk [vmem:[%s165 + $0xd8] sm:$0xff] %vm5865, %v5462
      %5894 = vst.msk [vmem:[%s165 + $0xe0] sm:$0xff] %vm5865, %v5467
      %5895 = vst.msk [vmem:[%s165 + $0xe8] sm:$0xff] %vm5865, %v5470
      %5896 = vst.msk [vmem:[%s165 + $0xf0] sm:$0xff] %vm5865, %v5475
      %5897 = vst.msk [vmem:[%s165 + $0xf8] sm:$0xff] %vm5865, %v5478
      %5898 = vst.msk [vmem:[%s165 + $0x100] sm:$0xff] %vm5865, %v5483
      %5899 = vst.msk [vmem:[%s165 + $0x108] sm:$0xff] %vm5865, %v5486
      %5900 = vst.msk [vmem:[%s165 + $0x110] sm:$0xff] %vm5865, %v5491
      %5901 = vst.msk [vmem:[%s165 + $0x118] sm:$0xff] %vm5865, %v5494
      %5902 = vst.msk [vmem:[%s165 + $0x120] sm:$0xff] %vm5865, %v5499
      %5903 = vst.msk [vmem:[%s165 + $0x128] sm:$0xff] %vm5865, %v5502
      %5904 = vst.msk [vmem:[%s165 + $0x130] sm:$0xff] %vm5865, %v5507
      %5905 = vst.msk [vmem:[%s165 + $0x138] sm:$0xff] %vm5865, %v5510
      %5906 = vst.msk [vmem:[%s165 + $0x140] sm:$0xff] %vm5865, %v5515
      %5907 = vst.msk [vmem:[%s165 + $0x148] sm:$0xff] %vm5865, %v5518
      %5908 = vst.msk [vmem:[%s165 + $0x150] sm:$0xff] %vm5865, %v5523
      %5909 = vst.msk [vmem:[%s165 + $0x158] sm:$0xff] %vm5865, %v5526
      %5910 = vst.msk [vmem:[%s165 + $0x160] sm:$0xff] %vm5865, %v5531
      %5911 = vst.msk [vmem:[%s165 + $0x168] sm:$0xff] %vm5865, %v5534
      %5912 = vst.msk [vmem:[%s165 + $0x170] sm:$0xff] %vm5865, %v5539
      %5913 = vst.msk [vmem:[%s165 + $0x178] sm:$0xff] %vm5865, %v5542
      %5914 = vst.msk [vmem:[%s165 + $0x180] sm:$0xff] %vm5865, %v5547
      %5915 = vst.msk [vmem:[%s165 + $0x188] sm:$0xff] %vm5865, %v5550
      %5916 = vst.msk [vmem:[%s165 + $0x190] sm:$0xff] %vm5865, %v5555
      %5917 = vst.msk [vmem:[%s165 + $0x198] sm:$0xff] %vm5865, %v5558
      %5918 = vst.msk [vmem:[%s165 + $0x1a0] sm:$0xff] %vm5865, %v5563
      %5919 = vst.msk [vmem:[%s165 + $0x1a8] sm:$0xff] %vm5865, %v5566
      %5920 = vst.msk [vmem:[%s165 + $0x1b0] sm:$0xff] %vm5865, %v5571
      %5921 = vst.msk [vmem:[%s165 + $0x1b8] sm:$0xff] %vm5865, %v5574
      %5922 = vst.msk [vmem:[%s165 + $0x1c0] sm:$0xff] %vm5865, %v5579
      %5923 = vst.msk [vmem:[%s165 + $0x1c8] sm:$0xff] %vm5865, %v5582
      %5924 = vst.msk [vmem:[%s165 + $0x1d0] sm:$0xff] %vm5865, %v5587
      %5925 = vst.msk [vmem:[%s165 + $0x1d8] sm:$0xff] %vm5865, %v5590
      %5926 = vst.msk [vmem:[%s165 + $0x1e0] sm:$0xff] %vm5865, %v5595
      %5927 = vst.msk [vmem:[%s165 + $0x1e8] sm:$0xff] %vm5865, %v5598
      %5928 = vst.msk [vmem:[%s165 + $0x1f0] sm:$0xff] %vm5865, %v5603
      %5929 = vst.msk [vmem:[%s165 + $0x1f8] sm:$0xff] %vm5865, %v5606
      %5930 = vst.msk [vmem:[%s165 + $0x200] sm:$0xff] %vm5865, %v5611
      %5931 = vst.msk [vmem:[%s165 + $0x208] sm:$0xff] %vm5865, %v5614
      %5932 = vst.msk [vmem:[%s165 + $0x210] sm:$0xff] %vm5865, %v5619
      %5933 = vst.msk [vmem:[%s165 + $0x218] sm:$0xff] %vm5865, %v5622
      %5934 = vst.msk [vmem:[%s165 + $0x220] sm:$0xff] %vm5865, %v5627
      %5935 = vst.msk [vmem:[%s165 + $0x228] sm:$0xff] %vm5865, %v5630
      %5936 = vst.msk [vmem:[%s165 + $0x230] sm:$0xff] %vm5865, %v5635
      %5937 = vst.msk [vmem:[%s165 + $0x238] sm:$0xff] %vm5865, %v5638
      %5938 = vst.msk [vmem:[%s165 + $0x240] sm:$0xff] %vm5865, %v5643
      %5939 = vst.msk [vmem:[%s165 + $0x248] sm:$0xff] %vm5865, %v5646
      %5940 = vst.msk [vmem:[%s165 + $0x250] sm:$0xff] %vm5865, %v5651
      %5941 = vst.msk [vmem:[%s165 + $0x258] sm:$0xff] %vm5865, %v5654
      %5942 = vst.msk [vmem:[%s165 + $0x260] sm:$0xff] %vm5865, %v5659
      %5943 = vst.msk [vmem:[%s165 + $0x268] sm:$0xff] %vm5865, %v5662
      %5944 = vst.msk [vmem:[%s165 + $0x270] sm:$0xff] %vm5865, %v5667
      %5945 = vst.msk [vmem:[%s165 + $0x278] sm:$0xff] %vm5865, %v5670
      %5946 = vst.msk [vmem:[%s165 + $0x280] sm:$0xff] %vm5865, %v5675
      %5947 = vst.msk [vmem:[%s165 + $0x288] sm:$0xff] %vm5865, %v5678
      %5948 = vst.msk [vmem:[%s165 + $0x290] sm:$0xff] %vm5865, %v5683
      %5949 = vst.msk [vmem:[%s165 + $0x298] sm:$0xff] %vm5865, %v5686
      %5950 = vst.msk [vmem:[%s165 + $0x2a0] sm:$0xff] %vm5865, %v5691
      %5951 = vst.msk [vmem:[%s165 + $0x2a8] sm:$0xff] %vm5865, %v5694
      %5952 = vst.msk [vmem:[%s165 + $0x2b0] sm:$0xff] %vm5865, %v5699
      %5953 = vst.msk [vmem:[%s165 + $0x2b8] sm:$0xff] %vm5865, %v5702
      %5954 = vst.msk [vmem:[%s165 + $0x2c0] sm:$0xff] %vm5865, %v5707
      %5955 = vst.msk [vmem:[%s165 + $0x2c8] sm:$0xff] %vm5865, %v5710
      %5956 = vst.msk [vmem:[%s165 + $0x2d0] sm:$0xff] %vm5865, %v5715
      %5957 = vst.msk [vmem:[%s165 + $0x2d8] sm:$0xff] %vm5865, %v5718
      %5958 = vst.msk [vmem:[%s165 + $0x2e0] sm:$0xff] %vm5865, %v5723
      %5959 = vst.msk [vmem:[%s165 + $0x2e8] sm:$0xff] %vm5865, %v5726
      %5960 = vst.msk [vmem:[%s165 + $0x2f0] sm:$0xff] %vm5865, %v5731
      %5961 = vst.msk [vmem:[%s165 + $0x2f8] sm:$0xff] %vm5865, %v5734
      %5962 = vst.msk [vmem:[%s165 + $0x300] sm:$0xff] %vm5865, %v5739
      %5963 = vst.msk [vmem:[%s165 + $0x308] sm:$0xff] %vm5865, %v5742
      %5964 = vst.msk [vmem:[%s165 + $0x310] sm:$0xff] %vm5865, %v5747
      %5965 = vst.msk [vmem:[%s165 + $0x318] sm:$0xff] %vm5865, %v5750
      %5966 = vst.msk [vmem:[%s165 + $0x320] sm:$0xff] %vm5865, %v5755
      %5967 = vst.msk [vmem:[%s165 + $0x328] sm:$0xff] %vm5865, %v5758
      %5968 = vst.msk [vmem:[%s165 + $0x330] sm:$0xff] %vm5865, %v5763
      %5969 = vst.msk [vmem:[%s165 + $0x338] sm:$0xff] %vm5865, %v5766
      %5970 = vst.msk [vmem:[%s165 + $0x340] sm:$0xff] %vm5865, %v5771
      %5971 = vst.msk [vmem:[%s165 + $0x348] sm:$0xff] %vm5865, %v5774
      %5972 = vst.msk [vmem:[%s165 + $0x350] sm:$0xff] %vm5865, %v5779
      %5973 = vst.msk [vmem:[%s165 + $0x358] sm:$0xff] %vm5865, %v5782
      %5974 = vst.msk [vmem:[%s165 + $0x360] sm:$0xff] %vm5865, %v5787
      %5975 = vst.msk [vmem:[%s165 + $0x368] sm:$0xff] %vm5865, %v5790
      %5976 = vst.msk [vmem:[%s165 + $0x370] sm:$0xff] %vm5865, %v5795
      %5977 = vst.msk [vmem:[%s165 + $0x378] sm:$0xff] %vm5865, %v5798
      %5978 = vst.msk [vmem:[%s165 + $0x380] sm:$0xff] %vm5865, %v5803
      %5979 = vst.msk [vmem:[%s165 + $0x388] sm:$0xff] %vm5865, %v5806
      %5980 = vst.msk [vmem:[%s165 + $0x390] sm:$0xff] %vm5865, %v5811
      %5981 = vst.msk [vmem:[%s165 + $0x398] sm:$0xff] %vm5865, %v5814
      %5982 = vst.msk [vmem:[%s165 + $0x3a0] sm:$0xff] %vm5865, %v5819
      %5983 = vst.msk [vmem:[%s165 + $0x3a8] sm:$0xff] %vm5865, %v5822
      %5984 = vst.msk [vmem:[%s165 + $0x3b0] sm:$0xff] %vm5865, %v5827
      %5985 = vst.msk [vmem:[%s165 + $0x3b8] sm:$0xff] %vm5865, %v5830
      %5986 = vst.msk [vmem:[%s165 + $0x3c0] sm:$0xff] %vm5865, %v5835
      %5987 = vst.msk [vmem:[%s165 + $0x3c8] sm:$0xff] %vm5865, %v5838
      %5988 = vst.msk [vmem:[%s165 + $0x3d0] sm:$0xff] %vm5865, %v5843
      %5989 = vst.msk [vmem:[%s165 + $0x3d8] sm:$0xff] %vm5865, %v5846
      %5990 = vst.msk [vmem:[%s165 + $0x3e0] sm:$0xff] %vm5865, %v5851
      %5991 = vst.msk [vmem:[%s165 + $0x3e8] sm:$0xff] %vm5865, %v5854
      %5992 = vst.msk [vmem:[%s165 + $0x3f0] sm:$0xff] %vm5865, %v5859
      %5993 = vst.msk [vmem:[%s165 + $0x3f8] sm:$0xff] %vm5865, %v5862
      %s5994 = smul.u32 128, %s18
      %p5995 = scmp.lt.s32.totalorder %s17, 1
      %s5996 = scalar_select %p5995, %s17, 1
      %p5997 = scmp.lt.s32.totalorder %s5994, 127
      %s5998 = scalar_select %p5997, %s5994, 127
      %s5999 = smul.addr %s5996, 128
      %s6000 = sadd.s32 %s5998, %s5999
      %s6001 = smul.addr %s6000, 8
      %s6002 = scalar_lea.vmem %s2, %s6001
      // Predicated region
      $region29: #{encoder_forward.4} parent=27 // pred_check
        %p6003 = pneg %p92
      $region30: #{encoder_forward.4} parent=27 // pred_check_branch
        %6005 = sbr.rel (%p6003) target = $region32
      $region31: #{encoder_forward.4} parent=27 // pred_region
        %s6006 = smul.u32 128, %s18
      $region32: #{encoder_forward.4} parent=27 // pred_fallthru
        _
    $region28: #{encoder_forward.4} parent=5 // pred_fallthru
      _
    %p6007 = scmp.le.s32.totalorder 2, %s8
    // Predicated region
    $region33: #{encoder_forward.4} parent=5 // pred_check
      %p6008 = pneg %p6007
    $region34: #{encoder_forward.4} parent=5 // pred_check_branch
      %6010 = sbr.rel (%p6008) target = $region36
    $region35: #{encoder_forward.4} parent=5 // pred_region
      %s6011 = ssub.s32 %s8, 2
      // Predicated region
      $region37: #{encoder_forward.4} parent=35 // pred_check
        %p6012 = pneg %p98
      $region38: #{encoder_forward.4} parent=35 // pred_check_branch
        %6014 = sbr.rel (%p6012) target = $region40
      $region39: #{encoder_forward.4} parent=35 // pred_region
        %s6015 = smul.u32 128, %s20
        %p6016 = scmp.lt.s32.totalorder %s19, 1
        %s6017 = scalar_select %p6016, %s19, 1
        %p6018 = scmp.lt.s32.totalorder %s6015, 127
        %s6019 = scalar_select %p6018, %s6015, 127
        %s6020 = smul.addr %s6017, 128
        %s6021 = sadd.s32 %s6019, %s6020
        %s6022 = smul.addr %s6021, 8
        %s6023 = scalar_lea.vmem %s2, %s6022
      $region40: #{encoder_forward.4} parent=35 // pred_fallthru
        _
    $region36: #{encoder_forward.4} parent=5 // pred_fallthru
      _
  $region6: #{encoder_forward.4} parent=0 // loop_footer
    %s12 = sadd.s32 1, %s8
  $region7: #{encoder_forward.4} parent=0 // loop_footer_branch
    %7 = sbr.rel target = $region3
  $region8: #{encoder_forward.4} parent=0 // loop_exit
    _

// kernel: encoder_forward.5
$region0: #{encoder_forward.5}
  #allocation0 [shape = 'u32[]', space=smem, size = 0x4, offset = 0x4, fixed_abs, tag = 'smem constant byte address 0x4 - core index']
  #allocation1 [shape = 'u32[144,128]{1,0:T(1,128)}', space=vmem, size = 0x12000, scoped, tag = 'internal scratch']
  %s0 = inlined_call_operand.vmem [shape: bf16[2,17,17,32], index: 0, kind: input, shape index: {}]
  %s1 = inlined_call_operand.vmem [shape: bf16[128,16], index: 1, kind: input, shape index: {}]
  %s2 = inlined_call_operand.vmem [shape: f32[2,256,16], index: 2, kind: output, shape index: {0}]
  %s3 = inlined_call_operand.vmem [shape: f32[2,1,2,16], index: 3, kind: output, shape index: {1}]
  %4 = xla_tuple %s2, %s3
  %s5 = sld [smem:[#allocation0]]
  $region49: #{encoder_forward.5} parent=0
    _
  %s7 = ssub.s32 1, %s5
  %s8 = scalar_select 0, %s7, %s5
  loop: start=0, step=1, limit=4
  $region2: #{encoder_forward.5} parent=0 // loop_pre_header
    _
  $region3: #{encoder_forward.5} parent=0 // loop_header
    %s10 = sphi 0, %s14
    %p11 = scmp.ge.s32.totalorder %s10, 4
    %s17 = sphi 0, %s29
    %s18 = sphi 0, %s25
    %s19 = sphi 0, %s17
    %s20 = sphi 0, %s18
    %s21 = sphi 0, %s19
    %s22 = sphi 0, %s20
    %s32 = sphi 0, %s34
    %s35 = sphi 0, %s32
    %s36 = sphi 0, %s35
    %s52 = sphi 0, %s36
    %s56 = sphi 0, %s56
    %s58 = sphi 0, %s56
    %s59 = sphi 0, %s58
    %s73 = sphi 0, %s59
    %s81 = sphi 0, %s83
    %s84 = sphi 0, %s81
    %s85 = sphi 0, %s84
    %s101 = sphi 0, %s85
    %s109 = sphi 0, %s111
    %s112 = sphi 0, %s109
    %s113 = sphi 0, %s112
    %s129 = sphi 0, %s113
  $region4: #{encoder_forward.5} parent=0 // loop_header_branch
    %13 = sbr.rel (%p11) target = $region8
  $region5: #{encoder_forward.5} parent=0 // loop_body
    %s15 = ssub.s32 %s10, 1
    %s16 = ssub.s32 %s10, 2
    %s23 = sadd.s32 1, %s18
    %p24 = scmp.ge.s32.totalorder %s23, 1
    %s25 = scalar_select %p24, 0, %s23
    %s26 = sadd.s32 1, %s17
    %s27 = scalar_select %p24, %s26, %s17
    %p28 = scmp.ge.s32.totalorder %s27, 2
    %s29 = scalar_select %p28, 0, %s27
    %s30 = ssub.s32 %s17, %s29
    %p31 = scmp.eq.s32.totalorder %s30, 0
    %s33 = sadd.s32 %s32, 1
    %s34 = scalar_select %p31, %s32, %s33
    %p37 = pneg %p31
    %p38 = scmp.eq.s32.totalorder %s10, 1
    %p39 = por %p37, %p38
    %p40 = scmp.ne.s32.totalorder %s32, %s35
    %p41 = scmp.eq.s32.totalorder %s10, 0
    %p42 = por %p40, %p41
    %p43 = scmp.ne.s32.totalorder %s32, %s35
    %p44 = scmp.eq.s32.totalorder %s15, 1
    %p45 = por %p43, %p44
    %p46 = scmp.ne.s32.totalorder %s35, %s36
    %p47 = scmp.eq.s32.totalorder %s15, 0
    %p48 = por %p46, %p47
    %p49 = scmp.ne.s32.totalorder %s35, %s36
    %p50 = scmp.eq.s32.totalorder %s16, 1
    %p51 = por %p49, %p50
    %p53 = scmp.ne.s32.totalorder %s36, %s52
    %p54 = scmp.eq.s32.totalorder %s16, 0
    %p55 = por %p53, %p54
    %s57 = sadd.s32 %s56, 1
    %p60 = scmp.eq.s32.totalorder %s10, 1
    %p61 = scmp.ne.s32.totalorder %s56, %s58
    %p62 = scmp.eq.s32.totalorder %s10, 0
    %p63 = por %p61, %p62
    %p64 = scmp.ne.s32.totalorder %s56, %s58
    %p65 = scmp.eq.s32.totalorder %s15, 1
    %p66 = por %p64, %p65
    %p67 = scmp.ne.s32.totalorder %s58, %s59
    %p68 = scmp.eq.s32.totalorder %s15, 0
    %p69 = por %p67, %p68
    %p70 = scmp.ne.s32.totalorder %s58, %s59
    %p71 = scmp.eq.s32.totalorder %s16, 1
    %p72 = por %p70, %p71
    %p74 = scmp.ne.s32.totalorder %s59, %s73
    %p75 = scmp.eq.s32.totalorder %s16, 0
    %p76 = por %p74, %p75
    %s77 = ssub.s32 %s17, %s29
    %s78 = ssub.s32 %s18, %s25
    %s79 = sor.u32 %s77, %s78
    %p80 = scmp.eq.s32.totalorder %s79, 0
    %s82 = sadd.s32 %s81, 1
    %s83 = scalar_select %p80, %s81, %s82
    %p86 = pneg %p80
    %p87 = scmp.eq.s32.totalorder %s10, 1
    %p88 = por %p86, %p87
    %p89 = scmp.ne.s32.totalorder %s81, %s84
    %p90 = scmp.eq.s32.totalorder %s10, 0
    %p91 = por %p89, %p90
    %p92 = scmp.ne.s32.totalorder %s81, %s84
    %p93 = scmp.eq.s32.totalorder %s15, 1
    %p94 = por %p92, %p93
    %p95 = scmp.ne.s32.totalorder %s84, %s85
    %p96 = scmp.eq.s32.totalorder %s15, 0
    %p97 = por %p95, %p96
    %p98 = scmp.ne.s32.totalorder %s84, %s85
    %p99 = scmp.eq.s32.totalorder %s16, 1
    %p100 = por %p98, %p99
    %p102 = scmp.ne.s32.totalorder %s85, %s101
    %p103 = scmp.eq.s32.totalorder %s16, 0
    %p104 = por %p102, %p103
    %s105 = ssub.s32 %s17, %s29
    %s106 = ssub.s32 %s18, %s25
    %s107 = sor.u32 %s105, %s106
    %p108 = scmp.eq.s32.totalorder %s107, 0
    %s110 = sadd.s32 %s109, 1
    %s111 = scalar_select %p108, %s109, %s110
    %p114 = pneg %p108
    %p115 = scmp.eq.s32.totalorder %s10, 1
    %p116 = por %p114, %p115
    %p117 = scmp.ne.s32.totalorder %s109, %s112
    %p118 = scmp.eq.s32.totalorder %s10, 0
    %p119 = por %p117, %p118
    %p120 = scmp.ne.s32.totalorder %s109, %s112
    %p121 = scmp.eq.s32.totalorder %s15, 1
    %p122 = por %p120, %p121
    %p123 = scmp.ne.s32.totalorder %s112, %s113
    %p124 = scmp.eq.s32.totalorder %s15, 0
    %p125 = por %p123, %p124
    %p126 = scmp.ne.s32.totalorder %s112, %s113
    %p127 = scmp.eq.s32.totalorder %s16, 1
    %p128 = por %p126, %p127
    %p130 = scmp.ne.s32.totalorder %s113, %s129
    %p131 = scmp.eq.s32.totalorder %s16, 0
    %p132 = por %p130, %p131
    %p133 = scmp.le.s32.totalorder 1, %s10
    %p134 = scmp.lt.s32.totalorder %s10, 3
    %p135 = pnand %p133, %p134
    %p136 = pneg %p135
    // Predicated region
    $region9: #{encoder_forward.5} parent=5 // pred_check
      _
    $region10: #{encoder_forward.5} parent=5 // pred_check_branch
      %138 = sbr.rel (%p135) target = $region12
    $region11: #{encoder_forward.5} parent=5 // pred_region
      %s139 = ssub.s32 %s10, 1
      // Predicated region
      $region13: #{encoder_forward.5} parent=11 // pred_check
        %p140 = pneg %p69
      $region14: #{encoder_forward.5} parent=11 // pred_check_branch
        %142 = sbr.rel (%p140) target = $region16
      $region15: #{encoder_forward.5} parent=11 // pred_region
        _
      $region16: #{encoder_forward.5} parent=11 // pred_fallthru
        _
    $region12: #{encoder_forward.5} parent=5 // pred_fallthru
      _
    %p143 = scmp.lt.s32.totalorder %s10, 2
    // Predicated region
    $region17: #{encoder_forward.5} parent=5 // pred_check
      %p144 = pneg %p143
    $region18: #{encoder_forward.5} parent=5 // pred_check_branch
      %146 = sbr.rel (%p144) target = $region20
    $region19: #{encoder_forward.5} parent=5 // pred_region
      // Predicated region
      $region21: #{encoder_forward.5} parent=19 // pred_check
        %p147 = pneg %p42
      $region22: #{encoder_forward.5} parent=19 // pred_check_branch
        %149 = sbr.rel (%p147) target = $region24
      $region23: #{encoder_forward.5} parent=19 // pred_region
        %p150 = scmp.lt.s32.totalorder %s17, 1
        %s151 = scalar_select %p150, %s17, 1
        %s152 = smul.addr %s151, 51
        %s153 = smul.addr %s152, 4
        %s154 = scalar_lea.vmem %s0, %s153
      $region24: #{encoder_forward.5} parent=19 // pred_fallthru
        _
    $region20: #{encoder_forward.5} parent=5 // pred_fallthru
      _
    %p155 = scmp.le.s32.totalorder 1, %s10
    %p156 = scmp.lt.s32.totalorder %s10, 3
    %p157 = pnand %p155, %p156
    %p158 = pneg %p157
    // Predicated region
    $region25: #{encoder_forward.5} parent=5 // pred_check
      _
    $region26: #{encoder_forward.5} parent=5 // pred_check_branch
      %160 = sbr.rel (%p157) target = $region28
    $region27: #{encoder_forward.5} parent=5 // pred_region
      %s161 = ssub.s32 %s10, 1
      %p162 = scmp.lt.s32.totalorder %s19, 1
      %s163 = scalar_select %p162, %s19, 1
      %s164 = smul.addr %s163, 51
      %s165 = smul.addr %s164, 4
      %s166 = scalar_lea.vmem %s0, %s165
      %p167 = pneg %p48
      %p168 = pneg %p45
      %p169 = pneg %p69
      %p170 = pneg %p66
      %p171 = pneg %p97
      %p172 = pneg %p94
      %s173 = smul.u32 32, %s20
      %p174 = scmp.lt.s32.totalorder %s19, 1
      %s175 = scalar_select %p174, %s19, 1
      %p176 = scmp.lt.s32.totalorder %s173, 31
      %s177 = scalar_select %p176, %s173, 31
      %s178 = smul.addr %s175, 32
      %s179 = sadd.s32 %s177, %s178
      %s180 = smul.addr %s179, 8
      %s181 = scalar_lea.vmem %s2, %s180
      %p182 = pneg %p125
      %p183 = pneg %p122
      %p184 = scmp.lt.s32.totalorder %s19, 1
      %s185 = scalar_select %p184, %s19, 1
      %p186 = scmp.lt.s32.totalorder %s20, 0
      %s187 = scalar_select %p186, %s20, 0
      %s188 = sadd.s32 %s187, %s185
      %s189 = smul.addr %s188, 2
      %s190 = scalar_lea.vmem %s3, %s189
      %p191 = scmp.lt.s32.totalorder %s19, 1
      %s192 = scalar_select %p191, %s19, 1
      %s193 = smul.addr %s192, 51
      %s194 = smul.addr %s193, 4
      %s195 = scalar_lea.vmem %s0, %s194
      %s196 = smul.u32 32, %s20
      %p197 = scmp.lt.s32.totalorder %s19, 1
      %s198 = scalar_select %p197, %s19, 1
      %p199 = scmp.lt.s32.totalorder %s196, 31
      %s200 = scalar_select %p199, %s196, 31
      %s201 = smul.addr %s198, 32
      %s202 = sadd.s32 %s200, %s201
      %s203 = smul.addr %s202, 8
      %s204 = scalar_lea.vmem %s2, %s203
      %s205 = smul.u32 32, %s20
      %p206 = scmp.lt.s32.totalorder %s19, 1
      %s207 = scalar_select %p206, %s19, 1
      %p208 = scmp.lt.s32.totalorder %s20, 0
      %s209 = scalar_select %p208, %s20, 0
      %s210 = sadd.s32 %s209, %s207
      %s211 = smul.addr %s210, 2
      %s212 = scalar_lea.vmem %s3, %s211
      %v214 = vld [vmem:[%s195] sm:$0xf]
      %v215 = vld [vmem:[%s195 + $0x4] sm:$0xf]
      %v216 = vld [vmem:[%s195 + $0x8] sm:$0x1]
      %v217 = vld [vmem:[%s195 + $0xc] sm:$0xf]
      %v218 = vld [vmem:[%s195 + $0x10] sm:$0xf]
      %v219 = vld [vmem:[%s195 + $0x14] sm:$0x1]
      %v220 = vld [vmem:[%s195 + $0x18] sm:$0xf]
      %v221 = vld [vmem:[%s195 + $0x1c] sm:$0xf]
      %v222 = vld [vmem:[%s195 + $0x20] sm:$0x1]
      %v223 = vld [vmem:[%s195 + $0x24] sm:$0xf]
      %v224 = vld [vmem:[%s195 + $0x28] sm:$0xf]
      %v225 = vld [vmem:[%s195 + $0x2c] sm:$0x1]
      %v226 = vld [vmem:[%s195 + $0x30] sm:$0xf]
      %v227 = vld [vmem:[%s195 + $0x34] sm:$0xf]
      %v228 = vld [vmem:[%s195 + $0x38] sm:$0x1]
      %v229 = vld [vmem:[%s195 + $0x3c] sm:$0xf]
      %v230 = vld [vmem:[%s195 + $0x40] sm:$0xf]
      %v231 = vld [vmem:[%s195 + $0x44] sm:$0x1]
      %v232 = vld [vmem:[%s195 + $0x48] sm:$0xf]
      %v233 = vld [vmem:[%s195 + $0x4c] sm:$0xf]
      %v234 = vld [vmem:[%s195 + $0x50] sm:$0x1]
      %v235 = vld [vmem:[%s195 + $0x54] sm:$0xf]
      %v236 = vld [vmem:[%s195 + $0x58] sm:$0xf]
      %v237 = vld [vmem:[%s195 + $0x5c] sm:$0x1]
      %v238 = vld [vmem:[%s195 + $0x60] sm:$0xf]
      %v239 = vld [vmem:[%s195 + $0x64] sm:$0xf]
      %v240 = vld [vmem:[%s195 + $0x68] sm:$0x1]
      %v241 = vld [vmem:[%s195 + $0x6c] sm:$0xf]
      %v242 = vld [vmem:[%s195 + $0x70] sm:$0xf]
      %v243 = vld [vmem:[%s195 + $0x74] sm:$0x1]
      %v244 = vld [vmem:[%s195 + $0x78] sm:$0xf]
      %v245 = vld [vmem:[%s195 + $0x7c] sm:$0xf]
      %v246 = vld [vmem:[%s195 + $0x80] sm:$0x1]
      %v247 = vld [vmem:[%s195 + $0x84] sm:$0xf]
      %v248 = vld [vmem:[%s195 + $0x88] sm:$0xf]
      %v249 = vld [vmem:[%s195 + $0x8c] sm:$0x1]
      %v250 = vld [vmem:[%s195 + $0x90] sm:$0xf]
      %v251 = vld [vmem:[%s195 + $0x94] sm:$0xf]
      %v252 = vld [vmem:[%s195 + $0x98] sm:$0x1]
      %v253 = vld [vmem:[%s195 + $0x9c] sm:$0xf]
      %v254 = vld [vmem:[%s195 + $0xa0] sm:$0xf]
      %v255 = vld [vmem:[%s195 + $0xa4] sm:$0x1]
      %v256 = vld [vmem:[%s195 + $0xa8] sm:$0xf]
      %v257 = vld [vmem:[%s195 + $0xac] sm:$0xf]
      %v258 = vld [vmem:[%s195 + $0xb0] sm:$0x1]
      %v259 = vld [vmem:[%s195 + $0xb4] sm:$0xf]
      %v260 = vld [vmem:[%s195 + $0xb8] sm:$0xf]
      %v261 = vld [vmem:[%s195 + $0xbc] sm:$0x1]
      %vm262 = vsmask.f32 3328
      %vm263 = vsmask.f32 7440
      %vm264 = vmor %vm262, %vm263
      %v266 = vshrl.u32 %v214, 16
      %v268 = vrot.slane %v266, 4
      %v269 = vshll.u32 %v214, 16
      %v271 = vrot.slane %v269, 5
      %v272 = vor.u32 %v268, %v271
      %v273 = vrot.slane %v272, 4
      %v275 = vshll.u32 %v215, 16
      %v277 = vrot.slane %v275, 5
      %v278 = vsel %vm264, %v273, %v277
      %v279 = vshrl.u32 %v215, 16
      %v281 = vrot.slane %v279, 4
      %v282 = vor.u32 %v281, %v277
      %v283 = vrot.slane %v282, 4
      %v285 = vshll.u32 %v216, 16
      %v287 = vrot.slane %v285, 5
      %v288 = vsel %vm264, %v283, %v287
      %v290 = vshrl.u32 %v217, 16
      %v292 = vrot.slane %v290, 4
      %v293 = vshll.u32 %v217, 16
      %v295 = vrot.slane %v293, 5
      %v296 = vor.u32 %v292, %v295
      %v297 = vrot.slane %v296, 4
      %v299 = vshll.u32 %v218, 16
      %v301 = vrot.slane %v299, 5
      %v302 = vsel %vm264, %v297, %v301
      %v303 = vshrl.u32 %v218, 16
      %v305 = vrot.slane %v303, 4
      %v306 = vor.u32 %v305, %v301
      %v307 = vrot.slane %v306, 4
      %v309 = vshll.u32 %v219, 16
      %v311 = vrot.slane %v309, 5
      %v312 = vsel %vm264, %v307, %v311
      %v314 = vshrl.u32 %v220, 16
      %v316 = vrot.slane %v314, 4
      %v317 = vshll.u32 %v220, 16
      %v319 = vrot.slane %v317, 5
      %v320 = vor.u32 %v316, %v319
      %v321 = vrot.slane %v320, 4
      %v323 = vshll.u32 %v221, 16
      %v325 = vrot.slane %v323, 5
      %v326 = vsel %vm264, %v321, %v325
      %v327 = vshrl.u32 %v221, 16
      %v329 = vrot.slane %v327, 4
      %v330 = vor.u32 %v329, %v325
      %v331 = vrot.slane %v330, 4
      %v333 = vshll.u32 %v222, 16
      %v335 = vrot.slane %v333, 5
      %v336 = vsel %vm264, %v331, %v335
      %v338 = vshrl.u32 %v223, 16
      %v340 = vrot.slane %v338, 4
      %v341 = vshll.u32 %v223, 16
      %v343 = vrot.slane %v341, 5
      %v344 = vor.u32 %v340, %v343
      %v345 = vrot.slane %v344, 4
      %v347 = vshll.u32 %v224, 16
      %v349 = vrot.slane %v347, 5
      %v350 = vsel %vm264, %v345, %v349
      %v351 = vshrl.u32 %v224, 16
      %v353 = vrot.slane %v351, 4
      %v354 = vor.u32 %v353, %v349
      %v355 = vrot.slane %v354, 4
      %v357 = vshll.u32 %v225, 16
      %v359 = vrot.slane %v357, 5
      %v360 = vsel %vm264, %v355, %v359
      %v362 = vshrl.u32 %v226, 16
      %v364 = vrot.slane %v362, 4
      %v365 = vshll.u32 %v226, 16
      %v367 = vrot.slane %v365, 5
      %v368 = vor.u32 %v364, %v367
      %v369 = vrot.slane %v368, 4
      %v371 = vshll.u32 %v227, 16
      %v373 = vrot.slane %v371, 5
      %v374 = vsel %vm264, %v369, %v373
      %v375 = vshrl.u32 %v227, 16
      %v377 = vrot.slane %v375, 4
      %v378 = vor.u32 %v377, %v373
      %v379 = vrot.slane %v378, 4
      %v381 = vshll.u32 %v228, 16
      %v383 = vrot.slane %v381, 5
      %v384 = vsel %vm264, %v379, %v383
      %v386 = vshrl.u32 %v229, 16
      %v388 = vrot.slane %v386, 4
      %v389 = vshll.u32 %v229, 16
      %v391 = vrot.slane %v389, 5
      %v392 = vor.u32 %v388, %v391
      %v393 = vrot.slane %v392, 4
      %v395 = vshll.u32 %v230, 16
      %v397 = vrot.slane %v395, 5
      %v398 = vsel %vm264, %v393, %v397
      %v399 = vshrl.u32 %v230, 16
      %v401 = vrot.slane %v399, 4
      %v402 = vor.u32 %v401, %v397
      %v403 = vrot.slane %v402, 4
      %v405 = vshll.u32 %v231, 16
      %v407 = vrot.slane %v405, 5
      %v408 = vsel %vm264, %v403, %v407
      %v410 = vshrl.u32 %v232, 16
      %v412 = vrot.slane %v410, 4
      %v413 = vshll.u32 %v232, 16
      %v415 = vrot.slane %v413, 5
      %v416 = vor.u32 %v412, %v415
      %v417 = vrot.slane %v416, 4
      %v419 = vshll.u32 %v233, 16
      %v421 = vrot.slane %v419, 5
      %v422 = vsel %vm264, %v417, %v421
      %v423 = vshrl.u32 %v233, 16
      %v425 = vrot.slane %v423, 4
      %v426 = vor.u32 %v425, %v421
      %v427 = vrot.slane %v426, 4
      %v429 = vshll.u32 %v234, 16
      %v431 = vrot.slane %v429, 5
      %v432 = vsel %vm264, %v427, %v431
      %v434 = vshrl.u32 %v235, 16
      %v436 = vrot.slane %v434, 4
      %v437 = vshll.u32 %v235, 16
      %v439 = vrot.slane %v437, 5
      %v440 = vor.u32 %v436, %v439
      %v441 = vrot.slane %v440, 4
      %v443 = vshll.u32 %v236, 16
      %v445 = vrot.slane %v443, 5
      %v446 = vsel %vm264, %v441, %v445
      %v447 = vshrl.u32 %v236, 16
      %v449 = vrot.slane %v447, 4
      %v450 = vor.u32 %v449, %v445
      %v451 = vrot.slane %v450, 4
      %v453 = vshll.u32 %v237, 16
      %v455 = vrot.slane %v453, 5
      %v456 = vsel %vm264, %v451, %v455
      %v458 = vshrl.u32 %v238, 16
      %v460 = vrot.slane %v458, 4
      %v461 = vshll.u32 %v238, 16
      %v463 = vrot.slane %v461, 5
      %v464 = vor.u32 %v460, %v463
      %v465 = vrot.slane %v464, 4
      %v467 = vshll.u32 %v239, 16
      %v469 = vrot.slane %v467, 5
      %v470 = vsel %vm264, %v465, %v469
      %v471 = vshrl.u32 %v239, 16
      %v473 = vrot.slane %v471, 4
      %v474 = vor.u32 %v473, %v469
      %v475 = vrot.slane %v474, 4
      %v477 = vshll.u32 %v240, 16
      %v479 = vrot.slane %v477, 5
      %v480 = vsel %vm264, %v475, %v479
      %v482 = vshrl.u32 %v241, 16
      %v484 = vrot.slane %v482, 4
      %v485 = vshll.u32 %v241, 16
      %v487 = vrot.slane %v485, 5
      %v488 = vor.u32 %v484, %v487
      %v489 = vrot.slane %v488, 4
      %v491 = vshll.u32 %v242, 16
      %v493 = vrot.slane %v491, 5
      %v494 = vsel %vm264, %v489, %v493
      %v495 = vshrl.u32 %v242, 16
      %v497 = vrot.slane %v495, 4
      %v498 = vor.u32 %v497, %v493
      %v499 = vrot.slane %v498, 4
      %v501 = vshll.u32 %v243, 16
      %v503 = vrot.slane %v501, 5
      %v504 = vsel %vm264, %v499, %v503
      %v506 = vshrl.u32 %v244, 16
      %v508 = vrot.slane %v506, 4
      %v509 = vshll.u32 %v244, 16
      %v511 = vrot.slane %v509, 5
      %v512 = vor.u32 %v508, %v511
      %v513 = vrot.slane %v512, 4
      %v515 = vshll.u32 %v245, 16
      %v517 = vrot.slane %v515, 5
      %v518 = vsel %vm264, %v513, %v517
      %v519 = vshrl.u32 %v245, 16
      %v521 = vrot.slane %v519, 4
      %v522 = vor.u32 %v521, %v517
      %v523 = vrot.slane %v522, 4
      %v525 = vshll.u32 %v246, 16
      %v527 = vrot.slane %v525, 5
      %v528 = vsel %vm264, %v523, %v527
      %v530 = vshrl.u32 %v247, 16
      %v532 = vrot.slane %v530, 4
      %v533 = vshll.u32 %v247, 16
      %v535 = vrot.slane %v533, 5
      %v536 = vor.u32 %v532, %v535
      %v537 = vrot.slane %v536, 4
      %v539 = vshll.u32 %v248, 16
      %v541 = vrot.slane %v539, 5
      %v542 = vsel %vm264, %v537, %v541
      %v543 = vshrl.u32 %v248, 16
      %v545 = vrot.slane %v543, 4
      %v546 = vor.u32 %v545, %v541
      %v547 = vrot.slane %v546, 4
      %v549 = vshll.u32 %v249, 16
      %v551 = vrot.slane %v549, 5
      %v552 = vsel %vm264, %v547, %v551
      %v554 = vshrl.u32 %v250, 16
      %v556 = vrot.slane %v554, 4
      %v557 = vshll.u32 %v250, 16
      %v559 = vrot.slane %v557, 5
      %v560 = vor.u32 %v556, %v559
      %v561 = vrot.slane %v560, 4
      %v563 = vshll.u32 %v251, 16
      %v565 = vrot.slane %v563, 5
      %v566 = vsel %vm264, %v561, %v565
      %v567 = vshrl.u32 %v251, 16
      %v569 = vrot.slane %v567, 4
      %v570 = vor.u32 %v569, %v565
      %v571 = vrot.slane %v570, 4
      %v573 = vshll.u32 %v252, 16
      %v575 = vrot.slane %v573, 5
      %v576 = vsel %vm264, %v571, %v575
      %v578 = vshrl.u32 %v253, 16
      %v580 = vrot.slane %v578, 4
      %v581 = vshll.u32 %v253, 16
      %v583 = vrot.slane %v581, 5
      %v584 = vor.u32 %v580, %v583
      %v585 = vrot.slane %v584, 4
      %v587 = vshll.u32 %v254, 16
      %v589 = vrot.slane %v587, 5
      %v590 = vsel %vm264, %v585, %v589
      %v591 = vshrl.u32 %v254, 16
      %v593 = vrot.slane %v591, 4
      %v594 = vor.u32 %v593, %v589
      %v595 = vrot.slane %v594, 4
      %v597 = vshll.u32 %v255, 16
      %v599 = vrot.slane %v597, 5
      %v600 = vsel %vm264, %v595, %v599
      %v602 = vshrl.u32 %v256, 16
      %v604 = vrot.slane %v602, 4
      %v605 = vshll.u32 %v256, 16
      %v607 = vrot.slane %v605, 5
      %v608 = vor.u32 %v604, %v607
      %v609 = vrot.slane %v608, 4
      %v611 = vshll.u32 %v257, 16
      %v613 = vrot.slane %v611, 5
      %v614 = vsel %vm264, %v609, %v613
      %v615 = vshrl.u32 %v257, 16
      %v617 = vrot.slane %v615, 4
      %v618 = vor.u32 %v617, %v613
      %v619 = vrot.slane %v618, 4
      %v621 = vshll.u32 %v258, 16
      %v623 = vrot.slane %v621, 5
      %v624 = vsel %vm264, %v619, %v623
      %v626 = vshrl.u32 %v259, 16
      %v628 = vrot.slane %v626, 4
      %v629 = vshll.u32 %v259, 16
      %v631 = vrot.slane %v629, 5
      %v632 = vor.u32 %v628, %v631
      %v633 = vrot.slane %v632, 4
      %v635 = vshll.u32 %v260, 16
      %v637 = vrot.slane %v635, 5
      %v638 = vsel %vm264, %v633, %v637
      %v639 = vshrl.u32 %v260, 16
      %v641 = vrot.slane %v639, 4
      %v642 = vor.u32 %v641, %v637
      %v643 = vrot.slane %v642, 4
      %v645 = vshll.u32 %v261, 16
      %v647 = vrot.slane %v645, 5
      %v648 = vsel %vm264, %v643, %v647
      %s649 = scalar_lea.vmem %s195, 12
      %v650 = vld [vmem:[%s649] sm:$0xf]
      %v651 = vld [vmem:[%s649 + $0x4] sm:$0xf]
      %v652 = vld [vmem:[%s649 + $0x8] sm:$0x1]
      %v653 = vld [vmem:[%s649 + $0xc] sm:$0xf]
      %v654 = vld [vmem:[%s649 + $0x10] sm:$0xf]
      %v655 = vld [vmem:[%s649 + $0x14] sm:$0x1]
      %v656 = vld [vmem:[%s649 + $0x18] sm:$0xf]
      %v657 = vld [vmem:[%s649 + $0x1c] sm:$0xf]
      %v658 = vld [vmem:[%s649 + $0x20] sm:$0x1]
      %v659 = vld [vmem:[%s649 + $0x24] sm:$0xf]
      %v660 = vld [vmem:[%s649 + $0x28] sm:$0xf]
      %v661 = vld [vmem:[%s649 + $0x2c] sm:$0x1]
      %v662 = vld [vmem:[%s649 + $0x30] sm:$0xf]
      %v663 = vld [vmem:[%s649 + $0x34] sm:$0xf]
      %v664 = vld [vmem:[%s649 + $0x38] sm:$0x1]
      %v665 = vld [vmem:[%s649 + $0x3c] sm:$0xf]
      %v666 = vld [vmem:[%s649 + $0x40] sm:$0xf]
      %v667 = vld [vmem:[%s649 + $0x44] sm:$0x1]
      %v668 = vld [vmem:[%s649 + $0x48] sm:$0xf]
      %v669 = vld [vmem:[%s649 + $0x4c] sm:$0xf]
      %v670 = vld [vmem:[%s649 + $0x50] sm:$0x1]
      %v671 = vld [vmem:[%s649 + $0x54] sm:$0xf]
      %v672 = vld [vmem:[%s649 + $0x58] sm:$0xf]
      %v673 = vld [vmem:[%s649 + $0x5c] sm:$0x1]
      %v674 = vld [vmem:[%s649 + $0x60] sm:$0xf]
      %v675 = vld [vmem:[%s649 + $0x64] sm:$0xf]
      %v676 = vld [vmem:[%s649 + $0x68] sm:$0x1]
      %v677 = vld [vmem:[%s649 + $0x6c] sm:$0xf]
      %v678 = vld [vmem:[%s649 + $0x70] sm:$0xf]
      %v679 = vld [vmem:[%s649 + $0x74] sm:$0x1]
      %v680 = vld [vmem:[%s649 + $0x78] sm:$0xf]
      %v681 = vld [vmem:[%s649 + $0x7c] sm:$0xf]
      %v682 = vld [vmem:[%s649 + $0x80] sm:$0x1]
      %v683 = vld [vmem:[%s649 + $0x84] sm:$0xf]
      %v684 = vld [vmem:[%s649 + $0x88] sm:$0xf]
      %v685 = vld [vmem:[%s649 + $0x8c] sm:$0x1]
      %v686 = vld [vmem:[%s649 + $0x90] sm:$0xf]
      %v687 = vld [vmem:[%s649 + $0x94] sm:$0xf]
      %v688 = vld [vmem:[%s649 + $0x98] sm:$0x1]
      %v689 = vld [vmem:[%s649 + $0x9c] sm:$0xf]
      %v690 = vld [vmem:[%s649 + $0xa0] sm:$0xf]
      %v691 = vld [vmem:[%s649 + $0xa4] sm:$0x1]
      %v692 = vld [vmem:[%s649 + $0xa8] sm:$0xf]
      %v693 = vld [vmem:[%s649 + $0xac] sm:$0xf]
      %v694 = vld [vmem:[%s649 + $0xb0] sm:$0x1]
      %v695 = vld [vmem:[%s649 + $0xb4] sm:$0xf]
      %v696 = vld [vmem:[%s649 + $0xb8] sm:$0xf]
      %v697 = vld [vmem:[%s649 + $0xbc] sm:$0x1]
      %v699 = vshrl.u32 %v650, 16
      %v701 = vrot.slane %v699, 4
      %v702 = vshll.u32 %v650, 16
      %v704 = vrot.slane %v702, 5
      %v705 = vor.u32 %v701, %v704
      %v706 = vrot.slane %v705, 4
      %v708 = vshll.u32 %v651, 16
      %v710 = vrot.slane %v708, 5
      %v711 = vsel %vm264, %v706, %v710
      %v712 = vshrl.u32 %v651, 16
      %v714 = vrot.slane %v712, 4
      %v715 = vor.u32 %v714, %v710
      %v716 = vrot.slane %v715, 4
      %v718 = vshll.u32 %v652, 16
      %v720 = vrot.slane %v718, 5
      %v721 = vsel %vm264, %v716, %v720
      %v723 = vshrl.u32 %v653, 16
      %v725 = vrot.slane %v723, 4
      %v726 = vshll.u32 %v653, 16
      %v728 = vrot.slane %v726, 5
      %v729 = vor.u32 %v725, %v728
      %v730 = vrot.slane %v729, 4
      %v732 = vshll.u32 %v654, 16
      %v734 = vrot.slane %v732, 5
      %v735 = vsel %vm264, %v730, %v734
      %v736 = vshrl.u32 %v654, 16
      %v738 = vrot.slane %v736, 4
      %v739 = vor.u32 %v738, %v734
      %v740 = vrot.slane %v739, 4
      %v742 = vshll.u32 %v655, 16
      %v744 = vrot.slane %v742, 5
      %v745 = vsel %vm264, %v740, %v744
      %v747 = vshrl.u32 %v656, 16
      %v749 = vrot.slane %v747, 4
      %v750 = vshll.u32 %v656, 16
      %v752 = vrot.slane %v750, 5
      %v753 = vor.u32 %v749, %v752
      %v754 = vrot.slane %v753, 4
      %v756 = vshll.u32 %v657, 16
      %v758 = vrot.slane %v756, 5
      %v759 = vsel %vm264, %v754, %v758
      %v760 = vshrl.u32 %v657, 16
      %v762 = vrot.slane %v760, 4
      %v763 = vor.u32 %v762, %v758
      %v764 = vrot.slane %v763, 4
      %v766 = vshll.u32 %v658, 16
      %v768 = vrot.slane %v766, 5
      %v769 = vsel %vm264, %v764, %v768
      %v771 = vshrl.u32 %v659, 16
      %v773 = vrot.slane %v771, 4
      %v774 = vshll.u32 %v659, 16
      %v776 = vrot.slane %v774, 5
      %v777 = vor.u32 %v773, %v776
      %v778 = vrot.slane %v777, 4
      %v780 = vshll.u32 %v660, 16
      %v782 = vrot.slane %v780, 5
      %v783 = vsel %vm264, %v778, %v782
      %v784 = vshrl.u32 %v660, 16
      %v786 = vrot.slane %v784, 4
      %v787 = vor.u32 %v786, %v782
      %v788 = vrot.slane %v787, 4
      %v790 = vshll.u32 %v661, 16
      %v792 = vrot.slane %v790, 5
      %v793 = vsel %vm264, %v788, %v792
      %v795 = vshrl.u32 %v662, 16
      %v797 = vrot.slane %v795, 4
      %v798 = vshll.u32 %v662, 16
      %v800 = vrot.slane %v798, 5
      %v801 = vor.u32 %v797, %v800
      %v802 = vrot.slane %v801, 4
      %v804 = vshll.u32 %v663, 16
      %v806 = vrot.slane %v804, 5
      %v807 = vsel %vm264, %v802, %v806
      %v808 = vshrl.u32 %v663, 16
      %v810 = vrot.slane %v808, 4
      %v811 = vor.u32 %v810, %v806
      %v812 = vrot.slane %v811, 4
      %v814 = vshll.u32 %v664, 16
      %v816 = vrot.slane %v814, 5
      %v817 = vsel %vm264, %v812, %v816
      %v819 = vshrl.u32 %v665, 16
      %v821 = vrot.slane %v819, 4
      %v822 = vshll.u32 %v665, 16
      %v824 = vrot.slane %v822, 5
      %v825 = vor.u32 %v821, %v824
      %v826 = vrot.slane %v825, 4
      %v828 = vshll.u32 %v666, 16
      %v830 = vrot.slane %v828, 5
      %v831 = vsel %vm264, %v826, %v830
      %v832 = vshrl.u32 %v666, 16
      %v834 = vrot.slane %v832, 4
      %v835 = vor.u32 %v834, %v830
      %v836 = vrot.slane %v835, 4
      %v838 = vshll.u32 %v667, 16
      %v840 = vrot.slane %v838, 5
      %v841 = vsel %vm264, %v836, %v840
      %v843 = vshrl.u32 %v668, 16
      %v845 = vrot.slane %v843, 4
      %v846 = vshll.u32 %v668, 16
      %v848 = vrot.slane %v846, 5
      %v849 = vor.u32 %v845, %v848
      %v850 = vrot.slane %v849, 4
      %v852 = vshll.u32 %v669, 16
      %v854 = vrot.slane %v852, 5
      %v855 = vsel %vm264, %v850, %v854
      %v856 = vshrl.u32 %v669, 16
      %v858 = vrot.slane %v856, 4
      %v859 = vor.u32 %v858, %v854
      %v860 = vrot.slane %v859, 4
      %v862 = vshll.u32 %v670, 16
      %v864 = vrot.slane %v862, 5
      %v865 = vsel %vm264, %v860, %v864
      %v867 = vshrl.u32 %v671, 16
      %v869 = vrot.slane %v867, 4
      %v870 = vshll.u32 %v671, 16
      %v872 = vrot.slane %v870, 5
      %v873 = vor.u32 %v869, %v872
      %v874 = vrot.slane %v873, 4
      %v876 = vshll.u32 %v672, 16
      %v878 = vrot.slane %v876, 5
      %v879 = vsel %vm264, %v874, %v878
      %v880 = vshrl.u32 %v672, 16
      %v882 = vrot.slane %v880, 4
      %v883 = vor.u32 %v882, %v878
      %v884 = vrot.slane %v883, 4
      %v886 = vshll.u32 %v673, 16
      %v888 = vrot.slane %v886, 5
      %v889 = vsel %vm264, %v884, %v888
      %v891 = vshrl.u32 %v674, 16
      %v893 = vrot.slane %v891, 4
      %v894 = vshll.u32 %v674, 16
      %v896 = vrot.slane %v894, 5
      %v897 = vor.u32 %v893, %v896
      %v898 = vrot.slane %v897, 4
      %v900 = vshll.u32 %v675, 16
      %v902 = vrot.slane %v900, 5
      %v903 = vsel %vm264, %v898, %v902
      %v904 = vshrl.u32 %v675, 16
      %v906 = vrot.slane %v904, 4
      %v907 = vor.u32 %v906, %v902
      %v908 = vrot.slane %v907, 4
      %v910 = vshll.u32 %v676, 16
      %v912 = vrot.slane %v910, 5
      %v913 = vsel %vm264, %v908, %v912
      %v915 = vshrl.u32 %v677, 16
      %v917 = vrot.slane %v915, 4
      %v918 = vshll.u32 %v677, 16
      %v920 = vrot.slane %v918, 5
      %v921 = vor.u32 %v917, %v920
      %v922 = vrot.slane %v921, 4
      %v924 = vshll.u32 %v678, 16
      %v926 = vrot.slane %v924, 5
      %v927 = vsel %vm264, %v922, %v926
      %v928 = vshrl.u32 %v678, 16
      %v930 = vrot.slane %v928, 4
      %v931 = vor.u32 %v930, %v926
      %v932 = vrot.slane %v931, 4
      %v934 = vshll.u32 %v679, 16
      %v936 = vrot.slane %v934, 5
      %v937 = vsel %vm264, %v932, %v936
      %v939 = vshrl.u32 %v680, 16
      %v941 = vrot.slane %v939, 4
      %v942 = vshll.u32 %v680, 16
      %v944 = vrot.slane %v942, 5
      %v945 = vor.u32 %v941, %v944
      %v946 = vrot.slane %v945, 4
      %v948 = vshll.u32 %v681, 16
      %v950 = vrot.slane %v948, 5
      %v951 = vsel %vm264, %v946, %v950
      %v952 = vshrl.u32 %v681, 16
      %v954 = vrot.slane %v952, 4
      %v955 = vor.u32 %v954, %v950
      %v956 = vrot.slane %v955, 4
      %v958 = vshll.u32 %v682, 16
      %v960 = vrot.slane %v958, 5
      %v961 = vsel %vm264, %v956, %v960
      %v963 = vshrl.u32 %v683, 16
      %v965 = vrot.slane %v963, 4
      %v966 = vshll.u32 %v683, 16
      %v968 = vrot.slane %v966, 5
      %v969 = vor.u32 %v965, %v968
      %v970 = vrot.slane %v969, 4
      %v972 = vshll.u32 %v684, 16
      %v974 = vrot.slane %v972, 5
      %v975 = vsel %vm264, %v970, %v974
      %v976 = vshrl.u32 %v684, 16
      %v978 = vrot.slane %v976, 4
      %v979 = vor.u32 %v978, %v974
      %v980 = vrot.slane %v979, 4
      %v982 = vshll.u32 %v685, 16
      %v984 = vrot.slane %v982, 5
      %v985 = vsel %vm264, %v980, %v984
      %v987 = vshrl.u32 %v686, 16
      %v989 = vrot.slane %v987, 4
      %v990 = vshll.u32 %v686, 16
      %v992 = vrot.slane %v990, 5
      %v993 = vor.u32 %v989, %v992
      %v994 = vrot.slane %v993, 4
      %v996 = vshll.u32 %v687, 16
      %v998 = vrot.slane %v996, 5
      %v999 = vsel %vm264, %v994, %v998
      %v1000 = vshrl.u32 %v687, 16
      %v1002 = vrot.slane %v1000, 4
      %v1003 = vor.u32 %v1002, %v998
      %v1004 = vrot.slane %v1003, 4
      %v1006 = vshll.u32 %v688, 16
      %v1008 = vrot.slane %v1006, 5
      %v1009 = vsel %vm264, %v1004, %v1008
      %v1011 = vshrl.u32 %v689, 16
      %v1013 = vrot.slane %v1011, 4
      %v1014 = vshll.u32 %v689, 16
      %v1016 = vrot.slane %v1014, 5
      %v1017 = vor.u32 %v1013, %v1016
      %v1018 = vrot.slane %v1017, 4
      %v1020 = vshll.u32 %v690, 16
      %v1022 = vrot.slane %v1020, 5
      %v1023 = vsel %vm264, %v1018, %v1022
      %v1024 = vshrl.u32 %v690, 16
      %v1026 = vrot.slane %v1024, 4
      %v1027 = vor.u32 %v1026, %v1022
      %v1028 = vrot.slane %v1027, 4
      %v1030 = vshll.u32 %v691, 16
      %v1032 = vrot.slane %v1030, 5
      %v1033 = vsel %vm264, %v1028, %v1032
      %v1035 = vshrl.u32 %v692, 16
      %v1037 = vrot.slane %v1035, 4
      %v1038 = vshll.u32 %v692, 16
      %v1040 = vrot.slane %v1038, 5
      %v1041 = vor.u32 %v1037, %v1040
      %v1042 = vrot.slane %v1041, 4
      %v1044 = vshll.u32 %v693, 16
      %v1046 = vrot.slane %v1044, 5
      %v1047 = vsel %vm264, %v1042, %v1046
      %v1048 = vshrl.u32 %v693, 16
      %v1050 = vrot.slane %v1048, 4
      %v1051 = vor.u32 %v1050, %v1046
      %v1052 = vrot.slane %v1051, 4
      %v1054 = vshll.u32 %v694, 16
      %v1056 = vrot.slane %v1054, 5
      %v1057 = vsel %vm264, %v1052, %v1056
      %v1059 = vshrl.u32 %v695, 16
      %v1061 = vrot.slane %v1059, 4
      %v1062 = vshll.u32 %v695, 16
      %v1064 = vrot.slane %v1062, 5
      %v1065 = vor.u32 %v1061, %v1064
      %v1066 = vrot.slane %v1065, 4
      %v1068 = vshll.u32 %v696, 16
      %v1070 = vrot.slane %v1068, 5
      %v1071 = vsel %vm264, %v1066, %v1070
      %v1072 = vshrl.u32 %v696, 16
      %v1074 = vrot.slane %v1072, 4
      %v1075 = vor.u32 %v1074, %v1070
      %v1076 = vrot.slane %v1075, 4
      %v1078 = vshll.u32 %v697, 16
      %v1080 = vrot.slane %v1078, 5
      %v1081 = vsel %vm264, %v1076, %v1080
      %v1114 = vunpack.c.l.b16 %v214
      %v1115 = vunpack.c.l.b16 %v215
      %v1116 = vunpack.c.l.b16 %v217
      %v1117 = vunpack.c.l.b16 %v218
      %v1118 = vunpack.c.l.b16 %v220
      %v1119 = vunpack.c.l.b16 %v221
      %v1120 = vunpack.c.l.b16 %v223
      %v1121 = vunpack.c.l.b16 %v224
      %v1122 = vunpack.c.l.b16 %v226
      %v1123 = vunpack.c.l.b16 %v227
      %v1124 = vunpack.c.l.b16 %v229
      %v1125 = vunpack.c.l.b16 %v230
      %v1126 = vunpack.c.l.b16 %v232
      %v1127 = vunpack.c.l.b16 %v233
      %v1128 = vunpack.c.l.b16 %v235
      %v1129 = vunpack.c.l.b16 %v236
      %v1130 = vunpack.c.l.b16 %v238
      %v1131 = vunpack.c.l.b16 %v239
      %v1132 = vunpack.c.l.b16 %v241
      %v1133 = vunpack.c.l.b16 %v242
      %v1134 = vunpack.c.l.b16 %v244
      %v1135 = vunpack.c.l.b16 %v245
      %v1136 = vunpack.c.l.b16 %v247
      %v1137 = vunpack.c.l.b16 %v248
      %v1138 = vunpack.c.l.b16 %v250
      %v1139 = vunpack.c.l.b16 %v251
      %v1140 = vunpack.c.l.b16 %v253
      %v1141 = vunpack.c.l.b16 %v254
      %v1142 = vunpack.c.l.b16 %v256
      %v1143 = vunpack.c.l.b16 %v257
      %v1144 = vunpack.c.l.b16 %v259
      %v1145 = vunpack.c.l.b16 %v260
      %v1146 = vpack.c.b16 %v1115, %v1114
      %v1147 = vpack.c.b16 %v1117, %v1116
      %v1148 = vpack.c.b16 %v1119, %v1118
      %v1149 = vpack.c.b16 %v1121, %v1120
      %v1150 = vpack.c.b16 %v1123, %v1122
      %v1151 = vpack.c.b16 %v1125, %v1124
      %v1152 = vpack.c.b16 %v1127, %v1126
      %v1153 = vpack.c.b16 %v1129, %v1128
      %v1154 = vpack.c.b16 %v1131, %v1130
      %v1155 = vpack.c.b16 %v1133, %v1132
      %v1156 = vpack.c.b16 %v1135, %v1134
      %v1157 = vpack.c.b16 %v1137, %v1136
      %v1158 = vpack.c.b16 %v1139, %v1138
      %v1159 = vpack.c.b16 %v1141, %v1140
      %v1160 = vpack.c.b16 %v1143, %v1142
      %v1161 = vpack.c.b16 %v1145, %v1144
      %v1162 = vunpack.c.l.b16 %v278
      %v1163 = vunpack.c.l.b16 %v288
      %v1164 = vunpack.c.l.b16 %v302
      %v1165 = vunpack.c.l.b16 %v312
      %v1166 = vunpack.c.l.b16 %v326
      %v1167 = vunpack.c.l.b16 %v336
      %v1168 = vunpack.c.l.b16 %v350
      %v1169 = vunpack.c.l.b16 %v360
      %v1170 = vunpack.c.l.b16 %v374
      %v1171 = vunpack.c.l.b16 %v384
      %v1172 = vunpack.c.l.b16 %v398
      %v1173 = vunpack.c.l.b16 %v408
      %v1174 = vunpack.c.l.b16 %v422
      %v1175 = vunpack.c.l.b16 %v432
      %v1176 = vunpack.c.l.b16 %v446
      %v1177 = vunpack.c.l.b16 %v456
      %v1178 = vunpack.c.l.b16 %v470
      %v1179 = vunpack.c.l.b16 %v480
      %v1180 = vunpack.c.l.b16 %v494
      %v1181 = vunpack.c.l.b16 %v504
      %v1182 = vunpack.c.l.b16 %v518
      %v1183 = vunpack.c.l.b16 %v528
      %v1184 = vunpack.c.l.b16 %v542
      %v1185 = vunpack.c.l.b16 %v552
      %v1186 = vunpack.c.l.b16 %v566
      %v1187 = vunpack.c.l.b16 %v576
      %v1188 = vunpack.c.l.b16 %v590
      %v1189 = vunpack.c.l.b16 %v600
      %v1190 = vunpack.c.l.b16 %v614
      %v1191 = vunpack.c.l.b16 %v624
      %v1192 = vunpack.c.l.b16 %v638
      %v1193 = vunpack.c.l.b16 %v648
      %v1194 = vpack.c.b16 %v1163, %v1162
      %v1195 = vpack.c.b16 %v1165, %v1164
      %v1196 = vpack.c.b16 %v1167, %v1166
      %v1197 = vpack.c.b16 %v1169, %v1168
      %v1198 = vpack.c.b16 %v1171, %v1170
      %v1199 = vpack.c.b16 %v1173, %v1172
      %v1200 = vpack.c.b16 %v1175, %v1174
      %v1201 = vpack.c.b16 %v1177, %v1176
      %v1202 = vpack.c.b16 %v1179, %v1178
      %v1203 = vpack.c.b16 %v1181, %v1180
      %v1204 = vpack.c.b16 %v1183, %v1182
      %v1205 = vpack.c.b16 %v1185, %v1184
      %v1206 = vpack.c.b16 %v1187, %v1186
      %v1207 = vpack.c.b16 %v1189, %v1188
      %v1208 = vpack.c.b16 %v1191, %v1190
      %v1209 = vpack.c.b16 %v1193, %v1192
      %1210 = vrot.lane.b32.xlu0 %v1194, 32
      %v1211 = vpop.permute.xlu0 %1210
      %1212 = vrot.lane.b32.xlu0 %v1195, 32
      %v1213 = vpop.permute.xlu0 %1212
      %1214 = vrot.lane.b32.xlu0 %v1196, 32
      %v1215 = vpop.permute.xlu0 %1214
      %1216 = vrot.lane.b32.xlu0 %v1197, 32
      %v1217 = vpop.permute.xlu0 %1216
      %1218 = vrot.lane.b32.xlu0 %v1198, 32
      %v1219 = vpop.permute.xlu0 %1218
      %1220 = vrot.lane.b32.xlu0 %v1199, 32
      %v1221 = vpop.permute.xlu0 %1220
      %1222 = vrot.lane.b32.xlu0 %v1200, 32
      %v1223 = vpop.permute.xlu0 %1222
      %1224 = vrot.lane.b32.xlu0 %v1201, 32
      %v1225 = vpop.permute.xlu0 %1224
      %1226 = vrot.lane.b32.xlu0 %v1202, 32
      %v1227 = vpop.permute.xlu0 %1226
      %1228 = vrot.lane.b32.xlu0 %v1203, 32
      %v1229 = vpop.permute.xlu0 %1228
      %1230 = vrot.lane.b32.xlu0 %v1204, 32
      %v1231 = vpop.permute.xlu0 %1230
      %1232 = vrot.lane.b32.xlu0 %v1205, 32
      %v1233 = vpop.permute.xlu0 %1232
      %1234 = vrot.lane.b32.xlu0 %v1206, 32
      %v1235 = vpop.permute.xlu0 %1234
      %1236 = vrot.lane.b32.xlu0 %v1207, 32
      %v1237 = vpop.permute.xlu0 %1236
      %1238 = vrot.lane.b32.xlu0 %v1208, 32
      %v1239 = vpop.permute.xlu0 %1238
      %1240 = vrot.lane.b32.xlu0 %v1209, 32
      %v1241 = vpop.permute.xlu0 %1240
      %v1274 = vunpack.c.l.b16 %v650
      %v1275 = vunpack.c.l.b16 %v651
      %v1276 = vunpack.c.l.b16 %v653
      %v1277 = vunpack.c.l.b16 %v654
      %v1278 = vunpack.c.l.b16 %v656
      %v1279 = vunpack.c.l.b16 %v657
      %v1280 = vunpack.c.l.b16 %v659
      %v1281 = vunpack.c.l.b16 %v660
      %v1282 = vunpack.c.l.b16 %v662
      %v1283 = vunpack.c.l.b16 %v663
      %v1284 = vunpack.c.l.b16 %v665
      %v1285 = vunpack.c.l.b16 %v666
      %v1286 = vunpack.c.l.b16 %v668
      %v1287 = vunpack.c.l.b16 %v669
      %v1288 = vunpack.c.l.b16 %v671
      %v1289 = vunpack.c.l.b16 %v672
      %v1290 = vunpack.c.l.b16 %v674
      %v1291 = vunpack.c.l.b16 %v675
      %v1292 = vunpack.c.l.b16 %v677
      %v1293 = vunpack.c.l.b16 %v678
      %v1294 = vunpack.c.l.b16 %v680
      %v1295 = vunpack.c.l.b16 %v681
      %v1296 = vunpack.c.l.b16 %v683
      %v1297 = vunpack.c.l.b16 %v684
      %v1298 = vunpack.c.l.b16 %v686
      %v1299 = vunpack.c.l.b16 %v687
      %v1300 = vunpack.c.l.b16 %v689
      %v1301 = vunpack.c.l.b16 %v690
      %v1302 = vunpack.c.l.b16 %v692
      %v1303 = vunpack.c.l.b16 %v693
      %v1304 = vunpack.c.l.b16 %v695
      %v1305 = vunpack.c.l.b16 %v696
      %v1306 = vpack.c.b16 %v1275, %v1274
      %v1307 = vpack.c.b16 %v1277, %v1276
      %v1308 = vpack.c.b16 %v1279, %v1278
      %v1309 = vpack.c.b16 %v1281, %v1280
      %v1310 = vpack.c.b16 %v1283, %v1282
      %v1311 = vpack.c.b16 %v1285, %v1284
      %v1312 = vpack.c.b16 %v1287, %v1286
      %v1313 = vpack.c.b16 %v1289, %v1288
      %v1314 = vpack.c.b16 %v1291, %v1290
      %v1315 = vpack.c.b16 %v1293, %v1292
      %v1316 = vpack.c.b16 %v1295, %v1294
      %v1317 = vpack.c.b16 %v1297, %v1296
      %v1318 = vpack.c.b16 %v1299, %v1298
      %v1319 = vpack.c.b16 %v1301, %v1300
      %v1320 = vpack.c.b16 %v1303, %v1302
      %v1321 = vpack.c.b16 %v1305, %v1304
      %1322 = vrot.lane.b32.xlu0 %v1306, 64
      %v1323 = vpop.permute.xlu0 %1322
      %1324 = vrot.lane.b32.xlu0 %v1307, 64
      %v1325 = vpop.permute.xlu0 %1324
      %1326 = vrot.lane.b32.xlu0 %v1308, 64
      %v1327 = vpop.permute.xlu0 %1326
      %1328 = vrot.lane.b32.xlu0 %v1309, 64
      %v1329 = vpop.permute.xlu0 %1328
      %1330 = vrot.lane.b32.xlu0 %v1310, 64
      %v1331 = vpop.permute.xlu0 %1330
      %1332 = vrot.lane.b32.xlu0 %v1311, 64
      %v1333 = vpop.permute.xlu0 %1332
      %1334 = vrot.lane.b32.xlu0 %v1312, 64
      %v1335 = vpop.permute.xlu0 %1334
      %1336 = vrot.lane.b32.xlu0 %v1313, 64
      %v1337 = vpop.permute.xlu0 %1336
      %1338 = vrot.lane.b32.xlu0 %v1314, 64
      %v1339 = vpop.permute.xlu0 %1338
      %1340 = vrot.lane.b32.xlu0 %v1315, 64
      %v1341 = vpop.permute.xlu0 %1340
      %1342 = vrot.lane.b32.xlu0 %v1316, 64
      %v1343 = vpop.permute.xlu0 %1342
      %1344 = vrot.lane.b32.xlu0 %v1317, 64
      %v1345 = vpop.permute.xlu0 %1344
      %1346 = vrot.lane.b32.xlu0 %v1318, 64
      %v1347 = vpop.permute.xlu0 %1346
      %1348 = vrot.lane.b32.xlu0 %v1319, 64
      %v1349 = vpop.permute.xlu0 %1348
      %1350 = vrot.lane.b32.xlu0 %v1320, 64
      %v1351 = vpop.permute.xlu0 %1350
      %1352 = vrot.lane.b32.xlu0 %v1321, 64
      %v1353 = vpop.permute.xlu0 %1352
      %v1354 = vunpack.c.l.b16 %v711
      %v1355 = vunpack.c.l.b16 %v721
      %v1356 = vunpack.c.l.b16 %v735
      %v1357 = vunpack.c.l.b16 %v745
      %v1358 = vunpack.c.l.b16 %v759
      %v1359 = vunpack.c.l.b16 %v769
      %v1360 = vunpack.c.l.b16 %v783
      %v1361 = vunpack.c.l.b16 %v793
      %v1362 = vunpack.c.l.b16 %v807
      %v1363 = vunpack.c.l.b16 %v817
      %v1364 = vunpack.c.l.b16 %v831
      %v1365 = vunpack.c.l.b16 %v841
      %v1366 = vunpack.c.l.b16 %v855
      %v1367 = vunpack.c.l.b16 %v865
      %v1368 = vunpack.c.l.b16 %v879
      %v1369 = vunpack.c.l.b16 %v889
      %v1370 = vunpack.c.l.b16 %v903
      %v1371 = vunpack.c.l.b16 %v913
      %v1372 = vunpack.c.l.b16 %v927
      %v1373 = vunpack.c.l.b16 %v937
      %v1374 = vunpack.c.l.b16 %v951
      %v1375 = vunpack.c.l.b16 %v961
      %v1376 = vunpack.c.l.b16 %v975
      %v1377 = vunpack.c.l.b16 %v985
      %v1378 = vunpack.c.l.b16 %v999
      %v1379 = vunpack.c.l.b16 %v1009
      %v1380 = vunpack.c.l.b16 %v1023
      %v1381 = vunpack.c.l.b16 %v1033
      %v1382 = vunpack.c.l.b16 %v1047
      %v1383 = vunpack.c.l.b16 %v1057
      %v1384 = vunpack.c.l.b16 %v1071
      %v1385 = vunpack.c.l.b16 %v1081
      %v1386 = vpack.c.b16 %v1355, %v1354
      %v1387 = vpack.c.b16 %v1357, %v1356
      %v1388 = vpack.c.b16 %v1359, %v1358
      %v1389 = vpack.c.b16 %v1361, %v1360
      %v1390 = vpack.c.b16 %v1363, %v1362
      %v1391 = vpack.c.b16 %v1365, %v1364
      %v1392 = vpack.c.b16 %v1367, %v1366
      %v1393 = vpack.c.b16 %v1369, %v1368
      %v1394 = vpack.c.b16 %v1371, %v1370
      %v1395 = vpack.c.b16 %v1373, %v1372
      %v1396 = vpack.c.b16 %v1375, %v1374
      %v1397 = vpack.c.b16 %v1377, %v1376
      %v1398 = vpack.c.b16 %v1379, %v1378
      %v1399 = vpack.c.b16 %v1381, %v1380
      %v1400 = vpack.c.b16 %v1383, %v1382
      %v1401 = vpack.c.b16 %v1385, %v1384
      %1402 = vrot.lane.b32.xlu0 %v1386, 96
      %v1403 = vpop.permute.xlu0 %1402
      %1404 = vrot.lane.b32.xlu0 %v1387, 96
      %v1405 = vpop.permute.xlu0 %1404
      %1406 = vrot.lane.b32.xlu0 %v1388, 96
      %v1407 = vpop.permute.xlu0 %1406
      %1408 = vrot.lane.b32.xlu0 %v1389, 96
      %v1409 = vpop.permute.xlu0 %1408
      %1410 = vrot.lane.b32.xlu0 %v1390, 96
      %v1411 = vpop.permute.xlu0 %1410
      %1412 = vrot.lane.b32.xlu0 %v1391, 96
      %v1413 = vpop.permute.xlu0 %1412
      %1414 = vrot.lane.b32.xlu0 %v1392, 96
      %v1415 = vpop.permute.xlu0 %1414
      %1416 = vrot.lane.b32.xlu0 %v1393, 96
      %v1417 = vpop.permute.xlu0 %1416
      %1418 = vrot.lane.b32.xlu0 %v1394, 96
      %v1419 = vpop.permute.xlu0 %1418
      %1420 = vrot.lane.b32.xlu0 %v1395, 96
      %v1421 = vpop.permute.xlu0 %1420
      %1422 = vrot.lane.b32.xlu0 %v1396, 96
      %v1423 = vpop.permute.xlu0 %1422
      %1424 = vrot.lane.b32.xlu0 %v1397, 96
      %v1425 = vpop.permute.xlu0 %1424
      %1426 = vrot.lane.b32.xlu0 %v1398, 96
      %v1427 = vpop.permute.xlu0 %1426
      %1428 = vrot.lane.b32.xlu0 %v1399, 96
      %v1429 = vpop.permute.xlu0 %1428
      %1430 = vrot.lane.b32.xlu0 %v1400, 96
      %v1431 = vpop.permute.xlu0 %1430
      %1432 = vrot.lane.b32.xlu0 %v1401, 96
      %v1433 = vpop.permute.xlu0 %1432
      %vm1434 = vcmask 261120
      %v1437 = vsel %vm1434, %v1146, %v1211
      %v1440 = vsel %vm1434, %v1147, %v1213
      %v1443 = vsel %vm1434, %v1148, %v1215
      %v1446 = vsel %vm1434, %v1149, %v1217
      %v1449 = vsel %vm1434, %v1150, %v1219
      %v1452 = vsel %vm1434, %v1151, %v1221
      %v1455 = vsel %vm1434, %v1152, %v1223
      %v1458 = vsel %vm1434, %v1153, %v1225
      %v1461 = vsel %vm1434, %v1154, %v1227
      %v1464 = vsel %vm1434, %v1155, %v1229
      %v1467 = vsel %vm1434, %v1156, %v1231
      %v1470 = vsel %vm1434, %v1157, %v1233
      %v1473 = vsel %vm1434, %v1158, %v1235
      %v1476 = vsel %vm1434, %v1159, %v1237
      %v1479 = vsel %vm1434, %v1160, %v1239
      %v1482 = vsel %vm1434, %v1161, %v1241
      %vm1483 = vcmask 523264
      %v1485 = vsel %vm1483, %v1437, %v1323
      %v1487 = vsel %vm1483, %v1440, %v1325
      %v1489 = vsel %vm1483, %v1443, %v1327
      %v1491 = vsel %vm1483, %v1446, %v1329
      %v1493 = vsel %vm1483, %v1449, %v1331
      %v1495 = vsel %vm1483, %v1452, %v1333
      %v1497 = vsel %vm1483, %v1455, %v1335
      %v1499 = vsel %vm1483, %v1458, %v1337
      %v1501 = vsel %vm1483, %v1461, %v1339
      %v1503 = vsel %vm1483, %v1464, %v1341
      %v1505 = vsel %vm1483, %v1467, %v1343
      %v1507 = vsel %vm1483, %v1470, %v1345
      %v1509 = vsel %vm1483, %v1473, %v1347
      %v1511 = vsel %vm1483, %v1476, %v1349
      %v1513 = vsel %vm1483, %v1479, %v1351
      %v1515 = vsel %vm1483, %v1482, %v1353
      %vm1516 = vcmask 785408
      %v1518 = vsel %vm1516, %v1485, %v1403
      %v1521 = vsel %vm1516, %v1487, %v1405
      %v1524 = vsel %vm1516, %v1489, %v1407
      %v1527 = vsel %vm1516, %v1491, %v1409
      %v1530 = vsel %vm1516, %v1493, %v1411
      %v1533 = vsel %vm1516, %v1495, %v1413
      %v1536 = vsel %vm1516, %v1497, %v1415
      %v1539 = vsel %vm1516, %v1499, %v1417
      %v1542 = vsel %vm1516, %v1501, %v1419
      %v1545 = vsel %vm1516, %v1503, %v1421
      %v1548 = vsel %vm1516, %v1505, %v1423
      %v1551 = vsel %vm1516, %v1507, %v1425
      %v1554 = vsel %vm1516, %v1509, %v1427
      %v1557 = vsel %vm1516, %v1511, %v1429
      %v1560 = vsel %vm1516, %v1513, %v1431
      %v1563 = vsel %vm1516, %v1515, %v1433
      %v1565 = vld [vmem:[%s1] sm:$0xf]
      %v1566 = vld [vmem:[%s1 + $0x4] sm:$0xf]
      %v1567 = vld [vmem:[%s1 + $0x8] sm:$0xf]
      %v1568 = vld [vmem:[%s1 + $0xc] sm:$0xf]
      %v1569 = vld [vmem:[%s1 + $0x10] sm:$0xf]
      %v1570 = vld [vmem:[%s1 + $0x14] sm:$0xf]
      %v1571 = vld [vmem:[%s1 + $0x18] sm:$0xf]
      %v1572 = vld [vmem:[%s1 + $0x1c] sm:$0xf]
      %v1573 = vld [vmem:[%s1 + $0x20] sm:$0xf]
      %v1574 = vld [vmem:[%s1 + $0x24] sm:$0xf]
      %v1575 = vld [vmem:[%s1 + $0x28] sm:$0xf]
      %v1576 = vld [vmem:[%s1 + $0x2c] sm:$0xf]
      %v1577 = vld [vmem:[%s1 + $0x30] sm:$0xf]
      %v1578 = vld [vmem:[%s1 + $0x34] sm:$0xf]
      %v1579 = vld [vmem:[%s1 + $0x38] sm:$0xf]
      %v1580 = vld [vmem:[%s1 + $0x3c] sm:$0xf]
      %v1597 = vunpack.c.l.b16 %v1565
      %v1598 = vunpack.c.l.b16 %v1566
      %v1599 = vunpack.c.l.b16 %v1567
      %v1600 = vunpack.c.l.b16 %v1568
      %v1601 = vunpack.c.l.b16 %v1569
      %v1602 = vunpack.c.l.b16 %v1570
      %v1603 = vunpack.c.l.b16 %v1571
      %v1604 = vunpack.c.l.b16 %v1572
      %v1605 = vunpack.c.l.b16 %v1573
      %v1606 = vunpack.c.l.b16 %v1574
      %v1607 = vunpack.c.l.b16 %v1575
      %v1608 = vunpack.c.l.b16 %v1576
      %v1609 = vunpack.c.l.b16 %v1577
      %v1610 = vunpack.c.l.b16 %v1578
      %v1611 = vunpack.c.l.b16 %v1579
      %v1612 = vunpack.c.l.b16 %v1580
      %v1613 = vpack.c.b16 %v1598, %v1597
      %v1614 = vpack.c.b16 %v1600, %v1599
      %v1615 = vpack.c.b16 %v1602, %v1601
      %v1616 = vpack.c.b16 %v1604, %v1603
      %v1617 = vpack.c.b16 %v1606, %v1605
      %v1618 = vpack.c.b16 %v1608, %v1607
      %v1619 = vpack.c.b16 %v1610, %v1609
      %v1620 = vpack.c.b16 %v1612, %v1611
      %1629 = vmatprep.subr.bf16.mxu0 0
      %1630 = vmatpush1.bf16.msra.mxu0 %v1613
      %1631 = vmatprep.subr.bf16.mxu0 0
      %1632 = vmatpush1.bf16.msra.mxu0 %v1614
      %1633 = vmatprep.subr.bf16.mxu0 0
      %1634 = vmatpush1.bf16.msra.mxu0 %v1615
      %1635 = vmatprep.subr.bf16.mxu0 0
      %1636 = vmatpush1.bf16.msra.mxu0 %v1616
      %1637 = vmatprep.subr.bf16.mxu0 0
      %1638 = vmatpush1.bf16.msra.mxu0 %v1617
      %1639 = vmatprep.subr.bf16.mxu0 0
      %1640 = vmatpush1.bf16.msra.mxu0 %v1618
      %1641 = vmatprep.subr.bf16.mxu0 0
      %1642 = vmatpush1.bf16.msra.mxu0 %v1619
      %1643 = vmatprep.subr.bf16.mxu0 0
      %1644 = vmatpush1.bf16.msra.mxu0 %v1620
      %1645 = vmatprep.subr.bf16.mxu0 0
      %1646 = vmatpush1.bf16.msra.mxu0 0
      %1647 = vmatprep.subr.bf16.mxu0 0
      %1648 = vmatpush1.bf16.msra.mxu0 0
      %1649 = vmatprep.subr.bf16.mxu0 0
      %1650 = vmatpush1.bf16.msra.mxu0 0
      %1651 = vmatprep.subr.bf16.mxu0 0
      %1652 = vmatpush1.bf16.msra.mxu0 0
      %1653 = vmatprep.subr.bf16.mxu0 0
      %1654 = vmatpush1.bf16.msra.mxu0 0
      %1655 = vmatprep.subr.bf16.mxu0 0
      %1656 = vmatpush1.bf16.msra.mxu0 0
      %1657 = vmatprep.subr.bf16.mxu0 0
      %1658 = vmatpush1.bf16.msra.mxu0 0
      %1659 = vmatprep.subr.bf16.mxu0 0
      %1660 = vmatpush1.bf16.msra.mxu0 0
      %1661 = vmatprep.mubr.bf16.mxu0 0
      %1662 = vmatmul.mubr.bf16.gmra.mrb[0].mxu0 %v1518
      %v1663 = vpop.f32.mrb[0].mxu0
      %v1664 = vadd.f32 0.0, %v1663
      %v1665 = vpop.f32.mrb[0].mxu0
      %v1666 = vpop.f32.mrb[0].mxu0
      %v1667 = vadd.f32 0.0, %v1666
      %v1668 = vpop.f32.mrb[0].mxu0
      %1669 = vmatprep.mubr.bf16.mxu0 0
      %1670 = vmatmul.mubr.bf16.gmra.mrb[0].mxu0 %v1521
      %v1671 = vpop.f32.mrb[0].mxu0
      %v1672 = vadd.f32 0.0, %v1671
      %v1673 = vpop.f32.mrb[0].mxu0
      %v1674 = vpop.f32.mrb[0].mxu0
      %v1675 = vadd.f32 0.0, %v1674
      %v1676 = vpop.f32.mrb[0].mxu0
      %1677 = vmatprep.mubr.bf16.mxu0 0
      %1678 = vmatmul.mubr.bf16.gmra.mrb[0].mxu0 %v1524
      %v1679 = vpop.f32.mrb[0].mxu0
      %v1680 = vadd.f32 0.0, %v1679
      %v1681 = vpop.f32.mrb[0].mxu0
      %v1682 = vpop.f32.mrb[0].mxu0
      %v1683 = vadd.f32 0.0, %v1682
      %v1684 = vpop.f32.mrb[0].mxu0
      %1685 = vmatprep.mubr.bf16.mxu0 0
      %1686 = vmatmul.mubr.bf16.gmra.mrb[0].mxu0 %v1527
      %v1687 = vpop.f32.mrb[0].mxu0
      %v1688 = vadd.f32 0.0, %v1687
      %v1689 = vpop.f32.mrb[0].mxu0
      %v1690 = vpop.f32.mrb[0].mxu0
      %v1691 = vadd.f32 0.0, %v1690
      %v1692 = vpop.f32.mrb[0].mxu0
      %1693 = vmatprep.mubr.bf16.mxu0 0
      %1694 = vmatmul.mubr.bf16.gmra.mrb[0].mxu0 %v1530
      %v1695 = vpop.f32.mrb[0].mxu0
      %v1696 = vadd.f32 0.0, %v1695
      %v1697 = vpop.f32.mrb[0].mxu0
      %v1698 = vpop.f32.mrb[0].mxu0
      %v1699 = vadd.f32 0.0, %v1698
      %v1700 = vpop.f32.mrb[0].mxu0
      %1701 = vmatprep.mubr.bf16.mxu0 0
      %1702 = vmatmul.mubr.bf16.gmra.mrb[0].mxu0 %v1533
      %v1703 = vpop.f32.mrb[0].mxu0
      %v1704 = vadd.f32 0.0, %v1703
      %v1705 = vpop.f32.mrb[0].mxu0
      %v1706 = vpop.f32.mrb[0].mxu0
      %v1707 = vadd.f32 0.0, %v1706
      %v1708 = vpop.f32.mrb[0].mxu0
      %1709 = vmatprep.mubr.bf16.mxu0 0
      %1710 = vmatmul.mubr.bf16.gmra.mrb[0].mxu0 %v1536
      %v1711 = vpop.f32.mrb[0].mxu0
      %v1712 = vadd.f32 0.0, %v1711
      %v1713 = vpop.f32.mrb[0].mxu0
      %v1714 = vpop.f32.mrb[0].mxu0
      %v1715 = vadd.f32 0.0, %v1714
      %v1716 = vpop.f32.mrb[0].mxu0
      %1717 = vmatprep.mubr.bf16.mxu0 0
      %1718 = vmatmul.mubr.bf16.gmra.mrb[0].mxu0 %v1539
      %v1719 = vpop.f32.mrb[0].mxu0
      %v1720 = vadd.f32 0.0, %v1719
      %v1721 = vpop.f32.mrb[0].mxu0
      %v1722 = vpop.f32.mrb[0].mxu0
      %v1723 = vadd.f32 0.0, %v1722
      %v1724 = vpop.f32.mrb[0].mxu0
      %1725 = vmatprep.mubr.bf16.mxu0 0
      %1726 = vmatmul.mubr.bf16.gmra.mrb[0].mxu0 %v1542
      %v1727 = vpop.f32.mrb[0].mxu0
      %v1728 = vadd.f32 0.0, %v1727
      %v1729 = vpop.f32.mrb[0].mxu0
      %v1730 = vpop.f32.mrb[0].mxu0
      %v1731 = vadd.f32 0.0, %v1730
      %v1732 = vpop.f32.mrb[0].mxu0
      %1733 = vmatprep.mubr.bf16.mxu0 0
      %1734 = vmatmul.mubr.bf16.gmra.mrb[0].mxu0 %v1545
      %v1735 = vpop.f32.mrb[0].mxu0
      %v1736 = vadd.f32 0.0, %v1735
      %v1737 = vpop.f32.mrb[0].mxu0
      %v1738 = vpop.f32.mrb[0].mxu0
      %v1739 = vadd.f32 0.0, %v1738
      %v1740 = vpop.f32.mrb[0].mxu0
      %1741 = vmatprep.mubr.bf16.mxu0 0
      %1742 = vmatmul.mubr.bf16.gmra.mrb[0].mxu0 %v1548
      %v1743 = vpop.f32.mrb[0].mxu0
      %v1744 = vadd.f32 0.0, %v1743
      %v1745 = vpop.f32.mrb[0].mxu0
      %v1746 = vpop.f32.mrb[0].mxu0
      %v1747 = vadd.f32 0.0, %v1746
      %v1748 = vpop.f32.mrb[0].mxu0
      %1749 = vmatprep.mubr.bf16.mxu0 0
      %1750 = vmatmul.mubr.bf16.gmra.mrb[0].mxu0 %v1551
      %v1751 = vpop.f32.mrb[0].mxu0
      %v1752 = vadd.f32 0.0, %v1751
      %v1753 = vpop.f32.mrb[0].mxu0
      %v1754 = vpop.f32.mrb[0].mxu0
      %v1755 = vadd.f32 0.0, %v1754
      %v1756 = vpop.f32.mrb[0].mxu0
      %1757 = vmatprep.mubr.bf16.mxu0 0
      %1758 = vmatmul.mubr.bf16.gmra.mrb[0].mxu0 %v1554
      %v1759 = vpop.f32.mrb[0].mxu0
      %v1760 = vadd.f32 0.0, %v1759
      %v1761 = vpop.f32.mrb[0].mxu0
      %v1762 = vpop.f32.mrb[0].mxu0
      %v1763 = vadd.f32 0.0, %v1762
      %v1764 = vpop.f32.mrb[0].mxu0
      %1765 = vmatprep.mubr.bf16.mxu0 0
      %1766 = vmatmul.mubr.bf16.gmra.mrb[0].mxu0 %v1557
      %v1767 = vpop.f32.mrb[0].mxu0
      %v1768 = vadd.f32 0.0, %v1767
      %v1769 = vpop.f32.mrb[0].mxu0
      %v1770 = vpop.f32.mrb[0].mxu0
      %v1771 = vadd.f32 0.0, %v1770
      %v1772 = vpop.f32.mrb[0].mxu0
      %1773 = vmatprep.mubr.bf16.mxu0 0
      %1774 = vmatmul.mubr.bf16.gmra.mrb[0].mxu0 %v1560
      %v1775 = vpop.f32.mrb[0].mxu0
      %v1776 = vadd.f32 0.0, %v1775
      %v1777 = vpop.f32.mrb[0].mxu0
      %v1778 = vpop.f32.mrb[0].mxu0
      %v1779 = vadd.f32 0.0, %v1778
      %v1780 = vpop.f32.mrb[0].mxu0
      %1781 = vmatprep.mubr.bf16.mxu0 0
      %1782 = vmatmul.mubr.bf16.gmra.mrb[0].mxu0 %v1563
      %v1783 = vpop.f32.mrb[0].mxu0
      %v1784 = vadd.f32 0.0, %v1783
      %v1785 = vpop.f32.mrb[0].mxu0
      %v1786 = vpop.f32.mrb[0].mxu0
      %v1787 = vadd.f32 0.0, %v1786
      %v1788 = vpop.f32.mrb[0].mxu0
      %1789 = vdwg.mxu0
      %vm1790 = vcmask 130048
      %v1791 = vsel %vm1790, %v1664, 0.0
      %v1792 = vsel %vm1790, %v1667, 0.0
      %v1793 = vadd.f32 %v1791, %v1792
      %v1794 = vsel %vm1790, %v1672, 0.0
      %v1795 = vadd.f32 %v1793, %v1794
      %v1796 = vsel %vm1790, %v1675, 0.0
      %v1797 = vadd.f32 %v1795, %v1796
      %v1798 = vsel %vm1790, %v1680, 0.0
      %v1799 = vadd.f32 %v1797, %v1798
      %v1800 = vsel %vm1790, %v1683, 0.0
      %v1801 = vadd.f32 %v1799, %v1800
      %v1802 = vsel %vm1790, %v1688, 0.0
      %v1803 = vadd.f32 %v1801, %v1802
      %v1804 = vsel %vm1790, %v1691, 0.0
      %v1805 = vadd.f32 %v1803, %v1804
      %v1806 = vsel %vm1790, %v1696, 0.0
      %v1807 = vadd.f32 %v1805, %v1806
      %v1808 = vsel %vm1790, %v1699, 0.0
      %v1809 = vadd.f32 %v1807, %v1808
      %v1810 = vsel %vm1790, %v1704, 0.0
      %v1811 = vadd.f32 %v1809, %v1810
      %v1812 = vsel %vm1790, %v1707, 0.0
      %v1813 = vadd.f32 %v1811, %v1812
      %v1814 = vsel %vm1790, %v1712, 0.0
      %v1815 = vadd.f32 %v1813, %v1814
      %v1816 = vsel %vm1790, %v1715, 0.0
      %v1817 = vadd.f32 %v1815, %v1816
      %v1818 = vsel %vm1790, %v1720, 0.0
      %v1819 = vadd.f32 %v1817, %v1818
      %v1820 = vsel %vm1790, %v1723, 0.0
      %v1821 = vadd.f32 %v1819, %v1820
      %v1822 = vsel %vm1790, %v1728, 0.0
      %v1823 = vadd.f32 %v1821, %v1822
      %v1824 = vsel %vm1790, %v1731, 0.0
      %v1825 = vadd.f32 %v1823, %v1824
      %v1826 = vsel %vm1790, %v1736, 0.0
      %v1827 = vadd.f32 %v1825, %v1826
      %v1828 = vsel %vm1790, %v1739, 0.0
      %v1829 = vadd.f32 %v1827, %v1828
      %v1830 = vsel %vm1790, %v1744, 0.0
      %v1831 = vadd.f32 %v1829, %v1830
      %v1832 = vsel %vm1790, %v1747, 0.0
      %v1833 = vadd.f32 %v1831, %v1832
      %v1834 = vsel %vm1790, %v1752, 0.0
      %v1835 = vadd.f32 %v1833, %v1834
      %v1836 = vsel %vm1790, %v1755, 0.0
      %v1837 = vadd.f32 %v1835, %v1836
      %v1838 = vsel %vm1790, %v1760, 0.0
      %v1839 = vadd.f32 %v1837, %v1838
      %v1840 = vsel %vm1790, %v1763, 0.0
      %v1841 = vadd.f32 %v1839, %v1840
      %v1842 = vsel %vm1790, %v1768, 0.0
      %v1843 = vadd.f32 %v1841, %v1842
      %v1844 = vsel %vm1790, %v1771, 0.0
      %v1845 = vadd.f32 %v1843, %v1844
      %v1846 = vsel %vm1790, %v1776, 0.0
      %v1847 = vadd.f32 %v1845, %v1846
      %v1848 = vsel %vm1790, %v1779, 0.0
      %v1849 = vadd.f32 %v1847, %v1848
      %v1850 = vsel %vm1790, %v1784, 0.0
      %v1851 = vadd.f32 %v1849, %v1850
      %v1852 = vsel %vm1790, %v1787, 0.0
      %v1853 = vadd.f32 %v1851, %v1852
      %v1854 = vrot.slane %v1853, 4
      %v1855 = vadd.f32 %v1853, %v1854
      %v1856 = vrot.slane %v1855, 2
      %v1857 = vadd.f32 %v1855, %v1856
      %v1858 = vrot.slane %v1857, 1
      %v1859 = vadd.f32 %v1857, %v1858
      %v1860 = vmul.f32 %v1664, %v1664
      %v1861 = vmul.f32 %v1667, %v1667
      %v1862 = vmul.f32 %v1672, %v1672
      %v1863 = vmul.f32 %v1675, %v1675
      %v1864 = vmul.f32 %v1680, %v1680
      %v1865 = vmul.f32 %v1683, %v1683
      %v1866 = vmul.f32 %v1688, %v1688
      %v1867 = vmul.f32 %v1691, %v1691
      %v1868 = vmul.f32 %v1696, %v1696
      %v1869 = vmul.f32 %v1699, %v1699
      %v1870 = vmul.f32 %v1704, %v1704
      %v1871 = vmul.f32 %v1707, %v1707
      %v1872 = vmul.f32 %v1712, %v1712
      %v1873 = vmul.f32 %v1715, %v1715
      %v1874 = vmul.f32 %v1720, %v1720
      %v1875 = vmul.f32 %v1723, %v1723
      %v1876 = vmul.f32 %v1728, %v1728
      %v1877 = vmul.f32 %v1731, %v1731
      %v1878 = vmul.f32 %v1736, %v1736
      %v1879 = vmul.f32 %v1739, %v1739
      %v1880 = vmul.f32 %v1744, %v1744
      %v1881 = vmul.f32 %v1747, %v1747
      %v1882 = vmul.f32 %v1752, %v1752
      %v1883 = vmul.f32 %v1755, %v1755
      %v1884 = vmul.f32 %v1760, %v1760
      %v1885 = vmul.f32 %v1763, %v1763
      %v1886 = vmul.f32 %v1768, %v1768
      %v1887 = vmul.f32 %v1771, %v1771
      %v1888 = vmul.f32 %v1776, %v1776
      %v1889 = vmul.f32 %v1779, %v1779
      %v1890 = vmul.f32 %v1784, %v1784
      %v1891 = vmul.f32 %v1787, %v1787
      %v1892 = vsel %vm1790, %v1860, 0.0
      %v1893 = vsel %vm1790, %v1861, 0.0
      %v1894 = vadd.f32 %v1892, %v1893
      %v1895 = vsel %vm1790, %v1862, 0.0
      %v1896 = vadd.f32 %v1894, %v1895
      %v1897 = vsel %vm1790, %v1863, 0.0
      %v1898 = vadd.f32 %v1896, %v1897
      %v1899 = vsel %vm1790, %v1864, 0.0
      %v1900 = vadd.f32 %v1898, %v1899
      %v1901 = vsel %vm1790, %v1865, 0.0
      %v1902 = vadd.f32 %v1900, %v1901
      %v1903 = vsel %vm1790, %v1866, 0.0
      %v1904 = vadd.f32 %v1902, %v1903
      %v1905 = vsel %vm1790, %v1867, 0.0
      %v1906 = vadd.f32 %v1904, %v1905
      %v1907 = vsel %vm1790, %v1868, 0.0
      %v1908 = vadd.f32 %v1906, %v1907
      %v1909 = vsel %vm1790, %v1869, 0.0
      %v1910 = vadd.f32 %v1908, %v1909
      %v1911 = vsel %vm1790, %v1870, 0.0
      %v1912 = vadd.f32 %v1910, %v1911
      %v1913 = vsel %vm1790, %v1871, 0.0
      %v1914 = vadd.f32 %v1912, %v1913
      %v1915 = vsel %vm1790, %v1872, 0.0
      %v1916 = vadd.f32 %v1914, %v1915
      %v1917 = vsel %vm1790, %v1873, 0.0
      %v1918 = vadd.f32 %v1916, %v1917
      %v1919 = vsel %vm1790, %v1874, 0.0
      %v1920 = vadd.f32 %v1918, %v1919
      %v1921 = vsel %vm1790, %v1875, 0.0
      %v1922 = vadd.f32 %v1920, %v1921
      %v1923 = vsel %vm1790, %v1876, 0.0
      %v1924 = vadd.f32 %v1922, %v1923
      %v1925 = vsel %vm1790, %v1877, 0.0
      %v1926 = vadd.f32 %v1924, %v1925
      %v1927 = vsel %vm1790, %v1878, 0.0
      %v1928 = vadd.f32 %v1926, %v1927
      %v1929 = vsel %vm1790, %v1879, 0.0
      %v1930 = vadd.f32 %v1928, %v1929
      %v1931 = vsel %vm1790, %v1880, 0.0
      %v1932 = vadd.f32 %v1930, %v1931
      %v1933 = vsel %vm1790, %v1881, 0.0
      %v1934 = vadd.f32 %v1932, %v1933
      %v1935 = vsel %vm1790, %v1882, 0.0
      %v1936 = vadd.f32 %v1934, %v1935
      %v1937 = vsel %vm1790, %v1883, 0.0
      %v1938 = vadd.f32 %v1936, %v1937
      %v1939 = vsel %vm1790, %v1884, 0.0
      %v1940 = vadd.f32 %v1938, %v1939
      %v1941 = vsel %vm1790, %v1885, 0.0
      %v1942 = vadd.f32 %v1940, %v1941
      %v1943 = vsel %vm1790, %v1886, 0.0
      %v1944 = vadd.f32 %v1942, %v1943
      %v1945 = vsel %vm1790, %v1887, 0.0
      %v1946 = vadd.f32 %v1944, %v1945
      %v1947 = vsel %vm1790, %v1888, 0.0
      %v1948 = vadd.f32 %v1946, %v1947
      %v1949 = vsel %vm1790, %v1889, 0.0
      %v1950 = vadd.f32 %v1948, %v1949
      %v1951 = vsel %vm1790, %v1890, 0.0
      %v1952 = vadd.f32 %v1950, %v1951
      %v1953 = vsel %vm1790, %v1891, 0.0
      %v1954 = vadd.f32 %v1952, %v1953
      %v1955 = vrot.slane %v1954, 4
      %v1956 = vadd.f32 %v1954, %v1955
      %v1957 = vrot.slane %v1956, 2
      %v1958 = vadd.f32 %v1956, %v1957
      %v1959 = vrot.slane %v1958, 1
      %v1960 = vadd.f32 %v1958, %v1959
      %vm1961 = vcmask 1040384
      %v1962 = vsel %vm1961, %v1859, %v1960
      %vm1963 = vcmask 123904
      %1964 = vst.msk [vmem:[%s212] sm:$0x3] %vm1963, %v1962
      %1965 = vst.msk [vmem:[%s204] sm:$0xff] %vm1790, %v1664
      %1966 = vst.msk [vmem:[%s204 + $0x8] sm:$0xff] %vm1790, %v1667
      %1967 = vst.msk [vmem:[%s204 + $0x10] sm:$0xff] %vm1790, %v1672
      %1968 = vst.msk [vmem:[%s204 + $0x18] sm:$0xff] %vm1790, %v1675
      %1969 = vst.msk [vmem:[%s204 + $0x20] sm:$0xff] %vm1790, %v1680
      %1970 = vst.msk [vmem:[%s204 + $0x28] sm:$0xff] %vm1790, %v1683
      %1971 = vst.msk [vmem:[%s204 + $0x30] sm:$0xff] %vm1790, %v1688
      %1972 = vst.msk [vmem:[%s204 + $0x38] sm:$0xff] %vm1790, %v1691
      %1973 = vst.msk [vmem:[%s204 + $0x40] sm:$0xff] %vm1790, %v1696
      %1974 = vst.msk [vmem:[%s204 + $0x48] sm:$0xff] %vm1790, %v1699
      %1975 = vst.msk [vmem:[%s204 + $0x50] sm:$0xff] %vm1790, %v1704
      %1976 = vst.msk [vmem:[%s204 + $0x58] sm:$0xff] %vm1790, %v1707
      %1977 = vst.msk [vmem:[%s204 + $0x60] sm:$0xff] %vm1790, %v1712
      %1978 = vst.msk [vmem:[%s204 + $0x68] sm:$0xff] %vm1790, %v1715
      %1979 = vst.msk [vmem:[%s204 + $0x70] sm:$0xff] %vm1790, %v1720
      %1980 = vst.msk [vmem:[%s204 + $0x78] sm:$0xff] %vm1790, %v1723
      %1981 = vst.msk [vmem:[%s204 + $0x80] sm:$0xff] %vm1790, %v1728
      %1982 = vst.msk [vmem:[%s204 + $0x88] sm:$0xff] %vm1790, %v1731
      %1983 = vst.msk [vmem:[%s204 + $0x90] sm:$0xff] %vm1790, %v1736
      %1984 = vst.msk [vmem:[%s204 + $0x98] sm:$0xff] %vm1790, %v1739
      %1985 = vst.msk [vmem:[%s204 + $0xa0] sm:$0xff] %vm1790, %v1744
      %1986 = vst.msk [vmem:[%s204 + $0xa8] sm:$0xff] %vm1790, %v1747
      %1987 = vst.msk [vmem:[%s204 + $0xb0] sm:$0xff] %vm1790, %v1752
      %1988 = vst.msk [vmem:[%s204 + $0xb8] sm:$0xff] %vm1790, %v1755
      %1989 = vst.msk [vmem:[%s204 + $0xc0] sm:$0xff] %vm1790, %v1760
      %1990 = vst.msk [vmem:[%s204 + $0xc8] sm:$0xff] %vm1790, %v1763
      %1991 = vst.msk [vmem:[%s204 + $0xd0] sm:$0xff] %vm1790, %v1768
      %1992 = vst.msk [vmem:[%s204 + $0xd8] sm:$0xff] %vm1790, %v1771
      %1993 = vst.msk [vmem:[%s204 + $0xe0] sm:$0xff] %vm1790, %v1776
      %1994 = vst.msk [vmem:[%s204 + $0xe8] sm:$0xff] %vm1790, %v1779
      %1995 = vst.msk [vmem:[%s204 + $0xf0] sm:$0xff] %vm1790, %v1784
      %1996 = vst.msk [vmem:[%s204 + $0xf8] sm:$0xff] %vm1790, %v1787
      %s1997 = smul.u32 32, %s20
      %p1998 = scmp.lt.s32.totalorder %s19, 1
      %s1999 = scalar_select %p1998, %s19, 1
      %p2000 = scmp.lt.s32.totalorder %s1997, 31
      %s2001 = scalar_select %p2000, %s1997, 31
      %s2002 = smul.addr %s1999, 32
      %s2003 = sadd.s32 %s2001, %s2002
      %s2004 = smul.addr %s2003, 8
      %s2005 = scalar_lea.vmem %s2, %s2004
      %p2006 = scmp.lt.s32.totalorder %s19, 1
      %s2007 = scalar_select %p2006, %s19, 1
      %p2008 = scmp.lt.s32.totalorder %s20, 0
      %s2009 = scalar_select %p2008, %s20, 0
      %s2010 = sadd.s32 %s2009, %s2007
      %s2011 = smul.addr %s2010, 2
      %s2012 = scalar_lea.vmem %s3, %s2011
      // Predicated region
      $region29: #{encoder_forward.5} parent=27 // pred_check
        %p2013 = pneg %p94
      $region30: #{encoder_forward.5} parent=27 // pred_check_branch
        %2015 = sbr.rel (%p2013) target = $region32
      $region31: #{encoder_forward.5} parent=27 // pred_region
        %s2016 = smul.u32 32, %s20
      $region32: #{encoder_forward.5} parent=27 // pred_fallthru
        _
      // Predicated region
      $region33: #{encoder_forward.5} parent=27 // pred_check
        %p2017 = pneg %p122
      $region34: #{encoder_forward.5} parent=27 // pred_check_branch
        %2019 = sbr.rel (%p2017) target = $region36
      $region35: #{encoder_forward.5} parent=27 // pred_region
        _
      $region36: #{encoder_forward.5} parent=27 // pred_fallthru
        _
    $region28: #{encoder_forward.5} parent=5 // pred_fallthru
      _
    %p2020 = scmp.le.s32.totalorder 2, %s10
    // Predicated region
    $region37: #{encoder_forward.5} parent=5 // pred_check
      %p2021 = pneg %p2020
    $region38: #{encoder_forward.5} parent=5 // pred_check_branch
      %2023 = sbr.rel (%p2021) target = $region40
    $region39: #{encoder_forward.5} parent=5 // pred_region
      %s2024 = ssub.s32 %s10, 2
      // Predicated region
      $region41: #{encoder_forward.5} parent=39 // pred_check
        %p2025 = pneg %p100
      $region42: #{encoder_forward.5} parent=39 // pred_check_branch
        %2027 = sbr.rel (%p2025) target = $region44
      $region43: #{encoder_forward.5} parent=39 // pred_region
        %s2028 = smul.u32 32, %s22
        %p2029 = scmp.lt.s32.totalorder %s21, 1
        %s2030 = scalar_select %p2029, %s21, 1
        %p2031 = scmp.lt.s32.totalorder %s2028, 31
        %s2032 = scalar_select %p2031, %s2028, 31
        %s2033 = smul.addr %s2030, 32
        %s2034 = sadd.s32 %s2032, %s2033
        %s2035 = smul.addr %s2034, 8
        %s2036 = scalar_lea.vmem %s2, %s2035
      $region44: #{encoder_forward.5} parent=39 // pred_fallthru
        _
      // Predicated region
      $region45: #{encoder_forward.5} parent=39 // pred_check
        %p2037 = pneg %p128
      $region46: #{encoder_forward.5} parent=39 // pred_check_branch
        %2039 = sbr.rel (%p2037) target = $region48
      $region47: #{encoder_forward.5} parent=39 // pred_region
        %p2040 = scmp.lt.s32.totalorder %s21, 1
        %s2041 = scalar_select %p2040, %s21, 1
        %p2042 = scmp.lt.s32.totalorder %s22, 0
        %s2043 = scalar_select %p2042, %s22, 0
        %s2044 = sadd.s32 %s2043, %s2041
        %s2045 = smul.addr %s2044, 2
        %s2046 = scalar_lea.vmem %s3, %s2045
      $region48: #{encoder_forward.5} parent=39 // pred_fallthru
        _
    $region40: #{encoder_forward.5} parent=5 // pred_fallthru
      _
  $region6: #{encoder_forward.5} parent=0 // loop_footer
    %s14 = sadd.s32 1, %s10
  $region7: #{encoder_forward.5} parent=0 // loop_footer_branch
    %9 = sbr.rel target = $region3
  $region8: #{encoder_forward.5} parent=0 // loop_exit
    _

// kernel: encoder_forward.6
$region0: #{encoder_forward.6}
  #allocation0 [shape = 'u32[]', space=smem, size = 0x4, offset = 0x4, fixed_abs, tag = 'smem constant byte address 0x4 - core index']
  #allocation1 [shape = 'u32[144,128]{1,0:T(1,128)}', space=vmem, size = 0x12000, scoped, tag = 'internal scratch']
  %s0 = inlined_call_operand.vmem [shape: bf16[2,9,9,64], index: 0, kind: input, shape index: {}]
  %s1 = inlined_call_operand.vmem [shape: bf16[256,32], index: 1, kind: input, shape index: {}]
  %s2 = inlined_call_operand.vmem [shape: f32[2,64,32], index: 2, kind: output, shape index: {0}]
  %s3 = inlined_call_operand.vmem [shape: f32[1,1,2,32], index: 3, kind: output, shape index: {1}]
  %4 = xla_tuple %s2, %s3
  %s5 = sld [smem:[#allocation0]]
  $region26: #{encoder_forward.6} parent=0
    _
  %s7 = ssub.s32 1, %s5
  %s8 = scalar_select 0, %s7, %s5
  // Predicated region
  $region2: #{encoder_forward.6} parent=0 // pred_check
    _
  $region3: #{encoder_forward.6} parent=0 // pred_check_branch
    %10 = sbr.rel (0) target = $region5
  $region4: #{encoder_forward.6} parent=0 // pred_region
    _
  $region5: #{encoder_forward.6} parent=0 // pred_fallthru
    _
  // Predicated region
  $region6: #{encoder_forward.6} parent=0 // pred_check
    _
  $region7: #{encoder_forward.6} parent=0 // pred_check_branch
    %12 = sbr.rel (0) target = $region9
  $region8: #{encoder_forward.6} parent=0 // pred_region
    _
  $region9: #{encoder_forward.6} parent=0 // pred_fallthru
    _
  %v14 = vld [vmem:[%s0] sm:$0xf]
  %v15 = vld [vmem:[%s0 + $0x4] sm:$0x1]
  %v16 = vld [vmem:[%s0 + $0x8] sm:$0xf]
  %v17 = vld [vmem:[%s0 + $0xc] sm:$0x1]
  %v18 = vld [vmem:[%s0 + $0x10] sm:$0xf]
  %v19 = vld [vmem:[%s0 + $0x14] sm:$0x1]
  %v20 = vld [vmem:[%s0 + $0x18] sm:$0xf]
  %v21 = vld [vmem:[%s0 + $0x1c] sm:$0x1]
  %v22 = vld [vmem:[%s0 + $0x20] sm:$0xf]
  %v23 = vld [vmem:[%s0 + $0x24] sm:$0x1]
  %v24 = vld [vmem:[%s0 + $0x28] sm:$0xf]
  %v25 = vld [vmem:[%s0 + $0x2c] sm:$0x1]
  %v26 = vld [vmem:[%s0 + $0x30] sm:$0xf]
  %v27 = vld [vmem:[%s0 + $0x34] sm:$0x1]
  %v28 = vld [vmem:[%s0 + $0x38] sm:$0xf]
  %v29 = vld [vmem:[%s0 + $0x3c] sm:$0x1]
  %vm30 = vsmask.f32 3328
  %vm31 = vsmask.f32 7440
  %vm32 = vmor %vm30, %vm31
  %v34 = vshrl.u32 %v14, 16
  %v36 = vrot.slane %v34, 4
  %v37 = vshll.u32 %v14, 16
  %v39 = vrot.slane %v37, 5
  %v40 = vor.u32 %v36, %v39
  %v41 = vrot.slane %v40, 4
  %v43 = vshll.u32 %v15, 16
  %v45 = vrot.slane %v43, 5
  %v46 = vsel %vm32, %v41, %v45
  %v48 = vshrl.u32 %v16, 16
  %v50 = vrot.slane %v48, 4
  %v51 = vshll.u32 %v16, 16
  %v53 = vrot.slane %v51, 5
  %v54 = vor.u32 %v50, %v53
  %v55 = vrot.slane %v54, 4
  %v57 = vshll.u32 %v17, 16
  %v59 = vrot.slane %v57, 5
  %v60 = vsel %vm32, %v55, %v59
  %v62 = vshrl.u32 %v18, 16
  %v64 = vrot.slane %v62, 4
  %v65 = vshll.u32 %v18, 16
  %v67 = vrot.slane %v65, 5
  %v68 = vor.u32 %v64, %v67
  %v69 = vrot.slane %v68, 4
  %v71 = vshll.u32 %v19, 16
  %v73 = vrot.slane %v71, 5
  %v74 = vsel %vm32, %v69, %v73
  %v76 = vshrl.u32 %v20, 16
  %v78 = vrot.slane %v76, 4
  %v79 = vshll.u32 %v20, 16
  %v81 = vrot.slane %v79, 5
  %v82 = vor.u32 %v78, %v81
  %v83 = vrot.slane %v82, 4
  %v85 = vshll.u32 %v21, 16
  %v87 = vrot.slane %v85, 5
  %v88 = vsel %vm32, %v83, %v87
  %v90 = vshrl.u32 %v22, 16
  %v92 = vrot.slane %v90, 4
  %v93 = vshll.u32 %v22, 16
  %v95 = vrot.slane %v93, 5
  %v96 = vor.u32 %v92, %v95
  %v97 = vrot.slane %v96, 4
  %v99 = vshll.u32 %v23, 16
  %v101 = vrot.slane %v99, 5
  %v102 = vsel %vm32, %v97, %v101
  %v104 = vshrl.u32 %v24, 16
  %v106 = vrot.slane %v104, 4
  %v107 = vshll.u32 %v24, 16
  %v109 = vrot.slane %v107, 5
  %v110 = vor.u32 %v106, %v109
  %v111 = vrot.slane %v110, 4
  %v113 = vshll.u32 %v25, 16
  %v115 = vrot.slane %v113, 5
  %v116 = vsel %vm32, %v111, %v115
  %v118 = vshrl.u32 %v26, 16
  %v120 = vrot.slane %v118, 4
  %v121 = vshll.u32 %v26, 16
  %v123 = vrot.slane %v121, 5
  %v124 = vor.u32 %v120, %v123
  %v125 = vrot.slane %v124, 4
  %v127 = vshll.u32 %v27, 16
  %v129 = vrot.slane %v127, 5
  %v130 = vsel %vm32, %v125, %v129
  %v132 = vshrl.u32 %v28, 16
  %v134 = vrot.slane %v132, 4
  %v135 = vshll.u32 %v28, 16
  %v137 = vrot.slane %v135, 5
  %v138 = vor.u32 %v134, %v137
  %v139 = vrot.slane %v138, 4
  %v141 = vshll.u32 %v29, 16
  %v143 = vrot.slane %v141, 5
  %v144 = vsel %vm32, %v139, %v143
  %s145 = scalar_lea.vmem %s0, 8
  %v146 = vld [vmem:[%s145] sm:$0xf]
  %v147 = vld [vmem:[%s145 + $0x4] sm:$0x1]
  %v148 = vld [vmem:[%s145 + $0x8] sm:$0xf]
  %v149 = vld [vmem:[%s145 + $0xc] sm:$0x1]
  %v150 = vld [vmem:[%s145 + $0x10] sm:$0xf]
  %v151 = vld [vmem:[%s145 + $0x14] sm:$0x1]
  %v152 = vld [vmem:[%s145 + $0x18] sm:$0xf]
  %v153 = vld [vmem:[%s145 + $0x1c] sm:$0x1]
  %v154 = vld [vmem:[%s145 + $0x20] sm:$0xf]
  %v155 = vld [vmem:[%s145 + $0x24] sm:$0x1]
  %v156 = vld [vmem:[%s145 + $0x28] sm:$0xf]
  %v157 = vld [vmem:[%s145 + $0x2c] sm:$0x1]
  %v158 = vld [vmem:[%s145 + $0x30] sm:$0xf]
  %v159 = vld [vmem:[%s145 + $0x34] sm:$0x1]
  %v160 = vld [vmem:[%s145 + $0x38] sm:$0xf]
  %v161 = vld [vmem:[%s145 + $0x3c] sm:$0x1]
  %v163 = vshrl.u32 %v146, 16
  %v165 = vrot.slane %v163, 4
  %v166 = vshll.u32 %v146, 16
  %v168 = vrot.slane %v166, 5
  %v169 = vor.u32 %v165, %v168
  %v170 = vrot.slane %v169, 4
  %v172 = vshll.u32 %v147, 16
  %v174 = vrot.slane %v172, 5
  %v175 = vsel %vm32, %v170, %v174
  %v177 = vshrl.u32 %v148, 16
  %v179 = vrot.slane %v177, 4
  %v180 = vshll.u32 %v148, 16
  %v182 = vrot.slane %v180, 5
  %v183 = vor.u32 %v179, %v182
  %v184 = vrot.slane %v183, 4
  %v186 = vshll.u32 %v149, 16
  %v188 = vrot.slane %v186, 5
  %v189 = vsel %vm32, %v184, %v188
  %v191 = vshrl.u32 %v150, 16
  %v193 = vrot.slane %v191, 4
  %v194 = vshll.u32 %v150, 16
  %v196 = vrot.slane %v194, 5
  %v197 = vor.u32 %v193, %v196
  %v198 = vrot.slane %v197, 4
  %v200 = vshll.u32 %v151, 16
  %v202 = vrot.slane %v200, 5
  %v203 = vsel %vm32, %v198, %v202
  %v205 = vshrl.u32 %v152, 16
  %v207 = vrot.slane %v205, 4
  %v208 = vshll.u32 %v152, 16
  %v210 = vrot.slane %v208, 5
  %v211 = vor.u32 %v207, %v210
  %v212 = vrot.slane %v211, 4
  %v214 = vshll.u32 %v153, 16
  %v216 = vrot.slane %v214, 5
  %v217 = vsel %vm32, %v212, %v216
  %v219 = vshrl.u32 %v154, 16
  %v221 = vrot.slane %v219, 4
  %v222 = vshll.u32 %v154, 16
  %v224 = vrot.slane %v222, 5
  %v225 = vor.u32 %v221, %v224
  %v226 = vrot.slane %v225, 4
  %v228 = vshll.u32 %v155, 16
  %v230 = vrot.slane %v228, 5
  %v231 = vsel %vm32, %v226, %v230
  %v233 = vshrl.u32 %v156, 16
  %v235 = vrot.slane %v233, 4
  %v236 = vshll.u32 %v156, 16
  %v238 = vrot.slane %v236, 5
  %v239 = vor.u32 %v235, %v238
  %v240 = vrot.slane %v239, 4
  %v242 = vshll.u32 %v157, 16
  %v244 = vrot.slane %v242, 5
  %v245 = vsel %vm32, %v240, %v244
  %v247 = vshrl.u32 %v158, 16
  %v249 = vrot.slane %v247, 4
  %v250 = vshll.u32 %v158, 16
  %v252 = vrot.slane %v250, 5
  %v253 = vor.u32 %v249, %v252
  %v254 = vrot.slane %v253, 4
  %v256 = vshll.u32 %v159, 16
  %v258 = vrot.slane %v256, 5
  %v259 = vsel %vm32, %v254, %v258
  %v261 = vshrl.u32 %v160, 16
  %v263 = vrot.slane %v261, 4
  %v264 = vshll.u32 %v160, 16
  %v266 = vrot.slane %v264, 5
  %v267 = vor.u32 %v263, %v266
  %v268 = vrot.slane %v267, 4
  %v270 = vshll.u32 %v161, 16
  %v272 = vrot.slane %v270, 5
  %v273 = vsel %vm32, %v268, %v272
  %v282 = vunpack.c.l.b16 %v14
  %v283 = vunpack.c.l.b16 %v16
  %v284 = vunpack.c.l.b16 %v18
  %v285 = vunpack.c.l.b16 %v20
  %v286 = vunpack.c.l.b16 %v22
  %v287 = vunpack.c.l.b16 %v24
  %v288 = vunpack.c.l.b16 %v26
  %v289 = vunpack.c.l.b16 %v28
  %v290 = vpack.c.b16 %v283, %v282
  %v291 = vpack.c.b16 %v285, %v284
  %v292 = vpack.c.b16 %v287, %v286
  %v293 = vpack.c.b16 %v289, %v288
  %v294 = vunpack.c.l.b16 %v46
  %v295 = vunpack.c.l.b16 %v60
  %v296 = vunpack.c.l.b16 %v74
  %v297 = vunpack.c.l.b16 %v88
  %v298 = vunpack.c.l.b16 %v102
  %v299 = vunpack.c.l.b16 %v116
  %v300 = vunpack.c.l.b16 %v130
  %v301 = vunpack.c.l.b16 %v144
  %v302 = vpack.c.b16 %v295, %v294
  %v303 = vpack.c.b16 %v297, %v296
  %v304 = vpack.c.b16 %v299, %v298
  %v305 = vpack.c.b16 %v301, %v300
  %306 = vrot.lane.b32.xlu0 %v302, 64
  %v307 = vpop.permute.xlu0 %306
  %308 = vrot.lane.b32.xlu0 %v303, 64
  %v309 = vpop.permute.xlu0 %308
  %310 = vrot.lane.b32.xlu0 %v304, 64
  %v311 = vpop.permute.xlu0 %310
  %312 = vrot.lane.b32.xlu0 %v305, 64
  %v313 = vpop.permute.xlu0 %312
  %v322 = vunpack.c.l.b16 %v146
  %v323 = vunpack.c.l.b16 %v148
  %v324 = vunpack.c.l.b16 %v150
  %v325 = vunpack.c.l.b16 %v152
  %v326 = vunpack.c.l.b16 %v154
  %v327 = vunpack.c.l.b16 %v156
  %v328 = vunpack.c.l.b16 %v158
  %v329 = vunpack.c.l.b16 %v160
  %v330 = vpack.c.b16 %v323, %v322
  %v331 = vpack.c.b16 %v325, %v324
  %v332 = vpack.c.b16 %v327, %v326
  %v333 = vpack.c.b16 %v329, %v328
  %v334 = vunpack.c.l.b16 %v175
  %v335 = vunpack.c.l.b16 %v189
  %v336 = vunpack.c.l.b16 %v203
  %v337 = vunpack.c.l.b16 %v217
  %v338 = vunpack.c.l.b16 %v231
  %v339 = vunpack.c.l.b16 %v245
  %v340 = vunpack.c.l.b16 %v259
  %v341 = vunpack.c.l.b16 %v273
  %v342 = vpack.c.b16 %v335, %v334
  %v343 = vpack.c.b16 %v337, %v336
  %v344 = vpack.c.b16 %v339, %v338
  %v345 = vpack.c.b16 %v341, %v340
  %346 = vrot.lane.b32.xlu0 %v342, 64
  %v347 = vpop.permute.xlu0 %346
  %348 = vrot.lane.b32.xlu0 %v343, 64
  %v349 = vpop.permute.xlu0 %348
  %350 = vrot.lane.b32.xlu0 %v344, 64
  %v351 = vpop.permute.xlu0 %350
  %352 = vrot.lane.b32.xlu0 %v345, 64
  %v353 = vpop.permute.xlu0 %352
  %vm354 = vcmask 523264
  %v357 = vsel %vm354, %v290, %v307
  %v361 = vsel %vm354, %v291, %v309
  %v365 = vsel %vm354, %v292, %v311
  %v369 = vsel %vm354, %v293, %v313
  %v373 = vsel %vm354, %v330, %v347
  %v377 = vsel %vm354, %v331, %v349
  %v381 = vsel %vm354, %v332, %v351
  %v385 = vsel %vm354, %v333, %v353
  %s387 = scalar_lea.vmem %s0, 72
  %v388 = vld [vmem:[%s387] sm:$0xf]
  %v389 = vld [vmem:[%s387 + $0x4] sm:$0x1]
  %v390 = vld [vmem:[%s387 + $0x8] sm:$0xf]
  %v391 = vld [vmem:[%s387 + $0xc] sm:$0x1]
  %v392 = vld [vmem:[%s387 + $0x10] sm:$0xf]
  %v393 = vld [vmem:[%s387 + $0x14] sm:$0x1]
  %v394 = vld [vmem:[%s387 + $0x18] sm:$0xf]
  %v395 = vld [vmem:[%s387 + $0x1c] sm:$0x1]
  %v396 = vld [vmem:[%s387 + $0x20] sm:$0xf]
  %v397 = vld [vmem:[%s387 + $0x24] sm:$0x1]
  %v398 = vld [vmem:[%s387 + $0x28] sm:$0xf]
  %v399 = vld [vmem:[%s387 + $0x2c] sm:$0x1]
  %v400 = vld [vmem:[%s387 + $0x30] sm:$0xf]
  %v401 = vld [vmem:[%s387 + $0x34] sm:$0x1]
  %v402 = vld [vmem:[%s387 + $0x38] sm:$0xf]
  %v403 = vld [vmem:[%s387 + $0x3c] sm:$0x1]
  %v405 = vshrl.u32 %v388, 16
  %v407 = vrot.slane %v405, 4
  %v408 = vshll.u32 %v388, 16
  %v410 = vrot.slane %v408, 5
  %v411 = vor.u32 %v407, %v410
  %v412 = vrot.slane %v411, 4
  %v414 = vshll.u32 %v389, 16
  %v416 = vrot.slane %v414, 5
  %v417 = vsel %vm32, %v412, %v416
  %v419 = vshrl.u32 %v390, 16
  %v421 = vrot.slane %v419, 4
  %v422 = vshll.u32 %v390, 16
  %v424 = vrot.slane %v422, 5
  %v425 = vor.u32 %v421, %v424
  %v426 = vrot.slane %v425, 4
  %v428 = vshll.u32 %v391, 16
  %v430 = vrot.slane %v428, 5
  %v431 = vsel %vm32, %v426, %v430
  %v433 = vshrl.u32 %v392, 16
  %v435 = vrot.slane %v433, 4
  %v436 = vshll.u32 %v392, 16
  %v438 = vrot.slane %v436, 5
  %v439 = vor.u32 %v435, %v438
  %v440 = vrot.slane %v439, 4
  %v442 = vshll.u32 %v393, 16
  %v444 = vrot.slane %v442, 5
  %v445 = vsel %vm32, %v440, %v444
  %v447 = vshrl.u32 %v394, 16
  %v449 = vrot.slane %v447, 4
  %v450 = vshll.u32 %v394, 16
  %v452 = vrot.slane %v450, 5
  %v453 = vor.u32 %v449, %v452
  %v454 = vrot.slane %v453, 4
  %v456 = vshll.u32 %v395, 16
  %v458 = vrot.slane %v456, 5
  %v459 = vsel %vm32, %v454, %v458
  %v461 = vshrl.u32 %v396, 16
  %v463 = vrot.slane %v461, 4
  %v464 = vshll.u32 %v396, 16
  %v466 = vrot.slane %v464, 5
  %v467 = vor.u32 %v463, %v466
  %v468 = vrot.slane %v467, 4
  %v470 = vshll.u32 %v397, 16
  %v472 = vrot.slane %v470, 5
  %v473 = vsel %vm32, %v468, %v472
  %v475 = vshrl.u32 %v398, 16
  %v477 = vrot.slane %v475, 4
  %v478 = vshll.u32 %v398, 16
  %v480 = vrot.slane %v478, 5
  %v481 = vor.u32 %v477, %v480
  %v482 = vrot.slane %v481, 4
  %v484 = vshll.u32 %v399, 16
  %v486 = vrot.slane %v484, 5
  %v487 = vsel %vm32, %v482, %v486
  %v489 = vshrl.u32 %v400, 16
  %v491 = vrot.slane %v489, 4
  %v492 = vshll.u32 %v400, 16
  %v494 = vrot.slane %v492, 5
  %v495 = vor.u32 %v491, %v494
  %v496 = vrot.slane %v495, 4
  %v498 = vshll.u32 %v401, 16
  %v500 = vrot.slane %v498, 5
  %v501 = vsel %vm32, %v496, %v500
  %v503 = vshrl.u32 %v402, 16
  %v505 = vrot.slane %v503, 4
  %v506 = vshll.u32 %v402, 16
  %v508 = vrot.slane %v506, 5
  %v509 = vor.u32 %v505, %v508
  %v510 = vrot.slane %v509, 4
  %v512 = vshll.u32 %v403, 16
  %v514 = vrot.slane %v512, 5
  %v515 = vsel %vm32, %v510, %v514
  %s516 = scalar_lea.vmem %s0, 80
  %v517 = vld [vmem:[%s516] sm:$0xf]
  %v518 = vld [vmem:[%s516 + $0x4] sm:$0x1]
  %v519 = vld [vmem:[%s516 + $0x8] sm:$0xf]
  %v520 = vld [vmem:[%s516 + $0xc] sm:$0x1]
  %v521 = vld [vmem:[%s516 + $0x10] sm:$0xf]
  %v522 = vld [vmem:[%s516 + $0x14] sm:$0x1]
  %v523 = vld [vmem:[%s516 + $0x18] sm:$0xf]
  %v524 = vld [vmem:[%s516 + $0x1c] sm:$0x1]
  %v525 = vld [vmem:[%s516 + $0x20] sm:$0xf]
  %v526 = vld [vmem:[%s516 + $0x24] sm:$0x1]
  %v527 = vld [vmem:[%s516 + $0x28] sm:$0xf]
  %v528 = vld [vmem:[%s516 + $0x2c] sm:$0x1]
  %v529 = vld [vmem:[%s516 + $0x30] sm:$0xf]
  %v530 = vld [vmem:[%s516 + $0x34] sm:$0x1]
  %v531 = vld [vmem:[%s516 + $0x38] sm:$0xf]
  %v532 = vld [vmem:[%s516 + $0x3c] sm:$0x1]
  %v534 = vshrl.u32 %v517, 16
  %v536 = vrot.slane %v534, 4
  %v537 = vshll.u32 %v517, 16
  %v539 = vrot.slane %v537, 5
  %v540 = vor.u32 %v536, %v539
  %v541 = vrot.slane %v540, 4
  %v543 = vshll.u32 %v518, 16
  %v545 = vrot.slane %v543, 5
  %v546 = vsel %vm32, %v541, %v545
  %v548 = vshrl.u32 %v519, 16
  %v550 = vrot.slane %v548, 4
  %v551 = vshll.u32 %v519, 16
  %v553 = vrot.slane %v551, 5
  %v554 = vor.u32 %v550, %v553
  %v555 = vrot.slane %v554, 4
  %v557 = vshll.u32 %v520, 16
  %v559 = vrot.slane %v557, 5
  %v560 = vsel %vm32, %v555, %v559
  %v562 = vshrl.u32 %v521, 16
  %v564 = vrot.slane %v562, 4
  %v565 = vshll.u32 %v521, 16
  %v567 = vrot.slane %v565, 5
  %v568 = vor.u32 %v564, %v567
  %v569 = vrot.slane %v568, 4
  %v571 = vshll.u32 %v522, 16
  %v573 = vrot.slane %v571, 5
  %v574 = vsel %vm32, %v569, %v573
  %v576 = vshrl.u32 %v523, 16
  %v578 = vrot.slane %v576, 4
  %v579 = vshll.u32 %v523, 16
  %v581 = vrot.slane %v579, 5
  %v582 = vor.u32 %v578, %v581
  %v583 = vrot.slane %v582, 4
  %v585 = vshll.u32 %v524, 16
  %v587 = vrot.slane %v585, 5
  %v588 = vsel %vm32, %v583, %v587
  %v590 = vshrl.u32 %v525, 16
  %v592 = vrot.slane %v590, 4
  %v593 = vshll.u32 %v525, 16
  %v595 = vrot.slane %v593, 5
  %v596 = vor.u32 %v592, %v595
  %v597 = vrot.slane %v596, 4
  %v599 = vshll.u32 %v526, 16
  %v601 = vrot.slane %v599, 5
  %v602 = vsel %vm32, %v597, %v601
  %v604 = vshrl.u32 %v527, 16
  %v606 = vrot.slane %v604, 4
  %v607 = vshll.u32 %v527, 16
  %v609 = vrot.slane %v607, 5
  %v610 = vor.u32 %v606, %v609
  %v611 = vrot.slane %v610, 4
  %v613 = vshll.u32 %v528, 16
  %v615 = vrot.slane %v613, 5
  %v616 = vsel %vm32, %v611, %v615
  %v618 = vshrl.u32 %v529, 16
  %v620 = vrot.slane %v618, 4
  %v621 = vshll.u32 %v529, 16
  %v623 = vrot.slane %v621, 5
  %v624 = vor.u32 %v620, %v623
  %v625 = vrot.slane %v624, 4
  %v627 = vshll.u32 %v530, 16
  %v629 = vrot.slane %v627, 5
  %v630 = vsel %vm32, %v625, %v629
  %v632 = vshrl.u32 %v531, 16
  %v634 = vrot.slane %v632, 4
  %v635 = vshll.u32 %v531, 16
  %v637 = vrot.slane %v635, 5
  %v638 = vor.u32 %v634, %v637
  %v639 = vrot.slane %v638, 4
  %v641 = vshll.u32 %v532, 16
  %v643 = vrot.slane %v641, 5
  %v644 = vsel %vm32, %v639, %v643
  %v653 = vunpack.c.l.b16 %v388
  %v654 = vunpack.c.l.b16 %v390
  %v655 = vunpack.c.l.b16 %v392
  %v656 = vunpack.c.l.b16 %v394
  %v657 = vunpack.c.l.b16 %v396
  %v658 = vunpack.c.l.b16 %v398
  %v659 = vunpack.c.l.b16 %v400
  %v660 = vunpack.c.l.b16 %v402
  %v661 = vpack.c.b16 %v654, %v653
  %v662 = vpack.c.b16 %v656, %v655
  %v663 = vpack.c.b16 %v658, %v657
  %v664 = vpack.c.b16 %v660, %v659
  %v665 = vunpack.c.l.b16 %v417
  %v666 = vunpack.c.l.b16 %v431
  %v667 = vunpack.c.l.b16 %v445
  %v668 = vunpack.c.l.b16 %v459
  %v669 = vunpack.c.l.b16 %v473
  %v670 = vunpack.c.l.b16 %v487
  %v671 = vunpack.c.l.b16 %v501
  %v672 = vunpack.c.l.b16 %v515
  %v673 = vpack.c.b16 %v666, %v665
  %v674 = vpack.c.b16 %v668, %v667
  %v675 = vpack.c.b16 %v670, %v669
  %v676 = vpack.c.b16 %v672, %v671
  %677 = vrot.lane.b32.xlu0 %v673, 64
  %v678 = vpop.permute.xlu0 %677
  %679 = vrot.lane.b32.xlu0 %v674, 64
  %v680 = vpop.permute.xlu0 %679
  %681 = vrot.lane.b32.xlu0 %v675, 64
  %v682 = vpop.permute.xlu0 %681
  %683 = vrot.lane.b32.xlu0 %v676, 64
  %v684 = vpop.permute.xlu0 %683
  %v693 = vunpack.c.l.b16 %v517
  %v694 = vunpack.c.l.b16 %v519
  %v695 = vunpack.c.l.b16 %v521
  %v696 = vunpack.c.l.b16 %v523
  %v697 = vunpack.c.l.b16 %v525
  %v698 = vunpack.c.l.b16 %v527
  %v699 = vunpack.c.l.b16 %v529
  %v700 = vunpack.c.l.b16 %v531
  %v701 = vpack.c.b16 %v694, %v693
  %v702 = vpack.c.b16 %v696, %v695
  %v703 = vpack.c.b16 %v698, %v697
  %v704 = vpack.c.b16 %v700, %v699
  %v705 = vunpack.c.l.b16 %v546
  %v706 = vunpack.c.l.b16 %v560
  %v707 = vunpack.c.l.b16 %v574
  %v708 = vunpack.c.l.b16 %v588
  %v709 = vunpack.c.l.b16 %v602
  %v710 = vunpack.c.l.b16 %v616
  %v711 = vunpack.c.l.b16 %v630
  %v712 = vunpack.c.l.b16 %v644
  %v713 = vpack.c.b16 %v706, %v705
  %v714 = vpack.c.b16 %v708, %v707
  %v715 = vpack.c.b16 %v710, %v709
  %v716 = vpack.c.b16 %v712, %v711
  %717 = vrot.lane.b32.xlu0 %v713, 64
  %v718 = vpop.permute.xlu0 %717
  %719 = vrot.lane.b32.xlu0 %v714, 64
  %v720 = vpop.permute.xlu0 %719
  %721 = vrot.lane.b32.xlu0 %v715, 64
  %v722 = vpop.permute.xlu0 %721
  %723 = vrot.lane.b32.xlu0 %v716, 64
  %v724 = vpop.permute.xlu0 %723
  %v727 = vsel %vm354, %v661, %v678
  %v731 = vsel %vm354, %v662, %v680
  %v735 = vsel %vm354, %v663, %v682
  %v739 = vsel %vm354, %v664, %v684
  %v743 = vsel %vm354, %v701, %v718
  %v747 = vsel %vm354, %v702, %v720
  %v751 = vsel %vm354, %v703, %v722
  %v755 = vsel %vm354, %v704, %v724
  %v757 = vld [vmem:[%s1] sm:$0xf]
  %v758 = vld [vmem:[%s1 + $0x4] sm:$0xf]
  %v759 = vld [vmem:[%s1 + $0x8] sm:$0xf]
  %v760 = vld [vmem:[%s1 + $0xc] sm:$0xf]
  %v761 = vld [vmem:[%s1 + $0x10] sm:$0xf]
  %v762 = vld [vmem:[%s1 + $0x14] sm:$0xf]
  %v763 = vld [vmem:[%s1 + $0x18] sm:$0xf]
  %v764 = vld [vmem:[%s1 + $0x1c] sm:$0xf]
  %v765 = vld [vmem:[%s1 + $0x20] sm:$0xf]
  %v766 = vld [vmem:[%s1 + $0x24] sm:$0xf]
  %v767 = vld [vmem:[%s1 + $0x28] sm:$0xf]
  %v768 = vld [vmem:[%s1 + $0x2c] sm:$0xf]
  %v769 = vld [vmem:[%s1 + $0x30] sm:$0xf]
  %v770 = vld [vmem:[%s1 + $0x34] sm:$0xf]
  %v771 = vld [vmem:[%s1 + $0x38] sm:$0xf]
  %v772 = vld [vmem:[%s1 + $0x3c] sm:$0xf]
  %v773 = vld [vmem:[%s1 + $0x40] sm:$0xf]
  %v774 = vld [vmem:[%s1 + $0x44] sm:$0xf]
  %v775 = vld [vmem:[%s1 + $0x48] sm:$0xf]
  %v776 = vld [vmem:[%s1 + $0x4c] sm:$0xf]
  %v777 = vld [vmem:[%s1 + $0x50] sm:$0xf]
  %v778 = vld [vmem:[%s1 + $0x54] sm:$0xf]
  %v779 = vld [vmem:[%s1 + $0x58] sm:$0xf]
  %v780 = vld [vmem:[%s1 + $0x5c] sm:$0xf]
  %v781 = vld [vmem:[%s1 + $0x60] sm:$0xf]
  %v782 = vld [vmem:[%s1 + $0x64] sm:$0xf]
  %v783 = vld [vmem:[%s1 + $0x68] sm:$0xf]
  %v784 = vld [vmem:[%s1 + $0x6c] sm:$0xf]
  %v785 = vld [vmem:[%s1 + $0x70] sm:$0xf]
  %v786 = vld [vmem:[%s1 + $0x74] sm:$0xf]
  %v787 = vld [vmem:[%s1 + $0x78] sm:$0xf]
  %v788 = vld [vmem:[%s1 + $0x7c] sm:$0xf]
  %v821 = vunpack.c.l.b16 %v757
  %v822 = vunpack.c.l.b16 %v758
  %v823 = vunpack.c.l.b16 %v759
  %v824 = vunpack.c.l.b16 %v760
  %v825 = vunpack.c.l.b16 %v761
  %v826 = vunpack.c.l.b16 %v762
  %v827 = vunpack.c.l.b16 %v763
  %v828 = vunpack.c.l.b16 %v764
  %v829 = vunpack.c.l.b16 %v765
  %v830 = vunpack.c.l.b16 %v766
  %v831 = vunpack.c.l.b16 %v767
  %v832 = vunpack.c.l.b16 %v768
  %v833 = vunpack.c.l.b16 %v769
  %v834 = vunpack.c.l.b16 %v770
  %v835 = vunpack.c.l.b16 %v771
  %v836 = vunpack.c.l.b16 %v772
  %v837 = vunpack.c.l.b16 %v773
  %v838 = vunpack.c.l.b16 %v774
  %v839 = vunpack.c.l.b16 %v775
  %v840 = vunpack.c.l.b16 %v776
  %v841 = vunpack.c.l.b16 %v777
  %v842 = vunpack.c.l.b16 %v778
  %v843 = vunpack.c.l.b16 %v779
  %v844 = vunpack.c.l.b16 %v780
  %v845 = vunpack.c.l.b16 %v781
  %v846 = vunpack.c.l.b16 %v782
  %v847 = vunpack.c.l.b16 %v783
  %v848 = vunpack.c.l.b16 %v784
  %v849 = vunpack.c.l.b16 %v785
  %v850 = vunpack.c.l.b16 %v786
  %v851 = vunpack.c.l.b16 %v787
  %v852 = vunpack.c.l.b16 %v788
  %v853 = vpack.c.b16 %v822, %v821
  %v854 = vpack.c.b16 %v824, %v823
  %v855 = vpack.c.b16 %v826, %v825
  %v856 = vpack.c.b16 %v828, %v827
  %v857 = vpack.c.b16 %v830, %v829
  %v858 = vpack.c.b16 %v832, %v831
  %v859 = vpack.c.b16 %v834, %v833
  %v860 = vpack.c.b16 %v836, %v835
  %v861 = vpack.c.b16 %v838, %v837
  %v862 = vpack.c.b16 %v840, %v839
  %v863 = vpack.c.b16 %v842, %v841
  %v864 = vpack.c.b16 %v844, %v843
  %v865 = vpack.c.b16 %v846, %v845
  %v866 = vpack.c.b16 %v848, %v847
  %v867 = vpack.c.b16 %v850, %v849
  %v868 = vpack.c.b16 %v852, %v851
  %885 = vmatprep.subr.bf16.mxu0 0
  %886 = vmatpush1.bf16.msra.mxu0 %v853
  %887 = vmatprep.subr.bf16.mxu0 0
  %888 = vmatpush1.bf16.msra.mxu0 %v854
  %889 = vmatprep.subr.bf16.mxu0 0
  %890 = vmatpush1.bf16.msra.mxu0 %v855
  %891 = vmatprep.subr.bf16.mxu0 0
  %892 = vmatpush1.bf16.msra.mxu0 %v856
  %893 = vmatprep.subr.bf16.mxu0 0
  %894 = vmatpush1.bf16.msra.mxu0 %v857
  %895 = vmatprep.subr.bf16.mxu0 0
  %896 = vmatpush1.bf16.msra.mxu0 %v858
  %897 = vmatprep.subr.bf16.mxu0 0
  %898 = vmatpush1.bf16.msra.mxu0 %v859
  %899 = vmatprep.subr.bf16.mxu0 0
  %900 = vmatpush1.bf16.msra.mxu0 %v860
  %901 = vmatprep.subr.bf16.mxu0 0
  %902 = vmatpush1.bf16.msra.mxu0 %v861
  %903 = vmatprep.subr.bf16.mxu0 0
  %904 = vmatpush1.bf16.msra.mxu0 %v862
  %905 = vmatprep.subr.bf16.mxu0 0
  %906 = vmatpush1.bf16.msra.mxu0 %v863
  %907 = vmatprep.subr.bf16.mxu0 0
  %908 = vmatpush1.bf16.msra.mxu0 %v864
  %909 = vmatprep.subr.bf16.mxu0 0
  %910 = vmatpush1.bf16.msra.mxu0 %v865
  %911 = vmatprep.subr.bf16.mxu0 0
  %912 = vmatpush1.bf16.msra.mxu0 %v866
  %913 = vmatprep.subr.bf16.mxu0 0
  %914 = vmatpush1.bf16.msra.mxu0 %v867
  %915 = vmatprep.subr.bf16.mxu0 0
  %916 = vmatpush1.bf16.msra.mxu0 %v868
  %917 = vmatprep.mubr.bf16.mxu0 %v373
  %918 = vmatmul.mubr.bf16.gmra.mrb[0].mxu0 %v357
  %v919 = vpop.f32.mrb[0].mxu0
  %v920 = vadd.f32 0.0, %v919
  %v921 = vpop.f32.mrb[0].mxu0
  %v922 = vpop.f32.mrb[0].mxu0
  %v923 = vadd.f32 0.0, %v922
  %v924 = vpop.f32.mrb[0].mxu0
  %925 = vmatprep.mubr.bf16.mxu0 %v377
  %926 = vmatmul.mubr.bf16.gmra.mrb[0].mxu0 %v361
  %v927 = vpop.f32.mrb[0].mxu0
  %v928 = vadd.f32 0.0, %v927
  %v929 = vpop.f32.mrb[0].mxu0
  %v930 = vpop.f32.mrb[0].mxu0
  %v931 = vadd.f32 0.0, %v930
  %v932 = vpop.f32.mrb[0].mxu0
  %933 = vmatprep.mubr.bf16.mxu0 %v381
  %934 = vmatmul.mubr.bf16.gmra.mrb[0].mxu0 %v365
  %v935 = vpop.f32.mrb[0].mxu0
  %v936 = vadd.f32 0.0, %v935
  %v937 = vpop.f32.mrb[0].mxu0
  %v938 = vpop.f32.mrb[0].mxu0
  %v939 = vadd.f32 0.0, %v938
  %v940 = vpop.f32.mrb[0].mxu0
  %941 = vmatprep.mubr.bf16.mxu0 %v385
  %942 = vmatmul.mubr.bf16.gmra.mrb[0].mxu0 %v369
  %v943 = vpop.f32.mrb[0].mxu0
  %v944 = vadd.f32 0.0, %v943
  %v945 = vpop.f32.mrb[0].mxu0
  %v946 = vpop.f32.mrb[0].mxu0
  %v947 = vadd.f32 0.0, %v946
  %v948 = vpop.f32.mrb[0].mxu0
  %949 = vmatprep.mubr.bf16.mxu0 %v743
  %950 = vmatmul.mubr.bf16.gmra.mrb[0].mxu0 %v727
  %v951 = vpop.f32.mrb[0].mxu0
  %v952 = vadd.f32 0.0, %v951
  %v953 = vpop.f32.mrb[0].mxu0
  %v954 = vpop.f32.mrb[0].mxu0
  %v955 = vadd.f32 0.0, %v954
  %v956 = vpop.f32.mrb[0].mxu0
  %957 = vmatprep.mubr.bf16.mxu0 %v747
  %958 = vmatmul.mubr.bf16.gmra.mrb[0].mxu0 %v731
  %v959 = vpop.f32.mrb[0].mxu0
  %v960 = vadd.f32 0.0, %v959
  %v961 = vpop.f32.mrb[0].mxu0
  %v962 = vpop.f32.mrb[0].mxu0
  %v963 = vadd.f32 0.0, %v962
  %v964 = vpop.f32.mrb[0].mxu0
  %965 = vmatprep.mubr.bf16.mxu0 %v751
  %966 = vmatmul.mubr.bf16.gmra.mrb[0].mxu0 %v735
  %v967 = vpop.f32.mrb[0].mxu0
  %v968 = vadd.f32 0.0, %v967
  %v969 = vpop.f32.mrb[0].mxu0
  %v970 = vpop.f32.mrb[0].mxu0
  %v971 = vadd.f32 0.0, %v970
  %v972 = vpop.f32.mrb[0].mxu0
  %973 = vmatprep.mubr.bf16.mxu0 %v755
  %974 = vmatmul.mubr.bf16.gmra.mrb[0].mxu0 %v739
  %v975 = vpop.f32.mrb[0].mxu0
  %v976 = vadd.f32 0.0, %v975
  %v977 = vpop.f32.mrb[0].mxu0
  %v978 = vpop.f32.mrb[0].mxu0
  %v979 = vadd.f32 0.0, %v978
  %v980 = vpop.f32.mrb[0].mxu0
  %981 = vdwg.mxu0
  %vm982 = vcmask 261120
  %v983 = vsel %vm982, %v920, 0.0
  %v984 = vsel %vm982, %v923, 0.0
  %v985 = vadd.f32 %v983, %v984
  %v986 = vsel %vm982, %v928, 0.0
  %v987 = vadd.f32 %v985, %v986
  %v988 = vsel %vm982, %v931, 0.0
  %v989 = vadd.f32 %v987, %v988
  %v990 = vsel %vm982, %v936, 0.0
  %v991 = vadd.f32 %v989, %v990
  %v992 = vsel %vm982, %v939, 0.0
  %v993 = vadd.f32 %v991, %v992
  %v994 = vsel %vm982, %v944, 0.0
  %v995 = vadd.f32 %v993, %v994
  %v996 = vsel %vm982, %v947, 0.0
  %v997 = vadd.f32 %v995, %v996
  %v998 = vsel %vm982, %v952, 0.0
  %v999 = vadd.f32 %v997, %v998
  %v1000 = vsel %vm982, %v955, 0.0
  %v1001 = vadd.f32 %v999, %v1000
  %v1002 = vsel %vm982, %v960, 0.0
  %v1003 = vadd.f32 %v1001, %v1002
  %v1004 = vsel %vm982, %v963, 0.0
  %v1005 = vadd.f32 %v1003, %v1004
  %v1006 = vsel %vm982, %v968, 0.0
  %v1007 = vadd.f32 %v1005, %v1006
  %v1008 = vsel %vm982, %v971, 0.0
  %v1009 = vadd.f32 %v1007, %v1008
  %v1010 = vsel %vm982, %v976, 0.0
  %v1011 = vadd.f32 %v1009, %v1010
  %v1012 = vsel %vm982, %v979, 0.0
  %v1013 = vadd.f32 %v1011, %v1012
  %v1014 = vrot.slane %v1013, 4
  %v1015 = vadd.f32 %v1013, %v1014
  %v1016 = vrot.slane %v1015, 2
  %v1017 = vadd.f32 %v1015, %v1016
  %v1018 = vrot.slane %v1017, 1
  %v1019 = vadd.f32 %v1017, %v1018
  %v1020 = vmul.f32 %v920, %v920
  %v1021 = vmul.f32 %v923, %v923
  %v1022 = vmul.f32 %v928, %v928
  %v1023 = vmul.f32 %v931, %v931
  %v1024 = vmul.f32 %v936, %v936
  %v1025 = vmul.f32 %v939, %v939
  %v1026 = vmul.f32 %v944, %v944
  %v1027 = vmul.f32 %v947, %v947
  %v1028 = vmul.f32 %v952, %v952
  %v1029 = vmul.f32 %v955, %v955
  %v1030 = vmul.f32 %v960, %v960
  %v1031 = vmul.f32 %v963, %v963
  %v1032 = vmul.f32 %v968, %v968
  %v1033 = vmul.f32 %v971, %v971
  %v1034 = vmul.f32 %v976, %v976
  %v1035 = vmul.f32 %v979, %v979
  %v1036 = vsel %vm982, %v1020, 0.0
  %v1037 = vsel %vm982, %v1021, 0.0
  %v1038 = vadd.f32 %v1036, %v1037
  %v1039 = vsel %vm982, %v1022, 0.0
  %v1040 = vadd.f32 %v1038, %v1039
  %v1041 = vsel %vm982, %v1023, 0.0
  %v1042 = vadd.f32 %v1040, %v1041
  %v1043 = vsel %vm982, %v1024, 0.0
  %v1044 = vadd.f32 %v1042, %v1043
  %v1045 = vsel %vm982, %v1025, 0.0
  %v1046 = vadd.f32 %v1044, %v1045
  %v1047 = vsel %vm982, %v1026, 0.0
  %v1048 = vadd.f32 %v1046, %v1047
  %v1049 = vsel %vm982, %v1027, 0.0
  %v1050 = vadd.f32 %v1048, %v1049
  %v1051 = vsel %vm982, %v1028, 0.0
  %v1052 = vadd.f32 %v1050, %v1051
  %v1053 = vsel %vm982, %v1029, 0.0
  %v1054 = vadd.f32 %v1052, %v1053
  %v1055 = vsel %vm982, %v1030, 0.0
  %v1056 = vadd.f32 %v1054, %v1055
  %v1057 = vsel %vm982, %v1031, 0.0
  %v1058 = vadd.f32 %v1056, %v1057
  %v1059 = vsel %vm982, %v1032, 0.0
  %v1060 = vadd.f32 %v1058, %v1059
  %v1061 = vsel %vm982, %v1033, 0.0
  %v1062 = vadd.f32 %v1060, %v1061
  %v1063 = vsel %vm982, %v1034, 0.0
  %v1064 = vadd.f32 %v1062, %v1063
  %v1065 = vsel %vm982, %v1035, 0.0
  %v1066 = vadd.f32 %v1064, %v1065
  %v1067 = vrot.slane %v1066, 4
  %v1068 = vadd.f32 %v1066, %v1067
  %v1069 = vrot.slane %v1068, 2
  %v1070 = vadd.f32 %v1068, %v1069
  %v1071 = vrot.slane %v1070, 1
  %v1072 = vadd.f32 %v1070, %v1071
  %vm1073 = vcmask 1040384
  %v1074 = vsel %vm1073, %v1019, %v1072
  %vm1075 = vcmask 254976
  %1076 = vst.msk [vmem:[%s3] sm:$0x3] %vm1075, %v1074
  %1077 = vst.msk [vmem:[%s2] sm:$0xff] %vm982, %v920
  %1078 = vst.msk [vmem:[%s2 + $0x8] sm:$0xff] %vm982, %v923
  %1079 = vst.msk [vmem:[%s2 + $0x10] sm:$0xff] %vm982, %v928
  %1080 = vst.msk [vmem:[%s2 + $0x18] sm:$0xff] %vm982, %v931
  %1081 = vst.msk [vmem:[%s2 + $0x20] sm:$0xff] %vm982, %v936
  %1082 = vst.msk [vmem:[%s2 + $0x28] sm:$0xff] %vm982, %v939
  %1083 = vst.msk [vmem:[%s2 + $0x30] sm:$0xff] %vm982, %v944
  %1084 = vst.msk [vmem:[%s2 + $0x38] sm:$0xff] %vm982, %v947
  %1085 = vst.msk [vmem:[%s2 + $0x40] sm:$0xff] %vm982, %v952
  %1086 = vst.msk [vmem:[%s2 + $0x48] sm:$0xff] %vm982, %v955
  %1087 = vst.msk [vmem:[%s2 + $0x50] sm:$0xff] %vm982, %v960
  %1088 = vst.msk [vmem:[%s2 + $0x58] sm:$0xff] %vm982, %v963
  %1089 = vst.msk [vmem:[%s2 + $0x60] sm:$0xff] %vm982, %v968
  %1090 = vst.msk [vmem:[%s2 + $0x68] sm:$0xff] %vm982, %v971
  %1091 = vst.msk [vmem:[%s2 + $0x70] sm:$0xff] %vm982, %v976
  %1092 = vst.msk [vmem:[%s2 + $0x78] sm:$0xff] %vm982, %v979
  // Predicated region
  $region10: #{encoder_forward.6} parent=0 // pred_check
    _
  $region11: #{encoder_forward.6} parent=0 // pred_check_branch
    %1094 = sbr.rel (0) target = $region13
  $region12: #{encoder_forward.6} parent=0 // pred_region
    _
  $region13: #{encoder_forward.6} parent=0 // pred_fallthru
    _
  // Predicated region
  $region14: #{encoder_forward.6} parent=0 // pred_check
    _
  $region15: #{encoder_forward.6} parent=0 // pred_check_branch
    %1096 = sbr.rel (0) target = $region17
  $region16: #{encoder_forward.6} parent=0 // pred_region
    _
  $region17: #{encoder_forward.6} parent=0 // pred_fallthru
    _
  // Predicated region
  $region18: #{encoder_forward.6} parent=0 // pred_check
    _
  $region19: #{encoder_forward.6} parent=0 // pred_check_branch
    %1098 = sbr.rel (0) target = $region21
  $region20: #{encoder_forward.6} parent=0 // pred_region
    _
  $region21: #{encoder_forward.6} parent=0 // pred_fallthru
    _
  // Predicated region
  $region22: #{encoder_forward.6} parent=0 // pred_check
    _
  $region23: #{encoder_forward.6} parent=0 // pred_check_branch
    %1100 = sbr.rel (0) target = $region25
  $region24: #{encoder_forward.6} parent=0 // pred_region
    _
  $region25: #{encoder_forward.6} parent=0 // pred_fallthru
    _

// kernel: encoder_forward.7
$region0: #{encoder_forward.7}
  #allocation0 [shape = 'u32[]', space=smem, size = 0x4, offset = 0x4, fixed_abs, tag = 'smem constant byte address 0x4 - core index']
  #allocation1 [shape = 'u32[144,128]{1,0:T(1,128)}', space=vmem, size = 0x12000, scoped, tag = 'internal scratch']
  %s0 = inlined_call_operand.vmem [shape: f32[2,2048], index: 0, kind: input, shape index: {}]
  %s1 = inlined_call_operand.vmem [shape: f32[1,2048], index: 1, kind: input, shape index: {}]
  %s2 = inlined_call_operand.vmem [shape: f32[1,2048], index: 2, kind: input, shape index: {}]
  %s3 = inlined_call_operand.vmem [shape: bf16[2048,32], index: 3, kind: input, shape index: {}]
  %s4 = inlined_call_operand.vmem [shape: f32[1,32], index: 4, kind: input, shape index: {}]
  %s5 = inlined_call_operand.vmem [shape: f32[2,32], index: 5, kind: output, shape index: {}]
  %s6 = sld [smem:[#allocation0]]
  $region30: #{encoder_forward.7} parent=0
    _
  %s8 = ssub.s32 1, %s6
  %s9 = scalar_select 0, %s8, %s6
  // Predicated region
  $region2: #{encoder_forward.7} parent=0 // pred_check
    _
  $region3: #{encoder_forward.7} parent=0 // pred_check_branch
    %11 = sbr.rel (0) target = $region5
  $region4: #{encoder_forward.7} parent=0 // pred_region
    _
  $region5: #{encoder_forward.7} parent=0 // pred_fallthru
    _
  // Predicated region
  $region6: #{encoder_forward.7} parent=0 // pred_check
    _
  $region7: #{encoder_forward.7} parent=0 // pred_check_branch
    %13 = sbr.rel (0) target = $region9
  $region8: #{encoder_forward.7} parent=0 // pred_region
    _
  $region9: #{encoder_forward.7} parent=0 // pred_fallthru
    _
  // Predicated region
  $region10: #{encoder_forward.7} parent=0 // pred_check
    _
  $region11: #{encoder_forward.7} parent=0 // pred_check_branch
    %15 = sbr.rel (0) target = $region13
  $region12: #{encoder_forward.7} parent=0 // pred_region
    _
  $region13: #{encoder_forward.7} parent=0 // pred_fallthru
    _
  // Predicated region
  $region14: #{encoder_forward.7} parent=0 // pred_check
    _
  $region15: #{encoder_forward.7} parent=0 // pred_check_branch
    %17 = sbr.rel (0) target = $region17
  $region16: #{encoder_forward.7} parent=0 // pred_region
    _
  $region17: #{encoder_forward.7} parent=0 // pred_fallthru
    _
  // Predicated region
  $region18: #{encoder_forward.7} parent=0 // pred_check
    _
  $region19: #{encoder_forward.7} parent=0 // pred_check_branch
    %19 = sbr.rel (0) target = $region21
  $region20: #{encoder_forward.7} parent=0 // pred_region
    _
  $region21: #{encoder_forward.7} parent=0 // pred_fallthru
    _
  %v21 = vld [vmem:[%s0] sm:$0xff]
  %v22 = vld [vmem:[%s0 + $0x8] sm:$0xff]
  %v23 = vld [vmem:[%s0 + $0x10] sm:$0xff]
  %v24 = vld [vmem:[%s0 + $0x18] sm:$0xff]
  %v25 = vld [vmem:[%s1] sm:$0xff]
  %v26 = vld [vmem:[%s1 + $0x8] sm:$0xff]
  %v29 = vlaneseq
  %v30 = vshrl.u32 %v29, 7
  %v31 = vsub.s32 0, %v30
  %v32 = vrot.slane %v25, %v31
  %v33 = vlaneseq
  %v34 = vshrl.u32 %v33, 7
  %v35 = vsub.s32 1, %v34
  %v36 = vrot.slane %v25, %v35
  %v37 = vlaneseq
  %v38 = vshrl.u32 %v37, 7
  %v39 = vsub.s32 2, %v38
  %v40 = vrot.slane %v25, %v39
  %v41 = vlaneseq
  %v42 = vshrl.u32 %v41, 7
  %v43 = vsub.s32 3, %v42
  %v44 = vrot.slane %v25, %v43
  %v45 = vlaneseq
  %v46 = vshrl.u32 %v45, 7
  %v47 = vsub.s32 4, %v46
  %v48 = vrot.slane %v25, %v47
  %v49 = vlaneseq
  %v50 = vshrl.u32 %v49, 7
  %v51 = vsub.s32 5, %v50
  %v52 = vrot.slane %v25, %v51
  %v53 = vlaneseq
  %v54 = vshrl.u32 %v53, 7
  %v55 = vsub.s32 6, %v54
  %v56 = vrot.slane %v25, %v55
  %v57 = vlaneseq
  %v58 = vshrl.u32 %v57, 7
  %v59 = vsub.s32 7, %v58
  %v60 = vrot.slane %v25, %v59
  %v61 = vlaneseq
  %v62 = vshrl.u32 %v61, 7
  %v63 = vsub.s32 0, %v62
  %v64 = vrot.slane %v26, %v63
  %v65 = vlaneseq
  %v66 = vshrl.u32 %v65, 7
  %v67 = vsub.s32 1, %v66
  %v68 = vrot.slane %v26, %v67
  %v69 = vlaneseq
  %v70 = vshrl.u32 %v69, 7
  %v71 = vsub.s32 2, %v70
  %v72 = vrot.slane %v26, %v71
  %v73 = vlaneseq
  %v74 = vshrl.u32 %v73, 7
  %v75 = vsub.s32 3, %v74
  %v76 = vrot.slane %v26, %v75
  %v77 = vlaneseq
  %v78 = vshrl.u32 %v77, 7
  %v79 = vsub.s32 4, %v78
  %v80 = vrot.slane %v26, %v79
  %v81 = vlaneseq
  %v82 = vshrl.u32 %v81, 7
  %v83 = vsub.s32 5, %v82
  %v84 = vrot.slane %v26, %v83
  %v85 = vlaneseq
  %v86 = vshrl.u32 %v85, 7
  %v87 = vsub.s32 6, %v86
  %v88 = vrot.slane %v26, %v87
  %v89 = vlaneseq
  %v90 = vshrl.u32 %v89, 7
  %v91 = vsub.s32 7, %v90
  %v92 = vrot.slane %v26, %v91
  %v93 = vcombine.low %v32, %v36
  %v94 = vcombine.low %v40, %v44
  %v96 = vunpack.c.l.s4 1983009808
  %v97 = vunpack.c.0.s8 %v96
  %v98 = vlaneseq
  %v99 = vshrl.u32 %v98, 7
  %v100 = vsub.s32 %v97, %v99
  %v101 = vrot.slane %v93, %v100
  %v103 = vunpack.c.l.s4 1983009808
  %v104 = vunpack.c.0.s8 %v103
  %v105 = vlaneseq
  %v106 = vshrl.u32 %v105, 7
  %v107 = vsub.s32 %v104, %v106
  %v108 = vrot.slane %v94, %v107
  %v109 = vcombine.low %v101, %v108
  %v110 = vcombine.low %v48, %v52
  %v111 = vcombine.low %v56, %v60
  %v113 = vunpack.c.l.s4 1983009808
  %v114 = vunpack.c.0.s8 %v113
  %v115 = vlaneseq
  %v116 = vshrl.u32 %v115, 7
  %v117 = vsub.s32 %v114, %v116
  %v118 = vrot.slane %v110, %v117
  %v120 = vunpack.c.l.s4 1983009808
  %v121 = vunpack.c.0.s8 %v120
  %v122 = vlaneseq
  %v123 = vshrl.u32 %v122, 7
  %v124 = vsub.s32 %v121, %v123
  %v125 = vrot.slane %v111, %v124
  %v126 = vcombine.low %v118, %v125
  %v127 = vcombine.low %v64, %v68
  %v128 = vcombine.low %v72, %v76
  %v130 = vunpack.c.l.s4 1983009808
  %v131 = vunpack.c.0.s8 %v130
  %v132 = vlaneseq
  %v133 = vshrl.u32 %v132, 7
  %v134 = vsub.s32 %v131, %v133
  %v135 = vrot.slane %v127, %v134
  %v137 = vunpack.c.l.s4 1983009808
  %v138 = vunpack.c.0.s8 %v137
  %v139 = vlaneseq
  %v140 = vshrl.u32 %v139, 7
  %v141 = vsub.s32 %v138, %v140
  %v142 = vrot.slane %v128, %v141
  %v143 = vcombine.low %v135, %v142
  %v144 = vcombine.low %v80, %v84
  %v145 = vcombine.low %v88, %v92
  %v147 = vunpack.c.l.s4 1983009808
  %v148 = vunpack.c.0.s8 %v147
  %v149 = vlaneseq
  %v150 = vshrl.u32 %v149, 7
  %v151 = vsub.s32 %v148, %v150
  %v152 = vrot.slane %v144, %v151
  %v154 = vunpack.c.l.s4 1983009808
  %v155 = vunpack.c.0.s8 %v154
  %v156 = vlaneseq
  %v157 = vshrl.u32 %v156, 7
  %v158 = vsub.s32 %v155, %v157
  %v159 = vrot.slane %v145, %v158
  %v160 = vcombine.low %v152, %v159
  %v165 = vmul.f32 %v21, %v109
  %v166 = vmul.f32 %v22, %v126
  %v167 = vmul.f32 %v23, %v143
  %v168 = vmul.f32 %v24, %v160
  %v169 = vld [vmem:[%s2] sm:$0xff]
  %v170 = vld [vmem:[%s2 + $0x8] sm:$0xff]
  %v173 = vlaneseq
  %v174 = vshrl.u32 %v173, 7
  %v175 = vsub.s32 0, %v174
  %v176 = vrot.slane %v169, %v175
  %v177 = vlaneseq
  %v178 = vshrl.u32 %v177, 7
  %v179 = vsub.s32 1, %v178
  %v180 = vrot.slane %v169, %v179
  %v181 = vlaneseq
  %v182 = vshrl.u32 %v181, 7
  %v183 = vsub.s32 2, %v182
  %v184 = vrot.slane %v169, %v183
  %v185 = vlaneseq
  %v186 = vshrl.u32 %v185, 7
  %v187 = vsub.s32 3, %v186
  %v188 = vrot.slane %v169, %v187
  %v189 = vlaneseq
  %v190 = vshrl.u32 %v189, 7
  %v191 = vsub.s32 4, %v190
  %v192 = vrot.slane %v169, %v191
  %v193 = vlaneseq
  %v194 = vshrl.u32 %v193, 7
  %v195 = vsub.s32 5, %v194
  %v196 = vrot.slane %v169, %v195
  %v197 = vlaneseq
  %v198 = vshrl.u32 %v197, 7
  %v199 = vsub.s32 6, %v198
  %v200 = vrot.slane %v169, %v199
  %v201 = vlaneseq
  %v202 = vshrl.u32 %v201, 7
  %v203 = vsub.s32 7, %v202
  %v204 = vrot.slane %v169, %v203
  %v205 = vlaneseq
  %v206 = vshrl.u32 %v205, 7
  %v207 = vsub.s32 0, %v206
  %v208 = vrot.slane %v170, %v207
  %v209 = vlaneseq
  %v210 = vshrl.u32 %v209, 7
  %v211 = vsub.s32 1, %v210
  %v212 = vrot.slane %v170, %v211
  %v213 = vlaneseq
  %v214 = vshrl.u32 %v213, 7
  %v215 = vsub.s32 2, %v214
  %v216 = vrot.slane %v170, %v215
  %v217 = vlaneseq
  %v218 = vshrl.u32 %v217, 7
  %v219 = vsub.s32 3, %v218
  %v220 = vrot.slane %v170, %v219
  %v221 = vlaneseq
  %v222 = vshrl.u32 %v221, 7
  %v223 = vsub.s32 4, %v222
  %v224 = vrot.slane %v170, %v223
  %v225 = vlaneseq
  %v226 = vshrl.u32 %v225, 7
  %v227 = vsub.s32 5, %v226
  %v228 = vrot.slane %v170, %v227
  %v229 = vlaneseq
  %v230 = vshrl.u32 %v229, 7
  %v231 = vsub.s32 6, %v230
  %v232 = vrot.slane %v170, %v231
  %v233 = vlaneseq
  %v234 = vshrl.u32 %v233, 7
  %v235 = vsub.s32 7, %v234
  %v236 = vrot.slane %v170, %v235
  %v237 = vcombine.low %v176, %v180
  %v238 = vcombine.low %v184, %v188
  %v240 = vunpack.c.l.s4 1983009808
  %v241 = vunpack.c.0.s8 %v240
  %v242 = vlaneseq
  %v243 = vshrl.u32 %v242, 7
  %v244 = vsub.s32 %v241, %v243
  %v245 = vrot.slane %v237, %v244
  %v247 = vunpack.c.l.s4 1983009808
  %v248 = vunpack.c.0.s8 %v247
  %v249 = vlaneseq
  %v250 = vshrl.u32 %v249, 7
  %v251 = vsub.s32 %v248, %v250
  %v252 = vrot.slane %v238, %v251
  %v253 = vcombine.low %v245, %v252
  %v254 = vcombine.low %v192, %v196
  %v255 = vcombine.low %v200, %v204
  %v257 = vunpack.c.l.s4 1983009808
  %v258 = vunpack.c.0.s8 %v257
  %v259 = vlaneseq
  %v260 = vshrl.u32 %v259, 7
  %v261 = vsub.s32 %v258, %v260
  %v262 = vrot.slane %v254, %v261
  %v264 = vunpack.c.l.s4 1983009808
  %v265 = vunpack.c.0.s8 %v264
  %v266 = vlaneseq
  %v267 = vshrl.u32 %v266, 7
  %v268 = vsub.s32 %v265, %v267
  %v269 = vrot.slane %v255, %v268
  %v270 = vcombine.low %v262, %v269
  %v271 = vcombine.low %v208, %v212
  %v272 = vcombine.low %v216, %v220
  %v274 = vunpack.c.l.s4 1983009808
  %v275 = vunpack.c.0.s8 %v274
  %v276 = vlaneseq
  %v277 = vshrl.u32 %v276, 7
  %v278 = vsub.s32 %v275, %v277
  %v279 = vrot.slane %v271, %v278
  %v281 = vunpack.c.l.s4 1983009808
  %v282 = vunpack.c.0.s8 %v281
  %v283 = vlaneseq
  %v284 = vshrl.u32 %v283, 7
  %v285 = vsub.s32 %v282, %v284
  %v286 = vrot.slane %v272, %v285
  %v287 = vcombine.low %v279, %v286
  %v288 = vcombine.low %v224, %v228
  %v289 = vcombine.low %v232, %v236
  %v291 = vunpack.c.l.s4 1983009808
  %v292 = vunpack.c.0.s8 %v291
  %v293 = vlaneseq
  %v294 = vshrl.u32 %v293, 7
  %v295 = vsub.s32 %v292, %v294
  %v296 = vrot.slane %v288, %v295
  %v298 = vunpack.c.l.s4 1983009808
  %v299 = vunpack.c.0.s8 %v298
  %v300 = vlaneseq
  %v301 = vshrl.u32 %v300, 7
  %v302 = vsub.s32 %v299, %v301
  %v303 = vrot.slane %v289, %v302
  %v304 = vcombine.low %v296, %v303
  %v309 = vadd.f32 %v165, %v253
  %v310 = vadd.f32 %v166, %v270
  %v311 = vadd.f32 %v167, %v287
  %v312 = vadd.f32 %v168, %v304
  %vm313 = vcmp.ge.f32.partialorder %v309, 0.0
  %vm314 = vcmp.ge.f32.partialorder %v310, 0.0
  %vm315 = vcmp.ge.f32.partialorder %v311, 0.0
  %vm316 = vcmp.ge.f32.partialorder %v312, 0.0
  %v317 = vmul.f32 %v309, 0.2
  %v318 = vmul.f32 %v310, 0.2
  %v319 = vmul.f32 %v311, 0.2
  %v320 = vmul.f32 %v312, 0.2
  %v321 = vsel %vm313, %v309, %v317
  %v322 = vsel %vm314, %v310, %v318
  %v323 = vsel %vm315, %v311, %v319
  %v324 = vsel %vm316, %v312, %v320
  %v329 = vcombine.high %v321, %v321
  %v331 = vunpack.c.l.s4 1983009808
  %v332 = vunpack.c.0.s8 %v331
  %v333 = vlaneseq
  %v334 = vshrl.u32 %v333, 7
  %v335 = vsub.s32 %v332, %v334
  %v336 = vrot.slane %v321, %v335
  %v338 = vunpack.c.l.s4 1983009808
  %v339 = vunpack.c.0.s8 %v338
  %v340 = vlaneseq
  %v341 = vshrl.u32 %v340, 7
  %v342 = vsub.s32 %v339, %v341
  %v343 = vrot.slane %v329, %v342
  %v344 = vcombine.high %v336, %v336
  %v345 = vcombine.high %v343, %v343
  %v346 = vcombine.high %v322, %v322
  %v348 = vunpack.c.l.s4 1983009808
  %v349 = vunpack.c.0.s8 %v348
  %v350 = vlaneseq
  %v351 = vshrl.u32 %v350, 7
  %v352 = vsub.s32 %v349, %v351
  %v353 = vrot.slane %v322, %v352
  %v355 = vunpack.c.l.s4 1983009808
  %v356 = vunpack.c.0.s8 %v355
  %v357 = vlaneseq
  %v358 = vshrl.u32 %v357, 7
  %v359 = vsub.s32 %v356, %v358
  %v360 = vrot.slane %v346, %v359
  %v361 = vcombine.high %v353, %v353
  %v362 = vcombine.high %v360, %v360
  %v363 = vcombine.high %v323, %v323
  %v365 = vunpack.c.l.s4 1983009808
  %v366 = vunpack.c.0.s8 %v365
  %v367 = vlaneseq
  %v368 = vshrl.u32 %v367, 7
  %v369 = vsub.s32 %v366, %v368
  %v370 = vrot.slane %v323, %v369
  %v372 = vunpack.c.l.s4 1983009808
  %v373 = vunpack.c.0.s8 %v372
  %v374 = vlaneseq
  %v375 = vshrl.u32 %v374, 7
  %v376 = vsub.s32 %v373, %v375
  %v377 = vrot.slane %v363, %v376
  %v378 = vcombine.high %v370, %v370
  %v379 = vcombine.high %v377, %v377
  %v380 = vcombine.high %v324, %v324
  %v382 = vunpack.c.l.s4 1983009808
  %v383 = vunpack.c.0.s8 %v382
  %v384 = vlaneseq
  %v385 = vshrl.u32 %v384, 7
  %v386 = vsub.s32 %v383, %v385
  %v387 = vrot.slane %v324, %v386
  %v389 = vunpack.c.l.s4 1983009808
  %v390 = vunpack.c.0.s8 %v389
  %v391 = vlaneseq
  %v392 = vshrl.u32 %v391, 7
  %v393 = vsub.s32 %v390, %v392
  %v394 = vrot.slane %v380, %v393
  %v395 = vcombine.high %v387, %v387
  %v396 = vcombine.high %v394, %v394
  %v413 = vpack.c.bf16 %v336, %v336
  %v414 = vpack.c.bf16 %v344, %v344
  %v415 = vpack.c.bf16 %v343, %v343
  %v416 = vpack.c.bf16 %v345, %v345
  %v417 = vpack.c.bf16 %v353, %v353
  %v418 = vpack.c.bf16 %v361, %v361
  %v419 = vpack.c.bf16 %v360, %v360
  %v420 = vpack.c.bf16 %v362, %v362
  %v421 = vpack.c.bf16 %v370, %v370
  %v422 = vpack.c.bf16 %v378, %v378
  %v423 = vpack.c.bf16 %v377, %v377
  %v424 = vpack.c.bf16 %v379, %v379
  %v425 = vpack.c.bf16 %v387, %v387
  %v426 = vpack.c.bf16 %v395, %v395
  %v427 = vpack.c.bf16 %v394, %v394
  %v428 = vpack.c.bf16 %v396, %v396
  %v429 = vld [vmem:[%s3] sm:$0xf]
  %v430 = vld [vmem:[%s3 + $0x4] sm:$0xf]
  %v431 = vld [vmem:[%s3 + $0x8] sm:$0xf]
  %v432 = vld [vmem:[%s3 + $0xc] sm:$0xf]
  %v433 = vld [vmem:[%s3 + $0x10] sm:$0xf]
  %v434 = vld [vmem:[%s3 + $0x14] sm:$0xf]
  %v435 = vld [vmem:[%s3 + $0x18] sm:$0xf]
  %v436 = vld [vmem:[%s3 + $0x1c] sm:$0xf]
  %v437 = vld [vmem:[%s3 + $0x20] sm:$0xf]
  %v438 = vld [vmem:[%s3 + $0x24] sm:$0xf]
  %v439 = vld [vmem:[%s3 + $0x28] sm:$0xf]
  %v440 = vld [vmem:[%s3 + $0x2c] sm:$0xf]
  %v441 = vld [vmem:[%s3 + $0x30] sm:$0xf]
  %v442 = vld [vmem:[%s3 + $0x34] sm:$0xf]
  %v443 = vld [vmem:[%s3 + $0x38] sm:$0xf]
  %v444 = vld [vmem:[%s3 + $0x3c] sm:$0xf]
  %v445 = vld [vmem:[%s3 + $0x40] sm:$0xf]
  %v446 = vld [vmem:[%s3 + $0x44] sm:$0xf]
  %v447 = vld [vmem:[%s3 + $0x48] sm:$0xf]
  %v448 = vld [vmem:[%s3 + $0x4c] sm:$0xf]
  %v449 = vld [vmem:[%s3 + $0x50] sm:$0xf]
  %v450 = vld [vmem:[%s3 + $0x54] sm:$0xf]
  %v451 = vld [vmem:[%s3 + $0x58] sm:$0xf]
  %v452 = vld [vmem:[%s3 + $0x5c] sm:$0xf]
  %v453 = vld [vmem:[%s3 + $0x60] sm:$0xf]
  %v454 = vld [vmem:[%s3 + $0x64] sm:$0xf]
  %v455 = vld [vmem:[%s3 + $0x68] sm:$0xf]
  %v456 = vld [vmem:[%s3 + $0x6c] sm:$0xf]
  %v457 = vld [vmem:[%s3 + $0x70] sm:$0xf]
  %v458 = vld [vmem:[%s3 + $0x74] sm:$0xf]
  %v459 = vld [vmem:[%s3 + $0x78] sm:$0xf]
  %v460 = vld [vmem:[%s3 + $0x7c] sm:$0xf]
  %v461 = vld [vmem:[%s3 + $0x80] sm:$0xf]
  %v462 = vld [vmem:[%s3 + $0x84] sm:$0xf]
  %v463 = vld [vmem:[%s3 + $0x88] sm:$0xf]
  %v464 = vld [vmem:[%s3 + $0x8c] sm:$0xf]
  %v465 = vld [vmem:[%s3 + $0x90] sm:$0xf]
  %v466 = vld [vmem:[%s3 + $0x94] sm:$0xf]
  %v467 = vld [vmem:[%s3 + $0x98] sm:$0xf]
  %v468 = vld [vmem:[%s3 + $0x9c] sm:$0xf]
  %v469 = vld [vmem:[%s3 + $0xa0] sm:$0xf]
  %v470 = vld [vmem:[%s3 + $0xa4] sm:$0xf]
  %v471 = vld [vmem:[%s3 + $0xa8] sm:$0xf]
  %v472 = vld [vmem:[%s3 + $0xac] sm:$0xf]
  %v473 = vld [vmem:[%s3 + $0xb0] sm:$0xf]
  %v474 = vld [vmem:[%s3 + $0xb4] sm:$0xf]
  %v475 = vld [vmem:[%s3 + $0xb8] sm:$0xf]
  %v476 = vld [vmem:[%s3 + $0xbc] sm:$0xf]
  %v477 = vld [vmem:[%s3 + $0xc0] sm:$0xf]
  %v478 = vld [vmem:[%s3 + $0xc4] sm:$0xf]
  %v479 = vld [vmem:[%s3 + $0xc8] sm:$0xf]
  %v480 = vld [vmem:[%s3 + $0xcc] sm:$0xf]
  %v481 = vld [vmem:[%s3 + $0xd0] sm:$0xf]
  %v482 = vld [vmem:[%s3 + $0xd4] sm:$0xf]
  %v483 = vld [vmem:[%s3 + $0xd8] sm:$0xf]
  %v484 = vld [vmem:[%s3 + $0xdc] sm:$0xf]
  %v485 = vld [vmem:[%s3 + $0xe0] sm:$0xf]
  %v486 = vld [vmem:[%s3 + $0xe4] sm:$0xf]
  %v487 = vld [vmem:[%s3 + $0xe8] sm:$0xf]
  %v488 = vld [vmem:[%s3 + $0xec] sm:$0xf]
  %v489 = vld [vmem:[%s3 + $0xf0] sm:$0xf]
  %v490 = vld [vmem:[%s3 + $0xf4] sm:$0xf]
  %v491 = vld [vmem:[%s3 + $0xf8] sm:$0xf]
  %v492 = vld [vmem:[%s3 + $0xfc] sm:$0xf]
  %v493 = vld [vmem:[%s3 + $0x100] sm:$0xf]
  %v494 = vld [vmem:[%s3 + $0x104] sm:$0xf]
  %v495 = vld [vmem:[%s3 + $0x108] sm:$0xf]
  %v496 = vld [vmem:[%s3 + $0x10c] sm:$0xf]
  %v497 = vld [vmem:[%s3 + $0x110] sm:$0xf]
  %v498 = vld [vmem:[%s3 + $0x114] sm:$0xf]
  %v499 = vld [vmem:[%s3 + $0x118] sm:$0xf]
  %v500 = vld [vmem:[%s3 + $0x11c] sm:$0xf]
  %v501 = vld [vmem:[%s3 + $0x120] sm:$0xf]
  %v502 = vld [vmem:[%s3 + $0x124] sm:$0xf]
  %v503 = vld [vmem:[%s3 + $0x128] sm:$0xf]
  %v504 = vld [vmem:[%s3 + $0x12c] sm:$0xf]
  %v505 = vld [vmem:[%s3 + $0x130] sm:$0xf]
  %v506 = vld [vmem:[%s3 + $0x134] sm:$0xf]
  %v507 = vld [vmem:[%s3 + $0x138] sm:$0xf]
  %v508 = vld [vmem:[%s3 + $0x13c] sm:$0xf]
  %v509 = vld [vmem:[%s3 + $0x140] sm:$0xf]
  %v510 = vld [vmem:[%s3 + $0x144] sm:$0xf]
  %v511 = vld [vmem:[%s3 + $0x148] sm:$0xf]
  %v512 = vld [vmem:[%s3 + $0x14c] sm:$0xf]
  %v513 = vld [vmem:[%s3 + $0x150] sm:$0xf]
  %v514 = vld [vmem:[%s3 + $0x154] sm:$0xf]
  %v515 = vld [vmem:[%s3 + $0x158] sm:$0xf]
  %v516 = vld [vmem:[%s3 + $0x15c] sm:$0xf]
  %v517 = vld [vmem:[%s3 + $0x160] sm:$0xf]
  %v518 = vld [vmem:[%s3 + $0x164] sm:$0xf]
  %v519 = vld [vmem:[%s3 + $0x168] sm:$0xf]
  %v520 = vld [vmem:[%s3 + $0x16c] sm:$0xf]
  %v521 = vld [vmem:[%s3 + $0x170] sm:$0xf]
  %v522 = vld [vmem:[%s3 + $0x174] sm:$0xf]
  %v523 = vld [vmem:[%s3 + $0x178] sm:$0xf]
  %v524 = vld [vmem:[%s3 + $0x17c] sm:$0xf]
  %v525 = vld [vmem:[%s3 + $0x180] sm:$0xf]
  %v526 = vld [vmem:[%s3 + $0x184] sm:$0xf]
  %v527 = vld [vmem:[%s3 + $0x188] sm:$0xf]
  %v528 = vld [vmem:[%s3 + $0x18c] sm:$0xf]
  %v529 = vld [vmem:[%s3 + $0x190] sm:$0xf]
  %v530 = vld [vmem:[%s3 + $0x194] sm:$0xf]
  %v531 = vld [vmem:[%s3 + $0x198] sm:$0xf]
  %v532 = vld [vmem:[%s3 + $0x19c] sm:$0xf]
  %v533 = vld [vmem:[%s3 + $0x1a0] sm:$0xf]
  %v534 = vld [vmem:[%s3 + $0x1a4] sm:$0xf]
  %v535 = vld [vmem:[%s3 + $0x1a8] sm:$0xf]
  %v536 = vld [vmem:[%s3 + $0x1ac] sm:$0xf]
  %v537 = vld [vmem:[%s3 + $0x1b0] sm:$0xf]
  %v538 = vld [vmem:[%s3 + $0x1b4] sm:$0xf]
  %v539 = vld [vmem:[%s3 + $0x1b8] sm:$0xf]
  %v540 = vld [vmem:[%s3 + $0x1bc] sm:$0xf]
  %v541 = vld [vmem:[%s3 + $0x1c0] sm:$0xf]
  %v542 = vld [vmem:[%s3 + $0x1c4] sm:$0xf]
  %v543 = vld [vmem:[%s3 + $0x1c8] sm:$0xf]
  %v544 = vld [vmem:[%s3 + $0x1cc] sm:$0xf]
  %v545 = vld [vmem:[%s3 + $0x1d0] sm:$0xf]
  %v546 = vld [vmem:[%s3 + $0x1d4] sm:$0xf]
  %v547 = vld [vmem:[%s3 + $0x1d8] sm:$0xf]
  %v548 = vld [vmem:[%s3 + $0x1dc] sm:$0xf]
  %v549 = vld [vmem:[%s3 + $0x1e0] sm:$0xf]
  %v550 = vld [vmem:[%s3 + $0x1e4] sm:$0xf]
  %v551 = vld [vmem:[%s3 + $0x1e8] sm:$0xf]
  %v552 = vld [vmem:[%s3 + $0x1ec] sm:$0xf]
  %v553 = vld [vmem:[%s3 + $0x1f0] sm:$0xf]
  %v554 = vld [vmem:[%s3 + $0x1f4] sm:$0xf]
  %v555 = vld [vmem:[%s3 + $0x1f8] sm:$0xf]
  %v556 = vld [vmem:[%s3 + $0x1fc] sm:$0xf]
  %v557 = vld [vmem:[%s3 + $0x200] sm:$0xf]
  %v558 = vld [vmem:[%s3 + $0x204] sm:$0xf]
  %v559 = vld [vmem:[%s3 + $0x208] sm:$0xf]
  %v560 = vld [vmem:[%s3 + $0x20c] sm:$0xf]
  %v561 = vld [vmem:[%s3 + $0x210] sm:$0xf]
  %v562 = vld [vmem:[%s3 + $0x214] sm:$0xf]
  %v563 = vld [vmem:[%s3 + $0x218] sm:$0xf]
  %v564 = vld [vmem:[%s3 + $0x21c] sm:$0xf]
  %v565 = vld [vmem:[%s3 + $0x220] sm:$0xf]
  %v566 = vld [vmem:[%s3 + $0x224] sm:$0xf]
  %v567 = vld [vmem:[%s3 + $0x228] sm:$0xf]
  %v568 = vld [vmem:[%s3 + $0x22c] sm:$0xf]
  %v569 = vld [vmem:[%s3 + $0x230] sm:$0xf]
  %v570 = vld [vmem:[%s3 + $0x234] sm:$0xf]
  %v571 = vld [vmem:[%s3 + $0x238] sm:$0xf]
  %v572 = vld [vmem:[%s3 + $0x23c] sm:$0xf]
  %v573 = vld [vmem:[%s3 + $0x240] sm:$0xf]
  %v574 = vld [vmem:[%s3 + $0x244] sm:$0xf]
  %v575 = vld [vmem:[%s3 + $0x248] sm:$0xf]
  %v576 = vld [vmem:[%s3 + $0x24c] sm:$0xf]
  %v577 = vld [vmem:[%s3 + $0x250] sm:$0xf]
  %v578 = vld [vmem:[%s3 + $0x254] sm:$0xf]
  %v579 = vld [vmem:[%s3 + $0x258] sm:$0xf]
  %v580 = vld [vmem:[%s3 + $0x25c] sm:$0xf]
  %v581 = vld [vmem:[%s3 + $0x260] sm:$0xf]
  %v582 = vld [vmem:[%s3 + $0x264] sm:$0xf]
  %v583 = vld [vmem:[%s3 + $0x268] sm:$0xf]
  %v584 = vld [vmem:[%s3 + $0x26c] sm:$0xf]
  %v585 = vld [vmem:[%s3 + $0x270] sm:$0xf]
  %v586 = vld [vmem:[%s3 + $0x274] sm:$0xf]
  %v587 = vld [vmem:[%s3 + $0x278] sm:$0xf]
  %v588 = vld [vmem:[%s3 + $0x27c] sm:$0xf]
  %v589 = vld [vmem:[%s3 + $0x280] sm:$0xf]
  %v590 = vld [vmem:[%s3 + $0x284] sm:$0xf]
  %v591 = vld [vmem:[%s3 + $0x288] sm:$0xf]
  %v592 = vld [vmem:[%s3 + $0x28c] sm:$0xf]
  %v593 = vld [vmem:[%s3 + $0x290] sm:$0xf]
  %v594 = vld [vmem:[%s3 + $0x294] sm:$0xf]
  %v595 = vld [vmem:[%s3 + $0x298] sm:$0xf]
  %v596 = vld [vmem:[%s3 + $0x29c] sm:$0xf]
  %v597 = vld [vmem:[%s3 + $0x2a0] sm:$0xf]
  %v598 = vld [vmem:[%s3 + $0x2a4] sm:$0xf]
  %v599 = vld [vmem:[%s3 + $0x2a8] sm:$0xf]
  %v600 = vld [vmem:[%s3 + $0x2ac] sm:$0xf]
  %v601 = vld [vmem:[%s3 + $0x2b0] sm:$0xf]
  %v602 = vld [vmem:[%s3 + $0x2b4] sm:$0xf]
  %v603 = vld [vmem:[%s3 + $0x2b8] sm:$0xf]
  %v604 = vld [vmem:[%s3 + $0x2bc] sm:$0xf]
  %v605 = vld [vmem:[%s3 + $0x2c0] sm:$0xf]
  %v606 = vld [vmem:[%s3 + $0x2c4] sm:$0xf]
  %v607 = vld [vmem:[%s3 + $0x2c8] sm:$0xf]
  %v608 = vld [vmem:[%s3 + $0x2cc] sm:$0xf]
  %v609 = vld [vmem:[%s3 + $0x2d0] sm:$0xf]
  %v610 = vld [vmem:[%s3 + $0x2d4] sm:$0xf]
  %v611 = vld [vmem:[%s3 + $0x2d8] sm:$0xf]
  %v612 = vld [vmem:[%s3 + $0x2dc] sm:$0xf]
  %v613 = vld [vmem:[%s3 + $0x2e0] sm:$0xf]
  %v614 = vld [vmem:[%s3 + $0x2e4] sm:$0xf]
  %v615 = vld [vmem:[%s3 + $0x2e8] sm:$0xf]
  %v616 = vld [vmem:[%s3 + $0x2ec] sm:$0xf]
  %v617 = vld [vmem:[%s3 + $0x2f0] sm:$0xf]
  %v618 = vld [vmem:[%s3 + $0x2f4] sm:$0xf]
  %v619 = vld [vmem:[%s3 + $0x2f8] sm:$0xf]
  %v620 = vld [vmem:[%s3 + $0x2fc] sm:$0xf]
  %v621 = vld [vmem:[%s3 + $0x300] sm:$0xf]
  %v622 = vld [vmem:[%s3 + $0x304] sm:$0xf]
  %v623 = vld [vmem:[%s3 + $0x308] sm:$0xf]
  %v624 = vld [vmem:[%s3 + $0x30c] sm:$0xf]
  %v625 = vld [vmem:[%s3 + $0x310] sm:$0xf]
  %v626 = vld [vmem:[%s3 + $0x314] sm:$0xf]
  %v627 = vld [vmem:[%s3 + $0x318] sm:$0xf]
  %v628 = vld [vmem:[%s3 + $0x31c] sm:$0xf]
  %v629 = vld [vmem:[%s3 + $0x320] sm:$0xf]
  %v630 = vld [vmem:[%s3 + $0x324] sm:$0xf]
  %v631 = vld [vmem:[%s3 + $0x328] sm:$0xf]
  %v632 = vld [vmem:[%s3 + $0x32c] sm:$0xf]
  %v633 = vld [vmem:[%s3 + $0x330] sm:$0xf]
  %v634 = vld [vmem:[%s3 + $0x334] sm:$0xf]
  %v635 = vld [vmem:[%s3 + $0x338] sm:$0xf]
  %v636 = vld [vmem:[%s3 + $0x33c] sm:$0xf]
  %v637 = vld [vmem:[%s3 + $0x340] sm:$0xf]
  %v638 = vld [vmem:[%s3 + $0x344] sm:$0xf]
  %v639 = vld [vmem:[%s3 + $0x348] sm:$0xf]
  %v640 = vld [vmem:[%s3 + $0x34c] sm:$0xf]
  %v641 = vld [vmem:[%s3 + $0x350] sm:$0xf]
  %v642 = vld [vmem:[%s3 + $0x354] sm:$0xf]
  %v643 = vld [vmem:[%s3 + $0x358] sm:$0xf]
  %v644 = vld [vmem:[%s3 + $0x35c] sm:$0xf]
  %v645 = vld [vmem:[%s3 + $0x360] sm:$0xf]
  %v646 = vld [vmem:[%s3 + $0x364] sm:$0xf]
  %v647 = vld [vmem:[%s3 + $0x368] sm:$0xf]
  %v648 = vld [vmem:[%s3 + $0x36c] sm:$0xf]
  %v649 = vld [vmem:[%s3 + $0x370] sm:$0xf]
  %v650 = vld [vmem:[%s3 + $0x374] sm:$0xf]
  %v651 = vld [vmem:[%s3 + $0x378] sm:$0xf]
  %v652 = vld [vmem:[%s3 + $0x37c] sm:$0xf]
  %v653 = vld [vmem:[%s3 + $0x380] sm:$0xf]
  %v654 = vld [vmem:[%s3 + $0x384] sm:$0xf]
  %v655 = vld [vmem:[%s3 + $0x388] sm:$0xf]
  %v656 = vld [vmem:[%s3 + $0x38c] sm:$0xf]
  %v657 = vld [vmem:[%s3 + $0x390] sm:$0xf]
  %v658 = vld [vmem:[%s3 + $0x394] sm:$0xf]
  %v659 = vld [vmem:[%s3 + $0x398] sm:$0xf]
  %v660 = vld [vmem:[%s3 + $0x39c] sm:$0xf]
  %v661 = vld [vmem:[%s3 + $0x3a0] sm:$0xf]
  %v662 = vld [vmem:[%s3 + $0x3a4] sm:$0xf]
  %v663 = vld [vmem:[%s3 + $0x3a8] sm:$0xf]
  %v664 = vld [vmem:[%s3 + $0x3ac] sm:$0xf]
  %v665 = vld [vmem:[%s3 + $0x3b0] sm:$0xf]
  %v666 = vld [vmem:[%s3 + $0x3b4] sm:$0xf]
  %v667 = vld [vmem:[%s3 + $0x3b8] sm:$0xf]
  %v668 = vld [vmem:[%s3 + $0x3bc] sm:$0xf]
  %v669 = vld [vmem:[%s3 + $0x3c0] sm:$0xf]
  %v670 = vld [vmem:[%s3 + $0x3c4] sm:$0xf]
  %v671 = vld [vmem:[%s3 + $0x3c8] sm:$0xf]
  %v672 = vld [vmem:[%s3 + $0x3cc] sm:$0xf]
  %v673 = vld [vmem:[%s3 + $0x3d0] sm:$0xf]
  %v674 = vld [vmem:[%s3 + $0x3d4] sm:$0xf]
  %v675 = vld [vmem:[%s3 + $0x3d8] sm:$0xf]
  %v676 = vld [vmem:[%s3 + $0x3dc] sm:$0xf]
  %v677 = vld [vmem:[%s3 + $0x3e0] sm:$0xf]
  %v678 = vld [vmem:[%s3 + $0x3e4] sm:$0xf]
  %v679 = vld [vmem:[%s3 + $0x3e8] sm:$0xf]
  %v680 = vld [vmem:[%s3 + $0x3ec] sm:$0xf]
  %v681 = vld [vmem:[%s3 + $0x3f0] sm:$0xf]
  %v682 = vld [vmem:[%s3 + $0x3f4] sm:$0xf]
  %v683 = vld [vmem:[%s3 + $0x3f8] sm:$0xf]
  %v684 = vld [vmem:[%s3 + $0x3fc] sm:$0xf]
  %v685 = vld [vmem:[%s4] sm:$0x1]
  %v687 = vlaneseq
  %v688 = vshrl.u32 %v687, 7
  %v689 = vsub.s32 0, %v688
  %v690 = vrot.slane %v685, %v689
  %v948 = vunpack.c.l.b16 %v429
  %v949 = vunpack.c.l.b16 %v430
  %v950 = vunpack.c.l.b16 %v431
  %v951 = vunpack.c.l.b16 %v432
  %v952 = vunpack.c.l.b16 %v433
  %v953 = vunpack.c.l.b16 %v434
  %v954 = vunpack.c.l.b16 %v435
  %v955 = vunpack.c.l.b16 %v436
  %v956 = vunpack.c.l.b16 %v437
  %v957 = vunpack.c.l.b16 %v438
  %v958 = vunpack.c.l.b16 %v439
  %v959 = vunpack.c.l.b16 %v440
  %v960 = vunpack.c.l.b16 %v441
  %v961 = vunpack.c.l.b16 %v442
  %v962 = vunpack.c.l.b16 %v443
  %v963 = vunpack.c.l.b16 %v444
  %v964 = vunpack.c.l.b16 %v445
  %v965 = vunpack.c.l.b16 %v446
  %v966 = vunpack.c.l.b16 %v447
  %v967 = vunpack.c.l.b16 %v448
  %v968 = vunpack.c.l.b16 %v449
  %v969 = vunpack.c.l.b16 %v450
  %v970 = vunpack.c.l.b16 %v451
  %v971 = vunpack.c.l.b16 %v452
  %v972 = vunpack.c.l.b16 %v453
  %v973 = vunpack.c.l.b16 %v454
  %v974 = vunpack.c.l.b16 %v455
  %v975 = vunpack.c.l.b16 %v456
  %v976 = vunpack.c.l.b16 %v457
  %v977 = vunpack.c.l.b16 %v458
  %v978 = vunpack.c.l.b16 %v459
  %v979 = vunpack.c.l.b16 %v460
  %v980 = vunpack.c.l.b16 %v461
  %v981 = vunpack.c.l.b16 %v462
  %v982 = vunpack.c.l.b16 %v463
  %v983 = vunpack.c.l.b16 %v464
  %v984 = vunpack.c.l.b16 %v465
  %v985 = vunpack.c.l.b16 %v466
  %v986 = vunpack.c.l.b16 %v467
  %v987 = vunpack.c.l.b16 %v468
  %v988 = vunpack.c.l.b16 %v469
  %v989 = vunpack.c.l.b16 %v470
  %v990 = vunpack.c.l.b16 %v471
  %v991 = vunpack.c.l.b16 %v472
  %v992 = vunpack.c.l.b16 %v473
  %v993 = vunpack.c.l.b16 %v474
  %v994 = vunpack.c.l.b16 %v475
  %v995 = vunpack.c.l.b16 %v476
  %v996 = vunpack.c.l.b16 %v477
  %v997 = vunpack.c.l.b16 %v478
  %v998 = vunpack.c.l.b16 %v479
  %v999 = vunpack.c.l.b16 %v480
  %v1000 = vunpack.c.l.b16 %v481
  %v1001 = vunpack.c.l.b16 %v482
  %v1002 = vunpack.c.l.b16 %v483
  %v1003 = vunpack.c.l.b16 %v484
  %v1004 = vunpack.c.l.b16 %v485
  %v1005 = vunpack.c.l.b16 %v486
  %v1006 = vunpack.c.l.b16 %v487
  %v1007 = vunpack.c.l.b16 %v488
  %v1008 = vunpack.c.l.b16 %v489
  %v1009 = vunpack.c.l.b16 %v490
  %v1010 = vunpack.c.l.b16 %v491
  %v1011 = vunpack.c.l.b16 %v492
  %v1012 = vunpack.c.l.b16 %v493
  %v1013 = vunpack.c.l.b16 %v494
  %v1014 = vunpack.c.l.b16 %v495
  %v1015 = vunpack.c.l.b16 %v496
  %v1016 = vunpack.c.l.b16 %v497
  %v1017 = vunpack.c.l.b16 %v498
  %v1018 = vunpack.c.l.b16 %v499
  %v1019 = vunpack.c.l.b16 %v500
  %v1020 = vunpack.c.l.b16 %v501
  %v1021 = vunpack.c.l.b16 %v502
  %v1022 = vunpack.c.l.b16 %v503
  %v1023 = vunpack.c.l.b16 %v504
  %v1024 = vunpack.c.l.b16 %v505
  %v1025 = vunpack.c.l.b16 %v506
  %v1026 = vunpack.c.l.b16 %v507
  %v1027 = vunpack.c.l.b16 %v508
  %v1028 = vunpack.c.l.b16 %v509
  %v1029 = vunpack.c.l.b16 %v510
  %v1030 = vunpack.c.l.b16 %v511
  %v1031 = vunpack.c.l.b16 %v512
  %v1032 = vunpack.c.l.b16 %v513
  %v1033 = vunpack.c.l.b16 %v514
  %v1034 = vunpack.c.l.b16 %v515
  %v1035 = vunpack.c.l.b16 %v516
  %v1036 = vunpack.c.l.b16 %v517
  %v1037 = vunpack.c.l.b16 %v518
  %v1038 = vunpack.c.l.b16 %v519
  %v1039 = vunpack.c.l.b16 %v520
  %v1040 = vunpack.c.l.b16 %v521
  %v1041 = vunpack.c.l.b16 %v522
  %v1042 = vunpack.c.l.b16 %v523
  %v1043 = vunpack.c.l.b16 %v524
  %v1044 = vunpack.c.l.b16 %v525
  %v1045 = vunpack.c.l.b16 %v526
  %v1046 = vunpack.c.l.b16 %v527
  %v1047 = vunpack.c.l.b16 %v528
  %v1048 = vunpack.c.l.b16 %v529
  %v1049 = vunpack.c.l.b16 %v530
  %v1050 = vunpack.c.l.b16 %v531
  %v1051 = vunpack.c.l.b16 %v532
  %v1052 = vunpack.c.l.b16 %v533
  %v1053 = vunpack.c.l.b16 %v534
  %v1054 = vunpack.c.l.b16 %v535
  %v1055 = vunpack.c.l.b16 %v536
  %v1056 = vunpack.c.l.b16 %v537
  %v1057 = vunpack.c.l.b16 %v538
  %v1058 = vunpack.c.l.b16 %v539
  %v1059 = vunpack.c.l.b16 %v540
  %v1060 = vunpack.c.l.b16 %v541
  %v1061 = vunpack.c.l.b16 %v542
  %v1062 = vunpack.c.l.b16 %v543
  %v1063 = vunpack.c.l.b16 %v544
  %v1064 = vunpack.c.l.b16 %v545
  %v1065 = vunpack.c.l.b16 %v546
  %v1066 = vunpack.c.l.b16 %v547
  %v1067 = vunpack.c.l.b16 %v548
  %v1068 = vunpack.c.l.b16 %v549
  %v1069 = vunpack.c.l.b16 %v550
  %v1070 = vunpack.c.l.b16 %v551
  %v1071 = vunpack.c.l.b16 %v552
  %v1072 = vunpack.c.l.b16 %v553
  %v1073 = vunpack.c.l.b16 %v554
  %v1074 = vunpack.c.l.b16 %v555
  %v1075 = vunpack.c.l.b16 %v556
  %v1076 = vunpack.c.l.b16 %v557
  %v1077 = vunpack.c.l.b16 %v558
  %v1078 = vunpack.c.l.b16 %v559
  %v1079 = vunpack.c.l.b16 %v560
  %v1080 = vunpack.c.l.b16 %v561
  %v1081 = vunpack.c.l.b16 %v562
  %v1082 = vunpack.c.l.b16 %v563
  %v1083 = vunpack.c.l.b16 %v564
  %v1084 = vunpack.c.l.b16 %v565
  %v1085 = vunpack.c.l.b16 %v566
  %v1086 = vunpack.c.l.b16 %v567
  %v1087 = vunpack.c.l.b16 %v568
  %v1088 = vunpack.c.l.b16 %v569
  %v1089 = vunpack.c.l.b16 %v570
  %v1090 = vunpack.c.l.b16 %v571
  %v1091 = vunpack.c.l.b16 %v572
  %v1092 = vunpack.c.l.b16 %v573
  %v1093 = vunpack.c.l.b16 %v574
  %v1094 = vunpack.c.l.b16 %v575
  %v1095 = vunpack.c.l.b16 %v576
  %v1096 = vunpack.c.l.b16 %v577
  %v1097 = vunpack.c.l.b16 %v578
  %v1098 = vunpack.c.l.b16 %v579
  %v1099 = vunpack.c.l.b16 %v580
  %v1100 = vunpack.c.l.b16 %v581
  %v1101 = vunpack.c.l.b16 %v582
  %v1102 = vunpack.c.l.b16 %v583
  %v1103 = vunpack.c.l.b16 %v584
  %v1104 = vunpack.c.l.b16 %v585
  %v1105 = vunpack.c.l.b16 %v586
  %v1106 = vunpack.c.l.b16 %v587
  %v1107 = vunpack.c.l.b16 %v588
  %v1108 = vunpack.c.l.b16 %v589
  %v1109 = vunpack.c.l.b16 %v590
  %v1110 = vunpack.c.l.b16 %v591
  %v1111 = vunpack.c.l.b16 %v592
  %v1112 = vunpack.c.l.b16 %v593
  %v1113 = vunpack.c.l.b16 %v594
  %v1114 = vunpack.c.l.b16 %v595
  %v1115 = vunpack.c.l.b16 %v596
  %v1116 = vunpack.c.l.b16 %v597
  %v1117 = vunpack.c.l.b16 %v598
  %v1118 = vunpack.c.l.b16 %v599
  %v1119 = vunpack.c.l.b16 %v600
  %v1120 = vunpack.c.l.b16 %v601
  %v1121 = vunpack.c.l.b16 %v602
  %v1122 = vunpack.c.l.b16 %v603
  %v1123 = vunpack.c.l.b16 %v604
  %v1124 = vunpack.c.l.b16 %v605
  %v1125 = vunpack.c.l.b16 %v606
  %v1126 = vunpack.c.l.b16 %v607
  %v1127 = vunpack.c.l.b16 %v608
  %v1128 = vunpack.c.l.b16 %v609
  %v1129 = vunpack.c.l.b16 %v610
  %v1130 = vunpack.c.l.b16 %v611
  %v1131 = vunpack.c.l.b16 %v612
  %v1132 = vunpack.c.l.b16 %v613
  %v1133 = vunpack.c.l.b16 %v614
  %v1134 = vunpack.c.l.b16 %v615
  %v1135 = vunpack.c.l.b16 %v616
  %v1136 = vunpack.c.l.b16 %v617
  %v1137 = vunpack.c.l.b16 %v618
  %v1138 = vunpack.c.l.b16 %v619
  %v1139 = vunpack.c.l.b16 %v620
  %v1140 = vunpack.c.l.b16 %v621
  %v1141 = vunpack.c.l.b16 %v622
  %v1142 = vunpack.c.l.b16 %v623
  %v1143 = vunpack.c.l.b16 %v624
  %v1144 = vunpack.c.l.b16 %v625
  %v1145 = vunpack.c.l.b16 %v626
  %v1146 = vunpack.c.l.b16 %v627
  %v1147 = vunpack.c.l.b16 %v628
  %v1148 = vunpack.c.l.b16 %v629
  %v1149 = vunpack.c.l.b16 %v630
  %v1150 = vunpack.c.l.b16 %v631
  %v1151 = vunpack.c.l.b16 %v632
  %v1152 = vunpack.c.l.b16 %v633
  %v1153 = vunpack.c.l.b16 %v634
  %v1154 = vunpack.c.l.b16 %v635
  %v1155 = vunpack.c.l.b16 %v636
  %v1156 = vunpack.c.l.b16 %v637
  %v1157 = vunpack.c.l.b16 %v638
  %v1158 = vunpack.c.l.b16 %v639
  %v1159 = vunpack.c.l.b16 %v640
  %v1160 = vunpack.c.l.b16 %v641
  %v1161 = vunpack.c.l.b16 %v642
  %v1162 = vunpack.c.l.b16 %v643
  %v1163 = vunpack.c.l.b16 %v644
  %v1164 = vunpack.c.l.b16 %v645
  %v1165 = vunpack.c.l.b16 %v646
  %v1166 = vunpack.c.l.b16 %v647
  %v1167 = vunpack.c.l.b16 %v648
  %v1168 = vunpack.c.l.b16 %v649
  %v1169 = vunpack.c.l.b16 %v650
  %v1170 = vunpack.c.l.b16 %v651
  %v1171 = vunpack.c.l.b16 %v652
  %v1172 = vunpack.c.l.b16 %v653
  %v1173 = vunpack.c.l.b16 %v654
  %v1174 = vunpack.c.l.b16 %v655
  %v1175 = vunpack.c.l.b16 %v656
  %v1176 = vunpack.c.l.b16 %v657
  %v1177 = vunpack.c.l.b16 %v658
  %v1178 = vunpack.c.l.b16 %v659
  %v1179 = vunpack.c.l.b16 %v660
  %v1180 = vunpack.c.l.b16 %v661
  %v1181 = vunpack.c.l.b16 %v662
  %v1182 = vunpack.c.l.b16 %v663
  %v1183 = vunpack.c.l.b16 %v664
  %v1184 = vunpack.c.l.b16 %v665
  %v1185 = vunpack.c.l.b16 %v666
  %v1186 = vunpack.c.l.b16 %v667
  %v1187 = vunpack.c.l.b16 %v668
  %v1188 = vunpack.c.l.b16 %v669
  %v1189 = vunpack.c.l.b16 %v670
  %v1190 = vunpack.c.l.b16 %v671
  %v1191 = vunpack.c.l.b16 %v672
  %v1192 = vunpack.c.l.b16 %v673
  %v1193 = vunpack.c.l.b16 %v674
  %v1194 = vunpack.c.l.b16 %v675
  %v1195 = vunpack.c.l.b16 %v676
  %v1196 = vunpack.c.l.b16 %v677
  %v1197 = vunpack.c.l.b16 %v678
  %v1198 = vunpack.c.l.b16 %v679
  %v1199 = vunpack.c.l.b16 %v680
  %v1200 = vunpack.c.l.b16 %v681
  %v1201 = vunpack.c.l.b16 %v682
  %v1202 = vunpack.c.l.b16 %v683
  %v1203 = vunpack.c.l.b16 %v684
  %v1204 = vpack.c.b16 %v949, %v948
  %v1205 = vpack.c.b16 %v951, %v950
  %v1206 = vpack.c.b16 %v953, %v952
  %v1207 = vpack.c.b16 %v955, %v954
  %v1208 = vpack.c.b16 %v957, %v956
  %v1209 = vpack.c.b16 %v959, %v958
  %v1210 = vpack.c.b16 %v961, %v960
  %v1211 = vpack.c.b16 %v963, %v962
  %v1212 = vpack.c.b16 %v965, %v964
  %v1213 = vpack.c.b16 %v967, %v966
  %v1214 = vpack.c.b16 %v969, %v968
  %v1215 = vpack.c.b16 %v971, %v970
  %v1216 = vpack.c.b16 %v973, %v972
  %v1217 = vpack.c.b16 %v975, %v974
  %v1218 = vpack.c.b16 %v977, %v976
  %v1219 = vpack.c.b16 %v979, %v978
  %v1220 = vpack.c.b16 %v981, %v980
  %v1221 = vpack.c.b16 %v983, %v982
  %v1222 = vpack.c.b16 %v985, %v984
  %v1223 = vpack.c.b16 %v987, %v986
  %v1224 = vpack.c.b16 %v989, %v988
  %v1225 = vpack.c.b16 %v991, %v990
  %v1226 = vpack.c.b16 %v993, %v992
  %v1227 = vpack.c.b16 %v995, %v994
  %v1228 = vpack.c.b16 %v997, %v996
  %v1229 = vpack.c.b16 %v999, %v998
  %v1230 = vpack.c.b16 %v1001, %v1000
  %v1231 = vpack.c.b16 %v1003, %v1002
  %v1232 = vpack.c.b16 %v1005, %v1004
  %v1233 = vpack.c.b16 %v1007, %v1006
  %v1234 = vpack.c.b16 %v1009, %v1008
  %v1235 = vpack.c.b16 %v1011, %v1010
  %v1236 = vpack.c.b16 %v1013, %v1012
  %v1237 = vpack.c.b16 %v1015, %v1014
  %v1238 = vpack.c.b16 %v1017, %v1016
  %v1239 = vpack.c.b16 %v1019, %v1018
  %v1240 = vpack.c.b16 %v1021, %v1020
  %v1241 = vpack.c.b16 %v1023, %v1022
  %v1242 = vpack.c.b16 %v1025, %v1024
  %v1243 = vpack.c.b16 %v1027, %v1026
  %v1244 = vpack.c.b16 %v1029, %v1028
  %v1245 = vpack.c.b16 %v1031, %v1030
  %v1246 = vpack.c.b16 %v1033, %v1032
  %v1247 = vpack.c.b16 %v1035, %v1034
  %v1248 = vpack.c.b16 %v1037, %v1036
  %v1249 = vpack.c.b16 %v1039, %v1038
  %v1250 = vpack.c.b16 %v1041, %v1040
  %v1251 = vpack.c.b16 %v1043, %v1042
  %v1252 = vpack.c.b16 %v1045, %v1044
  %v1253 = vpack.c.b16 %v1047, %v1046
  %v1254 = vpack.c.b16 %v1049, %v1048
  %v1255 = vpack.c.b16 %v1051, %v1050
  %v1256 = vpack.c.b16 %v1053, %v1052
  %v1257 = vpack.c.b16 %v1055, %v1054
  %v1258 = vpack.c.b16 %v1057, %v1056
  %v1259 = vpack.c.b16 %v1059, %v1058
  %v1260 = vpack.c.b16 %v1061, %v1060
  %v1261 = vpack.c.b16 %v1063, %v1062
  %v1262 = vpack.c.b16 %v1065, %v1064
  %v1263 = vpack.c.b16 %v1067, %v1066
  %v1264 = vpack.c.b16 %v1069, %v1068
  %v1265 = vpack.c.b16 %v1071, %v1070
  %v1266 = vpack.c.b16 %v1073, %v1072
  %v1267 = vpack.c.b16 %v1075, %v1074
  %v1268 = vpack.c.b16 %v1077, %v1076
  %v1269 = vpack.c.b16 %v1079, %v1078
  %v1270 = vpack.c.b16 %v1081, %v1080
  %v1271 = vpack.c.b16 %v1083, %v1082
  %v1272 = vpack.c.b16 %v1085, %v1084
  %v1273 = vpack.c.b16 %v1087, %v1086
  %v1274 = vpack.c.b16 %v1089, %v1088
  %v1275 = vpack.c.b16 %v1091, %v1090
  %v1276 = vpack.c.b16 %v1093, %v1092
  %v1277 = vpack.c.b16 %v1095, %v1094
  %v1278 = vpack.c.b16 %v1097, %v1096
  %v1279 = vpack.c.b16 %v1099, %v1098
  %v1280 = vpack.c.b16 %v1101, %v1100
  %v1281 = vpack.c.b16 %v1103, %v1102
  %v1282 = vpack.c.b16 %v1105, %v1104
  %v1283 = vpack.c.b16 %v1107, %v1106
  %v1284 = vpack.c.b16 %v1109, %v1108
  %v1285 = vpack.c.b16 %v1111, %v1110
  %v1286 = vpack.c.b16 %v1113, %v1112
  %v1287 = vpack.c.b16 %v1115, %v1114
  %v1288 = vpack.c.b16 %v1117, %v1116
  %v1289 = vpack.c.b16 %v1119, %v1118
  %v1290 = vpack.c.b16 %v1121, %v1120
  %v1291 = vpack.c.b16 %v1123, %v1122
  %v1292 = vpack.c.b16 %v1125, %v1124
  %v1293 = vpack.c.b16 %v1127, %v1126
  %v1294 = vpack.c.b16 %v1129, %v1128
  %v1295 = vpack.c.b16 %v1131, %v1130
  %v1296 = vpack.c.b16 %v1133, %v1132
  %v1297 = vpack.c.b16 %v1135, %v1134
  %v1298 = vpack.c.b16 %v1137, %v1136
  %v1299 = vpack.c.b16 %v1139, %v1138
  %v1300 = vpack.c.b16 %v1141, %v1140
  %v1301 = vpack.c.b16 %v1143, %v1142
  %v1302 = vpack.c.b16 %v1145, %v1144
  %v1303 = vpack.c.b16 %v1147, %v1146
  %v1304 = vpack.c.b16 %v1149, %v1148
  %v1305 = vpack.c.b16 %v1151, %v1150
  %v1306 = vpack.c.b16 %v1153, %v1152
  %v1307 = vpack.c.b16 %v1155, %v1154
  %v1308 = vpack.c.b16 %v1157, %v1156
  %v1309 = vpack.c.b16 %v1159, %v1158
  %v1310 = vpack.c.b16 %v1161, %v1160
  %v1311 = vpack.c.b16 %v1163, %v1162
  %v1312 = vpack.c.b16 %v1165, %v1164
  %v1313 = vpack.c.b16 %v1167, %v1166
  %v1314 = vpack.c.b16 %v1169, %v1168
  %v1315 = vpack.c.b16 %v1171, %v1170
  %v1316 = vpack.c.b16 %v1173, %v1172
  %v1317 = vpack.c.b16 %v1175, %v1174
  %v1318 = vpack.c.b16 %v1177, %v1176
  %v1319 = vpack.c.b16 %v1179, %v1178
  %v1320 = vpack.c.b16 %v1181, %v1180
  %v1321 = vpack.c.b16 %v1183, %v1182
  %v1322 = vpack.c.b16 %v1185, %v1184
  %v1323 = vpack.c.b16 %v1187, %v1186
  %v1324 = vpack.c.b16 %v1189, %v1188
  %v1325 = vpack.c.b16 %v1191, %v1190
  %v1326 = vpack.c.b16 %v1193, %v1192
  %v1327 = vpack.c.b16 %v1195, %v1194
  %v1328 = vpack.c.b16 %v1197, %v1196
  %v1329 = vpack.c.b16 %v1199, %v1198
  %v1330 = vpack.c.b16 %v1201, %v1200
  %v1331 = vpack.c.b16 %v1203, %v1202
  %1460 = vmatprep.subr.bf16.mxu0 0
  %1461 = vmatpush1.bf16.msra.mxu0 %v1204
  %1462 = vmatprep.subr.bf16.mxu0 0
  %1463 = vmatpush1.bf16.msra.mxu0 %v1205
  %1464 = vmatprep.subr.bf16.mxu0 0
  %1465 = vmatpush1.bf16.msra.mxu0 %v1206
  %1466 = vmatprep.subr.bf16.mxu0 0
  %1467 = vmatpush1.bf16.msra.mxu0 %v1207
  %1468 = vmatprep.subr.bf16.mxu0 0
  %1469 = vmatpush1.bf16.msra.mxu0 %v1208
  %1470 = vmatprep.subr.bf16.mxu0 0
  %1471 = vmatpush1.bf16.msra.mxu0 %v1209
  %1472 = vmatprep.subr.bf16.mxu0 0
  %1473 = vmatpush1.bf16.msra.mxu0 %v1210
  %1474 = vmatprep.subr.bf16.mxu0 0
  %1475 = vmatpush1.bf16.msra.mxu0 %v1211
  %1476 = vmatprep.subr.bf16.mxu0 0
  %1477 = vmatpush1.bf16.msra.mxu0 %v1212
  %1478 = vmatprep.subr.bf16.mxu0 0
  %1479 = vmatpush1.bf16.msra.mxu0 %v1213
  %1480 = vmatprep.subr.bf16.mxu0 0
  %1481 = vmatpush1.bf16.msra.mxu0 %v1214
  %1482 = vmatprep.subr.bf16.mxu0 0
  %1483 = vmatpush1.bf16.msra.mxu0 %v1215
  %1484 = vmatprep.subr.bf16.mxu0 0
  %1485 = vmatpush1.bf16.msra.mxu0 %v1216
  %1486 = vmatprep.subr.bf16.mxu0 0
  %1487 = vmatpush1.bf16.msra.mxu0 %v1217
  %1488 = vmatprep.subr.bf16.mxu0 0
  %1489 = vmatpush1.bf16.msra.mxu0 %v1218
  %1490 = vmatprep.subr.bf16.mxu0 0
  %1491 = vmatpush1.bf16.msra.mxu0 %v1219
  %1492 = vmatprep.mubr.bf16.mxu0 %v414
  %1493 = vmatmul.mubr.bf16.gmra.mrb[0].mxu0 %v413
  %v1494 = vpop.f32.mrb[0].mxu0
  %v1495 = vadd.f32 %v690, %v1494
  %v1496 = vpop.f32.mrb[0].mxu0
  %v1497 = vpop.f32.mrb[0].mxu0
  %v1498 = vpop.f32.mrb[0].mxu0
  %1499 = vdwg.mxu0
  %1500 = vmatprep.subr.bf16.mxu0 0
  %1501 = vmatpush1.bf16.msra.mxu0 %v1220
  %1502 = vmatprep.subr.bf16.mxu0 0
  %1503 = vmatpush1.bf16.msra.mxu0 %v1221
  %1504 = vmatprep.subr.bf16.mxu0 0
  %1505 = vmatpush1.bf16.msra.mxu0 %v1222
  %1506 = vmatprep.subr.bf16.mxu0 0
  %1507 = vmatpush1.bf16.msra.mxu0 %v1223
  %1508 = vmatprep.subr.bf16.mxu0 0
  %1509 = vmatpush1.bf16.msra.mxu0 %v1224
  %1510 = vmatprep.subr.bf16.mxu0 0
  %1511 = vmatpush1.bf16.msra.mxu0 %v1225
  %1512 = vmatprep.subr.bf16.mxu0 0
  %1513 = vmatpush1.bf16.msra.mxu0 %v1226
  %1514 = vmatprep.subr.bf16.mxu0 0
  %1515 = vmatpush1.bf16.msra.mxu0 %v1227
  %1516 = vmatprep.subr.bf16.mxu0 0
  %1517 = vmatpush1.bf16.msra.mxu0 %v1228
  %1518 = vmatprep.subr.bf16.mxu0 0
  %1519 = vmatpush1.bf16.msra.mxu0 %v1229
  %1520 = vmatprep.subr.bf16.mxu0 0
  %1521 = vmatpush1.bf16.msra.mxu0 %v1230
  %1522 = vmatprep.subr.bf16.mxu0 0
  %1523 = vmatpush1.bf16.msra.mxu0 %v1231
  %1524 = vmatprep.subr.bf16.mxu0 0
  %1525 = vmatpush1.bf16.msra.mxu0 %v1232
  %1526 = vmatprep.subr.bf16.mxu0 0
  %1527 = vmatpush1.bf16.msra.mxu0 %v1233
  %1528 = vmatprep.subr.bf16.mxu0 0
  %1529 = vmatpush1.bf16.msra.mxu0 %v1234
  %1530 = vmatprep.subr.bf16.mxu0 0
  %1531 = vmatpush1.bf16.msra.mxu0 %v1235
  %1532 = vmatprep.mubr.bf16.mxu0 %v416
  %1533 = vmatmul.mubr.bf16.gmra.mrb[0].mxu0 %v415
  %v1534 = vpop.f32.mrb[0].mxu0
  %v1535 = vadd.f32 %v1495, %v1534
  %v1536 = vpop.f32.mrb[0].mxu0
  %v1537 = vpop.f32.mrb[0].mxu0
  %v1538 = vpop.f32.mrb[0].mxu0
  %1539 = vdwg.mxu0
  %1540 = vmatprep.subr.bf16.mxu0 0
  %1541 = vmatpush1.bf16.msra.mxu0 %v1236
  %1542 = vmatprep.subr.bf16.mxu0 0
  %1543 = vmatpush1.bf16.msra.mxu0 %v1237
  %1544 = vmatprep.subr.bf16.mxu0 0
  %1545 = vmatpush1.bf16.msra.mxu0 %v1238
  %1546 = vmatprep.subr.bf16.mxu0 0
  %1547 = vmatpush1.bf16.msra.mxu0 %v1239
  %1548 = vmatprep.subr.bf16.mxu0 0
  %1549 = vmatpush1.bf16.msra.mxu0 %v1240
  %1550 = vmatprep.subr.bf16.mxu0 0
  %1551 = vmatpush1.bf16.msra.mxu0 %v1241
  %1552 = vmatprep.subr.bf16.mxu0 0
  %1553 = vmatpush1.bf16.msra.mxu0 %v1242
  %1554 = vmatprep.subr.bf16.mxu0 0
  %1555 = vmatpush1.bf16.msra.mxu0 %v1243
  %1556 = vmatprep.subr.bf16.mxu0 0
  %1557 = vmatpush1.bf16.msra.mxu0 %v1244
  %1558 = vmatprep.subr.bf16.mxu0 0
  %1559 = vmatpush1.bf16.msra.mxu0 %v1245
  %1560 = vmatprep.subr.bf16.mxu0 0
  %1561 = vmatpush1.bf16.msra.mxu0 %v1246
  %1562 = vmatprep.subr.bf16.mxu0 0
  %1563 = vmatpush1.bf16.msra.mxu0 %v1247
  %1564 = vmatprep.subr.bf16.mxu0 0
  %1565 = vmatpush1.bf16.msra.mxu0 %v1248
  %1566 = vmatprep.subr.bf16.mxu0 0
  %1567 = vmatpush1.bf16.msra.mxu0 %v1249
  %1568 = vmatprep.subr.bf16.mxu0 0
  %1569 = vmatpush1.bf16.msra.mxu0 %v1250
  %1570 = vmatprep.subr.bf16.mxu0 0
  %1571 = vmatpush1.bf16.msra.mxu0 %v1251
  %1572 = vmatprep.mubr.bf16.mxu0 %v418
  %1573 = vmatmul.mubr.bf16.gmra.mrb[0].mxu0 %v417
  %v1574 = vpop.f32.mrb[0].mxu0
  %v1575 = vadd.f32 %v1535, %v1574
  %v1576 = vpop.f32.mrb[0].mxu0
  %v1577 = vpop.f32.mrb[0].mxu0
  %v1578 = vpop.f32.mrb[0].mxu0
  %1579 = vdwg.mxu0
  %1580 = vmatprep.subr.bf16.mxu0 0
  %1581 = vmatpush1.bf16.msra.mxu0 %v1252
  %1582 = vmatprep.subr.bf16.mxu0 0
  %1583 = vmatpush1.bf16.msra.mxu0 %v1253
  %1584 = vmatprep.subr.bf16.mxu0 0
  %1585 = vmatpush1.bf16.msra.mxu0 %v1254
  %1586 = vmatprep.subr.bf16.mxu0 0
  %1587 = vmatpush1.bf16.msra.mxu0 %v1255
  %1588 = vmatprep.subr.bf16.mxu0 0
  %1589 = vmatpush1.bf16.msra.mxu0 %v1256
  %1590 = vmatprep.subr.bf16.mxu0 0
  %1591 = vmatpush1.bf16.msra.mxu0 %v1257
  %1592 = vmatprep.subr.bf16.mxu0 0
  %1593 = vmatpush1.bf16.msra.mxu0 %v1258
  %1594 = vmatprep.subr.bf16.mxu0 0
  %1595 = vmatpush1.bf16.msra.mxu0 %v1259
  %1596 = vmatprep.subr.bf16.mxu0 0
  %1597 = vmatpush1.bf16.msra.mxu0 %v1260
  %1598 = vmatprep.subr.bf16.mxu0 0
  %1599 = vmatpush1.bf16.msra.mxu0 %v1261
  %1600 = vmatprep.subr.bf16.mxu0 0
  %1601 = vmatpush1.bf16.msra.mxu0 %v1262
  %1602 = vmatprep.subr.bf16.mxu0 0
  %1603 = vmatpush1.bf16.msra.mxu0 %v1263
  %1604 = vmatprep.subr.bf16.mxu0 0
  %1605 = vmatpush1.bf16.msra.mxu0 %v1264
  %1606 = vmatprep.subr.bf16.mxu0 0
  %1607 = vmatpush1.bf16.msra.mxu0 %v1265
  %1608 = vmatprep.subr.bf16.mxu0 0
  %1609 = vmatpush1.bf16.msra.mxu0 %v1266
  %1610 = vmatprep.subr.bf16.mxu0 0
  %1611 = vmatpush1.bf16.msra.mxu0 %v1267
  %1612 = vmatprep.mubr.bf16.mxu0 %v420
  %1613 = vmatmul.mubr.bf16.gmra.mrb[0].mxu0 %v419
  %v1614 = vpop.f32.mrb[0].mxu0
  %v1615 = vadd.f32 %v1575, %v1614
  %v1616 = vpop.f32.mrb[0].mxu0
  %v1617 = vpop.f32.mrb[0].mxu0
  %v1618 = vpop.f32.mrb[0].mxu0
  %1619 = vdwg.mxu0
  %1620 = vmatprep.subr.bf16.mxu0 0
  %1621 = vmatpush1.bf16.msra.mxu0 %v1268
  %1622 = vmatprep.subr.bf16.mxu0 0
  %1623 = vmatpush1.bf16.msra.mxu0 %v1269
  %1624 = vmatprep.subr.bf16.mxu0 0
  %1625 = vmatpush1.bf16.msra.mxu0 %v1270
  %1626 = vmatprep.subr.bf16.mxu0 0
  %1627 = vmatpush1.bf16.msra.mxu0 %v1271
  %1628 = vmatprep.subr.bf16.mxu0 0
  %1629 = vmatpush1.bf16.msra.mxu0 %v1272
  %1630 = vmatprep.subr.bf16.mxu0 0
  %1631 = vmatpush1.bf16.msra.mxu0 %v1273
  %1632 = vmatprep.subr.bf16.mxu0 0
  %1633 = vmatpush1.bf16.msra.mxu0 %v1274
  %1634 = vmatprep.subr.bf16.mxu0 0
  %1635 = vmatpush1.bf16.msra.mxu0 %v1275
  %1636 = vmatprep.subr.bf16.mxu0 0
  %1637 = vmatpush1.bf16.msra.mxu0 %v1276
  %1638 = vmatprep.subr.bf16.mxu0 0
  %1639 = vmatpush1.bf16.msra.mxu0 %v1277
  %1640 = vmatprep.subr.bf16.mxu0 0
  %1641 = vmatpush1.bf16.msra.mxu0 %v1278
  %1642 = vmatprep.subr.bf16.mxu0 0
  %1643 = vmatpush1.bf16.msra.mxu0 %v1279
  %1644 = vmatprep.subr.bf16.mxu0 0
  %1645 = vmatpush1.bf16.msra.mxu0 %v1280
  %1646 = vmatprep.subr.bf16.mxu0 0
  %1647 = vmatpush1.bf16.msra.mxu0 %v1281
  %1648 = vmatprep.subr.bf16.mxu0 0
  %1649 = vmatpush1.bf16.msra.mxu0 %v1282
  %1650 = vmatprep.subr.bf16.mxu0 0
  %1651 = vmatpush1.bf16.msra.mxu0 %v1283
  %1652 = vmatprep.mubr.bf16.mxu0 %v422
  %1653 = vmatmul.mubr.bf16.gmra.mrb[0].mxu0 %v421
  %v1654 = vpop.f32.mrb[0].mxu0
  %v1655 = vadd.f32 %v1615, %v1654
  %v1656 = vpop.f32.mrb[0].mxu0
  %v1657 = vpop.f32.mrb[0].mxu0
  %v1658 = vpop.f32.mrb[0].mxu0
  %1659 = vdwg.mxu0
  %1660 = vmatprep.subr.bf16.mxu0 0
  %1661 = vmatpush1.bf16.msra.mxu0 %v1284
  %1662 = vmatprep.subr.bf16.mxu0 0
  %1663 = vmatpush1.bf16.msra.mxu0 %v1285
  %1664 = vmatprep.subr.bf16.mxu0 0
  %1665 = vmatpush1.bf16.msra.mxu0 %v1286
  %1666 = vmatprep.subr.bf16.mxu0 0
  %1667 = vmatpush1.bf16.msra.mxu0 %v1287
  %1668 = vmatprep.subr.bf16.mxu0 0
  %1669 = vmatpush1.bf16.msra.mxu0 %v1288
  %1670 = vmatprep.subr.bf16.mxu0 0
  %1671 = vmatpush1.bf16.msra.mxu0 %v1289
  %1672 = vmatprep.subr.bf16.mxu0 0
  %1673 = vmatpush1.bf16.msra.mxu0 %v1290
  %1674 = vmatprep.subr.bf16.mxu0 0
  %1675 = vmatpush1.bf16.msra.mxu0 %v1291
  %1676 = vmatprep.subr.bf16.mxu0 0
  %1677 = vmatpush1.bf16.msra.mxu0 %v1292
  %1678 = vmatprep.subr.bf16.mxu0 0
  %1679 = vmatpush1.bf16.msra.mxu0 %v1293
  %1680 = vmatprep.subr.bf16.mxu0 0
  %1681 = vmatpush1.bf16.msra.mxu0 %v1294
  %1682 = vmatprep.subr.bf16.mxu0 0
  %1683 = vmatpush1.bf16.msra.mxu0 %v1295
  %1684 = vmatprep.subr.bf16.mxu0 0
  %1685 = vmatpush1.bf16.msra.mxu0 %v1296
  %1686 = vmatprep.subr.bf16.mxu0 0
  %1687 = vmatpush1.bf16.msra.mxu0 %v1297
  %1688 = vmatprep.subr.bf16.mxu0 0
  %1689 = vmatpush1.bf16.msra.mxu0 %v1298
  %1690 = vmatprep.subr.bf16.mxu0 0
  %1691 = vmatpush1.bf16.msra.mxu0 %v1299
  %1692 = vmatprep.mubr.bf16.mxu0 %v424
  %1693 = vmatmul.mubr.bf16.gmra.mrb[0].mxu0 %v423
  %v1694 = vpop.f32.mrb[0].mxu0
  %v1695 = vadd.f32 %v1655, %v1694
  %v1696 = vpop.f32.mrb[0].mxu0
  %v1697 = vpop.f32.mrb[0].mxu0
  %v1698 = vpop.f32.mrb[0].mxu0
  %1699 = vdwg.mxu0
  %1700 = vmatprep.subr.bf16.mxu0 0
  %1701 = vmatpush1.bf16.msra.mxu0 %v1300
  %1702 = vmatprep.subr.bf16.mxu0 0
  %1703 = vmatpush1.bf16.msra.mxu0 %v1301
  %1704 = vmatprep.subr.bf16.mxu0 0
  %1705 = vmatpush1.bf16.msra.mxu0 %v1302
  %1706 = vmatprep.subr.bf16.mxu0 0
  %1707 = vmatpush1.bf16.msra.mxu0 %v1303
  %1708 = vmatprep.subr.bf16.mxu0 0
  %1709 = vmatpush1.bf16.msra.mxu0 %v1304
  %1710 = vmatprep.subr.bf16.mxu0 0
  %1711 = vmatpush1.bf16.msra.mxu0 %v1305
  %1712 = vmatprep.subr.bf16.mxu0 0
  %1713 = vmatpush1.bf16.msra.mxu0 %v1306
  %1714 = vmatprep.subr.bf16.mxu0 0
  %1715 = vmatpush1.bf16.msra.mxu0 %v1307
  %1716 = vmatprep.subr.bf16.mxu0 0
  %1717 = vmatpush1.bf16.msra.mxu0 %v1308
  %1718 = vmatprep.subr.bf16.mxu0 0
  %1719 = vmatpush1.bf16.msra.mxu0 %v1309
  %1720 = vmatprep.subr.bf16.mxu0 0
  %1721 = vmatpush1.bf16.msra.mxu0 %v1310
  %1722 = vmatprep.subr.bf16.mxu0 0
  %1723 = vmatpush1.bf16.msra.mxu0 %v1311
  %1724 = vmatprep.subr.bf16.mxu0 0
  %1725 = vmatpush1.bf16.msra.mxu0 %v1312
  %1726 = vmatprep.subr.bf16.mxu0 0
  %1727 = vmatpush1.bf16.msra.mxu0 %v1313
  %1728 = vmatprep.subr.bf16.mxu0 0
  %1729 = vmatpush1.bf16.msra.mxu0 %v1314
  %1730 = vmatprep.subr.bf16.mxu0 0
  %1731 = vmatpush1.bf16.msra.mxu0 %v1315
  %1732 = vmatprep.mubr.bf16.mxu0 %v426
  %1733 = vmatmul.mubr.bf16.gmra.mrb[0].mxu0 %v425
  %v1734 = vpop.f32.mrb[0].mxu0
  %v1735 = vadd.f32 %v1695, %v1734
  %v1736 = vpop.f32.mrb[0].mxu0
  %v1737 = vpop.f32.mrb[0].mxu0
  %v1738 = vpop.f32.mrb[0].mxu0
  %1739 = vdwg.mxu0
  %1740 = vmatprep.subr.bf16.mxu0 0
  %1741 = vmatpush1.bf16.msra.mxu0 %v1316
  %1742 = vmatprep.subr.bf16.mxu0 0
  %1743 = vmatpush1.bf16.msra.mxu0 %v1317
  %1744 = vmatprep.subr.bf16.mxu0 0
  %1745 = vmatpush1.bf16.msra.mxu0 %v1318
  %1746 = vmatprep.subr.bf16.mxu0 0
  %1747 = vmatpush1.bf16.msra.mxu0 %v1319
  %1748 = vmatprep.subr.bf16.mxu0 0
  %1749 = vmatpush1.bf16.msra.mxu0 %v1320
  %1750 = vmatprep.subr.bf16.mxu0 0
  %1751 = vmatpush1.bf16.msra.mxu0 %v1321
  %1752 = vmatprep.subr.bf16.mxu0 0
  %1753 = vmatpush1.bf16.msra.mxu0 %v1322
  %1754 = vmatprep.subr.bf16.mxu0 0
  %1755 = vmatpush1.bf16.msra.mxu0 %v1323
  %1756 = vmatprep.subr.bf16.mxu0 0
  %1757 = vmatpush1.bf16.msra.mxu0 %v1324
  %1758 = vmatprep.subr.bf16.mxu0 0
  %1759 = vmatpush1.bf16.msra.mxu0 %v1325
  %1760 = vmatprep.subr.bf16.mxu0 0
  %1761 = vmatpush1.bf16.msra.mxu0 %v1326
  %1762 = vmatprep.subr.bf16.mxu0 0
  %1763 = vmatpush1.bf16.msra.mxu0 %v1327
  %1764 = vmatprep.subr.bf16.mxu0 0
  %1765 = vmatpush1.bf16.msra.mxu0 %v1328
  %1766 = vmatprep.subr.bf16.mxu0 0
  %1767 = vmatpush1.bf16.msra.mxu0 %v1329
  %1768 = vmatprep.subr.bf16.mxu0 0
  %1769 = vmatpush1.bf16.msra.mxu0 %v1330
  %1770 = vmatprep.subr.bf16.mxu0 0
  %1771 = vmatpush1.bf16.msra.mxu0 %v1331
  %1772 = vmatprep.mubr.bf16.mxu0 %v428
  %1773 = vmatmul.mubr.bf16.gmra.mrb[0].mxu0 %v427
  %v1774 = vpop.f32.mrb[0].mxu0
  %v1775 = vadd.f32 %v1735, %v1774
  %v1776 = vpop.f32.mrb[0].mxu0
  %v1777 = vpop.f32.mrb[0].mxu0
  %v1778 = vpop.f32.mrb[0].mxu0
  %1779 = vdwg.mxu0
  %vm1780 = vcmask 254976
  %1781 = vst.msk [vmem:[%s5] sm:$0x3] %vm1780, %v1775
  // Predicated region
  $region22: #{encoder_forward.7} parent=0 // pred_check
    _
  $region23: #{encoder_forward.7} parent=0 // pred_check_branch
    %1783 = sbr.rel (0) target = $region25
  $region24: #{encoder_forward.7} parent=0 // pred_region
    _
  $region25: #{encoder_forward.7} parent=0 // pred_fallthru
    _
  // Predicated region
  $region26: #{encoder_forward.7} parent=0 // pred_check
    _
  $region27: #{encoder_forward.7} parent=0 // pred_check_branch
    %1785 = sbr.rel (0) target = $region29
  $region28: #{encoder_forward.7} parent=0 // pred_region
    _
  $region29: #{encoder_forward.7} parent=0 // pred_fallthru
    _

</llo_original>
